<compile_context>
chip_gen: v6e
topology: v6e:2x2x1
jax: 0.10.0
libtpu: 0.0.40
codegen_flags: <defaults>
</compile_context>

<pallas_src>
import functools

import jax
import jax.numpy as jnp
from jax import lax
from jax.experimental import pallas as pl
from jax.experimental.pallas import tpu as pltpu


# ----------------------------- Pallas kernels ------------------------------

def _conv_bn_relu_pool_kernel(
    x_ref, w_ref, b_ref, g_ref, bt_ref,
    ssum_ref, sbc_ref, pwe_ref, pwo_ref, rhe_ref, rho_ref, rp_ref, cp_ref,
    o_ref, *, n, ho, wo, cin, cout, kh, kw, out_pad, eps):
    """Fused conv + batchnorm(batch stats) + relu + 2x2 maxpool (+ next-layer pad).

    x_ref  : (n, Hp, Wp*cin)        padded input, lanes pack (x, c)
    w_ref  : (kh*kw, wo*cin, wo*cout)  per-tap block-diagonal weights
    b_ref  : (1, wo*cout)           conv bias tiled over x
    g_ref, bt_ref : (1, cout)       BN gamma / beta
    ssum_ref : (wo*cout, cout)      packed-lane -> per-channel sum selector
    sbc_ref  : (cout, wo*cout)      per-channel -> packed-lane broadcast selector
    pwe/pwo  : (wo*cout, (wo//2)*cout)  even / odd x-block selectors (W pooling)
    rhe/rho  : (ho//2, ho)              even / odd row selectors (H pooling)
    rp, cp   : pad-embedding selectors for the next layer's zero padding
    o_ref  : (n, ho//2 + 2*out_pad, (wo//2 + 2*out_pad)*cout)
    """
    f32 = jnp.float32
    woc = wo * cout
    wocin = wo * cin

    # ---- pass 1: conv via kh*kw block-diagonal matmuls + batch-stat accumulation
    convs = []
    tot = jnp.zeros((1, cout), f32)
    totsq = jnp.zeros((1, cout), f32)
    for i in range(n):                                  # static, n is tiny
        acc = jnp.zeros((ho, woc), f32)
        for t in range(kh * kw):                        # static unroll over taps
            ky, kx = t // kw, t % kw
            tap = x_ref[i, ky:ky + ho, kx * cin:kx * cin + wocin]   # (ho, wo*cin)
            acc = acc + jnp.dot(tap, w_ref[t], preferred_element_type=f32)
        acc = acc + b_ref[...]
        convs.append(acc)
        tot = tot + jnp.dot(jnp.sum(acc, axis=0, keepdims=True),
                            ssum_ref[...], preferred_element_type=f32)
        totsq = totsq + jnp.dot(jnp.sum(acc * acc, axis=0, keepdims=True),
                                ssum_ref[...], preferred_element_type=f32)

    # ---- batch-norm affine params (training-mode batch stats, biased variance)
    cnt = float(n * ho * wo)
    mean = tot / cnt
    var = jnp.maximum(totsq / cnt - mean * mean, 0.0)   # clamp cancellation
    scale = g_ref[...] * lax.rsqrt(var + eps)
    shift = bt_ref[...] - mean * scale
    pscale = jnp.dot(scale, sbc_ref[...], preferred_element_type=f32)   # (1, wo*cout)
    pshift = jnp.dot(shift, sbc_ref[...], preferred_element_type=f32)

    # ---- pass 2: normalize + relu + 2x2 maxpool + embed into next layer's padding
    for i in range(n):
        z = jnp.maximum(convs[i] * pscale + pshift, 0.0)                 # (ho, wo*cout)
        zw = jnp.maximum(jnp.dot(z, pwe_ref[...], preferred_element_type=f32),
                         jnp.dot(z, pwo_ref[...], preferred_element_type=f32))
        zp = jnp.maximum(jnp.dot(rhe_ref[...], zw, preferred_element_type=f32),
                         jnp.dot(rho_ref[...], zw, preferred_element_type=f32))
        if out_pad > 0:
            zp = jnp.dot(jnp.dot(rp_ref[...], zp, preferred_element_type=f32),
                         cp_ref[...], preferred_element_type=f32)
        o_ref[i] = zp


def _fc_head_kernel(*refs, n_layers):
    """Whole FC head in one kernel: (x @ W0 + b0) relu ... @ W_last + b_last."""
    x_ref, o_ref = refs[0], refs[-1]
    h = x_ref[...]
    for i in range(n_layers):
        w = refs[1 + 2 * i][...]
        b = refs[2 + 2 * i][...]
        h = jnp.dot(h, w, preferred_element_type=jnp.float32) + b
        if i < n_layers - 1:                            # ReLU on all but the output layer
            h = jnp.maximum(h, 0.0)
    o_ref[...] = h


# ------------------------------- wrappers -----------------------------------

def fused_conv_bn_relu_pool(x_packed, layer, *, n, in_h, in_w, in_c,
                            stride, pad, out_pad, eps=1e-5):
    """x_packed: (n, in_h + 2*pad, (in_w + 2*pad)*in_c), lanes pack (x, c).

    Returns (out_packed, out_h, out_w, out_c) where out_packed is already padded
    (with zeros) and lane-packed for the next conv layer (out_pad = its padding).
    """
    w, b = layer["w"], layer["b"]                       # (Cout, Cin, kh, kw), (Cout,)
    gamma, beta = layer["gamma"], layer["beta"]
    cout, cin, kh, kw = w.shape
    assert cin == in_c
    assert stride == 1, "fused conv kernel assumes stride == 1"
    hp, wp = in_h + 2 * pad, in_w + 2 * pad
    ho, wo = hp - kh + 1, wp - kw + 1
    assert ho % 2 == 0 and wo % 2 == 0, "2x2 maxpool needs even conv output size"
    hq, wq = ho // 2, wo // 2
    assert x_packed.shape == (n, hp, wp * cin), x_packed.shape

    f32 = jnp.float32
    eye_c = jnp.eye(cout, dtype=f32)
    eye_w = jnp.eye(wo, dtype=f32)

    # Per-tap (Cin, Cout) weights -> block-diagonal (wo*Cin, wo*Cout) so the matmul
    # works directly on the lane-packed (x, c) layout.
    wt = jnp.transpose(w, (2, 3, 1, 0)).reshape(kh * kw, cin, cout).astype(f32)
    wbd = jax.vmap(lambda m: jnp.kron(eye_w, m))(wt)                    # (kh*kw, wo*cin, wo*cout)
    b_packed = jnp.tile(b.astype(f32), wo)[None, :]                     # (1, wo*cout)

    # Constant 0/1 selector matrices (tiny).
    ssum = jnp.tile(eye_c, (wo, 1))                                     # (wo*cout, cout)
    sbc = ssum.T                                                        # (cout, wo*cout)
    pwe = jnp.kron(eye_w[:, 0::2], eye_c)                               # (wo*cout, wq*cout)
    pwo = jnp.kron(eye_w[:, 1::2], eye_c)
    rhe = jnp.eye(ho, dtype=f32)[0::2, :]                               # (hq, ho)
    rho = jnp.eye(ho, dtype=f32)[1::2, :]
    rp = jnp.pad(jnp.eye(hq, dtype=f32), ((out_pad, out_pad), (0, 0)))  # (hq+2op, hq)
    cp = jnp.pad(jnp.eye(wq * cout, dtype=f32),
                 ((0, 0), (out_pad * cout, out_pad * cout)))            # (wq*cout, (wq+2op)*cout)

    out_shape = jax.ShapeDtypeStruct(
        (n, hq + 2 * out_pad, (wq + 2 * out_pad) * cout), f32)
    kern = functools.partial(
        _conv_bn_relu_pool_kernel,
        n=n, ho=ho, wo=wo, cin=cin, cout=cout, kh=kh, kw=kw,
        out_pad=out_pad, eps=eps)
    out = pl.pallas_call(
        kern,
        out_shape=out_shape,
        compiler_params=pltpu.CompilerParams(vmem_limit_bytes=32 * 1024 * 1024),
    )(x_packed, wbd, b_packed,
      gamma.astype(f32)[None, :], beta.astype(f32)[None, :],
      ssum, sbc, pwe, pwo, rhe, rho, rp, cp)
    return out, hq, wq, cout


def fc_head(x, weights):
    """x: (m, fc_in); weights: list of (W (out, in), b (out,)). ReLU between layers."""
    f32 = jnp.float32
    m, _ = x.shape
    mp = max(8, ((m + 7) // 8) * 8)                      # pad rows to the 8-sublane grain
    xp = jnp.pad(x.astype(f32), ((0, mp - m), (0, 0)))
    args = [xp]
    for w, b in weights:
        args.append(w.T.astype(f32))
        args.append(b.astype(f32)[None, :])
    num_classes = weights[-1][0].shape[0]
    out = pl.pallas_call(
        functools.partial(_fc_head_kernel, n_layers=len(weights)),
        out_shape=jax.ShapeDtypeStruct((mp, num_classes), f32),
        compiler_params=pltpu.CompilerParams(vmem_limit_bytes=32 * 1024 * 1024),
    )(*args)
    return out[:m]


def cnn_forward(x_nchw, params, *, strides, paddings):
    conv_layers = params["conv_layers"]
    assert len(conv_layers) == len(strides) == len(paddings)
    # NCHW -> NHWC, pad for the first conv, pack lanes as (x, c).
    x = jnp.transpose(x_nchw, (0, 2, 3, 1)).astype(jnp.float32)
    n, h, w, c = x.shape
    p0 = paddings[0]
    x = jnp.pad(x, ((0, 0), (p0, p0), (p0, p0), (0, 0)))
    x = x.reshape(n, h + 2 * p0, (w + 2 * p0) * c)

    for li, layer in enumerate(conv_layers):
        out_pad = paddings[li + 1] if li + 1 < len(conv_layers) else 0
        x, h, w, c = fused_conv_bn_relu_pool(
            x, layer, n=n, in_h=h, in_w=w, in_c=c,
            stride=strides[li], pad=paddings[li], out_pad=out_pad)

    # Last conv layer emits (n, h, w*c) with no padding; flatten is a free reshape.
    feats = x.reshape(n, h * w * c)                      # feature order (y, x, c)

    # Fold PyTorch's NCHW flatten order (c, y, x) into the first FC weight.
    fcs = params["fc_layers"]
    w0 = fcs[0]["w"]
    w0p = w0.reshape(w0.shape[0], c, h, w).transpose(0, 2, 3, 1).reshape(w0.shape[0], -1)
    weights = [(w0p, fcs[0]["b"])]
    weights += [(fc["w"], fc["b"]) for fc in fcs[1:]]
    weights += [(params["out"]["w"], params["out"]["b"])]
    return fc_head(feats, weights)


# --------------------------- pure-JAX reference ------------------------------

def cnn_reference(x_nchw, params, strides, paddings, eps=1e-5):
    hi = lax.Precision.HIGHEST
    x = x_nchw.astype(jnp.float32)
    for layer, s, p in zip(params["conv_layers"], strides, paddings):
        x = lax.conv_general_dilated(
            x, layer["w"], window_strides=(s, s), padding=[(p, p), (p, p)],
            dimension_numbers=("NCHW", "OIHW", "NCHW"), precision=hi)
        x = x + layer["b"][None, :, None, None]
        mean = jnp.mean(x, axis=(0, 2, 3), keepdims=True)
        var = jnp.mean((x - mean) ** 2, axis=(0, 2, 3), keepdims=True)
        x = (x - mean) * lax.rsqrt(var + eps)
        x = x * layer["gamma"][None, :, None, None] + layer["beta"][None, :, None, None]
        x = jnp.maximum(x, 0.0)
        x = lax.reduce_window(x, -jnp.inf, lax.max, (1, 1, 2, 2), (1, 1, 2, 2), "VALID")
    x = x.reshape(x.shape[0], -1)
    for fc in params["fc_layers"]:
        x = jnp.maximum(jnp.dot(x, fc["w"].T, precision=hi) + fc["b"], 0.0)
    return jnp.dot(x, params["out"]["w"].T, precision=hi) + params["out"]["b"]


# ------------------------------- parameters ----------------------------------

def init_params(key, in_channels, conv_channels, kernel_sizes, strides, paddings,
                fc_hidden_units, num_classes, input_size, pool_size=2):
    params = {"conv_layers": [], "fc_layers": []}
    c, size = in_channels, input_size
    for out_c, k, s, p in zip(conv_channels, kernel_sizes, strides, paddings):
        key, k1, k2, k3, k4 = jax.random.split(key, 5)
        fan_in = c * k * k
        params["conv_layers"].append(dict(
            w=jax.random.normal(k1, (out_c, c, k, k), jnp.float32) / jnp.sqrt(fan_in),
            b=0.1 * jax.random.normal(k2, (out_c,), jnp.float32),
            gamma=1.0 + 0.1 * jax.random.normal(k3, (out_c,), jnp.float32),
            beta=0.1 * jax.random.normal(k4, (out_c,), jnp.float32)))
        size = ((size + 2 * p - k) // s + 1) // pool_size
        c = out_c
    fc_in = c * size * size
    for hdim in fc_hidden_units:
        key, k1, k2 = jax.random.split(key, 3)
        params["fc_layers"].append(dict(
            w=jax.random.normal(k1, (hdim, fc_in), jnp.float32) / jnp.sqrt(fc_in),
            b=0.1 * jax.random.normal(k2, (hdim,), jnp.float32)))
        fc_in = hdim
    key, k1, k2 = jax.random.split(key, 3)
    params["out"] = dict(
        w=jax.random.normal(k1, (num_classes, fc_in), jnp.float32) / jnp.sqrt(fc_in),
        b=0.1 * jax.random.normal(k2, (num_classes,), jnp.float32))
    return params


# ---------------------------------- main --------------------------------------

if __name__ == "__main__":
    batch, in_channels, input_size = 2, 3, 16
    conv_channels = [8, 16, 32]
    kernel_sizes = [3, 3, 3]
    strides = [1, 1, 1]
    paddings = [1, 1, 1]
    fc_hidden_units = [32]
    num_classes = 10

    key = jax.random.PRNGKey(0)
    key, xk = jax.random.split(key)
    x = jax.random.normal(xk, (batch, in_channels, input_size, input_size), jnp.float32)

    params = init_params(key, in_channels, conv_channels, kernel_sizes, strides,
                         paddings, fc_hidden_units, num_classes, input_size)

    fwd = jax.jit(functools.partial(cnn_forward,
                                    strides=tuple(strides), paddings=tuple(paddings)))
    logits = fwd(x, params)
    jax.block_until_ready(logits)
    assert logits.shape == (batch, num_classes), logits.shape

    ref = cnn_reference(x, params, strides, paddings)
    err = float(jnp.max(jnp.abs(logits - ref)))
    assert jnp.allclose(logits, ref, atol=5e-2, rtol=5e-2), err
    print("KERNEL_OK")
</pallas_src>

<mosaic_0001>
module attributes {stable_mosaic.version = 11 : i64} {
  func.func @_conv_bn_relu_pool_kernel(%arg0: memref<2x18x54xf32, #tpu.memory_space<vmem>>, %arg1: memref<9x48x128xf32, #tpu.memory_space<vmem>>, %arg2: memref<1x128xf32, #tpu.memory_space<vmem>>, %arg3: memref<1x8xf32, #tpu.memory_space<vmem>>, %arg4: memref<1x8xf32, #tpu.memory_space<vmem>>, %arg5: memref<128x8xf32, #tpu.memory_space<vmem>>, %arg6: memref<8x128xf32, #tpu.memory_space<vmem>>, %arg7: memref<128x64xf32, #tpu.memory_space<vmem>>, %arg8: memref<128x64xf32, #tpu.memory_space<vmem>>, %arg9: memref<8x16xf32, #tpu.memory_space<vmem>>, %arg10: memref<8x16xf32, #tpu.memory_space<vmem>>, %arg11: memref<10x8xf32, #tpu.memory_space<vmem>>, %arg12: memref<64x80xf32, #tpu.memory_space<vmem>>, %arg13: memref<2x10x80xf32, #tpu.memory_space<vmem>>) attributes {dimension_semantics = [], scalar_prefetch = 0 : i64, scratch_operands = 0 : i64, tpu.core_type = #tpu.core_type<tc>} {
    %cst = arith.constant 0.000000e+00 : f32
    %0 = vector.broadcast %cst : f32 to vector<1x8xf32>
    %cst_0 = arith.constant 0.000000e+00 : f32
    %1 = vector.broadcast %cst_0 : f32 to vector<1x8xf32>
    %cst_1 = arith.constant 0.000000e+00 : f32
    %2 = vector.broadcast %cst_1 : f32 to vector<16x128xf32>
    %c0 = arith.constant 0 : index
    %c0_2 = arith.constant 0 : index
    %c0_3 = arith.constant 0 : index
    %3 = vector.load %arg0[%c0, %c0_2, %c0_3] : memref<2x18x54xf32, #tpu.memory_space<vmem>>, vector<1x16x48xf32>
    %4 = vector.shape_cast %3 : vector<1x16x48xf32> to vector<16x48xf32>
    %c0_4 = arith.constant 0 : index
    %c0_5 = arith.constant 0 : index
    %c0_6 = arith.constant 0 : index
    %5 = vector.load %arg1[%c0_4, %c0_5, %c0_6] : memref<9x48x128xf32, #tpu.memory_space<vmem>>, vector<1x48x128xf32>
    %6 = vector.shape_cast %5 : vector<1x48x128xf32> to vector<48x128xf32>
    %cst_7 = arith.constant dense<0.000000e+00> : vector<16x128xf32>
    %7 = tpu.matmul %4, %6, %cst_7 {dimension_numbers = #tpu.dot_dimension_numbers<[1], [0], [0], [1], [0, 0, 1, 1], [], []>} : vector<16x48xf32>, vector<48x128xf32>, vector<16x128xf32> -> vector<16x128xf32>
    %8 = arith.addf %2, %7 : vector<16x128xf32>
    %c0_8 = arith.constant 0 : index
    %c0_9 = arith.constant 0 : index
    %c3 = arith.constant 3 : index
    %9 = vector.load %arg0[%c0_8, %c0_9, %c3] : memref<2x18x54xf32, #tpu.memory_space<vmem>>, vector<1x16x48xf32>
    %10 = vector.shape_cast %9 : vector<1x16x48xf32> to vector<16x48xf32>
    %c1 = arith.constant 1 : index
    %c0_10 = arith.constant 0 : index
    %c0_11 = arith.constant 0 : index
    %11 = vector.load %arg1[%c1, %c0_10, %c0_11] : memref<9x48x128xf32, #tpu.memory_space<vmem>>, vector<1x48x128xf32>
    %12 = vector.shape_cast %11 : vector<1x48x128xf32> to vector<48x128xf32>
    %cst_12 = arith.constant dense<0.000000e+00> : vector<16x128xf32>
    %13 = tpu.matmul %10, %12, %cst_12 {dimension_numbers = #tpu.dot_dimension_numbers<[1], [0], [0], [1], [0, 0, 1, 1], [], []>} : vector<16x48xf32>, vector<48x128xf32>, vector<16x128xf32> -> vector<16x128xf32>
    %14 = arith.addf %8, %13 : vector<16x128xf32>
    %c0_13 = arith.constant 0 : index
    %c0_14 = arith.constant 0 : index
    %c6 = arith.constant 6 : index
    %15 = vector.load %arg0[%c0_13, %c0_14, %c6] : memref<2x18x54xf32, #tpu.memory_space<vmem>>, vector<1x16x48xf32>
    %16 = vector.shape_cast %15 : vector<1x16x48xf32> to vector<16x48xf32>
    %c2 = arith.constant 2 : index
    %c0_15 = arith.constant 0 : index
    %c0_16 = arith.constant 0 : index
    %17 = vector.load %arg1[%c2, %c0_15, %c0_16] : memref<9x48x128xf32, #tpu.memory_space<vmem>>, vector<1x48x128xf32>
    %18 = vector.shape_cast %17 : vector<1x48x128xf32> to vector<48x128xf32>
    %cst_17 = arith.constant dense<0.000000e+00> : vector<16x128xf32>
    %19 = tpu.matmul %16, %18, %cst_17 {dimension_numbers = #tpu.dot_dimension_numbers<[1], [0], [0], [1], [0, 0, 1, 1], [], []>} : vector<16x48xf32>, vector<48x128xf32>, vector<16x128xf32> -> vector<16x128xf32>
    %20 = arith.addf %14, %19 : vector<16x128xf32>
    %c0_18 = arith.constant 0 : index
    %c1_19 = arith.constant 1 : index
    %c0_20 = arith.constant 0 : index
    %21 = vector.load %arg0[%c0_18, %c1_19, %c0_20] : memref<2x18x54xf32, #tpu.memory_space<vmem>>, vector<1x16x48xf32>
    %22 = vector.shape_cast %21 : vector<1x16x48xf32> to vector<16x48xf32>
    %c3_21 = arith.constant 3 : index
    %c0_22 = arith.constant 0 : index
    %c0_23 = arith.constant 0 : index
    %23 = vector.load %arg1[%c3_21, %c0_22, %c0_23] : memref<9x48x128xf32, #tpu.memory_space<vmem>>, vector<1x48x128xf32>
    %24 = vector.shape_cast %23 : vector<1x48x128xf32> to vector<48x128xf32>
    %cst_24 = arith.constant dense<0.000000e+00> : vector<16x128xf32>
    %25 = tpu.matmul %22, %24, %cst_24 {dimension_numbers = #tpu.dot_dimension_numbers<[1], [0], [0], [1], [0, 0, 1, 1], [], []>} : vector<16x48xf32>, vector<48x128xf32>, vector<16x128xf32> -> vector<16x128xf32>
    %26 = arith.addf %20, %25 : vector<16x128xf32>
    %c0_25 = arith.constant 0 : index
    %c1_26 = arith.constant 1 : index
    %c3_27 = arith.constant 3 : index
    %27 = vector.load %arg0[%c0_25, %c1_26, %c3_27] : memref<2x18x54xf32, #tpu.memory_space<vmem>>, vector<1x16x48xf32>
    %28 = vector.shape_cast %27 : vector<1x16x48xf32> to vector<16x48xf32>
    %c4 = arith.constant 4 : index
    %c0_28 = arith.constant 0 : index
    %c0_29 = arith.constant 0 : index
    %29 = vector.load %arg1[%c4, %c0_28, %c0_29] : memref<9x48x128xf32, #tpu.memory_space<vmem>>, vector<1x48x128xf32>
    %30 = vector.shape_cast %29 : vector<1x48x128xf32> to vector<48x128xf32>
    %cst_30 = arith.constant dense<0.000000e+00> : vector<16x128xf32>
    %31 = tpu.matmul %28, %30, %cst_30 {dimension_numbers = #tpu.dot_dimension_numbers<[1], [0], [0], [1], [0, 0, 1, 1], [], []>} : vector<16x48xf32>, vector<48x128xf32>, vector<16x128xf32> -> vector<16x128xf32>
    %32 = arith.addf %26, %31 : vector<16x128xf32>
    %c0_31 = arith.constant 0 : index
    %c1_32 = arith.constant 1 : index
    %c6_33 = arith.constant 6 : index
    %33 = vector.load %arg0[%c0_31, %c1_32, %c6_33] : memref<2x18x54xf32, #tpu.memory_space<vmem>>, vector<1x16x48xf32>
    %34 = vector.shape_cast %33 : vector<1x16x48xf32> to vector<16x48xf32>
    %c5 = arith.constant 5 : index
    %c0_34 = arith.constant 0 : index
    %c0_35 = arith.constant 0 : index
    %35 = vector.load %arg1[%c5, %c0_34, %c0_35] : memref<9x48x128xf32, #tpu.memory_space<vmem>>, vector<1x48x128xf32>
    %36 = vector.shape_cast %35 : vector<1x48x128xf32> to vector<48x128xf32>
    %cst_36 = arith.constant dense<0.000000e+00> : vector<16x128xf32>
    %37 = tpu.matmul %34, %36, %cst_36 {dimension_numbers = #tpu.dot_dimension_numbers<[1], [0], [0], [1], [0, 0, 1, 1], [], []>} : vector<16x48xf32>, vector<48x128xf32>, vector<16x128xf32> -> vector<16x128xf32>
    %38 = arith.addf %32, %37 : vector<16x128xf32>
    %c0_37 = arith.constant 0 : index
    %c2_38 = arith.constant 2 : index
    %c0_39 = arith.constant 0 : index
    %39 = vector.load %arg0[%c0_37, %c2_38, %c0_39] : memref<2x18x54xf32, #tpu.memory_space<vmem>>, vector<1x16x48xf32>
    %40 = vector.shape_cast %39 : vector<1x16x48xf32> to vector<16x48xf32>
    %c6_40 = arith.constant 6 : index
    %c0_41 = arith.constant 0 : index
    %c0_42 = arith.constant 0 : index
    %41 = vector.load %arg1[%c6_40, %c0_41, %c0_42] : memref<9x48x128xf32, #tpu.memory_space<vmem>>, vector<1x48x128xf32>
    %42 = vector.shape_cast %41 : vector<1x48x128xf32> to vector<48x128xf32>
    %cst_43 = arith.constant dense<0.000000e+00> : vector<16x128xf32>
    %43 = tpu.matmul %40, %42, %cst_43 {dimension_numbers = #tpu.dot_dimension_numbers<[1], [0], [0], [1], [0, 0, 1, 1], [], []>} : vector<16x48xf32>, vector<48x128xf32>, vector<16x128xf32> -> vector<16x128xf32>
    %44 = arith.addf %38, %43 : vector<16x128xf32>
    %c0_44 = arith.constant 0 : index
    %c2_45 = arith.constant 2 : index
    %c3_46 = arith.constant 3 : index
    %45 = vector.load %arg0[%c0_44, %c2_45, %c3_46] : memref<2x18x54xf32, #tpu.memory_space<vmem>>, vector<1x16x48xf32>
    %46 = vector.shape_cast %45 : vector<1x16x48xf32> to vector<16x48xf32>
    %c7 = arith.constant 7 : index
    %c0_47 = arith.constant 0 : index
    %c0_48 = arith.constant 0 : index
    %47 = vector.load %arg1[%c7, %c0_47, %c0_48] : memref<9x48x128xf32, #tpu.memory_space<vmem>>, vector<1x48x128xf32>
    %48 = vector.shape_cast %47 : vector<1x48x128xf32> to vector<48x128xf32>
    %cst_49 = arith.constant dense<0.000000e+00> : vector<16x128xf32>
    %49 = tpu.matmul %46, %48, %cst_49 {dimension_numbers = #tpu.dot_dimension_numbers<[1], [0], [0], [1], [0, 0, 1, 1], [], []>} : vector<16x48xf32>, vector<48x128xf32>, vector<16x128xf32> -> vector<16x128xf32>
    %50 = arith.addf %44, %49 : vector<16x128xf32>
    %c0_50 = arith.constant 0 : index
    %c2_51 = arith.constant 2 : index
    %c6_52 = arith.constant 6 : index
    %51 = vector.load %arg0[%c0_50, %c2_51, %c6_52] : memref<2x18x54xf32, #tpu.memory_space<vmem>>, vector<1x16x48xf32>
    %52 = vector.shape_cast %51 : vector<1x16x48xf32> to vector<16x48xf32>
    %c8 = arith.constant 8 : index
    %c0_53 = arith.constant 0 : index
    %c0_54 = arith.constant 0 : index
    %53 = vector.load %arg1[%c8, %c0_53, %c0_54] : memref<9x48x128xf32, #tpu.memory_space<vmem>>, vector<1x48x128xf32>
    %54 = vector.shape_cast %53 : vector<1x48x128xf32> to vector<48x128xf32>
    %cst_55 = arith.constant dense<0.000000e+00> : vector<16x128xf32>
    %55 = tpu.matmul %52, %54, %cst_55 {dimension_numbers = #tpu.dot_dimension_numbers<[1], [0], [0], [1], [0, 0, 1, 1], [], []>} : vector<16x48xf32>, vector<48x128xf32>, vector<16x128xf32> -> vector<16x128xf32>
    %56 = arith.addf %50, %55 : vector<16x128xf32>
    %c0_56 = arith.constant 0 : index
    %c0_57 = arith.constant 0 : index
    %57 = vector.load %arg2[%c0_56, %c0_57] : memref<1x128xf32, #tpu.memory_space<vmem>>, vector<1x128xf32>
    %58 = vector.broadcast %57 : vector<1x128xf32> to vector<16x128xf32>
    %59 = arith.addf %56, %58 : vector<16x128xf32>
    %cst_58 = arith.constant dense<0.000000e+00> : vector<128xf32>
    %60 = vector.multi_reduction <add>, %59, %cst_58 [0] : vector<16x128xf32> to vector<128xf32>
    %61 = vector.shape_cast %60 : vector<128xf32> to vector<1x128xf32>
    %c0_59 = arith.constant 0 : index
    %c0_60 = arith.constant 0 : index
    %62 = vector.load %arg5[%c0_59, %c0_60] : memref<128x8xf32, #tpu.memory_space<vmem>>, vector<128x8xf32>
    %cst_61 = arith.constant dense<0.000000e+00> : vector<1x8xf32>
    %63 = tpu.matmul %61, %62, %cst_61 {dimension_numbers = #tpu.dot_dimension_numbers<[1], [0], [0], [1], [0, 0, 1, 1], [], []>} : vector<1x128xf32>, vector<128x8xf32>, vector<1x8xf32> -> vector<1x8xf32>
    %64 = arith.addf %0, %63 : vector<1x8xf32>
    %65 = arith.mulf %59, %59 : vector<16x128xf32>
    %cst_62 = arith.constant dense<0.000000e+00> : vector<128xf32>
    %66 = vector.multi_reduction <add>, %65, %cst_62 [0] : vector<16x128xf32> to vector<128xf32>
    %67 = vector.shape_cast %66 : vector<128xf32> to vector<1x128xf32>
    %c0_63 = arith.constant 0 : index
    %c0_64 = arith.constant 0 : index
    %68 = vector.load %arg5[%c0_63, %c0_64] : memref<128x8xf32, #tpu.memory_space<vmem>>, vector<128x8xf32>
    %cst_65 = arith.constant dense<0.000000e+00> : vector<1x8xf32>
    %69 = tpu.matmul %67, %68, %cst_65 {dimension_numbers = #tpu.dot_dimension_numbers<[1], [0], [0], [1], [0, 0, 1, 1], [], []>} : vector<1x128xf32>, vector<128x8xf32>, vector<1x8xf32> -> vector<1x8xf32>
    %70 = arith.addf %1, %69 : vector<1x8xf32>
    %cst_66 = arith.constant 0.000000e+00 : f32
    %71 = vector.broadcast %cst_66 : f32 to vector<16x128xf32>
    %c1_67 = arith.constant 1 : index
    %c0_68 = arith.constant 0 : index
    %c0_69 = arith.constant 0 : index
    %72 = vector.load %arg0[%c1_67, %c0_68, %c0_69] : memref<2x18x54xf32, #tpu.memory_space<vmem>>, vector<1x16x48xf32>
    %73 = vector.shape_cast %72 : vector<1x16x48xf32> to vector<16x48xf32>
    %c0_70 = arith.constant 0 : index
    %c0_71 = arith.constant 0 : index
    %c0_72 = arith.constant 0 : index
    %74 = vector.load %arg1[%c0_70, %c0_71, %c0_72] : memref<9x48x128xf32, #tpu.memory_space<vmem>>, vector<1x48x128xf32>
    %75 = vector.shape_cast %74 : vector<1x48x128xf32> to vector<48x128xf32>
    %cst_73 = arith.constant dense<0.000000e+00> : vector<16x128xf32>
    %76 = tpu.matmul %73, %75, %cst_73 {dimension_numbers = #tpu.dot_dimension_numbers<[1], [0], [0], [1], [0, 0, 1, 1], [], []>} : vector<16x48xf32>, vector<48x128xf32>, vector<16x128xf32> -> vector<16x128xf32>
    %77 = arith.addf %71, %76 : vector<16x128xf32>
    %c1_74 = arith.constant 1 : index
    %c0_75 = arith.constant 0 : index
    %c3_76 = arith.constant 3 : index
    %78 = vector.load %arg0[%c1_74, %c0_75, %c3_76] : memref<2x18x54xf32, #tpu.memory_space<vmem>>, vector<1x16x48xf32>
    %79 = vector.shape_cast %78 : vector<1x16x48xf32> to vector<16x48xf32>
    %c1_77 = arith.constant 1 : index
    %c0_78 = arith.constant 0 : index
    %c0_79 = arith.constant 0 : index
    %80 = vector.load %arg1[%c1_77, %c0_78, %c0_79] : memref<9x48x128xf32, #tpu.memory_space<vmem>>, vector<1x48x128xf32>
    %81 = vector.shape_cast %80 : vector<1x48x128xf32> to vector<48x128xf32>
    %cst_80 = arith.constant dense<0.000000e+00> : vector<16x128xf32>
    %82 = tpu.matmul %79, %81, %cst_80 {dimension_numbers = #tpu.dot_dimension_numbers<[1], [0], [0], [1], [0, 0, 1, 1], [], []>} : vector<16x48xf32>, vector<48x128xf32>, vector<16x128xf32> -> vector<16x128xf32>
    %83 = arith.addf %77, %82 : vector<16x128xf32>
    %c1_81 = arith.constant 1 : index
    %c0_82 = arith.constant 0 : index
    %c6_83 = arith.constant 6 : index
    %84 = vector.load %arg0[%c1_81, %c0_82, %c6_83] : memref<2x18x54xf32, #tpu.memory_space<vmem>>, vector<1x16x48xf32>
    %85 = vector.shape_cast %84 : vector<1x16x48xf32> to vector<16x48xf32>
    %c2_84 = arith.constant 2 : index
    %c0_85 = arith.constant 0 : index
    %c0_86 = arith.constant 0 : index
    %86 = vector.load %arg1[%c2_84, %c0_85, %c0_86] : memref<9x48x128xf32, #tpu.memory_space<vmem>>, vector<1x48x128xf32>
    %87 = vector.shape_cast %86 : vector<1x48x128xf32> to vector<48x128xf32>
    %cst_87 = arith.constant dense<0.000000e+00> : vector<16x128xf32>
    %88 = tpu.matmul %85, %87, %cst_87 {dimension_numbers = #tpu.dot_dimension_numbers<[1], [0], [0], [1], [0, 0, 1, 1], [], []>} : vector<16x48xf32>, vector<48x128xf32>, vector<16x128xf32> -> vector<16x128xf32>
    %89 = arith.addf %83, %88 : vector<16x128xf32>
    %c1_88 = arith.constant 1 : index
    %c1_89 = arith.constant 1 : index
    %c0_90 = arith.constant 0 : index
    %90 = vector.load %arg0[%c1_88, %c1_89, %c0_90] : memref<2x18x54xf32, #tpu.memory_space<vmem>>, vector<1x16x48xf32>
    %91 = vector.shape_cast %90 : vector<1x16x48xf32> to vector<16x48xf32>
    %c3_91 = arith.constant 3 : index
    %c0_92 = arith.constant 0 : index
    %c0_93 = arith.constant 0 : index
    %92 = vector.load %arg1[%c3_91, %c0_92, %c0_93] : memref<9x48x128xf32, #tpu.memory_space<vmem>>, vector<1x48x128xf32>
    %93 = vector.shape_cast %92 : vector<1x48x128xf32> to vector<48x128xf32>
    %cst_94 = arith.constant dense<0.000000e+00> : vector<16x128xf32>
    %94 = tpu.matmul %91, %93, %cst_94 {dimension_numbers = #tpu.dot_dimension_numbers<[1], [0], [0], [1], [0, 0, 1, 1], [], []>} : vector<16x48xf32>, vector<48x128xf32>, vector<16x128xf32> -> vector<16x128xf32>
    %95 = arith.addf %89, %94 : vector<16x128xf32>
    %c1_95 = arith.constant 1 : index
    %c1_96 = arith.constant 1 : index
    %c3_97 = arith.constant 3 : index
    %96 = vector.load %arg0[%c1_95, %c1_96, %c3_97] : memref<2x18x54xf32, #tpu.memory_space<vmem>>, vector<1x16x48xf32>
    %97 = vector.shape_cast %96 : vector<1x16x48xf32> to vector<16x48xf32>
    %c4_98 = arith.constant 4 : index
    %c0_99 = arith.constant 0 : index
    %c0_100 = arith.constant 0 : index
    %98 = vector.load %arg1[%c4_98, %c0_99, %c0_100] : memref<9x48x128xf32, #tpu.memory_space<vmem>>, vector<1x48x128xf32>
    %99 = vector.shape_cast %98 : vector<1x48x128xf32> to vector<48x128xf32>
    %cst_101 = arith.constant dense<0.000000e+00> : vector<16x128xf32>
    %100 = tpu.matmul %97, %99, %cst_101 {dimension_numbers = #tpu.dot_dimension_numbers<[1], [0], [0], [1], [0, 0, 1, 1], [], []>} : vector<16x48xf32>, vector<48x128xf32>, vector<16x128xf32> -> vector<16x128xf32>
    %101 = arith.addf %95, %100 : vector<16x128xf32>
    %c1_102 = arith.constant 1 : index
    %c1_103 = arith.constant 1 : index
    %c6_104 = arith.constant 6 : index
    %102 = vector.load %arg0[%c1_102, %c1_103, %c6_104] : memref<2x18x54xf32, #tpu.memory_space<vmem>>, vector<1x16x48xf32>
    %103 = vector.shape_cast %102 : vector<1x16x48xf32> to vector<16x48xf32>
    %c5_105 = arith.constant 5 : index
    %c0_106 = arith.constant 0 : index
    %c0_107 = arith.constant 0 : index
    %104 = vector.load %arg1[%c5_105, %c0_106, %c0_107] : memref<9x48x128xf32, #tpu.memory_space<vmem>>, vector<1x48x128xf32>
    %105 = vector.shape_cast %104 : vector<1x48x128xf32> to vector<48x128xf32>
    %cst_108 = arith.constant dense<0.000000e+00> : vector<16x128xf32>
    %106 = tpu.matmul %103, %105, %cst_108 {dimension_numbers = #tpu.dot_dimension_numbers<[1], [0], [0], [1], [0, 0, 1, 1], [], []>} : vector<16x48xf32>, vector<48x128xf32>, vector<16x128xf32> -> vector<16x128xf32>
    %107 = arith.addf %101, %106 : vector<16x128xf32>
    %c1_109 = arith.constant 1 : index
    %c2_110 = arith.constant 2 : index
    %c0_111 = arith.constant 0 : index
    %108 = vector.load %arg0[%c1_109, %c2_110, %c0_111] : memref<2x18x54xf32, #tpu.memory_space<vmem>>, vector<1x16x48xf32>
    %109 = vector.shape_cast %108 : vector<1x16x48xf32> to vector<16x48xf32>
    %c6_112 = arith.constant 6 : index
    %c0_113 = arith.constant 0 : index
    %c0_114 = arith.constant 0 : index
    %110 = vector.load %arg1[%c6_112, %c0_113, %c0_114] : memref<9x48x128xf32, #tpu.memory_space<vmem>>, vector<1x48x128xf32>
    %111 = vector.shape_cast %110 : vector<1x48x128xf32> to vector<48x128xf32>
    %cst_115 = arith.constant dense<0.000000e+00> : vector<16x128xf32>
    %112 = tpu.matmul %109, %111, %cst_115 {dimension_numbers = #tpu.dot_dimension_numbers<[1], [0], [0], [1], [0, 0, 1, 1], [], []>} : vector<16x48xf32>, vector<48x128xf32>, vector<16x128xf32> -> vector<16x128xf32>
    %113 = arith.addf %107, %112 : vector<16x128xf32>
    %c1_116 = arith.constant 1 : index
    %c2_117 = arith.constant 2 : index
    %c3_118 = arith.constant 3 : index
    %114 = vector.load %arg0[%c1_116, %c2_117, %c3_118] : memref<2x18x54xf32, #tpu.memory_space<vmem>>, vector<1x16x48xf32>
    %115 = vector.shape_cast %114 : vector<1x16x48xf32> to vector<16x48xf32>
    %c7_119 = arith.constant 7 : index
    %c0_120 = arith.constant 0 : index
    %c0_121 = arith.constant 0 : index
    %116 = vector.load %arg1[%c7_119, %c0_120, %c0_121] : memref<9x48x128xf32, #tpu.memory_space<vmem>>, vector<1x48x128xf32>
    %117 = vector.shape_cast %116 : vector<1x48x128xf32> to vector<48x128xf32>
    %cst_122 = arith.constant dense<0.000000e+00> : vector<16x128xf32>
    %118 = tpu.matmul %115, %117, %cst_122 {dimension_numbers = #tpu.dot_dimension_numbers<[1], [0], [0], [1], [0, 0, 1, 1], [], []>} : vector<16x48xf32>, vector<48x128xf32>, vector<16x128xf32> -> vector<16x128xf32>
    %119 = arith.addf %113, %118 : vector<16x128xf32>
    %c1_123 = arith.constant 1 : index
    %c2_124 = arith.constant 2 : index
    %c6_125 = arith.constant 6 : index
    %120 = vector.load %arg0[%c1_123, %c2_124, %c6_125] : memref<2x18x54xf32, #tpu.memory_space<vmem>>, vector<1x16x48xf32>
    %121 = vector.shape_cast %120 : vector<1x16x48xf32> to vector<16x48xf32>
    %c8_126 = arith.constant 8 : index
    %c0_127 = arith.constant 0 : index
    %c0_128 = arith.constant 0 : index
    %122 = vector.load %arg1[%c8_126, %c0_127, %c0_128] : memref<9x48x128xf32, #tpu.memory_space<vmem>>, vector<1x48x128xf32>
    %123 = vector.shape_cast %122 : vector<1x48x128xf32> to vector<48x128xf32>
    %cst_129 = arith.constant dense<0.000000e+00> : vector<16x128xf32>
    %124 = tpu.matmul %121, %123, %cst_129 {dimension_numbers = #tpu.dot_dimension_numbers<[1], [0], [0], [1], [0, 0, 1, 1], [], []>} : vector<16x48xf32>, vector<48x128xf32>, vector<16x128xf32> -> vector<16x128xf32>
    %125 = arith.addf %119, %124 : vector<16x128xf32>
    %c0_130 = arith.constant 0 : index
    %c0_131 = arith.constant 0 : index
    %126 = vector.load %arg2[%c0_130, %c0_131] : memref<1x128xf32, #tpu.memory_space<vmem>>, vector<1x128xf32>
    %127 = vector.broadcast %126 : vector<1x128xf32> to vector<16x128xf32>
    %128 = arith.addf %125, %127 : vector<16x128xf32>
    %cst_132 = arith.constant dense<0.000000e+00> : vector<128xf32>
    %129 = vector.multi_reduction <add>, %128, %cst_132 [0] : vector<16x128xf32> to vector<128xf32>
    %130 = vector.shape_cast %129 : vector<128xf32> to vector<1x128xf32>
    %c0_133 = arith.constant 0 : index
    %c0_134 = arith.constant 0 : index
    %131 = vector.load %arg5[%c0_133, %c0_134] : memref<128x8xf32, #tpu.memory_space<vmem>>, vector<128x8xf32>
    %cst_135 = arith.constant dense<0.000000e+00> : vector<1x8xf32>
    %132 = tpu.matmul %130, %131, %cst_135 {dimension_numbers = #tpu.dot_dimension_numbers<[1], [0], [0], [1], [0, 0, 1, 1], [], []>} : vector<1x128xf32>, vector<128x8xf32>, vector<1x8xf32> -> vector<1x8xf32>
    %133 = arith.addf %64, %132 : vector<1x8xf32>
    %134 = arith.mulf %128, %128 : vector<16x128xf32>
    %cst_136 = arith.constant dense<0.000000e+00> : vector<128xf32>
    %135 = vector.multi_reduction <add>, %134, %cst_136 [0] : vector<16x128xf32> to vector<128xf32>
    %136 = vector.shape_cast %135 : vector<128xf32> to vector<1x128xf32>
    %c0_137 = arith.constant 0 : index
    %c0_138 = arith.constant 0 : index
    %137 = vector.load %arg5[%c0_137, %c0_138] : memref<128x8xf32, #tpu.memory_space<vmem>>, vector<128x8xf32>
    %cst_139 = arith.constant dense<0.000000e+00> : vector<1x8xf32>
    %138 = tpu.matmul %136, %137, %cst_139 {dimension_numbers = #tpu.dot_dimension_numbers<[1], [0], [0], [1], [0, 0, 1, 1], [], []>} : vector<1x128xf32>, vector<128x8xf32>, vector<1x8xf32> -> vector<1x8xf32>
    %139 = arith.addf %70, %138 : vector<1x8xf32>
    %cst_140 = arith.constant 5.120000e+02 : f32
    %140 = vector.broadcast %cst_140 : f32 to vector<1x8xf32>
    %141 = arith.divf %133, %140 : vector<1x8xf32>
    %cst_141 = arith.constant 5.120000e+02 : f32
    %142 = vector.broadcast %cst_141 : f32 to vector<1x8xf32>
    %143 = arith.divf %139, %142 : vector<1x8xf32>
    %144 = arith.mulf %141, %141 : vector<1x8xf32>
    %145 = arith.subf %143, %144 : vector<1x8xf32>
    %cst_142 = arith.constant 0.000000e+00 : f32
    %146 = vector.broadcast %cst_142 : f32 to vector<1x8xf32>
    %147 = arith.maximumf %145, %146 : vector<1x8xf32>
    %c0_143 = arith.constant 0 : index
    %c0_144 = arith.constant 0 : index
    %148 = vector.load %arg3[%c0_143, %c0_144] : memref<1x8xf32, #tpu.memory_space<vmem>>, vector<1x8xf32>
    %cst_145 = arith.constant 9.99999974E-6 : f32
    %149 = vector.broadcast %cst_145 : f32 to vector<1x8xf32>
    %150 = arith.addf %147, %149 : vector<1x8xf32>
    %151 = math.rsqrt %150 : vector<1x8xf32>
    %152 = arith.mulf %148, %151 : vector<1x8xf32>
    %c0_146 = arith.constant 0 : index
    %c0_147 = arith.constant 0 : index
    %153 = vector.load %arg4[%c0_146, %c0_147] : memref<1x8xf32, #tpu.memory_space<vmem>>, vector<1x8xf32>
    %154 = arith.mulf %141, %152 : vector<1x8xf32>
    %155 = arith.subf %153, %154 : vector<1x8xf32>
    %c0_148 = arith.constant 0 : index
    %c0_149 = arith.constant 0 : index
    %156 = vector.load %arg6[%c0_148, %c0_149] : memref<8x128xf32, #tpu.memory_space<vmem>>, vector<8x128xf32>
    %cst_150 = arith.constant dense<0.000000e+00> : vector<1x128xf32>
    %157 = tpu.matmul %152, %156, %cst_150 {dimension_numbers = #tpu.dot_dimension_numbers<[1], [0], [0], [1], [0, 0, 1, 1], [], []>} : vector<1x8xf32>, vector<8x128xf32>, vector<1x128xf32> -> vector<1x128xf32>
    %c0_151 = arith.constant 0 : index
    %c0_152 = arith.constant 0 : index
    %158 = vector.load %arg6[%c0_151, %c0_152] : memref<8x128xf32, #tpu.memory_space<vmem>>, vector<8x128xf32>
    %cst_153 = arith.constant dense<0.000000e+00> : vector<1x128xf32>
    %159 = tpu.matmul %155, %158, %cst_153 {dimension_numbers = #tpu.dot_dimension_numbers<[1], [0], [0], [1], [0, 0, 1, 1], [], []>} : vector<1x8xf32>, vector<8x128xf32>, vector<1x128xf32> -> vector<1x128xf32>
    %160 = vector.broadcast %157 : vector<1x128xf32> to vector<16x128xf32>
    %161 = arith.mulf %59, %160 : vector<16x128xf32>
    %162 = vector.broadcast %159 : vector<1x128xf32> to vector<16x128xf32>
    %163 = arith.addf %161, %162 : vector<16x128xf32>
    %cst_154 = arith.constant 0.000000e+00 : f32
    %164 = vector.broadcast %cst_154 : f32 to vector<16x128xf32>
    %165 = arith.maximumf %163, %164 : vector<16x128xf32>
    %c0_155 = arith.constant 0 : index
    %c0_156 = arith.constant 0 : index
    %166 = vector.load %arg7[%c0_155, %c0_156] : memref<128x64xf32, #tpu.memory_space<vmem>>, vector<128x64xf32>
    %cst_157 = arith.constant dense<0.000000e+00> : vector<16x64xf32>
    %167 = tpu.matmul %165, %166, %cst_157 {dimension_numbers = #tpu.dot_dimension_numbers<[1], [0], [0], [1], [0, 0, 1, 1], [], []>} : vector<16x128xf32>, vector<128x64xf32>, vector<16x64xf32> -> vector<16x64xf32>
    %c0_158 = arith.constant 0 : index
    %c0_159 = arith.constant 0 : index
    %168 = vector.load %arg8[%c0_158, %c0_159] : memref<128x64xf32, #tpu.memory_space<vmem>>, vector<128x64xf32>
    %cst_160 = arith.constant dense<0.000000e+00> : vector<16x64xf32>
    %169 = tpu.matmul %165, %168, %cst_160 {dimension_numbers = #tpu.dot_dimension_numbers<[1], [0], [0], [1], [0, 0, 1, 1], [], []>} : vector<16x128xf32>, vector<128x64xf32>, vector<16x64xf32> -> vector<16x64xf32>
    %170 = arith.maximumf %167, %169 : vector<16x64xf32>
    %c0_161 = arith.constant 0 : index
    %c0_162 = arith.constant 0 : index
    %171 = vector.load %arg9[%c0_161, %c0_162] : memref<8x16xf32, #tpu.memory_space<vmem>>, vector<8x16xf32>
    %cst_163 = arith.constant dense<0.000000e+00> : vector<8x64xf32>
    %172 = tpu.matmul %171, %170, %cst_163 {dimension_numbers = #tpu.dot_dimension_numbers<[1], [0], [0], [1], [0, 0, 1, 1], [], []>} : vector<8x16xf32>, vector<16x64xf32>, vector<8x64xf32> -> vector<8x64xf32>
    %c0_164 = arith.constant 0 : index
    %c0_165 = arith.constant 0 : index
    %173 = vector.load %arg10[%c0_164, %c0_165] : memref<8x16xf32, #tpu.memory_space<vmem>>, vector<8x16xf32>
    %cst_166 = arith.constant dense<0.000000e+00> : vector<8x64xf32>
    %174 = tpu.matmul %173, %170, %cst_166 {dimension_numbers = #tpu.dot_dimension_numbers<[1], [0], [0], [1], [0, 0, 1, 1], [], []>} : vector<8x16xf32>, vector<16x64xf32>, vector<8x64xf32> -> vector<8x64xf32>
    %175 = arith.maximumf %172, %174 : vector<8x64xf32>
    %c0_167 = arith.constant 0 : index
    %c0_168 = arith.constant 0 : index
    %176 = vector.load %arg11[%c0_167, %c0_168] : memref<10x8xf32, #tpu.memory_space<vmem>>, vector<10x8xf32>
    %cst_169 = arith.constant dense<0.000000e+00> : vector<10x64xf32>
    %177 = tpu.matmul %176, %175, %cst_169 {dimension_numbers = #tpu.dot_dimension_numbers<[1], [0], [0], [1], [0, 0, 1, 1], [], []>} : vector<10x8xf32>, vector<8x64xf32>, vector<10x64xf32> -> vector<10x64xf32>
    %c0_170 = arith.constant 0 : index
    %c0_171 = arith.constant 0 : index
    %178 = vector.load %arg12[%c0_170, %c0_171] : memref<64x80xf32, #tpu.memory_space<vmem>>, vector<64x80xf32>
    %cst_172 = arith.constant dense<0.000000e+00> : vector<10x80xf32>
    %179 = tpu.matmul %177, %178, %cst_172 {dimension_numbers = #tpu.dot_dimension_numbers<[1], [0], [0], [1], [0, 0, 1, 1], [], []>} : vector<10x64xf32>, vector<64x80xf32>, vector<10x80xf32> -> vector<10x80xf32>
    %c0_173 = arith.constant 0 : index
    %c0_174 = arith.constant 0 : index
    %c0_175 = arith.constant 0 : index
    %180 = vector.load %arg13[%c0_173, %c0_174, %c0_175] : memref<2x10x80xf32, #tpu.memory_space<vmem>>, vector<1x10x80xf32>
    %181 = vector.shape_cast %180 : vector<1x10x80xf32> to vector<10x80xf32>
    %182 = vector.shape_cast %179 : vector<10x80xf32> to vector<1x10x80xf32>
    tpu.vector_store %arg13[%c0_173, %c0_174, %c0_175], %182 {strides = array<i32>} : memref<2x10x80xf32, #tpu.memory_space<vmem>>, vector<1x10x80xf32>,
    %183 = vector.broadcast %157 : vector<1x128xf32> to vector<16x128xf32>
    %184 = arith.mulf %128, %183 : vector<16x128xf32>
    %185 = vector.broadcast %159 : vector<1x128xf32> to vector<16x128xf32>
    %186 = arith.addf %184, %185 : vector<16x128xf32>
    %cst_176 = arith.constant 0.000000e+00 : f32
    %187 = vector.broadcast %cst_176 : f32 to vector<16x128xf32>
    %188 = arith.maximumf %186, %187 : vector<16x128xf32>
    %c0_177 = arith.constant 0 : index
    %c0_178 = arith.constant 0 : index
    %189 = vector.load %arg7[%c0_177, %c0_178] : memref<128x64xf32, #tpu.memory_space<vmem>>, vector<128x64xf32>
    %cst_179 = arith.constant dense<0.000000e+00> : vector<16x64xf32>
    %190 = tpu.matmul %188, %189, %cst_179 {dimension_numbers = #tpu.dot_dimension_numbers<[1], [0], [0], [1], [0, 0, 1, 1], [], []>} : vector<16x128xf32>, vector<128x64xf32>, vector<16x64xf32> -> vector<16x64xf32>
    %c0_180 = arith.constant 0 : index
    %c0_181 = arith.constant 0 : index
    %191 = vector.load %arg8[%c0_180, %c0_181] : memref<128x64xf32, #tpu.memory_space<vmem>>, vector<128x64xf32>
    %cst_182 = arith.constant dense<0.000000e+00> : vector<16x64xf32>
    %192 = tpu.matmul %188, %191, %cst_182 {dimension_numbers = #tpu.dot_dimension_numbers<[1], [0], [0], [1], [0, 0, 1, 1], [], []>} : vector<16x128xf32>, vector<128x64xf32>, vector<16x64xf32> -> vector<16x64xf32>
    %193 = arith.maximumf %190, %192 : vector<16x64xf32>
    %c0_183 = arith.constant 0 : index
    %c0_184 = arith.constant 0 : index
    %194 = vector.load %arg9[%c0_183, %c0_184] : memref<8x16xf32, #tpu.memory_space<vmem>>, vector<8x16xf32>
    %cst_185 = arith.constant dense<0.000000e+00> : vector<8x64xf32>
    %195 = tpu.matmul %194, %193, %cst_185 {dimension_numbers = #tpu.dot_dimension_numbers<[1], [0], [0], [1], [0, 0, 1, 1], [], []>} : vector<8x16xf32>, vector<16x64xf32>, vector<8x64xf32> -> vector<8x64xf32>
    %c0_186 = arith.constant 0 : index
    %c0_187 = arith.constant 0 : index
    %196 = vector.load %arg10[%c0_186, %c0_187] : memref<8x16xf32, #tpu.memory_space<vmem>>, vector<8x16xf32>
    %cst_188 = arith.constant dense<0.000000e+00> : vector<8x64xf32>
    %197 = tpu.matmul %196, %193, %cst_188 {dimension_numbers = #tpu.dot_dimension_numbers<[1], [0], [0], [1], [0, 0, 1, 1], [], []>} : vector<8x16xf32>, vector<16x64xf32>, vector<8x64xf32> -> vector<8x64xf32>
    %198 = arith.maximumf %195, %197 : vector<8x64xf32>
    %c0_189 = arith.constant 0 : index
    %c0_190 = arith.constant 0 : index
    %199 = vector.load %arg11[%c0_189, %c0_190] : memref<10x8xf32, #tpu.memory_space<vmem>>, vector<10x8xf32>
    %cst_191 = arith.constant dense<0.000000e+00> : vector<10x64xf32>
    %200 = tpu.matmul %199, %198, %cst_191 {dimension_numbers = #tpu.dot_dimension_numbers<[1], [0], [0], [1], [0, 0, 1, 1], [], []>} : vector<10x8xf32>, vector<8x64xf32>, vector<10x64xf32> -> vector<10x64xf32>
    %c0_192 = arith.constant 0 : index
    %c0_193 = arith.constant 0 : index
    %201 = vector.load %arg12[%c0_192, %c0_193] : memref<64x80xf32, #tpu.memory_space<vmem>>, vector<64x80xf32>
    %cst_194 = arith.constant dense<0.000000e+00> : vector<10x80xf32>
    %202 = tpu.matmul %200, %201, %cst_194 {dimension_numbers = #tpu.dot_dimension_numbers<[1], [0], [0], [1], [0, 0, 1, 1], [], []>} : vector<10x64xf32>, vector<64x80xf32>, vector<10x80xf32> -> vector<10x80xf32>
    %c1_195 = arith.constant 1 : index
    %c0_196 = arith.constant 0 : index
    %c0_197 = arith.constant 0 : index
    %203 = vector.load %arg13[%c1_195, %c0_196, %c0_197] : memref<2x10x80xf32, #tpu.memory_space<vmem>>, vector<1x10x80xf32>
    %204 = vector.shape_cast %203 : vector<1x10x80xf32> to vector<10x80xf32>
    %205 = vector.shape_cast %202 : vector<10x80xf32> to vector<1x10x80xf32>
    tpu.vector_store %arg13[%c1_195, %c0_196, %c0_197], %205 {strides = array<i32>} : memref<2x10x80xf32, #tpu.memory_space<vmem>>, vector<1x10x80xf32>,
    return
  }
}

module attributes {stable_mosaic.version = 11 : i64} {
  func.func @_conv_bn_relu_pool_kernel(%arg0: memref<2x10x80xf32, #tpu.memory_space<vmem>>, %arg1: memref<9x64x128xf32, #tpu.memory_space<vmem>>, %arg2: memref<1x128xf32, #tpu.memory_space<vmem>>, %arg3: memref<1x16xf32, #tpu.memory_space<vmem>>, %arg4: memref<1x16xf32, #tpu.memory_space<vmem>>, %arg5: memref<128x16xf32, #tpu.memory_space<vmem>>, %arg6: memref<16x128xf32, #tpu.memory_space<vmem>>, %arg7: memref<128x64xf32, #tpu.memory_space<vmem>>, %arg8: memref<128x64xf32, #tpu.memory_space<vmem>>, %arg9: memref<4x8xf32, #tpu.memory_space<vmem>>, %arg10: memref<4x8xf32, #tpu.memory_space<vmem>>, %arg11: memref<6x4xf32, #tpu.memory_space<vmem>>, %arg12: memref<64x96xf32, #tpu.memory_space<vmem>>, %arg13: memref<2x6x96xf32, #tpu.memory_space<vmem>>) attributes {dimension_semantics = [], scalar_prefetch = 0 : i64, scratch_operands = 0 : i64, tpu.core_type = #tpu.core_type<tc>} {
    %cst = arith.constant 0.000000e+00 : f32
    %0 = vector.broadcast %cst : f32 to vector<1x16xf32>
    %cst_0 = arith.constant 0.000000e+00 : f32
    %1 = vector.broadcast %cst_0 : f32 to vector<1x16xf32>
    %cst_1 = arith.constant 0.000000e+00 : f32
    %2 = vector.broadcast %cst_1 : f32 to vector<8x128xf32>
    %c0 = arith.constant 0 : index
    %c0_2 = arith.constant 0 : index
    %c0_3 = arith.constant 0 : index
    %3 = vector.load %arg0[%c0, %c0_2, %c0_3] : memref<2x10x80xf32, #tpu.memory_space<vmem>>, vector<1x8x64xf32>
    %4 = vector.shape_cast %3 : vector<1x8x64xf32> to vector<8x64xf32>
    %c0_4 = arith.constant 0 : index
    %c0_5 = arith.constant 0 : index
    %c0_6 = arith.constant 0 : index
    %5 = vector.load %arg1[%c0_4, %c0_5, %c0_6] : memref<9x64x128xf32, #tpu.memory_space<vmem>>, vector<1x64x128xf32>
    %6 = vector.shape_cast %5 : vector<1x64x128xf32> to vector<64x128xf32>
    %cst_7 = arith.constant dense<0.000000e+00> : vector<8x128xf32>
    %7 = tpu.matmul %4, %6, %cst_7 {dimension_numbers = #tpu.dot_dimension_numbers<[1], [0], [0], [1], [0, 0, 1, 1], [], []>} : vector<8x64xf32>, vector<64x128xf32>, vector<8x128xf32> -> vector<8x128xf32>
    %8 = arith.addf %2, %7 : vector<8x128xf32>
    %c0_8 = arith.constant 0 : index
    %c0_9 = arith.constant 0 : index
    %c8 = arith.constant 8 : index
    %9 = vector.load %arg0[%c0_8, %c0_9, %c8] : memref<2x10x80xf32, #tpu.memory_space<vmem>>, vector<1x8x64xf32>
    %10 = vector.shape_cast %9 : vector<1x8x64xf32> to vector<8x64xf32>
    %c1 = arith.constant 1 : index
    %c0_10 = arith.constant 0 : index
    %c0_11 = arith.constant 0 : index
    %11 = vector.load %arg1[%c1, %c0_10, %c0_11] : memref<9x64x128xf32, #tpu.memory_space<vmem>>, vector<1x64x128xf32>
    %12 = vector.shape_cast %11 : vector<1x64x128xf32> to vector<64x128xf32>
    %cst_12 = arith.constant dense<0.000000e+00> : vector<8x128xf32>
    %13 = tpu.matmul %10, %12, %cst_12 {dimension_numbers = #tpu.dot_dimension_numbers<[1], [0], [0], [1], [0, 0, 1, 1], [], []>} : vector<8x64xf32>, vector<64x128xf32>, vector<8x128xf32> -> vector<8x128xf32>
    %14 = arith.addf %8, %13 : vector<8x128xf32>
    %c0_13 = arith.constant 0 : index
    %c0_14 = arith.constant 0 : index
    %c16 = arith.constant 16 : index
    %15 = vector.load %arg0[%c0_13, %c0_14, %c16] : memref<2x10x80xf32, #tpu.memory_space<vmem>>, vector<1x8x64xf32>
    %16 = vector.shape_cast %15 : vector<1x8x64xf32> to vector<8x64xf32>
    %c2 = arith.constant 2 : index
    %c0_15 = arith.constant 0 : index
    %c0_16 = arith.constant 0 : index
    %17 = vector.load %arg1[%c2, %c0_15, %c0_16] : memref<9x64x128xf32, #tpu.memory_space<vmem>>, vector<1x64x128xf32>
    %18 = vector.shape_cast %17 : vector<1x64x128xf32> to vector<64x128xf32>
    %cst_17 = arith.constant dense<0.000000e+00> : vector<8x128xf32>
    %19 = tpu.matmul %16, %18, %cst_17 {dimension_numbers = #tpu.dot_dimension_numbers<[1], [0], [0], [1], [0, 0, 1, 1], [], []>} : vector<8x64xf32>, vector<64x128xf32>, vector<8x128xf32> -> vector<8x128xf32>
    %20 = arith.addf %14, %19 : vector<8x128xf32>
    %c0_18 = arith.constant 0 : index
    %c1_19 = arith.constant 1 : index
    %c0_20 = arith.constant 0 : index
    %21 = vector.load %arg0[%c0_18, %c1_19, %c0_20] : memref<2x10x80xf32, #tpu.memory_space<vmem>>, vector<1x8x64xf32>
    %22 = vector.shape_cast %21 : vector<1x8x64xf32> to vector<8x64xf32>
    %c3 = arith.constant 3 : index
    %c0_21 = arith.constant 0 : index
    %c0_22 = arith.constant 0 : index
    %23 = vector.load %arg1[%c3, %c0_21, %c0_22] : memref<9x64x128xf32, #tpu.memory_space<vmem>>, vector<1x64x128xf32>
    %24 = vector.shape_cast %23 : vector<1x64x128xf32> to vector<64x128xf32>
    %cst_23 = arith.constant dense<0.000000e+00> : vector<8x128xf32>
    %25 = tpu.matmul %22, %24, %cst_23 {dimension_numbers = #tpu.dot_dimension_numbers<[1], [0], [0], [1], [0, 0, 1, 1], [], []>} : vector<8x64xf32>, vector<64x128xf32>, vector<8x128xf32> -> vector<8x128xf32>
    %26 = arith.addf %20, %25 : vector<8x128xf32>
    %c0_24 = arith.constant 0 : index
    %c1_25 = arith.constant 1 : index
    %c8_26 = arith.constant 8 : index
    %27 = vector.load %arg0[%c0_24, %c1_25, %c8_26] : memref<2x10x80xf32, #tpu.memory_space<vmem>>, vector<1x8x64xf32>
    %28 = vector.shape_cast %27 : vector<1x8x64xf32> to vector<8x64xf32>
    %c4 = arith.constant 4 : index
    %c0_27 = arith.constant 0 : index
    %c0_28 = arith.constant 0 : index
    %29 = vector.load %arg1[%c4, %c0_27, %c0_28] : memref<9x64x128xf32, #tpu.memory_space<vmem>>, vector<1x64x128xf32>
    %30 = vector.shape_cast %29 : vector<1x64x128xf32> to vector<64x128xf32>
    %cst_29 = arith.constant dense<0.000000e+00> : vector<8x128xf32>
    %31 = tpu.matmul %28, %30, %cst_29 {dimension_numbers = #tpu.dot_dimension_numbers<[1], [0], [0], [1], [0, 0, 1, 1], [], []>} : vector<8x64xf32>, vector<64x128xf32>, vector<8x128xf32> -> vector<8x128xf32>
    %32 = arith.addf %26, %31 : vector<8x128xf32>
    %c0_30 = arith.constant 0 : index
    %c1_31 = arith.constant 1 : index
    %c16_32 = arith.constant 16 : index
    %33 = vector.load %arg0[%c0_30, %c1_31, %c16_32] : memref<2x10x80xf32, #tpu.memory_space<vmem>>, vector<1x8x64xf32>
    %34 = vector.shape_cast %33 : vector<1x8x64xf32> to vector<8x64xf32>
    %c5 = arith.constant 5 : index
    %c0_33 = arith.constant 0 : index
    %c0_34 = arith.constant 0 : index
    %35 = vector.load %arg1[%c5, %c0_33, %c0_34] : memref<9x64x128xf32, #tpu.memory_space<vmem>>, vector<1x64x128xf32>
    %36 = vector.shape_cast %35 : vector<1x64x128xf32> to vector<64x128xf32>
    %cst_35 = arith.constant dense<0.000000e+00> : vector<8x128xf32>
    %37 = tpu.matmul %34, %36, %cst_35 {dimension_numbers = #tpu.dot_dimension_numbers<[1], [0], [0], [1], [0, 0, 1, 1], [], []>} : vector<8x64xf32>, vector<64x128xf32>, vector<8x128xf32> -> vector<8x128xf32>
    %38 = arith.addf %32, %37 : vector<8x128xf32>
    %c0_36 = arith.constant 0 : index
    %c2_37 = arith.constant 2 : index
    %c0_38 = arith.constant 0 : index
    %39 = vector.load %arg0[%c0_36, %c2_37, %c0_38] : memref<2x10x80xf32, #tpu.memory_space<vmem>>, vector<1x8x64xf32>
    %40 = vector.shape_cast %39 : vector<1x8x64xf32> to vector<8x64xf32>
    %c6 = arith.constant 6 : index
    %c0_39 = arith.constant 0 : index
    %c0_40 = arith.constant 0 : index
    %41 = vector.load %arg1[%c6, %c0_39, %c0_40] : memref<9x64x128xf32, #tpu.memory_space<vmem>>, vector<1x64x128xf32>
    %42 = vector.shape_cast %41 : vector<1x64x128xf32> to vector<64x128xf32>
    %cst_41 = arith.constant dense<0.000000e+00> : vector<8x128xf32>
    %43 = tpu.matmul %40, %42, %cst_41 {dimension_numbers = #tpu.dot_dimension_numbers<[1], [0], [0], [1], [0, 0, 1, 1], [], []>} : vector<8x64xf32>, vector<64x128xf32>, vector<8x128xf32> -> vector<8x128xf32>
    %44 = arith.addf %38, %43 : vector<8x128xf32>
    %c0_42 = arith.constant 0 : index
    %c2_43 = arith.constant 2 : index
    %c8_44 = arith.constant 8 : index
    %45 = vector.load %arg0[%c0_42, %c2_43, %c8_44] : memref<2x10x80xf32, #tpu.memory_space<vmem>>, vector<1x8x64xf32>
    %46 = vector.shape_cast %45 : vector<1x8x64xf32> to vector<8x64xf32>
    %c7 = arith.constant 7 : index
    %c0_45 = arith.constant 0 : index
    %c0_46 = arith.constant 0 : index
    %47 = vector.load %arg1[%c7, %c0_45, %c0_46] : memref<9x64x128xf32, #tpu.memory_space<vmem>>, vector<1x64x128xf32>
    %48 = vector.shape_cast %47 : vector<1x64x128xf32> to vector<64x128xf32>
    %cst_47 = arith.constant dense<0.000000e+00> : vector<8x128xf32>
    %49 = tpu.matmul %46, %48, %cst_47 {dimension_numbers = #tpu.dot_dimension_numbers<[1], [0], [0], [1], [0, 0, 1, 1], [], []>} : vector<8x64xf32>, vector<64x128xf32>, vector<8x128xf32> -> vector<8x128xf32>
    %50 = arith.addf %44, %49 : vector<8x128xf32>
    %c0_48 = arith.constant 0 : index
    %c2_49 = arith.constant 2 : index
    %c16_50 = arith.constant 16 : index
    %51 = vector.load %arg0[%c0_48, %c2_49, %c16_50] : memref<2x10x80xf32, #tpu.memory_space<vmem>>, vector<1x8x64xf32>
    %52 = vector.shape_cast %51 : vector<1x8x64xf32> to vector<8x64xf32>
    %c8_51 = arith.constant 8 : index
    %c0_52 = arith.constant 0 : index
    %c0_53 = arith.constant 0 : index
    %53 = vector.load %arg1[%c8_51, %c0_52, %c0_53] : memref<9x64x128xf32, #tpu.memory_space<vmem>>, vector<1x64x128xf32>
    %54 = vector.shape_cast %53 : vector<1x64x128xf32> to vector<64x128xf32>
    %cst_54 = arith.constant dense<0.000000e+00> : vector<8x128xf32>
    %55 = tpu.matmul %52, %54, %cst_54 {dimension_numbers = #tpu.dot_dimension_numbers<[1], [0], [0], [1], [0, 0, 1, 1], [], []>} : vector<8x64xf32>, vector<64x128xf32>, vector<8x128xf32> -> vector<8x128xf32>
    %56 = arith.addf %50, %55 : vector<8x128xf32>
    %c0_55 = arith.constant 0 : index
    %c0_56 = arith.constant 0 : index
    %57 = vector.load %arg2[%c0_55, %c0_56] : memref<1x128xf32, #tpu.memory_space<vmem>>, vector<1x128xf32>
    %58 = vector.broadcast %57 : vector<1x128xf32> to vector<8x128xf32>
    %59 = arith.addf %56, %58 : vector<8x128xf32>
    %cst_57 = arith.constant dense<0.000000e+00> : vector<128xf32>
    %60 = vector.multi_reduction <add>, %59, %cst_57 [0] : vector<8x128xf32> to vector<128xf32>
    %61 = vector.shape_cast %60 : vector<128xf32> to vector<1x128xf32>
    %c0_58 = arith.constant 0 : index
    %c0_59 = arith.constant 0 : index
    %62 = vector.load %arg5[%c0_58, %c0_59] : memref<128x16xf32, #tpu.memory_space<vmem>>, vector<128x16xf32>
    %cst_60 = arith.constant dense<0.000000e+00> : vector<1x16xf32>
    %63 = tpu.matmul %61, %62, %cst_60 {dimension_numbers = #tpu.dot_dimension_numbers<[1], [0], [0], [1], [0, 0, 1, 1], [], []>} : vector<1x128xf32>, vector<128x16xf32>, vector<1x16xf32> -> vector<1x16xf32>
    %64 = arith.addf %0, %63 : vector<1x16xf32>
    %65 = arith.mulf %59, %59 : vector<8x128xf32>
    %cst_61 = arith.constant dense<0.000000e+00> : vector<128xf32>
    %66 = vector.multi_reduction <add>, %65, %cst_61 [0] : vector<8x128xf32> to vector<128xf32>
    %67 = vector.shape_cast %66 : vector<128xf32> to vector<1x128xf32>
    %c0_62 = arith.constant 0 : index
    %c0_63 = arith.constant 0 : index
    %68 = vector.load %arg5[%c0_62, %c0_63] : memref<128x16xf32, #tpu.memory_space<vmem>>, vector<128x16xf32>
    %cst_64 = arith.constant dense<0.000000e+00> : vector<1x16xf32>
    %69 = tpu.matmul %67, %68, %cst_64 {dimension_numbers = #tpu.dot_dimension_numbers<[1], [0], [0], [1], [0, 0, 1, 1], [], []>} : vector<1x128xf32>, vector<128x16xf32>, vector<1x16xf32> -> vector<1x16xf32>
    %70 = arith.addf %1, %69 : vector<1x16xf32>
    %cst_65 = arith.constant 0.000000e+00 : f32
    %71 = vector.broadcast %cst_65 : f32 to vector<8x128xf32>
    %c1_66 = arith.constant 1 : index
    %c0_67 = arith.constant 0 : index
    %c0_68 = arith.constant 0 : index
    %72 = vector.load %arg0[%c1_66, %c0_67, %c0_68] : memref<2x10x80xf32, #tpu.memory_space<vmem>>, vector<1x8x64xf32>
    %73 = vector.shape_cast %72 : vector<1x8x64xf32> to vector<8x64xf32>
    %c0_69 = arith.constant 0 : index
    %c0_70 = arith.constant 0 : index
    %c0_71 = arith.constant 0 : index
    %74 = vector.load %arg1[%c0_69, %c0_70, %c0_71] : memref<9x64x128xf32, #tpu.memory_space<vmem>>, vector<1x64x128xf32>
    %75 = vector.shape_cast %74 : vector<1x64x128xf32> to vector<64x128xf32>
    %cst_72 = arith.constant dense<0.000000e+00> : vector<8x128xf32>
    %76 = tpu.matmul %73, %75, %cst_72 {dimension_numbers = #tpu.dot_dimension_numbers<[1], [0], [0], [1], [0, 0, 1, 1], [], []>} : vector<8x64xf32>, vector<64x128xf32>, vector<8x128xf32> -> vector<8x128xf32>
    %77 = arith.addf %71, %76 : vector<8x128xf32>
    %c1_73 = arith.constant 1 : index
    %c0_74 = arith.constant 0 : index
    %c8_75 = arith.constant 8 : index
    %78 = vector.load %arg0[%c1_73, %c0_74, %c8_75] : memref<2x10x80xf32, #tpu.memory_space<vmem>>, vector<1x8x64xf32>
    %79 = vector.shape_cast %78 : vector<1x8x64xf32> to vector<8x64xf32>
    %c1_76 = arith.constant 1 : index
    %c0_77 = arith.constant 0 : index
    %c0_78 = arith.constant 0 : index
    %80 = vector.load %arg1[%c1_76, %c0_77, %c0_78] : memref<9x64x128xf32, #tpu.memory_space<vmem>>, vector<1x64x128xf32>
    %81 = vector.shape_cast %80 : vector<1x64x128xf32> to vector<64x128xf32>
    %cst_79 = arith.constant dense<0.000000e+00> : vector<8x128xf32>
    %82 = tpu.matmul %79, %81, %cst_79 {dimension_numbers = #tpu.dot_dimension_numbers<[1], [0], [0], [1], [0, 0, 1, 1], [], []>} : vector<8x64xf32>, vector<64x128xf32>, vector<8x128xf32> -> vector<8x128xf32>
    %83 = arith.addf %77, %82 : vector<8x128xf32>
    %c1_80 = arith.constant 1 : index
    %c0_81 = arith.constant 0 : index
    %c16_82 = arith.constant 16 : index
    %84 = vector.load %arg0[%c1_80, %c0_81, %c16_82] : memref<2x10x80xf32, #tpu.memory_space<vmem>>, vector<1x8x64xf32>
    %85 = vector.shape_cast %84 : vector<1x8x64xf32> to vector<8x64xf32>
    %c2_83 = arith.constant 2 : index
    %c0_84 = arith.constant 0 : index
    %c0_85 = arith.constant 0 : index
    %86 = vector.load %arg1[%c2_83, %c0_84, %c0_85] : memref<9x64x128xf32, #tpu.memory_space<vmem>>, vector<1x64x128xf32>
    %87 = vector.shape_cast %86 : vector<1x64x128xf32> to vector<64x128xf32>
    %cst_86 = arith.constant dense<0.000000e+00> : vector<8x128xf32>
    %88 = tpu.matmul %85, %87, %cst_86 {dimension_numbers = #tpu.dot_dimension_numbers<[1], [0], [0], [1], [0, 0, 1, 1], [], []>} : vector<8x64xf32>, vector<64x128xf32>, vector<8x128xf32> -> vector<8x128xf32>
    %89 = arith.addf %83, %88 : vector<8x128xf32>
    %c1_87 = arith.constant 1 : index
    %c1_88 = arith.constant 1 : index
    %c0_89 = arith.constant 0 : index
    %90 = vector.load %arg0[%c1_87, %c1_88, %c0_89] : memref<2x10x80xf32, #tpu.memory_space<vmem>>, vector<1x8x64xf32>
    %91 = vector.shape_cast %90 : vector<1x8x64xf32> to vector<8x64xf32>
    %c3_90 = arith.constant 3 : index
    %c0_91 = arith.constant 0 : index
    %c0_92 = arith.constant 0 : index
    %92 = vector.load %arg1[%c3_90, %c0_91, %c0_92] : memref<9x64x128xf32, #tpu.memory_space<vmem>>, vector<1x64x128xf32>
    %93 = vector.shape_cast %92 : vector<1x64x128xf32> to vector<64x128xf32>
    %cst_93 = arith.constant dense<0.000000e+00> : vector<8x128xf32>
    %94 = tpu.matmul %91, %93, %cst_93 {dimension_numbers = #tpu.dot_dimension_numbers<[1], [0], [0], [1], [0, 0, 1, 1], [], []>} : vector<8x64xf32>, vector<64x128xf32>, vector<8x128xf32> -> vector<8x128xf32>
    %95 = arith.addf %89, %94 : vector<8x128xf32>
    %c1_94 = arith.constant 1 : index
    %c1_95 = arith.constant 1 : index
    %c8_96 = arith.constant 8 : index
    %96 = vector.load %arg0[%c1_94, %c1_95, %c8_96] : memref<2x10x80xf32, #tpu.memory_space<vmem>>, vector<1x8x64xf32>
    %97 = vector.shape_cast %96 : vector<1x8x64xf32> to vector<8x64xf32>
    %c4_97 = arith.constant 4 : index
    %c0_98 = arith.constant 0 : index
    %c0_99 = arith.constant 0 : index
    %98 = vector.load %arg1[%c4_97, %c0_98, %c0_99] : memref<9x64x128xf32, #tpu.memory_space<vmem>>, vector<1x64x128xf32>
    %99 = vector.shape_cast %98 : vector<1x64x128xf32> to vector<64x128xf32>
    %cst_100 = arith.constant dense<0.000000e+00> : vector<8x128xf32>
    %100 = tpu.matmul %97, %99, %cst_100 {dimension_numbers = #tpu.dot_dimension_numbers<[1], [0], [0], [1], [0, 0, 1, 1], [], []>} : vector<8x64xf32>, vector<64x128xf32>, vector<8x128xf32> -> vector<8x128xf32>
    %101 = arith.addf %95, %100 : vector<8x128xf32>
    %c1_101 = arith.constant 1 : index
    %c1_102 = arith.constant 1 : index
    %c16_103 = arith.constant 16 : index
    %102 = vector.load %arg0[%c1_101, %c1_102, %c16_103] : memref<2x10x80xf32, #tpu.memory_space<vmem>>, vector<1x8x64xf32>
    %103 = vector.shape_cast %102 : vector<1x8x64xf32> to vector<8x64xf32>
    %c5_104 = arith.constant 5 : index
    %c0_105 = arith.constant 0 : index
    %c0_106 = arith.constant 0 : index
    %104 = vector.load %arg1[%c5_104, %c0_105, %c0_106] : memref<9x64x128xf32, #tpu.memory_space<vmem>>, vector<1x64x128xf32>
    %105 = vector.shape_cast %104 : vector<1x64x128xf32> to vector<64x128xf32>
    %cst_107 = arith.constant dense<0.000000e+00> : vector<8x128xf32>
    %106 = tpu.matmul %103, %105, %cst_107 {dimension_numbers = #tpu.dot_dimension_numbers<[1], [0], [0], [1], [0, 0, 1, 1], [], []>} : vector<8x64xf32>, vector<64x128xf32>, vector<8x128xf32> -> vector<8x128xf32>
    %107 = arith.addf %101, %106 : vector<8x128xf32>
    %c1_108 = arith.constant 1 : index
    %c2_109 = arith.constant 2 : index
    %c0_110 = arith.constant 0 : index
    %108 = vector.load %arg0[%c1_108, %c2_109, %c0_110] : memref<2x10x80xf32, #tpu.memory_space<vmem>>, vector<1x8x64xf32>
    %109 = vector.shape_cast %108 : vector<1x8x64xf32> to vector<8x64xf32>
    %c6_111 = arith.constant 6 : index
    %c0_112 = arith.constant 0 : index
    %c0_113 = arith.constant 0 : index
    %110 = vector.load %arg1[%c6_111, %c0_112, %c0_113] : memref<9x64x128xf32, #tpu.memory_space<vmem>>, vector<1x64x128xf32>
    %111 = vector.shape_cast %110 : vector<1x64x128xf32> to vector<64x128xf32>
    %cst_114 = arith.constant dense<0.000000e+00> : vector<8x128xf32>
    %112 = tpu.matmul %109, %111, %cst_114 {dimension_numbers = #tpu.dot_dimension_numbers<[1], [0], [0], [1], [0, 0, 1, 1], [], []>} : vector<8x64xf32>, vector<64x128xf32>, vector<8x128xf32> -> vector<8x128xf32>
    %113 = arith.addf %107, %112 : vector<8x128xf32>
    %c1_115 = arith.constant 1 : index
    %c2_116 = arith.constant 2 : index
    %c8_117 = arith.constant 8 : index
    %114 = vector.load %arg0[%c1_115, %c2_116, %c8_117] : memref<2x10x80xf32, #tpu.memory_space<vmem>>, vector<1x8x64xf32>
    %115 = vector.shape_cast %114 : vector<1x8x64xf32> to vector<8x64xf32>
    %c7_118 = arith.constant 7 : index
    %c0_119 = arith.constant 0 : index
    %c0_120 = arith.constant 0 : index
    %116 = vector.load %arg1[%c7_118, %c0_119, %c0_120] : memref<9x64x128xf32, #tpu.memory_space<vmem>>, vector<1x64x128xf32>
    %117 = vector.shape_cast %116 : vector<1x64x128xf32> to vector<64x128xf32>
    %cst_121 = arith.constant dense<0.000000e+00> : vector<8x128xf32>
    %118 = tpu.matmul %115, %117, %cst_121 {dimension_numbers = #tpu.dot_dimension_numbers<[1], [0], [0], [1], [0, 0, 1, 1], [], []>} : vector<8x64xf32>, vector<64x128xf32>, vector<8x128xf32> -> vector<8x128xf32>
    %119 = arith.addf %113, %118 : vector<8x128xf32>
    %c1_122 = arith.constant 1 : index
    %c2_123 = arith.constant 2 : index
    %c16_124 = arith.constant 16 : index
    %120 = vector.load %arg0[%c1_122, %c2_123, %c16_124] : memref<2x10x80xf32, #tpu.memory_space<vmem>>, vector<1x8x64xf32>
    %121 = vector.shape_cast %120 : vector<1x8x64xf32> to vector<8x64xf32>
    %c8_125 = arith.constant 8 : index
    %c0_126 = arith.constant 0 : index
    %c0_127 = arith.constant 0 : index
    %122 = vector.load %arg1[%c8_125, %c0_126, %c0_127] : memref<9x64x128xf32, #tpu.memory_space<vmem>>, vector<1x64x128xf32>
    %123 = vector.shape_cast %122 : vector<1x64x128xf32> to vector<64x128xf32>
    %cst_128 = arith.constant dense<0.000000e+00> : vector<8x128xf32>
    %124 = tpu.matmul %121, %123, %cst_128 {dimension_numbers = #tpu.dot_dimension_numbers<[1], [0], [0], [1], [0, 0, 1, 1], [], []>} : vector<8x64xf32>, vector<64x128xf32>, vector<8x128xf32> -> vector<8x128xf32>
    %125 = arith.addf %119, %124 : vector<8x128xf32>
    %c0_129 = arith.constant 0 : index
    %c0_130 = arith.constant 0 : index
    %126 = vector.load %arg2[%c0_129, %c0_130] : memref<1x128xf32, #tpu.memory_space<vmem>>, vector<1x128xf32>
    %127 = vector.broadcast %126 : vector<1x128xf32> to vector<8x128xf32>
    %128 = arith.addf %125, %127 : vector<8x128xf32>
    %cst_131 = arith.constant dense<0.000000e+00> : vector<128xf32>
    %129 = vector.multi_reduction <add>, %128, %cst_131 [0] : vector<8x128xf32> to vector<128xf32>
    %130 = vector.shape_cast %129 : vector<128xf32> to vector<1x128xf32>
    %c0_132 = arith.constant 0 : index
    %c0_133 = arith.constant 0 : index
    %131 = vector.load %arg5[%c0_132, %c0_133] : memref<128x16xf32, #tpu.memory_space<vmem>>, vector<128x16xf32>
    %cst_134 = arith.constant dense<0.000000e+00> : vector<1x16xf32>
    %132 = tpu.matmul %130, %131, %cst_134 {dimension_numbers = #tpu.dot_dimension_numbers<[1], [0], [0], [1], [0, 0, 1, 1], [], []>} : vector<1x128xf32>, vector<128x16xf32>, vector<1x16xf32> -> vector<1x16xf32>
    %133 = arith.addf %64, %132 : vector<1x16xf32>
    %134 = arith.mulf %128, %128 : vector<8x128xf32>
    %cst_135 = arith.constant dense<0.000000e+00> : vector<128xf32>
    %135 = vector.multi_reduction <add>, %134, %cst_135 [0] : vector<8x128xf32> to vector<128xf32>
    %136 = vector.shape_cast %135 : vector<128xf32> to vector<1x128xf32>
    %c0_136 = arith.constant 0 : index
    %c0_137 = arith.constant 0 : index
    %137 = vector.load %arg5[%c0_136, %c0_137] : memref<128x16xf32, #tpu.memory_space<vmem>>, vector<128x16xf32>
    %cst_138 = arith.constant dense<0.000000e+00> : vector<1x16xf32>
    %138 = tpu.matmul %136, %137, %cst_138 {dimension_numbers = #tpu.dot_dimension_numbers<[1], [0], [0], [1], [0, 0, 1, 1], [], []>} : vector<1x128xf32>, vector<128x16xf32>, vector<1x16xf32> -> vector<1x16xf32>
    %139 = arith.addf %70, %138 : vector<1x16xf32>
    %cst_139 = arith.constant 1.280000e+02 : f32
    %140 = vector.broadcast %cst_139 : f32 to vector<1x16xf32>
    %141 = arith.divf %133, %140 : vector<1x16xf32>
    %cst_140 = arith.constant 1.280000e+02 : f32
    %142 = vector.broadcast %cst_140 : f32 to vector<1x16xf32>
    %143 = arith.divf %139, %142 : vector<1x16xf32>
    %144 = arith.mulf %141, %141 : vector<1x16xf32>
    %145 = arith.subf %143, %144 : vector<1x16xf32>
    %cst_141 = arith.constant 0.000000e+00 : f32
    %146 = vector.broadcast %cst_141 : f32 to vector<1x16xf32>
    %147 = arith.maximumf %145, %146 : vector<1x16xf32>
    %c0_142 = arith.constant 0 : index
    %c0_143 = arith.constant 0 : index
    %148 = vector.load %arg3[%c0_142, %c0_143] : memref<1x16xf32, #tpu.memory_space<vmem>>, vector<1x16xf32>
    %cst_144 = arith.constant 9.99999974E-6 : f32
    %149 = vector.broadcast %cst_144 : f32 to vector<1x16xf32>
    %150 = arith.addf %147, %149 : vector<1x16xf32>
    %151 = math.rsqrt %150 : vector<1x16xf32>
    %152 = arith.mulf %148, %151 : vector<1x16xf32>
    %c0_145 = arith.constant 0 : index
    %c0_146 = arith.constant 0 : index
    %153 = vector.load %arg4[%c0_145, %c0_146] : memref<1x16xf32, #tpu.memory_space<vmem>>, vector<1x16xf32>
    %154 = arith.mulf %141, %152 : vector<1x16xf32>
    %155 = arith.subf %153, %154 : vector<1x16xf32>
    %c0_147 = arith.constant 0 : index
    %c0_148 = arith.constant 0 : index
    %156 = vector.load %arg6[%c0_147, %c0_148] : memref<16x128xf32, #tpu.memory_space<vmem>>, vector<16x128xf32>
    %cst_149 = arith.constant dense<0.000000e+00> : vector<1x128xf32>
    %157 = tpu.matmul %152, %156, %cst_149 {dimension_numbers = #tpu.dot_dimension_numbers<[1], [0], [0], [1], [0, 0, 1, 1], [], []>} : vector<1x16xf32>, vector<16x128xf32>, vector<1x128xf32> -> vector<1x128xf32>
    %c0_150 = arith.constant 0 : index
    %c0_151 = arith.constant 0 : index
    %158 = vector.load %arg6[%c0_150, %c0_151] : memref<16x128xf32, #tpu.memory_space<vmem>>, vector<16x128xf32>
    %cst_152 = arith.constant dense<0.000000e+00> : vector<1x128xf32>
    %159 = tpu.matmul %155, %158, %cst_152 {dimension_numbers = #tpu.dot_dimension_numbers<[1], [0], [0], [1], [0, 0, 1, 1], [], []>} : vector<1x16xf32>, vector<16x128xf32>, vector<1x128xf32> -> vector<1x128xf32>
    %160 = vector.broadcast %157 : vector<1x128xf32> to vector<8x128xf32>
    %161 = arith.mulf %59, %160 : vector<8x128xf32>
    %162 = vector.broadcast %159 : vector<1x128xf32> to vector<8x128xf32>
    %163 = arith.addf %161, %162 : vector<8x128xf32>
    %cst_153 = arith.constant 0.000000e+00 : f32
    %164 = vector.broadcast %cst_153 : f32 to vector<8x128xf32>
    %165 = arith.maximumf %163, %164 : vector<8x128xf32>
    %c0_154 = arith.constant 0 : index
    %c0_155 = arith.constant 0 : index
    %166 = vector.load %arg7[%c0_154, %c0_155] : memref<128x64xf32, #tpu.memory_space<vmem>>, vector<128x64xf32>
    %cst_156 = arith.constant dense<0.000000e+00> : vector<8x64xf32>
    %167 = tpu.matmul %165, %166, %cst_156 {dimension_numbers = #tpu.dot_dimension_numbers<[1], [0], [0], [1], [0, 0, 1, 1], [], []>} : vector<8x128xf32>, vector<128x64xf32>, vector<8x64xf32> -> vector<8x64xf32>
    %c0_157 = arith.constant 0 : index
    %c0_158 = arith.constant 0 : index
    %168 = vector.load %arg8[%c0_157, %c0_158] : memref<128x64xf32, #tpu.memory_space<vmem>>, vector<128x64xf32>
    %cst_159 = arith.constant dense<0.000000e+00> : vector<8x64xf32>
    %169 = tpu.matmul %165, %168, %cst_159 {dimension_numbers = #tpu.dot_dimension_numbers<[1], [0], [0], [1], [0, 0, 1, 1], [], []>} : vector<8x128xf32>, vector<128x64xf32>, vector<8x64xf32> -> vector<8x64xf32>
    %170 = arith.maximumf %167, %169 : vector<8x64xf32>
    %c0_160 = arith.constant 0 : index
    %c0_161 = arith.constant 0 : index
    %171 = vector.load %arg9[%c0_160, %c0_161] : memref<4x8xf32, #tpu.memory_space<vmem>>, vector<4x8xf32>
    %cst_162 = arith.constant dense<0.000000e+00> : vector<4x64xf32>
    %172 = tpu.matmul %171, %170, %cst_162 {dimension_numbers = #tpu.dot_dimension_numbers<[1], [0], [0], [1], [0, 0, 1, 1], [], []>} : vector<4x8xf32>, vector<8x64xf32>, vector<4x64xf32> -> vector<4x64xf32>
    %c0_163 = arith.constant 0 : index
    %c0_164 = arith.constant 0 : index
    %173 = vector.load %arg10[%c0_163, %c0_164] : memref<4x8xf32, #tpu.memory_space<vmem>>, vector<4x8xf32>
    %cst_165 = arith.constant dense<0.000000e+00> : vector<4x64xf32>
    %174 = tpu.matmul %173, %170, %cst_165 {dimension_numbers = #tpu.dot_dimension_numbers<[1], [0], [0], [1], [0, 0, 1, 1], [], []>} : vector<4x8xf32>, vector<8x64xf32>, vector<4x64xf32> -> vector<4x64xf32>
    %175 = arith.maximumf %172, %174 : vector<4x64xf32>
    %c0_166 = arith.constant 0 : index
    %c0_167 = arith.constant 0 : index
    %176 = vector.load %arg11[%c0_166, %c0_167] : memref<6x4xf32, #tpu.memory_space<vmem>>, vector<6x4xf32>
    %cst_168 = arith.constant dense<0.000000e+00> : vector<6x64xf32>
    %177 = tpu.matmul %176, %175, %cst_168 {dimension_numbers = #tpu.dot_dimension_numbers<[1], [0], [0], [1], [0, 0, 1, 1], [], []>} : vector<6x4xf32>, vector<4x64xf32>, vector<6x64xf32> -> vector<6x64xf32>
    %c0_169 = arith.constant 0 : index
    %c0_170 = arith.constant 0 : index
    %178 = vector.load %arg12[%c0_169, %c0_170] : memref<64x96xf32, #tpu.memory_space<vmem>>, vector<64x96xf32>
    %cst_171 = arith.constant dense<0.000000e+00> : vector<6x96xf32>
    %179 = tpu.matmul %177, %178, %cst_171 {dimension_numbers = #tpu.dot_dimension_numbers<[1], [0], [0], [1], [0, 0, 1, 1], [], []>} : vector<6x64xf32>, vector<64x96xf32>, vector<6x96xf32> -> vector<6x96xf32>
    %c0_172 = arith.constant 0 : index
    %c0_173 = arith.constant 0 : index
    %c0_174 = arith.constant 0 : index
    %180 = vector.load %arg13[%c0_172, %c0_173, %c0_174] : memref<2x6x96xf32, #tpu.memory_space<vmem>>, vector<1x6x96xf32>
    %181 = vector.shape_cast %180 : vector<1x6x96xf32> to vector<6x96xf32>
    %182 = vector.shape_cast %179 : vector<6x96xf32> to vector<1x6x96xf32>
    tpu.vector_store %arg13[%c0_172, %c0_173, %c0_174], %182 {strides = array<i32>} : memref<2x6x96xf32, #tpu.memory_space<vmem>>, vector<1x6x96xf32>,
    %183 = vector.broadcast %157 : vector<1x128xf32> to vector<8x128xf32>
    %184 = arith.mulf %128, %183 : vector<8x128xf32>
    %185 = vector.broadcast %159 : vector<1x128xf32> to vector<8x128xf32>
    %186 = arith.addf %184, %185 : vector<8x128xf32>
    %cst_175 = arith.constant 0.000000e+00 : f32
    %187 = vector.broadcast %cst_175 : f32 to vector<8x128xf32>
    %188 = arith.maximumf %186, %187 : vector<8x128xf32>
    %c0_176 = arith.constant 0 : index
    %c0_177 = arith.constant 0 : index
    %189 = vector.load %arg7[%c0_176, %c0_177] : memref<128x64xf32, #tpu.memory_space<vmem>>, vector<128x64xf32>
    %cst_178 = arith.constant dense<0.000000e+00> : vector<8x64xf32>
    %190 = tpu.matmul %188, %189, %cst_178 {dimension_numbers = #tpu.dot_dimension_numbers<[1], [0], [0], [1], [0, 0, 1, 1], [], []>} : vector<8x128xf32>, vector<128x64xf32>, vector<8x64xf32> -> vector<8x64xf32>
    %c0_179 = arith.constant 0 : index
    %c0_180 = arith.constant 0 : index
    %191 = vector.load %arg8[%c0_179, %c0_180] : memref<128x64xf32, #tpu.memory_space<vmem>>, vector<128x64xf32>
    %cst_181 = arith.constant dense<0.000000e+00> : vector<8x64xf32>
    %192 = tpu.matmul %188, %191, %cst_181 {dimension_numbers = #tpu.dot_dimension_numbers<[1], [0], [0], [1], [0, 0, 1, 1], [], []>} : vector<8x128xf32>, vector<128x64xf32>, vector<8x64xf32> -> vector<8x64xf32>
    %193 = arith.maximumf %190, %192 : vector<8x64xf32>
    %c0_182 = arith.constant 0 : index
    %c0_183 = arith.constant 0 : index
    %194 = vector.load %arg9[%c0_182, %c0_183] : memref<4x8xf32, #tpu.memory_space<vmem>>, vector<4x8xf32>
    %cst_184 = arith.constant dense<0.000000e+00> : vector<4x64xf32>
    %195 = tpu.matmul %194, %193, %cst_184 {dimension_numbers = #tpu.dot_dimension_numbers<[1], [0], [0], [1], [0, 0, 1, 1], [], []>} : vector<4x8xf32>, vector<8x64xf32>, vector<4x64xf32> -> vector<4x64xf32>
    %c0_185 = arith.constant 0 : index
    %c0_186 = arith.constant 0 : index
    %196 = vector.load %arg10[%c0_185, %c0_186] : memref<4x8xf32, #tpu.memory_space<vmem>>, vector<4x8xf32>
    %cst_187 = arith.constant dense<0.000000e+00> : vector<4x64xf32>
    %197 = tpu.matmul %196, %193, %cst_187 {dimension_numbers = #tpu.dot_dimension_numbers<[1], [0], [0], [1], [0, 0, 1, 1], [], []>} : vector<4x8xf32>, vector<8x64xf32>, vector<4x64xf32> -> vector<4x64xf32>
    %198 = arith.maximumf %195, %197 : vector<4x64xf32>
    %c0_188 = arith.constant 0 : index
    %c0_189 = arith.constant 0 : index
    %199 = vector.load %arg11[%c0_188, %c0_189] : memref<6x4xf32, #tpu.memory_space<vmem>>, vector<6x4xf32>
    %cst_190 = arith.constant dense<0.000000e+00> : vector<6x64xf32>
    %200 = tpu.matmul %199, %198, %cst_190 {dimension_numbers = #tpu.dot_dimension_numbers<[1], [0], [0], [1], [0, 0, 1, 1], [], []>} : vector<6x4xf32>, vector<4x64xf32>, vector<6x64xf32> -> vector<6x64xf32>
    %c0_191 = arith.constant 0 : index
    %c0_192 = arith.constant 0 : index
    %201 = vector.load %arg12[%c0_191, %c0_192] : memref<64x96xf32, #tpu.memory_space<vmem>>, vector<64x96xf32>
    %cst_193 = arith.constant dense<0.000000e+00> : vector<6x96xf32>
    %202 = tpu.matmul %200, %201, %cst_193 {dimension_numbers = #tpu.dot_dimension_numbers<[1], [0], [0], [1], [0, 0, 1, 1], [], []>} : vector<6x64xf32>, vector<64x96xf32>, vector<6x96xf32> -> vector<6x96xf32>
    %c1_194 = arith.constant 1 : index
    %c0_195 = arith.constant 0 : index
    %c0_196 = arith.constant 0 : index
    %203 = vector.load %arg13[%c1_194, %c0_195, %c0_196] : memref<2x6x96xf32, #tpu.memory_space<vmem>>, vector<1x6x96xf32>
    %204 = vector.shape_cast %203 : vector<1x6x96xf32> to vector<6x96xf32>
    %205 = vector.shape_cast %202 : vector<6x96xf32> to vector<1x6x96xf32>
    tpu.vector_store %arg13[%c1_194, %c0_195, %c0_196], %205 {strides = array<i32>} : memref<2x6x96xf32, #tpu.memory_space<vmem>>, vector<1x6x96xf32>,
    return
  }
}

module attributes {stable_mosaic.version = 11 : i64} {
  func.func @_conv_bn_relu_pool_kernel(%arg0: memref<2x6x96xf32, #tpu.memory_space<vmem>>, %arg1: memref<9x64x128xf32, #tpu.memory_space<vmem>>, %arg2: memref<1x128xf32, #tpu.memory_space<vmem>>, %arg3: memref<1x32xf32, #tpu.memory_space<vmem>>, %arg4: memref<1x32xf32, #tpu.memory_space<vmem>>, %arg5: memref<128x32xf32, #tpu.memory_space<vmem>>, %arg6: memref<32x128xf32, #tpu.memory_space<vmem>>, %arg7: memref<128x64xf32, #tpu.memory_space<vmem>>, %arg8: memref<128x64xf32, #tpu.memory_space<vmem>>, %arg9: memref<2x4xf32, #tpu.memory_space<vmem>>, %arg10: memref<2x4xf32, #tpu.memory_space<vmem>>, %arg11: memref<2x2xf32, #tpu.memory_space<vmem>>, %arg12: memref<64x64xf32, #tpu.memory_space<vmem>>, %arg13: memref<2x2x64xf32, #tpu.memory_space<vmem>>) attributes {dimension_semantics = [], scalar_prefetch = 0 : i64, scratch_operands = 0 : i64, tpu.core_type = #tpu.core_type<tc>} {
    %cst = arith.constant 0.000000e+00 : f32
    %0 = vector.broadcast %cst : f32 to vector<1x32xf32>
    %cst_0 = arith.constant 0.000000e+00 : f32
    %1 = vector.broadcast %cst_0 : f32 to vector<1x32xf32>
    %cst_1 = arith.constant 0.000000e+00 : f32
    %2 = vector.broadcast %cst_1 : f32 to vector<4x128xf32>
    %c0 = arith.constant 0 : index
    %c0_2 = arith.constant 0 : index
    %c0_3 = arith.constant 0 : index
    %3 = vector.load %arg0[%c0, %c0_2, %c0_3] : memref<2x6x96xf32, #tpu.memory_space<vmem>>, vector<1x4x64xf32>
    %4 = vector.shape_cast %3 : vector<1x4x64xf32> to vector<4x64xf32>
    %c0_4 = arith.constant 0 : index
    %c0_5 = arith.constant 0 : index
    %c0_6 = arith.constant 0 : index
    %5 = vector.load %arg1[%c0_4, %c0_5, %c0_6] : memref<9x64x128xf32, #tpu.memory_space<vmem>>, vector<1x64x128xf32>
    %6 = vector.shape_cast %5 : vector<1x64x128xf32> to vector<64x128xf32>
    %cst_7 = arith.constant dense<0.000000e+00> : vector<4x128xf32>
    %7 = tpu.matmul %4, %6, %cst_7 {dimension_numbers = #tpu.dot_dimension_numbers<[1], [0], [0], [1], [0, 0, 1, 1], [], []>} : vector<4x64xf32>, vector<64x128xf32>, vector<4x128xf32> -> vector<4x128xf32>
    %8 = arith.addf %2, %7 : vector<4x128xf32>
    %c0_8 = arith.constant 0 : index
    %c0_9 = arith.constant 0 : index
    %c16 = arith.constant 16 : index
    %9 = vector.load %arg0[%c0_8, %c0_9, %c16] : memref<2x6x96xf32, #tpu.memory_space<vmem>>, vector<1x4x64xf32>
    %10 = vector.shape_cast %9 : vector<1x4x64xf32> to vector<4x64xf32>
    %c1 = arith.constant 1 : index
    %c0_10 = arith.constant 0 : index
    %c0_11 = arith.constant 0 : index
    %11 = vector.load %arg1[%c1, %c0_10, %c0_11] : memref<9x64x128xf32, #tpu.memory_space<vmem>>, vector<1x64x128xf32>
    %12 = vector.shape_cast %11 : vector<1x64x128xf32> to vector<64x128xf32>
    %cst_12 = arith.constant dense<0.000000e+00> : vector<4x128xf32>
    %13 = tpu.matmul %10, %12, %cst_12 {dimension_numbers = #tpu.dot_dimension_numbers<[1], [0], [0], [1], [0, 0, 1, 1], [], []>} : vector<4x64xf32>, vector<64x128xf32>, vector<4x128xf32> -> vector<4x128xf32>
    %14 = arith.addf %8, %13 : vector<4x128xf32>
    %c0_13 = arith.constant 0 : index
    %c0_14 = arith.constant 0 : index
    %c32 = arith.constant 32 : index
    %15 = vector.load %arg0[%c0_13, %c0_14, %c32] : memref<2x6x96xf32, #tpu.memory_space<vmem>>, vector<1x4x64xf32>
    %16 = vector.shape_cast %15 : vector<1x4x64xf32> to vector<4x64xf32>
    %c2 = arith.constant 2 : index
    %c0_15 = arith.constant 0 : index
    %c0_16 = arith.constant 0 : index
    %17 = vector.load %arg1[%c2, %c0_15, %c0_16] : memref<9x64x128xf32, #tpu.memory_space<vmem>>, vector<1x64x128xf32>
    %18 = vector.shape_cast %17 : vector<1x64x128xf32> to vector<64x128xf32>
    %cst_17 = arith.constant dense<0.000000e+00> : vector<4x128xf32>
    %19 = tpu.matmul %16, %18, %cst_17 {dimension_numbers = #tpu.dot_dimension_numbers<[1], [0], [0], [1], [0, 0, 1, 1], [], []>} : vector<4x64xf32>, vector<64x128xf32>, vector<4x128xf32> -> vector<4x128xf32>
    %20 = arith.addf %14, %19 : vector<4x128xf32>
    %c0_18 = arith.constant 0 : index
    %c1_19 = arith.constant 1 : index
    %c0_20 = arith.constant 0 : index
    %21 = vector.load %arg0[%c0_18, %c1_19, %c0_20] : memref<2x6x96xf32, #tpu.memory_space<vmem>>, vector<1x4x64xf32>
    %22 = vector.shape_cast %21 : vector<1x4x64xf32> to vector<4x64xf32>
    %c3 = arith.constant 3 : index
    %c0_21 = arith.constant 0 : index
    %c0_22 = arith.constant 0 : index
    %23 = vector.load %arg1[%c3, %c0_21, %c0_22] : memref<9x64x128xf32, #tpu.memory_space<vmem>>, vector<1x64x128xf32>
    %24 = vector.shape_cast %23 : vector<1x64x128xf32> to vector<64x128xf32>
    %cst_23 = arith.constant dense<0.000000e+00> : vector<4x128xf32>
    %25 = tpu.matmul %22, %24, %cst_23 {dimension_numbers = #tpu.dot_dimension_numbers<[1], [0], [0], [1], [0, 0, 1, 1], [], []>} : vector<4x64xf32>, vector<64x128xf32>, vector<4x128xf32> -> vector<4x128xf32>
    %26 = arith.addf %20, %25 : vector<4x128xf32>
    %c0_24 = arith.constant 0 : index
    %c1_25 = arith.constant 1 : index
    %c16_26 = arith.constant 16 : index
    %27 = vector.load %arg0[%c0_24, %c1_25, %c16_26] : memref<2x6x96xf32, #tpu.memory_space<vmem>>, vector<1x4x64xf32>
    %28 = vector.shape_cast %27 : vector<1x4x64xf32> to vector<4x64xf32>
    %c4 = arith.constant 4 : index
    %c0_27 = arith.constant 0 : index
    %c0_28 = arith.constant 0 : index
    %29 = vector.load %arg1[%c4, %c0_27, %c0_28] : memref<9x64x128xf32, #tpu.memory_space<vmem>>, vector<1x64x128xf32>
    %30 = vector.shape_cast %29 : vector<1x64x128xf32> to vector<64x128xf32>
    %cst_29 = arith.constant dense<0.000000e+00> : vector<4x128xf32>
    %31 = tpu.matmul %28, %30, %cst_29 {dimension_numbers = #tpu.dot_dimension_numbers<[1], [0], [0], [1], [0, 0, 1, 1], [], []>} : vector<4x64xf32>, vector<64x128xf32>, vector<4x128xf32> -> vector<4x128xf32>
    %32 = arith.addf %26, %31 : vector<4x128xf32>
    %c0_30 = arith.constant 0 : index
    %c1_31 = arith.constant 1 : index
    %c32_32 = arith.constant 32 : index
    %33 = vector.load %arg0[%c0_30, %c1_31, %c32_32] : memref<2x6x96xf32, #tpu.memory_space<vmem>>, vector<1x4x64xf32>
    %34 = vector.shape_cast %33 : vector<1x4x64xf32> to vector<4x64xf32>
    %c5 = arith.constant 5 : index
    %c0_33 = arith.constant 0 : index
    %c0_34 = arith.constant 0 : index
    %35 = vector.load %arg1[%c5, %c0_33, %c0_34] : memref<9x64x128xf32, #tpu.memory_space<vmem>>, vector<1x64x128xf32>
    %36 = vector.shape_cast %35 : vector<1x64x128xf32> to vector<64x128xf32>
    %cst_35 = arith.constant dense<0.000000e+00> : vector<4x128xf32>
    %37 = tpu.matmul %34, %36, %cst_35 {dimension_numbers = #tpu.dot_dimension_numbers<[1], [0], [0], [1], [0, 0, 1, 1], [], []>} : vector<4x64xf32>, vector<64x128xf32>, vector<4x128xf32> -> vector<4x128xf32>
    %38 = arith.addf %32, %37 : vector<4x128xf32>
    %c0_36 = arith.constant 0 : index
    %c2_37 = arith.constant 2 : index
    %c0_38 = arith.constant 0 : index
    %39 = vector.load %arg0[%c0_36, %c2_37, %c0_38] : memref<2x6x96xf32, #tpu.memory_space<vmem>>, vector<1x4x64xf32>
    %40 = vector.shape_cast %39 : vector<1x4x64xf32> to vector<4x64xf32>
    %c6 = arith.constant 6 : index
    %c0_39 = arith.constant 0 : index
    %c0_40 = arith.constant 0 : index
    %41 = vector.load %arg1[%c6, %c0_39, %c0_40] : memref<9x64x128xf32, #tpu.memory_space<vmem>>, vector<1x64x128xf32>
    %42 = vector.shape_cast %41 : vector<1x64x128xf32> to vector<64x128xf32>
    %cst_41 = arith.constant dense<0.000000e+00> : vector<4x128xf32>
    %43 = tpu.matmul %40, %42, %cst_41 {dimension_numbers = #tpu.dot_dimension_numbers<[1], [0], [0], [1], [0, 0, 1, 1], [], []>} : vector<4x64xf32>, vector<64x128xf32>, vector<4x128xf32> -> vector<4x128xf32>
    %44 = arith.addf %38, %43 : vector<4x128xf32>
    %c0_42 = arith.constant 0 : index
    %c2_43 = arith.constant 2 : index
    %c16_44 = arith.constant 16 : index
    %45 = vector.load %arg0[%c0_42, %c2_43, %c16_44] : memref<2x6x96xf32, #tpu.memory_space<vmem>>, vector<1x4x64xf32>
    %46 = vector.shape_cast %45 : vector<1x4x64xf32> to vector<4x64xf32>
    %c7 = arith.constant 7 : index
    %c0_45 = arith.constant 0 : index
    %c0_46 = arith.constant 0 : index
    %47 = vector.load %arg1[%c7, %c0_45, %c0_46] : memref<9x64x128xf32, #tpu.memory_space<vmem>>, vector<1x64x128xf32>
    %48 = vector.shape_cast %47 : vector<1x64x128xf32> to vector<64x128xf32>
    %cst_47 = arith.constant dense<0.000000e+00> : vector<4x128xf32>
    %49 = tpu.matmul %46, %48, %cst_47 {dimension_numbers = #tpu.dot_dimension_numbers<[1], [0], [0], [1], [0, 0, 1, 1], [], []>} : vector<4x64xf32>, vector<64x128xf32>, vector<4x128xf32> -> vector<4x128xf32>
    %50 = arith.addf %44, %49 : vector<4x128xf32>
    %c0_48 = arith.constant 0 : index
    %c2_49 = arith.constant 2 : index
    %c32_50 = arith.constant 32 : index
    %51 = vector.load %arg0[%c0_48, %c2_49, %c32_50] : memref<2x6x96xf32, #tpu.memory_space<vmem>>, vector<1x4x64xf32>
    %52 = vector.shape_cast %51 : vector<1x4x64xf32> to vector<4x64xf32>
    %c8 = arith.constant 8 : index
    %c0_51 = arith.constant 0 : index
    %c0_52 = arith.constant 0 : index
    %53 = vector.load %arg1[%c8, %c0_51, %c0_52] : memref<9x64x128xf32, #tpu.memory_space<vmem>>, vector<1x64x128xf32>
    %54 = vector.shape_cast %53 : vector<1x64x128xf32> to vector<64x128xf32>
    %cst_53 = arith.constant dense<0.000000e+00> : vector<4x128xf32>
    %55 = tpu.matmul %52, %54, %cst_53 {dimension_numbers = #tpu.dot_dimension_numbers<[1], [0], [0], [1], [0, 0, 1, 1], [], []>} : vector<4x64xf32>, vector<64x128xf32>, vector<4x128xf32> -> vector<4x128xf32>
    %56 = arith.addf %50, %55 : vector<4x128xf32>
    %c0_54 = arith.constant 0 : index
    %c0_55 = arith.constant 0 : index
    %57 = vector.load %arg2[%c0_54, %c0_55] : memref<1x128xf32, #tpu.memory_space<vmem>>, vector<1x128xf32>
    %58 = vector.broadcast %57 : vector<1x128xf32> to vector<4x128xf32>
    %59 = arith.addf %56, %58 : vector<4x128xf32>
    %cst_56 = arith.constant dense<0.000000e+00> : vector<128xf32>
    %60 = vector.multi_reduction <add>, %59, %cst_56 [0] : vector<4x128xf32> to vector<128xf32>
    %61 = vector.shape_cast %60 : vector<128xf32> to vector<1x128xf32>
    %c0_57 = arith.constant 0 : index
    %c0_58 = arith.constant 0 : index
    %62 = vector.load %arg5[%c0_57, %c0_58] : memref<128x32xf32, #tpu.memory_space<vmem>>, vector<128x32xf32>
    %cst_59 = arith.constant dense<0.000000e+00> : vector<1x32xf32>
    %63 = tpu.matmul %61, %62, %cst_59 {dimension_numbers = #tpu.dot_dimension_numbers<[1], [0], [0], [1], [0, 0, 1, 1], [], []>} : vector<1x128xf32>, vector<128x32xf32>, vector<1x32xf32> -> vector<1x32xf32>
    %64 = arith.addf %0, %63 : vector<1x32xf32>
    %65 = arith.mulf %59, %59 : vector<4x128xf32>
    %cst_60 = arith.constant dense<0.000000e+00> : vector<128xf32>
    %66 = vector.multi_reduction <add>, %65, %cst_60 [0] : vector<4x128xf32> to vector<128xf32>
    %67 = vector.shape_cast %66 : vector<128xf32> to vector<1x128xf32>
    %c0_61 = arith.constant 0 : index
    %c0_62 = arith.constant 0 : index
    %68 = vector.load %arg5[%c0_61, %c0_62] : memref<128x32xf32, #tpu.memory_space<vmem>>, vector<128x32xf32>
    %cst_63 = arith.constant dense<0.000000e+00> : vector<1x32xf32>
    %69 = tpu.matmul %67, %68, %cst_63 {dimension_numbers = #tpu.dot_dimension_numbers<[1], [0], [0], [1], [0, 0, 1, 1], [], []>} : vector<1x128xf32>, vector<128x32xf32>, vector<1x32xf32> -> vector<1x32xf32>
    %70 = arith.addf %1, %69 : vector<1x32xf32>
    %cst_64 = arith.constant 0.000000e+00 : f32
    %71 = vector.broadcast %cst_64 : f32 to vector<4x128xf32>
    %c1_65 = arith.constant 1 : index
    %c0_66 = arith.constant 0 : index
    %c0_67 = arith.constant 0 : index
    %72 = vector.load %arg0[%c1_65, %c0_66, %c0_67] : memref<2x6x96xf32, #tpu.memory_space<vmem>>, vector<1x4x64xf32>
    %73 = vector.shape_cast %72 : vector<1x4x64xf32> to vector<4x64xf32>
    %c0_68 = arith.constant 0 : index
    %c0_69 = arith.constant 0 : index
    %c0_70 = arith.constant 0 : index
    %74 = vector.load %arg1[%c0_68, %c0_69, %c0_70] : memref<9x64x128xf32, #tpu.memory_space<vmem>>, vector<1x64x128xf32>
    %75 = vector.shape_cast %74 : vector<1x64x128xf32> to vector<64x128xf32>
    %cst_71 = arith.constant dense<0.000000e+00> : vector<4x128xf32>
    %76 = tpu.matmul %73, %75, %cst_71 {dimension_numbers = #tpu.dot_dimension_numbers<[1], [0], [0], [1], [0, 0, 1, 1], [], []>} : vector<4x64xf32>, vector<64x128xf32>, vector<4x128xf32> -> vector<4x128xf32>
    %77 = arith.addf %71, %76 : vector<4x128xf32>
    %c1_72 = arith.constant 1 : index
    %c0_73 = arith.constant 0 : index
    %c16_74 = arith.constant 16 : index
    %78 = vector.load %arg0[%c1_72, %c0_73, %c16_74] : memref<2x6x96xf32, #tpu.memory_space<vmem>>, vector<1x4x64xf32>
    %79 = vector.shape_cast %78 : vector<1x4x64xf32> to vector<4x64xf32>
    %c1_75 = arith.constant 1 : index
    %c0_76 = arith.constant 0 : index
    %c0_77 = arith.constant 0 : index
    %80 = vector.load %arg1[%c1_75, %c0_76, %c0_77] : memref<9x64x128xf32, #tpu.memory_space<vmem>>, vector<1x64x128xf32>
    %81 = vector.shape_cast %80 : vector<1x64x128xf32> to vector<64x128xf32>
    %cst_78 = arith.constant dense<0.000000e+00> : vector<4x128xf32>
    %82 = tpu.matmul %79, %81, %cst_78 {dimension_numbers = #tpu.dot_dimension_numbers<[1], [0], [0], [1], [0, 0, 1, 1], [], []>} : vector<4x64xf32>, vector<64x128xf32>, vector<4x128xf32> -> vector<4x128xf32>
    %83 = arith.addf %77, %82 : vector<4x128xf32>
    %c1_79 = arith.constant 1 : index
    %c0_80 = arith.constant 0 : index
    %c32_81 = arith.constant 32 : index
    %84 = vector.load %arg0[%c1_79, %c0_80, %c32_81] : memref<2x6x96xf32, #tpu.memory_space<vmem>>, vector<1x4x64xf32>
    %85 = vector.shape_cast %84 : vector<1x4x64xf32> to vector<4x64xf32>
    %c2_82 = arith.constant 2 : index
    %c0_83 = arith.constant 0 : index
    %c0_84 = arith.constant 0 : index
    %86 = vector.load %arg1[%c2_82, %c0_83, %c0_84] : memref<9x64x128xf32, #tpu.memory_space<vmem>>, vector<1x64x128xf32>
    %87 = vector.shape_cast %86 : vector<1x64x128xf32> to vector<64x128xf32>
    %cst_85 = arith.constant dense<0.000000e+00> : vector<4x128xf32>
    %88 = tpu.matmul %85, %87, %cst_85 {dimension_numbers = #tpu.dot_dimension_numbers<[1], [0], [0], [1], [0, 0, 1, 1], [], []>} : vector<4x64xf32>, vector<64x128xf32>, vector<4x128xf32> -> vector<4x128xf32>
    %89 = arith.addf %83, %88 : vector<4x128xf32>
    %c1_86 = arith.constant 1 : index
    %c1_87 = arith.constant 1 : index
    %c0_88 = arith.constant 0 : index
    %90 = vector.load %arg0[%c1_86, %c1_87, %c0_88] : memref<2x6x96xf32, #tpu.memory_space<vmem>>, vector<1x4x64xf32>
    %91 = vector.shape_cast %90 : vector<1x4x64xf32> to vector<4x64xf32>
    %c3_89 = arith.constant 3 : index
    %c0_90 = arith.constant 0 : index
    %c0_91 = arith.constant 0 : index
    %92 = vector.load %arg1[%c3_89, %c0_90, %c0_91] : memref<9x64x128xf32, #tpu.memory_space<vmem>>, vector<1x64x128xf32>
    %93 = vector.shape_cast %92 : vector<1x64x128xf32> to vector<64x128xf32>
    %cst_92 = arith.constant dense<0.000000e+00> : vector<4x128xf32>
    %94 = tpu.matmul %91, %93, %cst_92 {dimension_numbers = #tpu.dot_dimension_numbers<[1], [0], [0], [1], [0, 0, 1, 1], [], []>} : vector<4x64xf32>, vector<64x128xf32>, vector<4x128xf32> -> vector<4x128xf32>
    %95 = arith.addf %89, %94 : vector<4x128xf32>
    %c1_93 = arith.constant 1 : index
    %c1_94 = arith.constant 1 : index
    %c16_95 = arith.constant 16 : index
    %96 = vector.load %arg0[%c1_93, %c1_94, %c16_95] : memref<2x6x96xf32, #tpu.memory_space<vmem>>, vector<1x4x64xf32>
    %97 = vector.shape_cast %96 : vector<1x4x64xf32> to vector<4x64xf32>
    %c4_96 = arith.constant 4 : index
    %c0_97 = arith.constant 0 : index
    %c0_98 = arith.constant 0 : index
    %98 = vector.load %arg1[%c4_96, %c0_97, %c0_98] : memref<9x64x128xf32, #tpu.memory_space<vmem>>, vector<1x64x128xf32>
    %99 = vector.shape_cast %98 : vector<1x64x128xf32> to vector<64x128xf32>
    %cst_99 = arith.constant dense<0.000000e+00> : vector<4x128xf32>
    %100 = tpu.matmul %97, %99, %cst_99 {dimension_numbers = #tpu.dot_dimension_numbers<[1], [0], [0], [1], [0, 0, 1, 1], [], []>} : vector<4x64xf32>, vector<64x128xf32>, vector<4x128xf32> -> vector<4x128xf32>
    %101 = arith.addf %95, %100 : vector<4x128xf32>
    %c1_100 = arith.constant 1 : index
    %c1_101 = arith.constant 1 : index
    %c32_102 = arith.constant 32 : index
    %102 = vector.load %arg0[%c1_100, %c1_101, %c32_102] : memref<2x6x96xf32, #tpu.memory_space<vmem>>, vector<1x4x64xf32>
    %103 = vector.shape_cast %102 : vector<1x4x64xf32> to vector<4x64xf32>
    %c5_103 = arith.constant 5 : index
    %c0_104 = arith.constant 0 : index
    %c0_105 = arith.constant 0 : index
    %104 = vector.load %arg1[%c5_103, %c0_104, %c0_105] : memref<9x64x128xf32, #tpu.memory_space<vmem>>, vector<1x64x128xf32>
    %105 = vector.shape_cast %104 : vector<1x64x128xf32> to vector<64x128xf32>
    %cst_106 = arith.constant dense<0.000000e+00> : vector<4x128xf32>
    %106 = tpu.matmul %103, %105, %cst_106 {dimension_numbers = #tpu.dot_dimension_numbers<[1], [0], [0], [1], [0, 0, 1, 1], [], []>} : vector<4x64xf32>, vector<64x128xf32>, vector<4x128xf32> -> vector<4x128xf32>
    %107 = arith.addf %101, %106 : vector<4x128xf32>
    %c1_107 = arith.constant 1 : index
    %c2_108 = arith.constant 2 : index
    %c0_109 = arith.constant 0 : index
    %108 = vector.load %arg0[%c1_107, %c2_108, %c0_109] : memref<2x6x96xf32, #tpu.memory_space<vmem>>, vector<1x4x64xf32>
    %109 = vector.shape_cast %108 : vector<1x4x64xf32> to vector<4x64xf32>
    %c6_110 = arith.constant 6 : index
    %c0_111 = arith.constant 0 : index
    %c0_112 = arith.constant 0 : index
    %110 = vector.load %arg1[%c6_110, %c0_111, %c0_112] : memref<9x64x128xf32, #tpu.memory_space<vmem>>, vector<1x64x128xf32>
    %111 = vector.shape_cast %110 : vector<1x64x128xf32> to vector<64x128xf32>
    %cst_113 = arith.constant dense<0.000000e+00> : vector<4x128xf32>
    %112 = tpu.matmul %109, %111, %cst_113 {dimension_numbers = #tpu.dot_dimension_numbers<[1], [0], [0], [1], [0, 0, 1, 1], [], []>} : vector<4x64xf32>, vector<64x128xf32>, vector<4x128xf32> -> vector<4x128xf32>
    %113 = arith.addf %107, %112 : vector<4x128xf32>
    %c1_114 = arith.constant 1 : index
    %c2_115 = arith.constant 2 : index
    %c16_116 = arith.constant 16 : index
    %114 = vector.load %arg0[%c1_114, %c2_115, %c16_116] : memref<2x6x96xf32, #tpu.memory_space<vmem>>, vector<1x4x64xf32>
    %115 = vector.shape_cast %114 : vector<1x4x64xf32> to vector<4x64xf32>
    %c7_117 = arith.constant 7 : index
    %c0_118 = arith.constant 0 : index
    %c0_119 = arith.constant 0 : index
    %116 = vector.load %arg1[%c7_117, %c0_118, %c0_119] : memref<9x64x128xf32, #tpu.memory_space<vmem>>, vector<1x64x128xf32>
    %117 = vector.shape_cast %116 : vector<1x64x128xf32> to vector<64x128xf32>
    %cst_120 = arith.constant dense<0.000000e+00> : vector<4x128xf32>
    %118 = tpu.matmul %115, %117, %cst_120 {dimension_numbers = #tpu.dot_dimension_numbers<[1], [0], [0], [1], [0, 0, 1, 1], [], []>} : vector<4x64xf32>, vector<64x128xf32>, vector<4x128xf32> -> vector<4x128xf32>
    %119 = arith.addf %113, %118 : vector<4x128xf32>
    %c1_121 = arith.constant 1 : index
    %c2_122 = arith.constant 2 : index
    %c32_123 = arith.constant 32 : index
    %120 = vector.load %arg0[%c1_121, %c2_122, %c32_123] : memref<2x6x96xf32, #tpu.memory_space<vmem>>, vector<1x4x64xf32>
    %121 = vector.shape_cast %120 : vector<1x4x64xf32> to vector<4x64xf32>
    %c8_124 = arith.constant 8 : index
    %c0_125 = arith.constant 0 : index
    %c0_126 = arith.constant 0 : index
    %122 = vector.load %arg1[%c8_124, %c0_125, %c0_126] : memref<9x64x128xf32, #tpu.memory_space<vmem>>, vector<1x64x128xf32>
    %123 = vector.shape_cast %122 : vector<1x64x128xf32> to vector<64x128xf32>
    %cst_127 = arith.constant dense<0.000000e+00> : vector<4x128xf32>
    %124 = tpu.matmul %121, %123, %cst_127 {dimension_numbers = #tpu.dot_dimension_numbers<[1], [0], [0], [1], [0, 0, 1, 1], [], []>} : vector<4x64xf32>, vector<64x128xf32>, vector<4x128xf32> -> vector<4x128xf32>
    %125 = arith.addf %119, %124 : vector<4x128xf32>
    %c0_128 = arith.constant 0 : index
    %c0_129 = arith.constant 0 : index
    %126 = vector.load %arg2[%c0_128, %c0_129] : memref<1x128xf32, #tpu.memory_space<vmem>>, vector<1x128xf32>
    %127 = vector.broadcast %126 : vector<1x128xf32> to vector<4x128xf32>
    %128 = arith.addf %125, %127 : vector<4x128xf32>
    %cst_130 = arith.constant dense<0.000000e+00> : vector<128xf32>
    %129 = vector.multi_reduction <add>, %128, %cst_130 [0] : vector<4x128xf32> to vector<128xf32>
    %130 = vector.shape_cast %129 : vector<128xf32> to vector<1x128xf32>
    %c0_131 = arith.constant 0 : index
    %c0_132 = arith.constant 0 : index
    %131 = vector.load %arg5[%c0_131, %c0_132] : memref<128x32xf32, #tpu.memory_space<vmem>>, vector<128x32xf32>
    %cst_133 = arith.constant dense<0.000000e+00> : vector<1x32xf32>
    %132 = tpu.matmul %130, %131, %cst_133 {dimension_numbers = #tpu.dot_dimension_numbers<[1], [0], [0], [1], [0, 0, 1, 1], [], []>} : vector<1x128xf32>, vector<128x32xf32>, vector<1x32xf32> -> vector<1x32xf32>
    %133 = arith.addf %64, %132 : vector<1x32xf32>
    %134 = arith.mulf %128, %128 : vector<4x128xf32>
    %cst_134 = arith.constant dense<0.000000e+00> : vector<128xf32>
    %135 = vector.multi_reduction <add>, %134, %cst_134 [0] : vector<4x128xf32> to vector<128xf32>
    %136 = vector.shape_cast %135 : vector<128xf32> to vector<1x128xf32>
    %c0_135 = arith.constant 0 : index
    %c0_136 = arith.constant 0 : index
    %137 = vector.load %arg5[%c0_135, %c0_136] : memref<128x32xf32, #tpu.memory_space<vmem>>, vector<128x32xf32>
    %cst_137 = arith.constant dense<0.000000e+00> : vector<1x32xf32>
    %138 = tpu.matmul %136, %137, %cst_137 {dimension_numbers = #tpu.dot_dimension_numbers<[1], [0], [0], [1], [0, 0, 1, 1], [], []>} : vector<1x128xf32>, vector<128x32xf32>, vector<1x32xf32> -> vector<1x32xf32>
    %139 = arith.addf %70, %138 : vector<1x32xf32>
    %cst_138 = arith.constant 3.200000e+01 : f32
    %140 = vector.broadcast %cst_138 : f32 to vector<1x32xf32>
    %141 = arith.divf %133, %140 : vector<1x32xf32>
    %cst_139 = arith.constant 3.200000e+01 : f32
    %142 = vector.broadcast %cst_139 : f32 to vector<1x32xf32>
    %143 = arith.divf %139, %142 : vector<1x32xf32>
    %144 = arith.mulf %141, %141 : vector<1x32xf32>
    %145 = arith.subf %143, %144 : vector<1x32xf32>
    %cst_140 = arith.constant 0.000000e+00 : f32
    %146 = vector.broadcast %cst_140 : f32 to vector<1x32xf32>
    %147 = arith.maximumf %145, %146 : vector<1x32xf32>
    %c0_141 = arith.constant 0 : index
    %c0_142 = arith.constant 0 : index
    %148 = vector.load %arg3[%c0_141, %c0_142] : memref<1x32xf32, #tpu.memory_space<vmem>>, vector<1x32xf32>
    %cst_143 = arith.constant 9.99999974E-6 : f32
    %149 = vector.broadcast %cst_143 : f32 to vector<1x32xf32>
    %150 = arith.addf %147, %149 : vector<1x32xf32>
    %151 = math.rsqrt %150 : vector<1x32xf32>
    %152 = arith.mulf %148, %151 : vector<1x32xf32>
    %c0_144 = arith.constant 0 : index
    %c0_145 = arith.constant 0 : index
    %153 = vector.load %arg4[%c0_144, %c0_145] : memref<1x32xf32, #tpu.memory_space<vmem>>, vector<1x32xf32>
    %154 = arith.mulf %141, %152 : vector<1x32xf32>
    %155 = arith.subf %153, %154 : vector<1x32xf32>
    %c0_146 = arith.constant 0 : index
    %c0_147 = arith.constant 0 : index
    %156 = vector.load %arg6[%c0_146, %c0_147] : memref<32x128xf32, #tpu.memory_space<vmem>>, vector<32x128xf32>
    %cst_148 = arith.constant dense<0.000000e+00> : vector<1x128xf32>
    %157 = tpu.matmul %152, %156, %cst_148 {dimension_numbers = #tpu.dot_dimension_numbers<[1], [0], [0], [1], [0, 0, 1, 1], [], []>} : vector<1x32xf32>, vector<32x128xf32>, vector<1x128xf32> -> vector<1x128xf32>
    %c0_149 = arith.constant 0 : index
    %c0_150 = arith.constant 0 : index
    %158 = vector.load %arg6[%c0_149, %c0_150] : memref<32x128xf32, #tpu.memory_space<vmem>>, vector<32x128xf32>
    %cst_151 = arith.constant dense<0.000000e+00> : vector<1x128xf32>
    %159 = tpu.matmul %155, %158, %cst_151 {dimension_numbers = #tpu.dot_dimension_numbers<[1], [0], [0], [1], [0, 0, 1, 1], [], []>} : vector<1x32xf32>, vector<32x128xf32>, vector<1x128xf32> -> vector<1x128xf32>
    %160 = vector.broadcast %157 : vector<1x128xf32> to vector<4x128xf32>
    %161 = arith.mulf %59, %160 : vector<4x128xf32>
    %162 = vector.broadcast %159 : vector<1x128xf32> to vector<4x128xf32>
    %163 = arith.addf %161, %162 : vector<4x128xf32>
    %cst_152 = arith.constant 0.000000e+00 : f32
    %164 = vector.broadcast %cst_152 : f32 to vector<4x128xf32>
    %165 = arith.maximumf %163, %164 : vector<4x128xf32>
    %c0_153 = arith.constant 0 : index
    %c0_154 = arith.constant 0 : index
    %166 = vector.load %arg7[%c0_153, %c0_154] : memref<128x64xf32, #tpu.memory_space<vmem>>, vector<128x64xf32>
    %cst_155 = arith.constant dense<0.000000e+00> : vector<4x64xf32>
    %167 = tpu.matmul %165, %166, %cst_155 {dimension_numbers = #tpu.dot_dimension_numbers<[1], [0], [0], [1], [0, 0, 1, 1], [], []>} : vector<4x128xf32>, vector<128x64xf32>, vector<4x64xf32> -> vector<4x64xf32>
    %c0_156 = arith.constant 0 : index
    %c0_157 = arith.constant 0 : index
    %168 = vector.load %arg8[%c0_156, %c0_157] : memref<128x64xf32, #tpu.memory_space<vmem>>, vector<128x64xf32>
    %cst_158 = arith.constant dense<0.000000e+00> : vector<4x64xf32>
    %169 = tpu.matmul %165, %168, %cst_158 {dimension_numbers = #tpu.dot_dimension_numbers<[1], [0], [0], [1], [0, 0, 1, 1], [], []>} : vector<4x128xf32>, vector<128x64xf32>, vector<4x64xf32> -> vector<4x64xf32>
    %170 = arith.maximumf %167, %169 : vector<4x64xf32>
    %c0_159 = arith.constant 0 : index
    %c0_160 = arith.constant 0 : index
    %171 = vector.load %arg9[%c0_159, %c0_160] : memref<2x4xf32, #tpu.memory_space<vmem>>, vector<2x4xf32>
    %cst_161 = arith.constant dense<0.000000e+00> : vector<2x64xf32>
    %172 = tpu.matmul %171, %170, %cst_161 {dimension_numbers = #tpu.dot_dimension_numbers<[1], [0], [0], [1], [0, 0, 1, 1], [], []>} : vector<2x4xf32>, vector<4x64xf32>, vector<2x64xf32> -> vector<2x64xf32>
    %c0_162 = arith.constant 0 : index
    %c0_163 = arith.constant 0 : index
    %173 = vector.load %arg10[%c0_162, %c0_163] : memref<2x4xf32, #tpu.memory_space<vmem>>, vector<2x4xf32>
    %cst_164 = arith.constant dense<0.000000e+00> : vector<2x64xf32>
    %174 = tpu.matmul %173, %170, %cst_164 {dimension_numbers = #tpu.dot_dimension_numbers<[1], [0], [0], [1], [0, 0, 1, 1], [], []>} : vector<2x4xf32>, vector<4x64xf32>, vector<2x64xf32> -> vector<2x64xf32>
    %175 = arith.maximumf %172, %174 : vector<2x64xf32>
    %c0_165 = arith.constant 0 : index
    %c0_166 = arith.constant 0 : index
    %c0_167 = arith.constant 0 : index
    %176 = vector.load %arg13[%c0_165, %c0_166, %c0_167] : memref<2x2x64xf32, #tpu.memory_space<vmem>>, vector<1x2x64xf32>
    %177 = vector.shape_cast %176 : vector<1x2x64xf32> to vector<2x64xf32>
    %178 = vector.shape_cast %175 : vector<2x64xf32> to vector<1x2x64xf32>
    tpu.vector_store %arg13[%c0_165, %c0_166, %c0_167], %178 {strides = array<i32>} : memref<2x2x64xf32, #tpu.memory_space<vmem>>, vector<1x2x64xf32>,
    %179 = vector.broadcast %157 : vector<1x128xf32> to vector<4x128xf32>
    %180 = arith.mulf %128, %179 : vector<4x128xf32>
    %181 = vector.broadcast %159 : vector<1x128xf32> to vector<4x128xf32>
    %182 = arith.addf %180, %181 : vector<4x128xf32>
    %cst_168 = arith.constant 0.000000e+00 : f32
    %183 = vector.broadcast %cst_168 : f32 to vector<4x128xf32>
    %184 = arith.maximumf %182, %183 : vector<4x128xf32>
    %c0_169 = arith.constant 0 : index
    %c0_170 = arith.constant 0 : index
    %185 = vector.load %arg7[%c0_169, %c0_170] : memref<128x64xf32, #tpu.memory_space<vmem>>, vector<128x64xf32>
    %cst_171 = arith.constant dense<0.000000e+00> : vector<4x64xf32>
    %186 = tpu.matmul %184, %185, %cst_171 {dimension_numbers = #tpu.dot_dimension_numbers<[1], [0], [0], [1], [0, 0, 1, 1], [], []>} : vector<4x128xf32>, vector<128x64xf32>, vector<4x64xf32> -> vector<4x64xf32>
    %c0_172 = arith.constant 0 : index
    %c0_173 = arith.constant 0 : index
    %187 = vector.load %arg8[%c0_172, %c0_173] : memref<128x64xf32, #tpu.memory_space<vmem>>, vector<128x64xf32>
    %cst_174 = arith.constant dense<0.000000e+00> : vector<4x64xf32>
    %188 = tpu.matmul %184, %187, %cst_174 {dimension_numbers = #tpu.dot_dimension_numbers<[1], [0], [0], [1], [0, 0, 1, 1], [], []>} : vector<4x128xf32>, vector<128x64xf32>, vector<4x64xf32> -> vector<4x64xf32>
    %189 = arith.maximumf %186, %188 : vector<4x64xf32>
    %c0_175 = arith.constant 0 : index
    %c0_176 = arith.constant 0 : index
    %190 = vector.load %arg9[%c0_175, %c0_176] : memref<2x4xf32, #tpu.memory_space<vmem>>, vector<2x4xf32>
    %cst_177 = arith.constant dense<0.000000e+00> : vector<2x64xf32>
    %191 = tpu.matmul %190, %189, %cst_177 {dimension_numbers = #tpu.dot_dimension_numbers<[1], [0], [0], [1], [0, 0, 1, 1], [], []>} : vector<2x4xf32>, vector<4x64xf32>, vector<2x64xf32> -> vector<2x64xf32>
    %c0_178 = arith.constant 0 : index
    %c0_179 = arith.constant 0 : index
    %192 = vector.load %arg10[%c0_178, %c0_179] : memref<2x4xf32, #tpu.memory_space<vmem>>, vector<2x4xf32>
    %cst_180 = arith.constant dense<0.000000e+00> : vector<2x64xf32>
    %193 = tpu.matmul %192, %189, %cst_180 {dimension_numbers = #tpu.dot_dimension_numbers<[1], [0], [0], [1], [0, 0, 1, 1], [], []>} : vector<2x4xf32>, vector<4x64xf32>, vector<2x64xf32> -> vector<2x64xf32>
    %194 = arith.maximumf %191, %193 : vector<2x64xf32>
    %c1_181 = arith.constant 1 : index
    %c0_182 = arith.constant 0 : index
    %c0_183 = arith.constant 0 : index
    %195 = vector.load %arg13[%c1_181, %c0_182, %c0_183] : memref<2x2x64xf32, #tpu.memory_space<vmem>>, vector<1x2x64xf32>
    %196 = vector.shape_cast %195 : vector<1x2x64xf32> to vector<2x64xf32>
    %197 = vector.shape_cast %194 : vector<2x64xf32> to vector<1x2x64xf32>
    tpu.vector_store %arg13[%c1_181, %c0_182, %c0_183], %197 {strides = array<i32>} : memref<2x2x64xf32, #tpu.memory_space<vmem>>, vector<1x2x64xf32>,
    return
  }
}

module attributes {stable_mosaic.version = 11 : i64} {
  func.func @_fc_head_kernel(%arg0: memref<8x128xf32, #tpu.memory_space<vmem>>, %arg1: memref<128x32xf32, #tpu.memory_space<vmem>>, %arg2: memref<1x32xf32, #tpu.memory_space<vmem>>, %arg3: memref<32x10xf32, #tpu.memory_space<vmem>>, %arg4: memref<1x10xf32, #tpu.memory_space<vmem>>, %arg5: memref<8x10xf32, #tpu.memory_space<vmem>>) attributes {dimension_semantics = [], scalar_prefetch = 0 : i64, scratch_operands = 0 : i64, tpu.core_type = #tpu.core_type<tc>} {
    %c0 = arith.constant 0 : index
    %c0_0 = arith.constant 0 : index
    %0 = vector.load %arg0[%c0, %c0_0] : memref<8x128xf32, #tpu.memory_space<vmem>>, vector<8x128xf32>
    %c0_1 = arith.constant 0 : index
    %c0_2 = arith.constant 0 : index
    %1 = vector.load %arg1[%c0_1, %c0_2] : memref<128x32xf32, #tpu.memory_space<vmem>>, vector<128x32xf32>
    %c0_3 = arith.constant 0 : index
    %c0_4 = arith.constant 0 : index
    %2 = vector.load %arg2[%c0_3, %c0_4] : memref<1x32xf32, #tpu.memory_space<vmem>>, vector<1x32xf32>
    %cst = arith.constant dense<0.000000e+00> : vector<8x32xf32>
    %3 = tpu.matmul %0, %1, %cst {dimension_numbers = #tpu.dot_dimension_numbers<[1], [0], [0], [1], [0, 0, 1, 1], [], []>} : vector<8x128xf32>, vector<128x32xf32>, vector<8x32xf32> -> vector<8x32xf32>
    %4 = vector.broadcast %2 : vector<1x32xf32> to vector<8x32xf32>
    %5 = arith.addf %3, %4 : vector<8x32xf32>
    %cst_5 = arith.constant 0.000000e+00 : f32
    %6 = vector.broadcast %cst_5 : f32 to vector<8x32xf32>
    %7 = arith.maximumf %5, %6 : vector<8x32xf32>
    %c0_6 = arith.constant 0 : index
    %c0_7 = arith.constant 0 : index
    %8 = vector.load %arg3[%c0_6, %c0_7] : memref<32x10xf32, #tpu.memory_space<vmem>>, vector<32x10xf32>
    %c0_8 = arith.constant 0 : index
    %c0_9 = arith.constant 0 : index
    %9 = vector.load %arg4[%c0_8, %c0_9] : memref<1x10xf32, #tpu.memory_space<vmem>>, vector<1x10xf32>
    %cst_10 = arith.constant dense<0.000000e+00> : vector<8x10xf32>
    %10 = tpu.matmul %7, %8, %cst_10 {dimension_numbers = #tpu.dot_dimension_numbers<[1], [0], [0], [1], [0, 0, 1, 1], [], []>} : vector<8x32xf32>, vector<32x10xf32>, vector<8x10xf32> -> vector<8x10xf32>
    %11 = vector.broadcast %9 : vector<1x10xf32> to vector<8x10xf32>
    %12 = arith.addf %10, %11 : vector<8x10xf32>
    %c0_11 = arith.constant 0 : index
    %c0_12 = arith.constant 0 : index
    %13 = vector.load %arg5[%c0_11, %c0_12] : memref<8x10xf32, #tpu.memory_space<vmem>>, vector<8x10xf32>
    tpu.vector_store %arg5[%c0_11, %c0_12], %12 {strides = array<i32>} : memref<8x10xf32, #tpu.memory_space<vmem>>, vector<8x10xf32>,
    return
  }
}

</mosaic_0001>

<llo_original>
// kernel: tile.33
$region0: #{tile.33}
  #allocation0 [shape = 's32[1]{0}', space=sflag, size = 0x4, scoped, tag = 'scoped memory for tile.33']
  %s0 = inlined_call_operand.vmem [shape: f32[8], index: 0, kind: input, shape index: {}]
  %s1 = inlined_call_operand.vmem [shape: f32[16,8], index: 1, kind: output, shape index: {}]
  // Predicated region
  $region2: #{tile.33} parent=0 // pred_check
    _
  $region3: #{tile.33} parent=0 // pred_check_branch
    %3 = sbr.rel (0) target = $region5
  $region4: #{tile.33} parent=0 // pred_region
    _
  $region5: #{tile.33} parent=0 // pred_fallthru
    _
  %v4 = vld [vmem:[%s0] ss:$0 sm:$0xff]
  %5 = vst [vmem:[%s1] sm:$0xff] %v4
  %s6 = scalar_lea.vmem %s1, 8
  %7 = vst [vmem:[%s6] sm:$0xff] %v4

// kernel: tile.34
$region0: #{tile.34}
  %s0 = inlined_call_operand.vmem [shape: f32[16,8], index: 0, kind: input, shape index: {}]
  %s1 = inlined_call_operand.vmem [shape: f32[1,128], index: 1, kind: output, shape index: {}]
  $region1: #{tile.34} parent=0
    #allocation0 [shape = 'u8[4096]{0}', space=vmem, size = 0x1000, scoped, tag = 'scoped mem for output reshape']
    %v2 = vld [vmem:[%s0] sm:$0x1]
    %vm3 = vcmask 64512
    %4 = vst.msk [vmem:[#allocation0] sm:$0x1] %vm3, %v2
    %s5 = scalar_lea.vmem %s0, 15
    %v6 = vld [vmem:[%s5] sm:$0x1]
    %7 = vrot.lane.b32.xlu0 %v6, 120
    %v8 = vpop.permute.xlu0 %7
    %vm9 = vcmask 1048512
    %10 = vst.msk [vmem:[#allocation0] sm:$0x1] %vm9, %v8
    %s11 = scalar_lea.vmem %s0, 14
    %v12 = vld [vmem:[%s11] sm:$0x1]
    %13 = vrot.lane.b32.xlu0 %v12, 112
    %v14 = vpop.permute.xlu0 %13
    %vm15 = vcmask 982912
    %16 = vst.msk [vmem:[#allocation0] sm:$0x1] %vm15, %v14
    %s17 = scalar_lea.vmem %s0, 13
    %v18 = vld [vmem:[%s17] sm:$0x1]
    %19 = vrot.lane.b32.xlu0 %v18, 104
    %v20 = vpop.permute.xlu0 %19
    %vm21 = vcmask 917312
    %22 = vst.msk [vmem:[#allocation0] sm:$0x1] %vm21, %v20
    %s23 = scalar_lea.vmem %s0, 12
    %v24 = vld [vmem:[%s23] sm:$0x1]
    %25 = vrot.lane.b32.xlu0 %v24, 96
    %v26 = vpop.permute.xlu0 %25
    %vm27 = vcmask 851712
    %28 = vst.msk [vmem:[#allocation0] sm:$0x1] %vm27, %v26
    %s29 = scalar_lea.vmem %s0, 11
    %v30 = vld [vmem:[%s29] sm:$0x1]
    %31 = vrot.lane.b32.xlu0 %v30, 88
    %v32 = vpop.permute.xlu0 %31
    %vm33 = vcmask 786112
    %34 = vst.msk [vmem:[#allocation0] sm:$0x1] %vm33, %v32
    %s35 = scalar_lea.vmem %s0, 10
    %v36 = vld [vmem:[%s35] sm:$0x1]
    %37 = vrot.lane.b32.xlu0 %v36, 80
    %v38 = vpop.permute.xlu0 %37
    %vm39 = vcmask 720512
    %40 = vst.msk [vmem:[#allocation0] sm:$0x1] %vm39, %v38
    %s41 = scalar_lea.vmem %s0, 9
    %v42 = vld [vmem:[%s41] sm:$0x1]
    %43 = vrot.lane.b32.xlu0 %v42, 72
    %v44 = vpop.permute.xlu0 %43
    %vm45 = vcmask 654912
    %46 = vst.msk [vmem:[#allocation0] sm:$0x1] %vm45, %v44
    %s47 = scalar_lea.vmem %s0, 8
    %v48 = vld [vmem:[%s47] sm:$0x1]
    %49 = vrot.lane.b32.xlu0 %v48, 64
    %v50 = vpop.permute.xlu0 %49
    %vm51 = vcmask 589312
    %52 = vst.msk [vmem:[#allocation0] sm:$0x1] %vm51, %v50
    %s53 = scalar_lea.vmem %s0, 7
    %v54 = vld [vmem:[%s53] sm:$0x1]
    %55 = vrot.lane.b32.xlu0 %v54, 56
    %v56 = vpop.permute.xlu0 %55
    %vm57 = vcmask 523712
    %58 = vst.msk [vmem:[#allocation0] sm:$0x1] %vm57, %v56
    %s59 = scalar_lea.vmem %s0, 6
    %v60 = vld [vmem:[%s59] sm:$0x1]
    %61 = vrot.lane.b32.xlu0 %v60, 48
    %v62 = vpop.permute.xlu0 %61
    %vm63 = vcmask 458112
    %64 = vst.msk [vmem:[#allocation0] sm:$0x1] %vm63, %v62
    %s65 = scalar_lea.vmem %s0, 5
    %v66 = vld [vmem:[%s65] sm:$0x1]
    %67 = vrot.lane.b32.xlu0 %v66, 40
    %v68 = vpop.permute.xlu0 %67
    %vm69 = vcmask 392512
    %70 = vst.msk [vmem:[#allocation0] sm:$0x1] %vm69, %v68
    %s71 = scalar_lea.vmem %s0, 4
    %v72 = vld [vmem:[%s71] sm:$0x1]
    %73 = vrot.lane.b32.xlu0 %v72, 32
    %v74 = vpop.permute.xlu0 %73
    %vm75 = vcmask 326912
    %76 = vst.msk [vmem:[#allocation0] sm:$0x1] %vm75, %v74
    %s77 = scalar_lea.vmem %s0, 3
    %v78 = vld [vmem:[%s77] sm:$0x1]
    %79 = vrot.lane.b32.xlu0 %v78, 24
    %v80 = vpop.permute.xlu0 %79
    %vm81 = vcmask 261312
    %82 = vst.msk [vmem:[#allocation0] sm:$0x1] %vm81, %v80
    %s83 = scalar_lea.vmem %s0, 2
    %v84 = vld [vmem:[%s83] sm:$0x1]
    %85 = vrot.lane.b32.xlu0 %v84, 16
    %v86 = vpop.permute.xlu0 %85
    %vm87 = vcmask 195712
    %88 = vst.msk [vmem:[#allocation0] sm:$0x1] %vm87, %v86
    %s89 = scalar_lea.vmem %s0, 1
    %v90 = vld [vmem:[%s89] sm:$0x1]
    %91 = vrot.lane.b32.xlu0 %v90, 8
    %v92 = vpop.permute.xlu0 %91
    %vm93 = vcmask 130112
    %94 = vst.msk [vmem:[#allocation0] sm:$0x1] %vm93, %v92
    %s96 = sshll.u32 1, 1
    %s97 = ssub.s32 %s96, 1
    %v99 = vld [vmem:[#allocation0] sm:%s97]
    %s100 = sshll.u32 1, 1
    %s101 = ssub.s32 %s100, 1
    %102 = vst [vmem:[%s1] sm:%s101] %v99

// kernel: tile.39
$region0: #{tile.39}
  %s0 = inlined_call_operand.vmem [shape: f32[16,8,8], index: 0, kind: input, shape index: {}]
  %s1 = inlined_call_operand.vmem [shape: f32[128,8], index: 1, kind: output, shape index: {}]
  %s2 = smov 3
  %v3 = vld [vmem:[%s0] ss:$16 sm:%s2]
  %s4 = smov 12
  %v5 = vld [vmem:[%s0] ss:$16 sm:%s4]
  %vm6 = vcmask 1043458
  %v7 = vsel %vm6, %v5, %v3
  %s8 = smov 48
  %v9 = vld [vmem:[%s0] ss:$16 sm:%s8]
  %vm10 = vcmask 1045508
  %v11 = vsel %vm10, %v9, %v7
  %s12 = smov 192
  %v13 = vld [vmem:[%s0] ss:$16 sm:%s12]
  %vm14 = vcmask 1047558
  %v15 = vsel %vm14, %v13, %v11
  %vm16 = vcmask 64512
  %17 = vst.msk [vmem:[%s1] sm:$0xff] %vm16, %v15
  %s18 = scalar_lea.vmem %s0, 15
  %s19 = smov 3
  %v20 = vld [vmem:[%s18] ss:$16 sm:%s19]
  %s21 = scalar_lea.vmem %s0, 15
  %s22 = smov 12
  %v23 = vld [vmem:[%s21] ss:$16 sm:%s22]
  %vm24 = vcmask 1043458
  %v25 = vsel %vm24, %v23, %v20
  %s26 = scalar_lea.vmem %s0, 15
  %s27 = smov 48
  %v28 = vld [vmem:[%s26] ss:$16 sm:%s27]
  %vm29 = vcmask 1045508
  %v30 = vsel %vm29, %v28, %v25
  %s31 = scalar_lea.vmem %s0, 15
  %s32 = smov 192
  %v33 = vld [vmem:[%s31] ss:$16 sm:%s32]
  %vm34 = vcmask 1047558
  %v35 = vsel %vm34, %v33, %v30
  %36 = vrot.lane.b32.xlu0 %v35, 120
  %v37 = vpop.permute.xlu0 %36
  %vm38 = vcmask 1048512
  %39 = vst.msk [vmem:[%s1] sm:$0xff] %vm38, %v37
  %s40 = scalar_lea.vmem %s0, 14
  %s41 = smov 3
  %v42 = vld [vmem:[%s40] ss:$16 sm:%s41]
  %s43 = scalar_lea.vmem %s0, 14
  %s44 = smov 12
  %v45 = vld [vmem:[%s43] ss:$16 sm:%s44]
  %vm46 = vcmask 1043458
  %v47 = vsel %vm46, %v45, %v42
  %s48 = scalar_lea.vmem %s0, 14
  %s49 = smov 48
  %v50 = vld [vmem:[%s48] ss:$16 sm:%s49]
  %vm51 = vcmask 1045508
  %v52 = vsel %vm51, %v50, %v47
  %s53 = scalar_lea.vmem %s0, 14
  %s54 = smov 192
  %v55 = vld [vmem:[%s53] ss:$16 sm:%s54]
  %vm56 = vcmask 1047558
  %v57 = vsel %vm56, %v55, %v52
  %58 = vrot.lane.b32.xlu0 %v57, 112
  %v59 = vpop.permute.xlu0 %58
  %vm60 = vcmask 982912
  %61 = vst.msk [vmem:[%s1] sm:$0xff] %vm60, %v59
  %s62 = scalar_lea.vmem %s0, 13
  %s63 = smov 3
  %v64 = vld [vmem:[%s62] ss:$16 sm:%s63]
  %s65 = scalar_lea.vmem %s0, 13
  %s66 = smov 12
  %v67 = vld [vmem:[%s65] ss:$16 sm:%s66]
  %vm68 = vcmask 1043458
  %v69 = vsel %vm68, %v67, %v64
  %s70 = scalar_lea.vmem %s0, 13
  %s71 = smov 48
  %v72 = vld [vmem:[%s70] ss:$16 sm:%s71]
  %vm73 = vcmask 1045508
  %v74 = vsel %vm73, %v72, %v69
  %s75 = scalar_lea.vmem %s0, 13
  %s76 = smov 192
  %v77 = vld [vmem:[%s75] ss:$16 sm:%s76]
  %vm78 = vcmask 1047558
  %v79 = vsel %vm78, %v77, %v74
  %80 = vrot.lane.b32.xlu0 %v79, 104
  %v81 = vpop.permute.xlu0 %80
  %vm82 = vcmask 917312
  %83 = vst.msk [vmem:[%s1] sm:$0xff] %vm82, %v81
  %s84 = scalar_lea.vmem %s0, 12
  %s85 = smov 3
  %v86 = vld [vmem:[%s84] ss:$16 sm:%s85]
  %s87 = scalar_lea.vmem %s0, 12
  %s88 = smov 12
  %v89 = vld [vmem:[%s87] ss:$16 sm:%s88]
  %vm90 = vcmask 1043458
  %v91 = vsel %vm90, %v89, %v86
  %s92 = scalar_lea.vmem %s0, 12
  %s93 = smov 48
  %v94 = vld [vmem:[%s92] ss:$16 sm:%s93]
  %vm95 = vcmask 1045508
  %v96 = vsel %vm95, %v94, %v91
  %s97 = scalar_lea.vmem %s0, 12
  %s98 = smov 192
  %v99 = vld [vmem:[%s97] ss:$16 sm:%s98]
  %vm100 = vcmask 1047558
  %v101 = vsel %vm100, %v99, %v96
  %102 = vrot.lane.b32.xlu0 %v101, 96
  %v103 = vpop.permute.xlu0 %102
  %vm104 = vcmask 851712
  %105 = vst.msk [vmem:[%s1] sm:$0xff] %vm104, %v103
  %s106 = scalar_lea.vmem %s0, 11
  %s107 = smov 3
  %v108 = vld [vmem:[%s106] ss:$16 sm:%s107]
  %s109 = scalar_lea.vmem %s0, 11
  %s110 = smov 12
  %v111 = vld [vmem:[%s109] ss:$16 sm:%s110]
  %vm112 = vcmask 1043458
  %v113 = vsel %vm112, %v111, %v108
  %s114 = scalar_lea.vmem %s0, 11
  %s115 = smov 48
  %v116 = vld [vmem:[%s114] ss:$16 sm:%s115]
  %vm117 = vcmask 1045508
  %v118 = vsel %vm117, %v116, %v113
  %s119 = scalar_lea.vmem %s0, 11
  %s120 = smov 192
  %v121 = vld [vmem:[%s119] ss:$16 sm:%s120]
  %vm122 = vcmask 1047558
  %v123 = vsel %vm122, %v121, %v118
  %124 = vrot.lane.b32.xlu0 %v123, 88
  %v125 = vpop.permute.xlu0 %124
  %vm126 = vcmask 786112
  %127 = vst.msk [vmem:[%s1] sm:$0xff] %vm126, %v125
  %s128 = scalar_lea.vmem %s0, 10
  %s129 = smov 3
  %v130 = vld [vmem:[%s128] ss:$16 sm:%s129]
  %s131 = scalar_lea.vmem %s0, 10
  %s132 = smov 12
  %v133 = vld [vmem:[%s131] ss:$16 sm:%s132]
  %vm134 = vcmask 1043458
  %v135 = vsel %vm134, %v133, %v130
  %s136 = scalar_lea.vmem %s0, 10
  %s137 = smov 48
  %v138 = vld [vmem:[%s136] ss:$16 sm:%s137]
  %vm139 = vcmask 1045508
  %v140 = vsel %vm139, %v138, %v135
  %s141 = scalar_lea.vmem %s0, 10
  %s142 = smov 192
  %v143 = vld [vmem:[%s141] ss:$16 sm:%s142]
  %vm144 = vcmask 1047558
  %v145 = vsel %vm144, %v143, %v140
  %146 = vrot.lane.b32.xlu0 %v145, 80
  %v147 = vpop.permute.xlu0 %146
  %vm148 = vcmask 720512
  %149 = vst.msk [vmem:[%s1] sm:$0xff] %vm148, %v147
  %s150 = scalar_lea.vmem %s0, 9
  %s151 = smov 3
  %v152 = vld [vmem:[%s150] ss:$16 sm:%s151]
  %s153 = scalar_lea.vmem %s0, 9
  %s154 = smov 12
  %v155 = vld [vmem:[%s153] ss:$16 sm:%s154]
  %vm156 = vcmask 1043458
  %v157 = vsel %vm156, %v155, %v152
  %s158 = scalar_lea.vmem %s0, 9
  %s159 = smov 48
  %v160 = vld [vmem:[%s158] ss:$16 sm:%s159]
  %vm161 = vcmask 1045508
  %v162 = vsel %vm161, %v160, %v157
  %s163 = scalar_lea.vmem %s0, 9
  %s164 = smov 192
  %v165 = vld [vmem:[%s163] ss:$16 sm:%s164]
  %vm166 = vcmask 1047558
  %v167 = vsel %vm166, %v165, %v162
  %168 = vrot.lane.b32.xlu0 %v167, 72
  %v169 = vpop.permute.xlu0 %168
  %vm170 = vcmask 654912
  %171 = vst.msk [vmem:[%s1] sm:$0xff] %vm170, %v169
  %s172 = scalar_lea.vmem %s0, 8
  %s173 = smov 3
  %v174 = vld [vmem:[%s172] ss:$16 sm:%s173]
  %s175 = scalar_lea.vmem %s0, 8
  %s176 = smov 12
  %v177 = vld [vmem:[%s175] ss:$16 sm:%s176]
  %vm178 = vcmask 1043458
  %v179 = vsel %vm178, %v177, %v174
  %s180 = scalar_lea.vmem %s0, 8
  %s181 = smov 48
  %v182 = vld [vmem:[%s180] ss:$16 sm:%s181]
  %vm183 = vcmask 1045508
  %v184 = vsel %vm183, %v182, %v179
  %s185 = scalar_lea.vmem %s0, 8
  %s186 = smov 192
  %v187 = vld [vmem:[%s185] ss:$16 sm:%s186]
  %vm188 = vcmask 1047558
  %v189 = vsel %vm188, %v187, %v184
  %190 = vrot.lane.b32.xlu0 %v189, 64
  %v191 = vpop.permute.xlu0 %190
  %vm192 = vcmask 589312
  %193 = vst.msk [vmem:[%s1] sm:$0xff] %vm192, %v191
  %s194 = scalar_lea.vmem %s0, 7
  %s195 = smov 3
  %v196 = vld [vmem:[%s194] ss:$16 sm:%s195]
  %s197 = scalar_lea.vmem %s0, 7
  %s198 = smov 12
  %v199 = vld [vmem:[%s197] ss:$16 sm:%s198]
  %vm200 = vcmask 1043458
  %v201 = vsel %vm200, %v199, %v196
  %s202 = scalar_lea.vmem %s0, 7
  %s203 = smov 48
  %v204 = vld [vmem:[%s202] ss:$16 sm:%s203]
  %vm205 = vcmask 1045508
  %v206 = vsel %vm205, %v204, %v201
  %s207 = scalar_lea.vmem %s0, 7
  %s208 = smov 192
  %v209 = vld [vmem:[%s207] ss:$16 sm:%s208]
  %vm210 = vcmask 1047558
  %v211 = vsel %vm210, %v209, %v206
  %212 = vrot.lane.b32.xlu0 %v211, 56
  %v213 = vpop.permute.xlu0 %212
  %vm214 = vcmask 523712
  %215 = vst.msk [vmem:[%s1] sm:$0xff] %vm214, %v213
  %s216 = scalar_lea.vmem %s0, 6
  %s217 = smov 3
  %v218 = vld [vmem:[%s216] ss:$16 sm:%s217]
  %s219 = scalar_lea.vmem %s0, 6
  %s220 = smov 12
  %v221 = vld [vmem:[%s219] ss:$16 sm:%s220]
  %vm222 = vcmask 1043458
  %v223 = vsel %vm222, %v221, %v218
  %s224 = scalar_lea.vmem %s0, 6
  %s225 = smov 48
  %v226 = vld [vmem:[%s224] ss:$16 sm:%s225]
  %vm227 = vcmask 1045508
  %v228 = vsel %vm227, %v226, %v223
  %s229 = scalar_lea.vmem %s0, 6
  %s230 = smov 192
  %v231 = vld [vmem:[%s229] ss:$16 sm:%s230]
  %vm232 = vcmask 1047558
  %v233 = vsel %vm232, %v231, %v228
  %234 = vrot.lane.b32.xlu0 %v233, 48
  %v235 = vpop.permute.xlu0 %234
  %vm236 = vcmask 458112
  %237 = vst.msk [vmem:[%s1] sm:$0xff] %vm236, %v235
  %s238 = scalar_lea.vmem %s0, 5
  %s239 = smov 3
  %v240 = vld [vmem:[%s238] ss:$16 sm:%s239]
  %s241 = scalar_lea.vmem %s0, 5
  %s242 = smov 12
  %v243 = vld [vmem:[%s241] ss:$16 sm:%s242]
  %vm244 = vcmask 1043458
  %v245 = vsel %vm244, %v243, %v240
  %s246 = scalar_lea.vmem %s0, 5
  %s247 = smov 48
  %v248 = vld [vmem:[%s246] ss:$16 sm:%s247]
  %vm249 = vcmask 1045508
  %v250 = vsel %vm249, %v248, %v245
  %s251 = scalar_lea.vmem %s0, 5
  %s252 = smov 192
  %v253 = vld [vmem:[%s251] ss:$16 sm:%s252]
  %vm254 = vcmask 1047558
  %v255 = vsel %vm254, %v253, %v250
  %256 = vrot.lane.b32.xlu0 %v255, 40
  %v257 = vpop.permute.xlu0 %256
  %vm258 = vcmask 392512
  %259 = vst.msk [vmem:[%s1] sm:$0xff] %vm258, %v257
  %s260 = scalar_lea.vmem %s0, 4
  %s261 = smov 3
  %v262 = vld [vmem:[%s260] ss:$16 sm:%s261]
  %s263 = scalar_lea.vmem %s0, 4
  %s264 = smov 12
  %v265 = vld [vmem:[%s263] ss:$16 sm:%s264]
  %vm266 = vcmask 1043458
  %v267 = vsel %vm266, %v265, %v262
  %s268 = scalar_lea.vmem %s0, 4
  %s269 = smov 48
  %v270 = vld [vmem:[%s268] ss:$16 sm:%s269]
  %vm271 = vcmask 1045508
  %v272 = vsel %vm271, %v270, %v267
  %s273 = scalar_lea.vmem %s0, 4
  %s274 = smov 192
  %v275 = vld [vmem:[%s273] ss:$16 sm:%s274]
  %vm276 = vcmask 1047558
  %v277 = vsel %vm276, %v275, %v272
  %278 = vrot.lane.b32.xlu0 %v277, 32
  %v279 = vpop.permute.xlu0 %278
  %vm280 = vcmask 326912
  %281 = vst.msk [vmem:[%s1] sm:$0xff] %vm280, %v279
  %s282 = scalar_lea.vmem %s0, 3
  %s283 = smov 3
  %v284 = vld [vmem:[%s282] ss:$16 sm:%s283]
  %s285 = scalar_lea.vmem %s0, 3
  %s286 = smov 12
  %v287 = vld [vmem:[%s285] ss:$16 sm:%s286]
  %vm288 = vcmask 1043458
  %v289 = vsel %vm288, %v287, %v284
  %s290 = scalar_lea.vmem %s0, 3
  %s291 = smov 48
  %v292 = vld [vmem:[%s290] ss:$16 sm:%s291]
  %vm293 = vcmask 1045508
  %v294 = vsel %vm293, %v292, %v289
  %s295 = scalar_lea.vmem %s0, 3
  %s296 = smov 192
  %v297 = vld [vmem:[%s295] ss:$16 sm:%s296]
  %vm298 = vcmask 1047558
  %v299 = vsel %vm298, %v297, %v294
  %300 = vrot.lane.b32.xlu0 %v299, 24
  %v301 = vpop.permute.xlu0 %300
  %vm302 = vcmask 261312
  %303 = vst.msk [vmem:[%s1] sm:$0xff] %vm302, %v301
  %s304 = scalar_lea.vmem %s0, 2
  %s305 = smov 3
  %v306 = vld [vmem:[%s304] ss:$16 sm:%s305]
  %s307 = scalar_lea.vmem %s0, 2
  %s308 = smov 12
  %v309 = vld [vmem:[%s307] ss:$16 sm:%s308]
  %vm310 = vcmask 1043458
  %v311 = vsel %vm310, %v309, %v306
  %s312 = scalar_lea.vmem %s0, 2
  %s313 = smov 48
  %v314 = vld [vmem:[%s312] ss:$16 sm:%s313]
  %vm315 = vcmask 1045508
  %v316 = vsel %vm315, %v314, %v311
  %s317 = scalar_lea.vmem %s0, 2
  %s318 = smov 192
  %v319 = vld [vmem:[%s317] ss:$16 sm:%s318]
  %vm320 = vcmask 1047558
  %v321 = vsel %vm320, %v319, %v316
  %322 = vrot.lane.b32.xlu0 %v321, 16
  %v323 = vpop.permute.xlu0 %322
  %vm324 = vcmask 195712
  %325 = vst.msk [vmem:[%s1] sm:$0xff] %vm324, %v323
  %s326 = scalar_lea.vmem %s0, 1
  %s327 = smov 3
  %v328 = vld [vmem:[%s326] ss:$16 sm:%s327]
  %s329 = scalar_lea.vmem %s0, 1
  %s330 = smov 12
  %v331 = vld [vmem:[%s329] ss:$16 sm:%s330]
  %vm332 = vcmask 1043458
  %v333 = vsel %vm332, %v331, %v328
  %s334 = scalar_lea.vmem %s0, 1
  %s335 = smov 48
  %v336 = vld [vmem:[%s334] ss:$16 sm:%s335]
  %vm337 = vcmask 1045508
  %v338 = vsel %vm337, %v336, %v333
  %s339 = scalar_lea.vmem %s0, 1
  %s340 = smov 192
  %v341 = vld [vmem:[%s339] ss:$16 sm:%s340]
  %vm342 = vcmask 1047558
  %v343 = vsel %vm342, %v341, %v338
  %344 = vrot.lane.b32.xlu0 %v343, 8
  %v345 = vpop.permute.xlu0 %344
  %vm346 = vcmask 130112
  %347 = vst.msk [vmem:[%s1] sm:$0xff] %vm346, %v345

// kernel: tile.43
$region0: #{tile.43}
  #allocation0 [shape = 's32[1]{0}', space=sflag, size = 0x4, scoped, tag = 'scoped memory for tile.43']
  %s0 = inlined_call_operand.vmem [shape: f32[16], index: 0, kind: input, shape index: {}]
  %s1 = inlined_call_operand.vmem [shape: f32[8,16], index: 1, kind: output, shape index: {}]
  // Predicated region
  $region2: #{tile.43} parent=0 // pred_check
    _
  $region3: #{tile.43} parent=0 // pred_check_branch
    %3 = sbr.rel (0) target = $region5
  $region4: #{tile.43} parent=0 // pred_region
    _
  $region5: #{tile.43} parent=0 // pred_fallthru
    _
  %v4 = vld [vmem:[%s0] ss:$0 sm:$0xff]
  %5 = vst [vmem:[%s1] sm:$0xff] %v4

// kernel: tile.44
$region0: #{tile.44}
  %s0 = inlined_call_operand.vmem [shape: f32[8,16], index: 0, kind: input, shape index: {}]
  %s1 = inlined_call_operand.vmem [shape: f32[1,128], index: 1, kind: output, shape index: {}]
  $region1: #{tile.44} parent=0
    #allocation0 [shape = 'u8[4096]{0}', space=vmem, size = 0x1000, scoped, tag = 'scoped mem for output reshape']
    %v2 = vld [vmem:[%s0] sm:$0x1]
    %vm3 = vcmask 130048
    %4 = vst.msk [vmem:[#allocation0] sm:$0x1] %vm3, %v2
    %s5 = scalar_lea.vmem %s0, 7
    %v6 = vld [vmem:[%s5] sm:$0x1]
    %7 = vrot.lane.b32.xlu0 %v6, 112
    %v8 = vpop.permute.xlu0 %7
    %vm9 = vcmask 1048448
    %10 = vst.msk [vmem:[#allocation0] sm:$0x1] %vm9, %v8
    %s11 = scalar_lea.vmem %s0, 6
    %v12 = vld [vmem:[%s11] sm:$0x1]
    %13 = vrot.lane.b32.xlu0 %v12, 96
    %v14 = vpop.permute.xlu0 %13
    %vm15 = vcmask 917248
    %16 = vst.msk [vmem:[#allocation0] sm:$0x1] %vm15, %v14
    %s17 = scalar_lea.vmem %s0, 5
    %v18 = vld [vmem:[%s17] sm:$0x1]
    %19 = vrot.lane.b32.xlu0 %v18, 80
    %v20 = vpop.permute.xlu0 %19
    %vm21 = vcmask 786048
    %22 = vst.msk [vmem:[#allocation0] sm:$0x1] %vm21, %v20
    %s23 = scalar_lea.vmem %s0, 4
    %v24 = vld [vmem:[%s23] sm:$0x1]
    %25 = vrot.lane.b32.xlu0 %v24, 64
    %v26 = vpop.permute.xlu0 %25
    %vm27 = vcmask 654848
    %28 = vst.msk [vmem:[#allocation0] sm:$0x1] %vm27, %v26
    %s29 = scalar_lea.vmem %s0, 3
    %v30 = vld [vmem:[%s29] sm:$0x1]
    %31 = vrot.lane.b32.xlu0 %v30, 48
    %v32 = vpop.permute.xlu0 %31
    %vm33 = vcmask 523648
    %34 = vst.msk [vmem:[#allocation0] sm:$0x1] %vm33, %v32
    %s35 = scalar_lea.vmem %s0, 2
    %v36 = vld [vmem:[%s35] sm:$0x1]
    %37 = vrot.lane.b32.xlu0 %v36, 32
    %v38 = vpop.permute.xlu0 %37
    %vm39 = vcmask 392448
    %40 = vst.msk [vmem:[#allocation0] sm:$0x1] %vm39, %v38
    %s41 = scalar_lea.vmem %s0, 1
    %v42 = vld [vmem:[%s41] sm:$0x1]
    %43 = vrot.lane.b32.xlu0 %v42, 16
    %v44 = vpop.permute.xlu0 %43
    %vm45 = vcmask 261248
    %46 = vst.msk [vmem:[#allocation0] sm:$0x1] %vm45, %v44
    %s48 = sshll.u32 1, 1
    %s49 = ssub.s32 %s48, 1
    %v51 = vld [vmem:[#allocation0] sm:%s49]
    %s52 = sshll.u32 1, 1
    %s53 = ssub.s32 %s52, 1
    %54 = vst [vmem:[%s1] sm:%s53] %v51

// kernel: tile.49
$region0: #{tile.49}
  %s0 = inlined_call_operand.vmem [shape: f32[8,16,16], index: 0, kind: input, shape index: {}]
  %s1 = inlined_call_operand.vmem [shape: f32[128,16], index: 1, kind: output, shape index: {}]
  %v2 = vld [vmem:[%s0] ss:$8 sm:$0xf]
  %v3 = vld [vmem:[%s0] ss:$8 sm:$0xf0]
  %vm4 = vcmask 1047556
  %v5 = vsel %vm4, %v3, %v2
  %vm6 = vcmask 130048
  %7 = vst.msk [vmem:[%s1] sm:$0xff] %vm6, %v5
  %s8 = scalar_lea.vmem %s0, 64
  %v9 = vld [vmem:[%s8] ss:$8 sm:$0xf]
  %s10 = scalar_lea.vmem %s0, 64
  %v11 = vld [vmem:[%s10] ss:$8 sm:$0xf0]
  %vm12 = vcmask 1047556
  %v13 = vsel %vm12, %v11, %v9
  %vm14 = vcmask 130048
  %s15 = scalar_lea.vmem %s1, 8
  %16 = vst.msk [vmem:[%s15] sm:$0xff] %vm14, %v13
  %s17 = scalar_lea.vmem %s0, 7
  %v18 = vld [vmem:[%s17] ss:$8 sm:$0xf]
  %s19 = scalar_lea.vmem %s0, 7
  %v20 = vld [vmem:[%s19] ss:$8 sm:$0xf0]
  %vm21 = vcmask 1047556
  %v22 = vsel %vm21, %v20, %v18
  %23 = vrot.lane.b32.xlu0 %v22, 112
  %v24 = vpop.permute.xlu0 %23
  %vm25 = vcmask 1048448
  %26 = vst.msk [vmem:[%s1] sm:$0xff] %vm25, %v24
  %s27 = scalar_lea.vmem %s0, 71
  %v28 = vld [vmem:[%s27] ss:$8 sm:$0xf]
  %s29 = scalar_lea.vmem %s0, 71
  %v30 = vld [vmem:[%s29] ss:$8 sm:$0xf0]
  %vm31 = vcmask 1047556
  %v32 = vsel %vm31, %v30, %v28
  %33 = vrot.lane.b32.xlu0 %v32, 112
  %v34 = vpop.permute.xlu0 %33
  %vm35 = vcmask 1048448
  %s36 = scalar_lea.vmem %s1, 8
  %37 = vst.msk [vmem:[%s36] sm:$0xff] %vm35, %v34
  %s38 = scalar_lea.vmem %s0, 6
  %v39 = vld [vmem:[%s38] ss:$8 sm:$0xf]
  %s40 = scalar_lea.vmem %s0, 6
  %v41 = vld [vmem:[%s40] ss:$8 sm:$0xf0]
  %vm42 = vcmask 1047556
  %v43 = vsel %vm42, %v41, %v39
  %44 = vrot.lane.b32.xlu0 %v43, 96
  %v45 = vpop.permute.xlu0 %44
  %vm46 = vcmask 917248
  %47 = vst.msk [vmem:[%s1] sm:$0xff] %vm46, %v45
  %s48 = scalar_lea.vmem %s0, 70
  %v49 = vld [vmem:[%s48] ss:$8 sm:$0xf]
  %s50 = scalar_lea.vmem %s0, 70
  %v51 = vld [vmem:[%s50] ss:$8 sm:$0xf0]
  %vm52 = vcmask 1047556
  %v53 = vsel %vm52, %v51, %v49
  %54 = vrot.lane.b32.xlu0 %v53, 96
  %v55 = vpop.permute.xlu0 %54
  %vm56 = vcmask 917248
  %s57 = scalar_lea.vmem %s1, 8
  %58 = vst.msk [vmem:[%s57] sm:$0xff] %vm56, %v55
  %s59 = scalar_lea.vmem %s0, 5
  %v60 = vld [vmem:[%s59] ss:$8 sm:$0xf]
  %s61 = scalar_lea.vmem %s0, 5
  %v62 = vld [vmem:[%s61] ss:$8 sm:$0xf0]
  %vm63 = vcmask 1047556
  %v64 = vsel %vm63, %v62, %v60
  %65 = vrot.lane.b32.xlu0 %v64, 80
  %v66 = vpop.permute.xlu0 %65
  %vm67 = vcmask 786048
  %68 = vst.msk [vmem:[%s1] sm:$0xff] %vm67, %v66
  %s69 = scalar_lea.vmem %s0, 69
  %v70 = vld [vmem:[%s69] ss:$8 sm:$0xf]
  %s71 = scalar_lea.vmem %s0, 69
  %v72 = vld [vmem:[%s71] ss:$8 sm:$0xf0]
  %vm73 = vcmask 1047556
  %v74 = vsel %vm73, %v72, %v70
  %75 = vrot.lane.b32.xlu0 %v74, 80
  %v76 = vpop.permute.xlu0 %75
  %vm77 = vcmask 786048
  %s78 = scalar_lea.vmem %s1, 8
  %79 = vst.msk [vmem:[%s78] sm:$0xff] %vm77, %v76
  %s80 = scalar_lea.vmem %s0, 4
  %v81 = vld [vmem:[%s80] ss:$8 sm:$0xf]
  %s82 = scalar_lea.vmem %s0, 4
  %v83 = vld [vmem:[%s82] ss:$8 sm:$0xf0]
  %vm84 = vcmask 1047556
  %v85 = vsel %vm84, %v83, %v81
  %86 = vrot.lane.b32.xlu0 %v85, 64
  %v87 = vpop.permute.xlu0 %86
  %vm88 = vcmask 654848
  %89 = vst.msk [vmem:[%s1] sm:$0xff] %vm88, %v87
  %s90 = scalar_lea.vmem %s0, 68
  %v91 = vld [vmem:[%s90] ss:$8 sm:$0xf]
  %s92 = scalar_lea.vmem %s0, 68
  %v93 = vld [vmem:[%s92] ss:$8 sm:$0xf0]
  %vm94 = vcmask 1047556
  %v95 = vsel %vm94, %v93, %v91
  %96 = vrot.lane.b32.xlu0 %v95, 64
  %v97 = vpop.permute.xlu0 %96
  %vm98 = vcmask 654848
  %s99 = scalar_lea.vmem %s1, 8
  %100 = vst.msk [vmem:[%s99] sm:$0xff] %vm98, %v97
  %s101 = scalar_lea.vmem %s0, 3
  %v102 = vld [vmem:[%s101] ss:$8 sm:$0xf]
  %s103 = scalar_lea.vmem %s0, 3
  %v104 = vld [vmem:[%s103] ss:$8 sm:$0xf0]
  %vm105 = vcmask 1047556
  %v106 = vsel %vm105, %v104, %v102
  %107 = vrot.lane.b32.xlu0 %v106, 48
  %v108 = vpop.permute.xlu0 %107
  %vm109 = vcmask 523648
  %110 = vst.msk [vmem:[%s1] sm:$0xff] %vm109, %v108
  %s111 = scalar_lea.vmem %s0, 67
  %v112 = vld [vmem:[%s111] ss:$8 sm:$0xf]
  %s113 = scalar_lea.vmem %s0, 67
  %v114 = vld [vmem:[%s113] ss:$8 sm:$0xf0]
  %vm115 = vcmask 1047556
  %v116 = vsel %vm115, %v114, %v112
  %117 = vrot.lane.b32.xlu0 %v116, 48
  %v118 = vpop.permute.xlu0 %117
  %vm119 = vcmask 523648
  %s120 = scalar_lea.vmem %s1, 8
  %121 = vst.msk [vmem:[%s120] sm:$0xff] %vm119, %v118
  %s122 = scalar_lea.vmem %s0, 2
  %v123 = vld [vmem:[%s122] ss:$8 sm:$0xf]
  %s124 = scalar_lea.vmem %s0, 2
  %v125 = vld [vmem:[%s124] ss:$8 sm:$0xf0]
  %vm126 = vcmask 1047556
  %v127 = vsel %vm126, %v125, %v123
  %128 = vrot.lane.b32.xlu0 %v127, 32
  %v129 = vpop.permute.xlu0 %128
  %vm130 = vcmask 392448
  %131 = vst.msk [vmem:[%s1] sm:$0xff] %vm130, %v129
  %s132 = scalar_lea.vmem %s0, 66
  %v133 = vld [vmem:[%s132] ss:$8 sm:$0xf]
  %s134 = scalar_lea.vmem %s0, 66
  %v135 = vld [vmem:[%s134] ss:$8 sm:$0xf0]
  %vm136 = vcmask 1047556
  %v137 = vsel %vm136, %v135, %v133
  %138 = vrot.lane.b32.xlu0 %v137, 32
  %v139 = vpop.permute.xlu0 %138
  %vm140 = vcmask 392448
  %s141 = scalar_lea.vmem %s1, 8
  %142 = vst.msk [vmem:[%s141] sm:$0xff] %vm140, %v139
  %s143 = scalar_lea.vmem %s0, 1
  %v144 = vld [vmem:[%s143] ss:$8 sm:$0xf]
  %s145 = scalar_lea.vmem %s0, 1
  %v146 = vld [vmem:[%s145] ss:$8 sm:$0xf0]
  %vm147 = vcmask 1047556
  %v148 = vsel %vm147, %v146, %v144
  %149 = vrot.lane.b32.xlu0 %v148, 16
  %v150 = vpop.permute.xlu0 %149
  %vm151 = vcmask 261248
  %152 = vst.msk [vmem:[%s1] sm:$0xff] %vm151, %v150
  %s153 = scalar_lea.vmem %s0, 65
  %v154 = vld [vmem:[%s153] ss:$8 sm:$0xf]
  %s155 = scalar_lea.vmem %s0, 65
  %v156 = vld [vmem:[%s155] ss:$8 sm:$0xf0]
  %vm157 = vcmask 1047556
  %v158 = vsel %vm157, %v156, %v154
  %159 = vrot.lane.b32.xlu0 %v158, 16
  %v160 = vpop.permute.xlu0 %159
  %vm161 = vcmask 261248
  %s162 = scalar_lea.vmem %s1, 8
  %163 = vst.msk [vmem:[%s162] sm:$0xff] %vm161, %v160

// kernel: cnn_forward.4
$region0: #{cnn_forward.4}
  #allocation0 [shape = 'u32[]', space=smem, size = 0x4, offset = 0x4, fixed_abs, tag = 'smem constant byte address 0x4 - core index']
  #allocation1 [shape = 'u32[144,128]{1,0:T(1,128)}', space=vmem, size = 0x12000, scoped, tag = 'internal scratch']
  %s0 = inlined_call_operand.vmem [shape: f32[2,18,54], index: 0, kind: input, shape index: {}]
  %s1 = inlined_call_operand.vmem [shape: f32[9,48,128], index: 1, kind: input, shape index: {}]
  %s2 = inlined_call_operand.vmem [shape: f32[1,128], index: 2, kind: input, shape index: {}]
  %s3 = inlined_call_operand.vmem [shape: f32[1,8], index: 3, kind: input, shape index: {}]
  %s4 = inlined_call_operand.vmem [shape: f32[1,8], index: 4, kind: input, shape index: {}]
  %s5 = inlined_call_operand.vmem [shape: f32[128,8], index: 5, kind: input, shape index: {}]
  %s6 = inlined_call_operand.vmem [shape: f32[8,128], index: 6, kind: input, shape index: {}]
  %s7 = inlined_call_operand.vmem [shape: f32[128,64], index: 7, kind: input, shape index: {}]
  %s8 = inlined_call_operand.vmem [shape: f32[128,64], index: 8, kind: input, shape index: {}]
  %s9 = inlined_call_operand.vmem [shape: f32[8,16], index: 9, kind: input, shape index: {}]
  %s10 = inlined_call_operand.vmem [shape: f32[8,16], index: 10, kind: input, shape index: {}]
  %s11 = inlined_call_operand.vmem [shape: f32[10,8], index: 11, kind: input, shape index: {}]
  %s12 = inlined_call_operand.vmem [shape: f32[64,80], index: 12, kind: input, shape index: {}]
  %s13 = inlined_call_operand.vmem [shape: f32[2,10,80], index: 13, kind: output, shape index: {}]
  %s14 = sld [smem:[#allocation0]]
  $region62: #{cnn_forward.4} parent=0
    _
  %s16 = ssub.s32 1, %s14
  %s17 = scalar_select 0, %s16, %s14
  // Predicated region
  $region2: #{cnn_forward.4} parent=0 // pred_check
    _
  $region3: #{cnn_forward.4} parent=0 // pred_check_branch
    %19 = sbr.rel (0) target = $region5
  $region4: #{cnn_forward.4} parent=0 // pred_region
    _
  $region5: #{cnn_forward.4} parent=0 // pred_fallthru
    _
  // Predicated region
  $region6: #{cnn_forward.4} parent=0 // pred_check
    _
  $region7: #{cnn_forward.4} parent=0 // pred_check_branch
    %21 = sbr.rel (0) target = $region9
  $region8: #{cnn_forward.4} parent=0 // pred_region
    _
  $region9: #{cnn_forward.4} parent=0 // pred_fallthru
    _
  // Predicated region
  $region10: #{cnn_forward.4} parent=0 // pred_check
    _
  $region11: #{cnn_forward.4} parent=0 // pred_check_branch
    %23 = sbr.rel (0) target = $region13
  $region12: #{cnn_forward.4} parent=0 // pred_region
    _
  $region13: #{cnn_forward.4} parent=0 // pred_fallthru
    _
  // Predicated region
  $region14: #{cnn_forward.4} parent=0 // pred_check
    _
  $region15: #{cnn_forward.4} parent=0 // pred_check_branch
    %25 = sbr.rel (0) target = $region17
  $region16: #{cnn_forward.4} parent=0 // pred_region
    _
  $region17: #{cnn_forward.4} parent=0 // pred_fallthru
    _
  // Predicated region
  $region18: #{cnn_forward.4} parent=0 // pred_check
    _
  $region19: #{cnn_forward.4} parent=0 // pred_check_branch
    %27 = sbr.rel (0) target = $region21
  $region20: #{cnn_forward.4} parent=0 // pred_region
    _
  $region21: #{cnn_forward.4} parent=0 // pred_fallthru
    _
  // Predicated region
  $region22: #{cnn_forward.4} parent=0 // pred_check
    _
  $region23: #{cnn_forward.4} parent=0 // pred_check_branch
    %29 = sbr.rel (0) target = $region25
  $region24: #{cnn_forward.4} parent=0 // pred_region
    _
  $region25: #{cnn_forward.4} parent=0 // pred_fallthru
    _
  // Predicated region
  $region26: #{cnn_forward.4} parent=0 // pred_check
    _
  $region27: #{cnn_forward.4} parent=0 // pred_check_branch
    %31 = sbr.rel (0) target = $region29
  $region28: #{cnn_forward.4} parent=0 // pred_region
    _
  $region29: #{cnn_forward.4} parent=0 // pred_fallthru
    _
  // Predicated region
  $region30: #{cnn_forward.4} parent=0 // pred_check
    _
  $region31: #{cnn_forward.4} parent=0 // pred_check_branch
    %33 = sbr.rel (0) target = $region33
  $region32: #{cnn_forward.4} parent=0 // pred_region
    _
  $region33: #{cnn_forward.4} parent=0 // pred_fallthru
    _
  // Predicated region
  $region34: #{cnn_forward.4} parent=0 // pred_check
    _
  $region35: #{cnn_forward.4} parent=0 // pred_check_branch
    %35 = sbr.rel (0) target = $region37
  $region36: #{cnn_forward.4} parent=0 // pred_region
    _
  $region37: #{cnn_forward.4} parent=0 // pred_fallthru
    _
  // Predicated region
  $region38: #{cnn_forward.4} parent=0 // pred_check
    _
  $region39: #{cnn_forward.4} parent=0 // pred_check_branch
    %37 = sbr.rel (0) target = $region41
  $region40: #{cnn_forward.4} parent=0 // pred_region
    _
  $region41: #{cnn_forward.4} parent=0 // pred_fallthru
    _
  // Predicated region
  $region42: #{cnn_forward.4} parent=0 // pred_check
    _
  $region43: #{cnn_forward.4} parent=0 // pred_check_branch
    %39 = sbr.rel (0) target = $region45
  $region44: #{cnn_forward.4} parent=0 // pred_region
    _
  $region45: #{cnn_forward.4} parent=0 // pred_fallthru
    _
  // Predicated region
  $region46: #{cnn_forward.4} parent=0 // pred_check
    _
  $region47: #{cnn_forward.4} parent=0 // pred_check_branch
    %41 = sbr.rel (0) target = $region49
  $region48: #{cnn_forward.4} parent=0 // pred_region
    _
  $region49: #{cnn_forward.4} parent=0 // pred_fallthru
    _
  // Predicated region
  $region50: #{cnn_forward.4} parent=0 // pred_check
    _
  $region51: #{cnn_forward.4} parent=0 // pred_check_branch
    %43 = sbr.rel (0) target = $region53
  $region52: #{cnn_forward.4} parent=0 // pred_region
    _
  $region53: #{cnn_forward.4} parent=0 // pred_fallthru
    _
  %v44 = vld [vmem:[%s0] sm:$0xff]
  %v45 = vld [vmem:[%s0 + $0x8] sm:$0xff]
  %v46 = vld [vmem:[%s1] sm:$0xff]
  %v47 = vld [vmem:[%s1 + $0x8] sm:$0xff]
  %v48 = vld [vmem:[%s1 + $0x10] sm:$0xff]
  %v49 = vld [vmem:[%s1 + $0x18] sm:$0xff]
  %v50 = vld [vmem:[%s1 + $0x20] sm:$0xff]
  %v51 = vld [vmem:[%s1 + $0x28] sm:$0xff]
  %s52 = scalar_lea.vmem %s1, 48
  %v53 = vld [vmem:[%s52] sm:$0xff]
  %v54 = vld [vmem:[%s52 + $0x8] sm:$0xff]
  %v55 = vld [vmem:[%s52 + $0x10] sm:$0xff]
  %v56 = vld [vmem:[%s52 + $0x18] sm:$0xff]
  %v57 = vld [vmem:[%s52 + $0x20] sm:$0xff]
  %v58 = vld [vmem:[%s52 + $0x28] sm:$0xff]
  %61 = vrot.lane.b32.xlu0 %v44, 125
  %v62 = vpop.permute.xlu0 %61
  %63 = vrot.lane.b32.xlu0 %v45, 125
  %v64 = vpop.permute.xlu0 %63
  %vm65 = vcmask 392192
  %v66 = vsel %vm65, %v62, 0
  %v68 = vsel %vm65, %v64, 0
  %70 = vmatprep.subr.mxu0 0.0
  %71 = vmatpush1.msra.mxu0 0.0
  %72 = vmatprep.subr.mxu0 0.0
  %73 = vmatpush1.msra.mxu0 0.0
  %74 = vmatprep.subr.mxu0 0.0
  %75 = vmatpush1.msra.mxu0 0.0
  %76 = vmatprep.subr.mxu0 0.0
  %77 = vmatpush1.msra.mxu0 0.0
  %78 = vmatprep.subr.mxu0 0.0
  %79 = vmatpush1.msra.mxu0 0.0
  %80 = vmatprep.subr.mxu0 0.0
  %81 = vmatpush1.msra.mxu0 0.0
  %82 = vmatprep.subr.mxu0 0.0
  %83 = vmatpush1.msra.mxu0 0.0
  %84 = vmatprep.subr.mxu0 0.0
  %85 = vmatpush1.msra.mxu0 0.0
  %86 = vmatprep.subr.mxu0 0.0
  %87 = vmatpush1.msra.mxu0 0.0
  %88 = vmatprep.subr.mxu0 0.0
  %89 = vmatpush1.msra.mxu0 0.0
  %90 = vmatprep.subr.mxu0 0.0
  %91 = vmatpush1.msra.mxu0 %v58
  %92 = vmatprep.subr.mxu0 0.0
  %93 = vmatpush1.msra.mxu0 %v57
  %94 = vmatprep.subr.mxu0 0.0
  %95 = vmatpush1.msra.mxu0 %v56
  %96 = vmatprep.subr.mxu0 0.0
  %97 = vmatpush1.msra.mxu0 %v55
  %98 = vmatprep.subr.mxu0 0.0
  %99 = vmatpush1.msra.mxu0 %v54
  %100 = vmatprep.subr.mxu0 0.0
  %101 = vmatpush1.msra.mxu0 %v53
  %102 = vmatprep.subr.mxu0 0.0
  %103 = vmatpush2.msra.mxu0 0.0
  %104 = vmatprep.subr.mxu0 0.0
  %105 = vmatpush2.msra.mxu0 0.0
  %106 = vmatprep.subr.mxu0 0.0
  %107 = vmatpush2.msra.mxu0 0.0
  %108 = vmatprep.subr.mxu0 0.0
  %109 = vmatpush2.msra.mxu0 0.0
  %110 = vmatprep.subr.mxu0 0.0
  %111 = vmatpush2.msra.mxu0 0.0
  %112 = vmatprep.subr.mxu0 0.0
  %113 = vmatpush2.msra.mxu0 0.0
  %114 = vmatprep.subr.mxu0 0.0
  %115 = vmatpush2.msra.mxu0 0.0
  %116 = vmatprep.subr.mxu0 0.0
  %117 = vmatpush2.msra.mxu0 0.0
  %118 = vmatprep.subr.mxu0 0.0
  %119 = vmatpush2.msra.mxu0 0.0
  %120 = vmatprep.subr.mxu0 0.0
  %121 = vmatpush2.msra.mxu0 0.0
  %122 = vmatprep.subr.mxu0 0.0
  %123 = vmatpush2.msra.mxu0 0.0
  %124 = vmatprep.subr.mxu0 0.0
  %125 = vmatpush2.msra.mxu0 0.0
  %126 = vmatprep.subr.mxu0 0.0
  %127 = vmatpush2.msra.mxu0 0.0
  %128 = vmatprep.subr.mxu0 0.0
  %129 = vmatpush2.msra.mxu0 0.0
  %130 = vmatprep.subr.mxu0 0.0
  %131 = vmatpush2.msra.mxu0 0.0
  %132 = vmatprep.subr.mxu0 0.0
  %133 = vmatpush2.msra.mxu0 0.0
  %134 = vmatprep.mubr.f32.mxu0 0.0
  %135 = vmatmul.mubr.f32.gmra.mxu0 %v66
  %v136 = vpop.f32.mrf.mxu0
  %v137 = vadd.f32 0.0, %v136
  %v138 = vpop.f32.mrf.mxu0
  %139 = vmatprep.mubr.f32.mxu0 0.0
  %140 = vmatmul.mubr.f32.gmra.mxu0 %v68
  %v141 = vpop.f32.mrf.mxu0
  %v142 = vadd.f32 0.0, %v141
  %v143 = vpop.f32.mrf.mxu0
  %144 = vdwg.mxu0
  %v145 = vsel %vm65, %v44, 0
  %v147 = vsel %vm65, %v45, 0
  %149 = vmatprep.subr.mxu0 0.0
  %150 = vmatpush1.msra.mxu0 0.0
  %151 = vmatprep.subr.mxu0 0.0
  %152 = vmatpush1.msra.mxu0 0.0
  %153 = vmatprep.subr.mxu0 0.0
  %154 = vmatpush1.msra.mxu0 0.0
  %155 = vmatprep.subr.mxu0 0.0
  %156 = vmatpush1.msra.mxu0 0.0
  %157 = vmatprep.subr.mxu0 0.0
  %158 = vmatpush1.msra.mxu0 0.0
  %159 = vmatprep.subr.mxu0 0.0
  %160 = vmatpush1.msra.mxu0 0.0
  %161 = vmatprep.subr.mxu0 0.0
  %162 = vmatpush1.msra.mxu0 0.0
  %163 = vmatprep.subr.mxu0 0.0
  %164 = vmatpush1.msra.mxu0 0.0
  %165 = vmatprep.subr.mxu0 0.0
  %166 = vmatpush1.msra.mxu0 0.0
  %167 = vmatprep.subr.mxu0 0.0
  %168 = vmatpush1.msra.mxu0 0.0
  %169 = vmatprep.subr.mxu0 0.0
  %170 = vmatpush1.msra.mxu0 %v51
  %171 = vmatprep.subr.mxu0 0.0
  %172 = vmatpush1.msra.mxu0 %v50
  %173 = vmatprep.subr.mxu0 0.0
  %174 = vmatpush1.msra.mxu0 %v49
  %175 = vmatprep.subr.mxu0 0.0
  %176 = vmatpush1.msra.mxu0 %v48
  %177 = vmatprep.subr.mxu0 0.0
  %178 = vmatpush1.msra.mxu0 %v47
  %179 = vmatprep.subr.mxu0 0.0
  %180 = vmatpush1.msra.mxu0 %v46
  %181 = vmatprep.subr.mxu0 0.0
  %182 = vmatpush2.msra.mxu0 0.0
  %183 = vmatprep.subr.mxu0 0.0
  %184 = vmatpush2.msra.mxu0 0.0
  %185 = vmatprep.subr.mxu0 0.0
  %186 = vmatpush2.msra.mxu0 0.0
  %187 = vmatprep.subr.mxu0 0.0
  %188 = vmatpush2.msra.mxu0 0.0
  %189 = vmatprep.subr.mxu0 0.0
  %190 = vmatpush2.msra.mxu0 0.0
  %191 = vmatprep.subr.mxu0 0.0
  %192 = vmatpush2.msra.mxu0 0.0
  %193 = vmatprep.subr.mxu0 0.0
  %194 = vmatpush2.msra.mxu0 0.0
  %195 = vmatprep.subr.mxu0 0.0
  %196 = vmatpush2.msra.mxu0 0.0
  %197 = vmatprep.subr.mxu0 0.0
  %198 = vmatpush2.msra.mxu0 0.0
  %199 = vmatprep.subr.mxu0 0.0
  %200 = vmatpush2.msra.mxu0 0.0
  %201 = vmatprep.subr.mxu0 0.0
  %202 = vmatpush2.msra.mxu0 0.0
  %203 = vmatprep.subr.mxu0 0.0
  %204 = vmatpush2.msra.mxu0 0.0
  %205 = vmatprep.subr.mxu0 0.0
  %206 = vmatpush2.msra.mxu0 0.0
  %207 = vmatprep.subr.mxu0 0.0
  %208 = vmatpush2.msra.mxu0 0.0
  %209 = vmatprep.subr.mxu0 0.0
  %210 = vmatpush2.msra.mxu0 0.0
  %211 = vmatprep.subr.mxu0 0.0
  %212 = vmatpush2.msra.mxu0 0.0
  %213 = vmatprep.mubr.f32.mxu0 0.0
  %214 = vmatmul.mubr.f32.gmra.mxu0 %v145
  %v215 = vpop.f32.mrf.mxu0
  %v216 = vadd.f32 %v137, %v215
  %v217 = vpop.f32.mrf.mxu0
  %218 = vmatprep.mubr.f32.mxu0 0.0
  %219 = vmatmul.mubr.f32.gmra.mxu0 %v147
  %v220 = vpop.f32.mrf.mxu0
  %v221 = vadd.f32 %v142, %v220
  %v222 = vpop.f32.mrf.mxu0
  %223 = vdwg.mxu0
  %s224 = scalar_lea.vmem %s1, 96
  %v225 = vld [vmem:[%s224] sm:$0xff]
  %v226 = vld [vmem:[%s224 + $0x8] sm:$0xff]
  %v227 = vld [vmem:[%s224 + $0x10] sm:$0xff]
  %v228 = vld [vmem:[%s224 + $0x18] sm:$0xff]
  %v229 = vld [vmem:[%s224 + $0x20] sm:$0xff]
  %v230 = vld [vmem:[%s224 + $0x28] sm:$0xff]
  %231 = vrot.lane.b32.xlu0 %v44, 122
  %v232 = vpop.permute.xlu0 %231
  %233 = vrot.lane.b32.xlu0 %v45, 122
  %v234 = vpop.permute.xlu0 %233
  %v235 = vsel %vm65, %v232, 0
  %v237 = vsel %vm65, %v234, 0
  %239 = vmatprep.subr.mxu0 0.0
  %240 = vmatpush1.msra.mxu0 0.0
  %241 = vmatprep.subr.mxu0 0.0
  %242 = vmatpush1.msra.mxu0 0.0
  %243 = vmatprep.subr.mxu0 0.0
  %244 = vmatpush1.msra.mxu0 0.0
  %245 = vmatprep.subr.mxu0 0.0
  %246 = vmatpush1.msra.mxu0 0.0
  %247 = vmatprep.subr.mxu0 0.0
  %248 = vmatpush1.msra.mxu0 0.0
  %249 = vmatprep.subr.mxu0 0.0
  %250 = vmatpush1.msra.mxu0 0.0
  %251 = vmatprep.subr.mxu0 0.0
  %252 = vmatpush1.msra.mxu0 0.0
  %253 = vmatprep.subr.mxu0 0.0
  %254 = vmatpush1.msra.mxu0 0.0
  %255 = vmatprep.subr.mxu0 0.0
  %256 = vmatpush1.msra.mxu0 0.0
  %257 = vmatprep.subr.mxu0 0.0
  %258 = vmatpush1.msra.mxu0 0.0
  %259 = vmatprep.subr.mxu0 0.0
  %260 = vmatpush1.msra.mxu0 %v230
  %261 = vmatprep.subr.mxu0 0.0
  %262 = vmatpush1.msra.mxu0 %v229
  %263 = vmatprep.subr.mxu0 0.0
  %264 = vmatpush1.msra.mxu0 %v228
  %265 = vmatprep.subr.mxu0 0.0
  %266 = vmatpush1.msra.mxu0 %v227
  %267 = vmatprep.subr.mxu0 0.0
  %268 = vmatpush1.msra.mxu0 %v226
  %269 = vmatprep.subr.mxu0 0.0
  %270 = vmatpush1.msra.mxu0 %v225
  %271 = vmatprep.subr.mxu0 0.0
  %272 = vmatpush2.msra.mxu0 0.0
  %273 = vmatprep.subr.mxu0 0.0
  %274 = vmatpush2.msra.mxu0 0.0
  %275 = vmatprep.subr.mxu0 0.0
  %276 = vmatpush2.msra.mxu0 0.0
  %277 = vmatprep.subr.mxu0 0.0
  %278 = vmatpush2.msra.mxu0 0.0
  %279 = vmatprep.subr.mxu0 0.0
  %280 = vmatpush2.msra.mxu0 0.0
  %281 = vmatprep.subr.mxu0 0.0
  %282 = vmatpush2.msra.mxu0 0.0
  %283 = vmatprep.subr.mxu0 0.0
  %284 = vmatpush2.msra.mxu0 0.0
  %285 = vmatprep.subr.mxu0 0.0
  %286 = vmatpush2.msra.mxu0 0.0
  %287 = vmatprep.subr.mxu0 0.0
  %288 = vmatpush2.msra.mxu0 0.0
  %289 = vmatprep.subr.mxu0 0.0
  %290 = vmatpush2.msra.mxu0 0.0
  %291 = vmatprep.subr.mxu0 0.0
  %292 = vmatpush2.msra.mxu0 0.0
  %293 = vmatprep.subr.mxu0 0.0
  %294 = vmatpush2.msra.mxu0 0.0
  %295 = vmatprep.subr.mxu0 0.0
  %296 = vmatpush2.msra.mxu0 0.0
  %297 = vmatprep.subr.mxu0 0.0
  %298 = vmatpush2.msra.mxu0 0.0
  %299 = vmatprep.subr.mxu0 0.0
  %300 = vmatpush2.msra.mxu0 0.0
  %301 = vmatprep.subr.mxu0 0.0
  %302 = vmatpush2.msra.mxu0 0.0
  %303 = vmatprep.mubr.f32.mxu0 0.0
  %304 = vmatmul.mubr.f32.gmra.mxu0 %v235
  %v305 = vpop.f32.mrf.mxu0
  %v306 = vadd.f32 0.0, %v305
  %v307 = vpop.f32.mrf.mxu0
  %308 = vmatprep.mubr.f32.mxu0 0.0
  %309 = vmatmul.mubr.f32.gmra.mxu0 %v237
  %v310 = vpop.f32.mrf.mxu0
  %v311 = vadd.f32 0.0, %v310
  %v312 = vpop.f32.mrf.mxu0
  %313 = vdwg.mxu0
  %v314 = vadd.f32 %v216, %v306
  %v315 = vadd.f32 %v221, %v311
  %v316 = vld [vmem:[%s0 + $0x1] sm:$0xff]
  %v317 = vld [vmem:[%s0 + $0x9] sm:$0xff]
  %s318 = scalar_lea.vmem %s1, 144
  %v319 = vld [vmem:[%s318] sm:$0xff]
  %v320 = vld [vmem:[%s318 + $0x8] sm:$0xff]
  %v321 = vld [vmem:[%s318 + $0x10] sm:$0xff]
  %v322 = vld [vmem:[%s318 + $0x18] sm:$0xff]
  %v323 = vld [vmem:[%s318 + $0x20] sm:$0xff]
  %v324 = vld [vmem:[%s318 + $0x28] sm:$0xff]
  %v326 = vsel %vm65, %v316, 0
  %v329 = vsel %vm65, %v317, 0
  %331 = vmatprep.subr.mxu0 0.0
  %332 = vmatpush1.msra.mxu0 0.0
  %333 = vmatprep.subr.mxu0 0.0
  %334 = vmatpush1.msra.mxu0 0.0
  %335 = vmatprep.subr.mxu0 0.0
  %336 = vmatpush1.msra.mxu0 0.0
  %337 = vmatprep.subr.mxu0 0.0
  %338 = vmatpush1.msra.mxu0 0.0
  %339 = vmatprep.subr.mxu0 0.0
  %340 = vmatpush1.msra.mxu0 0.0
  %341 = vmatprep.subr.mxu0 0.0
  %342 = vmatpush1.msra.mxu0 0.0
  %343 = vmatprep.subr.mxu0 0.0
  %344 = vmatpush1.msra.mxu0 0.0
  %345 = vmatprep.subr.mxu0 0.0
  %346 = vmatpush1.msra.mxu0 0.0
  %347 = vmatprep.subr.mxu0 0.0
  %348 = vmatpush1.msra.mxu0 0.0
  %349 = vmatprep.subr.mxu0 0.0
  %350 = vmatpush1.msra.mxu0 0.0
  %351 = vmatprep.subr.mxu0 0.0
  %352 = vmatpush1.msra.mxu0 %v324
  %353 = vmatprep.subr.mxu0 0.0
  %354 = vmatpush1.msra.mxu0 %v323
  %355 = vmatprep.subr.mxu0 0.0
  %356 = vmatpush1.msra.mxu0 %v322
  %357 = vmatprep.subr.mxu0 0.0
  %358 = vmatpush1.msra.mxu0 %v321
  %359 = vmatprep.subr.mxu0 0.0
  %360 = vmatpush1.msra.mxu0 %v320
  %361 = vmatprep.subr.mxu0 0.0
  %362 = vmatpush1.msra.mxu0 %v319
  %363 = vmatprep.subr.mxu0 0.0
  %364 = vmatpush2.msra.mxu0 0.0
  %365 = vmatprep.subr.mxu0 0.0
  %366 = vmatpush2.msra.mxu0 0.0
  %367 = vmatprep.subr.mxu0 0.0
  %368 = vmatpush2.msra.mxu0 0.0
  %369 = vmatprep.subr.mxu0 0.0
  %370 = vmatpush2.msra.mxu0 0.0
  %371 = vmatprep.subr.mxu0 0.0
  %372 = vmatpush2.msra.mxu0 0.0
  %373 = vmatprep.subr.mxu0 0.0
  %374 = vmatpush2.msra.mxu0 0.0
  %375 = vmatprep.subr.mxu0 0.0
  %376 = vmatpush2.msra.mxu0 0.0
  %377 = vmatprep.subr.mxu0 0.0
  %378 = vmatpush2.msra.mxu0 0.0
  %379 = vmatprep.subr.mxu0 0.0
  %380 = vmatpush2.msra.mxu0 0.0
  %381 = vmatprep.subr.mxu0 0.0
  %382 = vmatpush2.msra.mxu0 0.0
  %383 = vmatprep.subr.mxu0 0.0
  %384 = vmatpush2.msra.mxu0 0.0
  %385 = vmatprep.subr.mxu0 0.0
  %386 = vmatpush2.msra.mxu0 0.0
  %387 = vmatprep.subr.mxu0 0.0
  %388 = vmatpush2.msra.mxu0 0.0
  %389 = vmatprep.subr.mxu0 0.0
  %390 = vmatpush2.msra.mxu0 0.0
  %391 = vmatprep.subr.mxu0 0.0
  %392 = vmatpush2.msra.mxu0 0.0
  %393 = vmatprep.subr.mxu0 0.0
  %394 = vmatpush2.msra.mxu0 0.0
  %395 = vmatprep.mubr.f32.mxu0 0.0
  %396 = vmatmul.mubr.f32.gmra.mxu0 %v326
  %v397 = vpop.f32.mrf.mxu0
  %v398 = vadd.f32 0.0, %v397
  %v399 = vpop.f32.mrf.mxu0
  %400 = vmatprep.mubr.f32.mxu0 0.0
  %401 = vmatmul.mubr.f32.gmra.mxu0 %v329
  %v402 = vpop.f32.mrf.mxu0
  %v403 = vadd.f32 0.0, %v402
  %v404 = vpop.f32.mrf.mxu0
  %405 = vdwg.mxu0
  %v406 = vadd.f32 %v314, %v398
  %v407 = vadd.f32 %v315, %v403
  %s408 = scalar_lea.vmem %s1, 192
  %v409 = vld [vmem:[%s408] sm:$0xff]
  %v410 = vld [vmem:[%s408 + $0x8] sm:$0xff]
  %v411 = vld [vmem:[%s408 + $0x10] sm:$0xff]
  %v412 = vld [vmem:[%s408 + $0x18] sm:$0xff]
  %v413 = vld [vmem:[%s408 + $0x20] sm:$0xff]
  %v414 = vld [vmem:[%s408 + $0x28] sm:$0xff]
  %415 = vrot.lane.b32.xlu0 %v316, 125
  %v416 = vpop.permute.xlu0 %415
  %417 = vrot.lane.b32.xlu0 %v317, 125
  %v418 = vpop.permute.xlu0 %417
  %v419 = vsel %vm65, %v416, 0
  %v421 = vsel %vm65, %v418, 0
  %423 = vmatprep.subr.mxu0 0.0
  %424 = vmatpush1.msra.mxu0 0.0
  %425 = vmatprep.subr.mxu0 0.0
  %426 = vmatpush1.msra.mxu0 0.0
  %427 = vmatprep.subr.mxu0 0.0
  %428 = vmatpush1.msra.mxu0 0.0
  %429 = vmatprep.subr.mxu0 0.0
  %430 = vmatpush1.msra.mxu0 0.0
  %431 = vmatprep.subr.mxu0 0.0
  %432 = vmatpush1.msra.mxu0 0.0
  %433 = vmatprep.subr.mxu0 0.0
  %434 = vmatpush1.msra.mxu0 0.0
  %435 = vmatprep.subr.mxu0 0.0
  %436 = vmatpush1.msra.mxu0 0.0
  %437 = vmatprep.subr.mxu0 0.0
  %438 = vmatpush1.msra.mxu0 0.0
  %439 = vmatprep.subr.mxu0 0.0
  %440 = vmatpush1.msra.mxu0 0.0
  %441 = vmatprep.subr.mxu0 0.0
  %442 = vmatpush1.msra.mxu0 0.0
  %443 = vmatprep.subr.mxu0 0.0
  %444 = vmatpush1.msra.mxu0 %v414
  %445 = vmatprep.subr.mxu0 0.0
  %446 = vmatpush1.msra.mxu0 %v413
  %447 = vmatprep.subr.mxu0 0.0
  %448 = vmatpush1.msra.mxu0 %v412
  %449 = vmatprep.subr.mxu0 0.0
  %450 = vmatpush1.msra.mxu0 %v411
  %451 = vmatprep.subr.mxu0 0.0
  %452 = vmatpush1.msra.mxu0 %v410
  %453 = vmatprep.subr.mxu0 0.0
  %454 = vmatpush1.msra.mxu0 %v409
  %455 = vmatprep.subr.mxu0 0.0
  %456 = vmatpush2.msra.mxu0 0.0
  %457 = vmatprep.subr.mxu0 0.0
  %458 = vmatpush2.msra.mxu0 0.0
  %459 = vmatprep.subr.mxu0 0.0
  %460 = vmatpush2.msra.mxu0 0.0
  %461 = vmatprep.subr.mxu0 0.0
  %462 = vmatpush2.msra.mxu0 0.0
  %463 = vmatprep.subr.mxu0 0.0
  %464 = vmatpush2.msra.mxu0 0.0
  %465 = vmatprep.subr.mxu0 0.0
  %466 = vmatpush2.msra.mxu0 0.0
  %467 = vmatprep.subr.mxu0 0.0
  %468 = vmatpush2.msra.mxu0 0.0
  %469 = vmatprep.subr.mxu0 0.0
  %470 = vmatpush2.msra.mxu0 0.0
  %471 = vmatprep.subr.mxu0 0.0
  %472 = vmatpush2.msra.mxu0 0.0
  %473 = vmatprep.subr.mxu0 0.0
  %474 = vmatpush2.msra.mxu0 0.0
  %475 = vmatprep.subr.mxu0 0.0
  %476 = vmatpush2.msra.mxu0 0.0
  %477 = vmatprep.subr.mxu0 0.0
  %478 = vmatpush2.msra.mxu0 0.0
  %479 = vmatprep.subr.mxu0 0.0
  %480 = vmatpush2.msra.mxu0 0.0
  %481 = vmatprep.subr.mxu0 0.0
  %482 = vmatpush2.msra.mxu0 0.0
  %483 = vmatprep.subr.mxu0 0.0
  %484 = vmatpush2.msra.mxu0 0.0
  %485 = vmatprep.subr.mxu0 0.0
  %486 = vmatpush2.msra.mxu0 0.0
  %487 = vmatprep.mubr.f32.mxu0 0.0
  %488 = vmatmul.mubr.f32.gmra.mxu0 %v419
  %v489 = vpop.f32.mrf.mxu0
  %v490 = vadd.f32 0.0, %v489
  %v491 = vpop.f32.mrf.mxu0
  %492 = vmatprep.mubr.f32.mxu0 0.0
  %493 = vmatmul.mubr.f32.gmra.mxu0 %v421
  %v494 = vpop.f32.mrf.mxu0
  %v495 = vadd.f32 0.0, %v494
  %v496 = vpop.f32.mrf.mxu0
  %497 = vdwg.mxu0
  %v498 = vadd.f32 %v406, %v490
  %v499 = vadd.f32 %v407, %v495
  %s500 = scalar_lea.vmem %s1, 240
  %v501 = vld [vmem:[%s500] sm:$0xff]
  %v502 = vld [vmem:[%s500 + $0x8] sm:$0xff]
  %v503 = vld [vmem:[%s500 + $0x10] sm:$0xff]
  %v504 = vld [vmem:[%s500 + $0x18] sm:$0xff]
  %v505 = vld [vmem:[%s500 + $0x20] sm:$0xff]
  %v506 = vld [vmem:[%s500 + $0x28] sm:$0xff]
  %507 = vrot.lane.b32.xlu0 %v316, 122
  %v508 = vpop.permute.xlu0 %507
  %509 = vrot.lane.b32.xlu0 %v317, 122
  %v510 = vpop.permute.xlu0 %509
  %v511 = vsel %vm65, %v508, 0
  %v513 = vsel %vm65, %v510, 0
  %515 = vmatprep.subr.mxu0 0.0
  %516 = vmatpush1.msra.mxu0 0.0
  %517 = vmatprep.subr.mxu0 0.0
  %518 = vmatpush1.msra.mxu0 0.0
  %519 = vmatprep.subr.mxu0 0.0
  %520 = vmatpush1.msra.mxu0 0.0
  %521 = vmatprep.subr.mxu0 0.0
  %522 = vmatpush1.msra.mxu0 0.0
  %523 = vmatprep.subr.mxu0 0.0
  %524 = vmatpush1.msra.mxu0 0.0
  %525 = vmatprep.subr.mxu0 0.0
  %526 = vmatpush1.msra.mxu0 0.0
  %527 = vmatprep.subr.mxu0 0.0
  %528 = vmatpush1.msra.mxu0 0.0
  %529 = vmatprep.subr.mxu0 0.0
  %530 = vmatpush1.msra.mxu0 0.0
  %531 = vmatprep.subr.mxu0 0.0
  %532 = vmatpush1.msra.mxu0 0.0
  %533 = vmatprep.subr.mxu0 0.0
  %534 = vmatpush1.msra.mxu0 0.0
  %535 = vmatprep.subr.mxu0 0.0
  %536 = vmatpush1.msra.mxu0 %v506
  %537 = vmatprep.subr.mxu0 0.0
  %538 = vmatpush1.msra.mxu0 %v505
  %539 = vmatprep.subr.mxu0 0.0
  %540 = vmatpush1.msra.mxu0 %v504
  %541 = vmatprep.subr.mxu0 0.0
  %542 = vmatpush1.msra.mxu0 %v503
  %543 = vmatprep.subr.mxu0 0.0
  %544 = vmatpush1.msra.mxu0 %v502
  %545 = vmatprep.subr.mxu0 0.0
  %546 = vmatpush1.msra.mxu0 %v501
  %547 = vmatprep.subr.mxu0 0.0
  %548 = vmatpush2.msra.mxu0 0.0
  %549 = vmatprep.subr.mxu0 0.0
  %550 = vmatpush2.msra.mxu0 0.0
  %551 = vmatprep.subr.mxu0 0.0
  %552 = vmatpush2.msra.mxu0 0.0
  %553 = vmatprep.subr.mxu0 0.0
  %554 = vmatpush2.msra.mxu0 0.0
  %555 = vmatprep.subr.mxu0 0.0
  %556 = vmatpush2.msra.mxu0 0.0
  %557 = vmatprep.subr.mxu0 0.0
  %558 = vmatpush2.msra.mxu0 0.0
  %559 = vmatprep.subr.mxu0 0.0
  %560 = vmatpush2.msra.mxu0 0.0
  %561 = vmatprep.subr.mxu0 0.0
  %562 = vmatpush2.msra.mxu0 0.0
  %563 = vmatprep.subr.mxu0 0.0
  %564 = vmatpush2.msra.mxu0 0.0
  %565 = vmatprep.subr.mxu0 0.0
  %566 = vmatpush2.msra.mxu0 0.0
  %567 = vmatprep.subr.mxu0 0.0
  %568 = vmatpush2.msra.mxu0 0.0
  %569 = vmatprep.subr.mxu0 0.0
  %570 = vmatpush2.msra.mxu0 0.0
  %571 = vmatprep.subr.mxu0 0.0
  %572 = vmatpush2.msra.mxu0 0.0
  %573 = vmatprep.subr.mxu0 0.0
  %574 = vmatpush2.msra.mxu0 0.0
  %575 = vmatprep.subr.mxu0 0.0
  %576 = vmatpush2.msra.mxu0 0.0
  %577 = vmatprep.subr.mxu0 0.0
  %578 = vmatpush2.msra.mxu0 0.0
  %579 = vmatprep.mubr.f32.mxu0 0.0
  %580 = vmatmul.mubr.f32.gmra.mxu0 %v511
  %v581 = vpop.f32.mrf.mxu0
  %v582 = vadd.f32 0.0, %v581
  %v583 = vpop.f32.mrf.mxu0
  %584 = vmatprep.mubr.f32.mxu0 0.0
  %585 = vmatmul.mubr.f32.gmra.mxu0 %v513
  %v586 = vpop.f32.mrf.mxu0
  %v587 = vadd.f32 0.0, %v586
  %v588 = vpop.f32.mrf.mxu0
  %589 = vdwg.mxu0
  %v590 = vadd.f32 %v498, %v582
  %v591 = vadd.f32 %v499, %v587
  %v592 = vld [vmem:[%s0 + $0x2] sm:$0xff]
  %v593 = vld [vmem:[%s0 + $0xa] sm:$0xff]
  %s594 = scalar_lea.vmem %s1, 288
  %v595 = vld [vmem:[%s594] sm:$0xff]
  %v596 = vld [vmem:[%s594 + $0x8] sm:$0xff]
  %v597 = vld [vmem:[%s594 + $0x10] sm:$0xff]
  %v598 = vld [vmem:[%s594 + $0x18] sm:$0xff]
  %v599 = vld [vmem:[%s594 + $0x20] sm:$0xff]
  %v600 = vld [vmem:[%s594 + $0x28] sm:$0xff]
  %v602 = vsel %vm65, %v592, 0
  %v605 = vsel %vm65, %v593, 0
  %607 = vmatprep.subr.mxu0 0.0
  %608 = vmatpush1.msra.mxu0 0.0
  %609 = vmatprep.subr.mxu0 0.0
  %610 = vmatpush1.msra.mxu0 0.0
  %611 = vmatprep.subr.mxu0 0.0
  %612 = vmatpush1.msra.mxu0 0.0
  %613 = vmatprep.subr.mxu0 0.0
  %614 = vmatpush1.msra.mxu0 0.0
  %615 = vmatprep.subr.mxu0 0.0
  %616 = vmatpush1.msra.mxu0 0.0
  %617 = vmatprep.subr.mxu0 0.0
  %618 = vmatpush1.msra.mxu0 0.0
  %619 = vmatprep.subr.mxu0 0.0
  %620 = vmatpush1.msra.mxu0 0.0
  %621 = vmatprep.subr.mxu0 0.0
  %622 = vmatpush1.msra.mxu0 0.0
  %623 = vmatprep.subr.mxu0 0.0
  %624 = vmatpush1.msra.mxu0 0.0
  %625 = vmatprep.subr.mxu0 0.0
  %626 = vmatpush1.msra.mxu0 0.0
  %627 = vmatprep.subr.mxu0 0.0
  %628 = vmatpush1.msra.mxu0 %v600
  %629 = vmatprep.subr.mxu0 0.0
  %630 = vmatpush1.msra.mxu0 %v599
  %631 = vmatprep.subr.mxu0 0.0
  %632 = vmatpush1.msra.mxu0 %v598
  %633 = vmatprep.subr.mxu0 0.0
  %634 = vmatpush1.msra.mxu0 %v597
  %635 = vmatprep.subr.mxu0 0.0
  %636 = vmatpush1.msra.mxu0 %v596
  %637 = vmatprep.subr.mxu0 0.0
  %638 = vmatpush1.msra.mxu0 %v595
  %639 = vmatprep.subr.mxu0 0.0
  %640 = vmatpush2.msra.mxu0 0.0
  %641 = vmatprep.subr.mxu0 0.0
  %642 = vmatpush2.msra.mxu0 0.0
  %643 = vmatprep.subr.mxu0 0.0
  %644 = vmatpush2.msra.mxu0 0.0
  %645 = vmatprep.subr.mxu0 0.0
  %646 = vmatpush2.msra.mxu0 0.0
  %647 = vmatprep.subr.mxu0 0.0
  %648 = vmatpush2.msra.mxu0 0.0
  %649 = vmatprep.subr.mxu0 0.0
  %650 = vmatpush2.msra.mxu0 0.0
  %651 = vmatprep.subr.mxu0 0.0
  %652 = vmatpush2.msra.mxu0 0.0
  %653 = vmatprep.subr.mxu0 0.0
  %654 = vmatpush2.msra.mxu0 0.0
  %655 = vmatprep.subr.mxu0 0.0
  %656 = vmatpush2.msra.mxu0 0.0
  %657 = vmatprep.subr.mxu0 0.0
  %658 = vmatpush2.msra.mxu0 0.0
  %659 = vmatprep.subr.mxu0 0.0
  %660 = vmatpush2.msra.mxu0 0.0
  %661 = vmatprep.subr.mxu0 0.0
  %662 = vmatpush2.msra.mxu0 0.0
  %663 = vmatprep.subr.mxu0 0.0
  %664 = vmatpush2.msra.mxu0 0.0
  %665 = vmatprep.subr.mxu0 0.0
  %666 = vmatpush2.msra.mxu0 0.0
  %667 = vmatprep.subr.mxu0 0.0
  %668 = vmatpush2.msra.mxu0 0.0
  %669 = vmatprep.subr.mxu0 0.0
  %670 = vmatpush2.msra.mxu0 0.0
  %671 = vmatprep.mubr.f32.mxu0 0.0
  %672 = vmatmul.mubr.f32.gmra.mxu0 %v602
  %v673 = vpop.f32.mrf.mxu0
  %v674 = vadd.f32 0.0, %v673
  %v675 = vpop.f32.mrf.mxu0
  %676 = vmatprep.mubr.f32.mxu0 0.0
  %677 = vmatmul.mubr.f32.gmra.mxu0 %v605
  %v678 = vpop.f32.mrf.mxu0
  %v679 = vadd.f32 0.0, %v678
  %v680 = vpop.f32.mrf.mxu0
  %681 = vdwg.mxu0
  %v682 = vadd.f32 %v590, %v674
  %v683 = vadd.f32 %v591, %v679
  %s684 = scalar_lea.vmem %s1, 336
  %v685 = vld [vmem:[%s684] sm:$0xff]
  %v686 = vld [vmem:[%s684 + $0x8] sm:$0xff]
  %v687 = vld [vmem:[%s684 + $0x10] sm:$0xff]
  %v688 = vld [vmem:[%s684 + $0x18] sm:$0xff]
  %v689 = vld [vmem:[%s684 + $0x20] sm:$0xff]
  %v690 = vld [vmem:[%s684 + $0x28] sm:$0xff]
  %691 = vrot.lane.b32.xlu0 %v592, 125
  %v692 = vpop.permute.xlu0 %691
  %693 = vrot.lane.b32.xlu0 %v593, 125
  %v694 = vpop.permute.xlu0 %693
  %v695 = vsel %vm65, %v692, 0
  %v697 = vsel %vm65, %v694, 0
  %699 = vmatprep.subr.mxu0 0.0
  %700 = vmatpush1.msra.mxu0 0.0
  %701 = vmatprep.subr.mxu0 0.0
  %702 = vmatpush1.msra.mxu0 0.0
  %703 = vmatprep.subr.mxu0 0.0
  %704 = vmatpush1.msra.mxu0 0.0
  %705 = vmatprep.subr.mxu0 0.0
  %706 = vmatpush1.msra.mxu0 0.0
  %707 = vmatprep.subr.mxu0 0.0
  %708 = vmatpush1.msra.mxu0 0.0
  %709 = vmatprep.subr.mxu0 0.0
  %710 = vmatpush1.msra.mxu0 0.0
  %711 = vmatprep.subr.mxu0 0.0
  %712 = vmatpush1.msra.mxu0 0.0
  %713 = vmatprep.subr.mxu0 0.0
  %714 = vmatpush1.msra.mxu0 0.0
  %715 = vmatprep.subr.mxu0 0.0
  %716 = vmatpush1.msra.mxu0 0.0
  %717 = vmatprep.subr.mxu0 0.0
  %718 = vmatpush1.msra.mxu0 0.0
  %719 = vmatprep.subr.mxu0 0.0
  %720 = vmatpush1.msra.mxu0 %v690
  %721 = vmatprep.subr.mxu0 0.0
  %722 = vmatpush1.msra.mxu0 %v689
  %723 = vmatprep.subr.mxu0 0.0
  %724 = vmatpush1.msra.mxu0 %v688
  %725 = vmatprep.subr.mxu0 0.0
  %726 = vmatpush1.msra.mxu0 %v687
  %727 = vmatprep.subr.mxu0 0.0
  %728 = vmatpush1.msra.mxu0 %v686
  %729 = vmatprep.subr.mxu0 0.0
  %730 = vmatpush1.msra.mxu0 %v685
  %731 = vmatprep.subr.mxu0 0.0
  %732 = vmatpush2.msra.mxu0 0.0
  %733 = vmatprep.subr.mxu0 0.0
  %734 = vmatpush2.msra.mxu0 0.0
  %735 = vmatprep.subr.mxu0 0.0
  %736 = vmatpush2.msra.mxu0 0.0
  %737 = vmatprep.subr.mxu0 0.0
  %738 = vmatpush2.msra.mxu0 0.0
  %739 = vmatprep.subr.mxu0 0.0
  %740 = vmatpush2.msra.mxu0 0.0
  %741 = vmatprep.subr.mxu0 0.0
  %742 = vmatpush2.msra.mxu0 0.0
  %743 = vmatprep.subr.mxu0 0.0
  %744 = vmatpush2.msra.mxu0 0.0
  %745 = vmatprep.subr.mxu0 0.0
  %746 = vmatpush2.msra.mxu0 0.0
  %747 = vmatprep.subr.mxu0 0.0
  %748 = vmatpush2.msra.mxu0 0.0
  %749 = vmatprep.subr.mxu0 0.0
  %750 = vmatpush2.msra.mxu0 0.0
  %751 = vmatprep.subr.mxu0 0.0
  %752 = vmatpush2.msra.mxu0 0.0
  %753 = vmatprep.subr.mxu0 0.0
  %754 = vmatpush2.msra.mxu0 0.0
  %755 = vmatprep.subr.mxu0 0.0
  %756 = vmatpush2.msra.mxu0 0.0
  %757 = vmatprep.subr.mxu0 0.0
  %758 = vmatpush2.msra.mxu0 0.0
  %759 = vmatprep.subr.mxu0 0.0
  %760 = vmatpush2.msra.mxu0 0.0
  %761 = vmatprep.subr.mxu0 0.0
  %762 = vmatpush2.msra.mxu0 0.0
  %763 = vmatprep.mubr.f32.mxu0 0.0
  %764 = vmatmul.mubr.f32.gmra.mxu0 %v695
  %v765 = vpop.f32.mrf.mxu0
  %v766 = vadd.f32 0.0, %v765
  %v767 = vpop.f32.mrf.mxu0
  %768 = vmatprep.mubr.f32.mxu0 0.0
  %769 = vmatmul.mubr.f32.gmra.mxu0 %v697
  %v770 = vpop.f32.mrf.mxu0
  %v771 = vadd.f32 0.0, %v770
  %v772 = vpop.f32.mrf.mxu0
  %773 = vdwg.mxu0
  %v774 = vadd.f32 %v682, %v766
  %v775 = vadd.f32 %v683, %v771
  %s776 = scalar_lea.vmem %s1, 384
  %v777 = vld [vmem:[%s776] sm:$0xff]
  %v778 = vld [vmem:[%s776 + $0x8] sm:$0xff]
  %v779 = vld [vmem:[%s776 + $0x10] sm:$0xff]
  %v780 = vld [vmem:[%s776 + $0x18] sm:$0xff]
  %v781 = vld [vmem:[%s776 + $0x20] sm:$0xff]
  %v782 = vld [vmem:[%s776 + $0x28] sm:$0xff]
  %783 = vrot.lane.b32.xlu0 %v592, 122
  %v784 = vpop.permute.xlu0 %783
  %785 = vrot.lane.b32.xlu0 %v593, 122
  %v786 = vpop.permute.xlu0 %785
  %v787 = vsel %vm65, %v784, 0
  %v789 = vsel %vm65, %v786, 0
  %791 = vmatprep.subr.mxu0 0.0
  %792 = vmatpush1.msra.mxu0 0.0
  %793 = vmatprep.subr.mxu0 0.0
  %794 = vmatpush1.msra.mxu0 0.0
  %795 = vmatprep.subr.mxu0 0.0
  %796 = vmatpush1.msra.mxu0 0.0
  %797 = vmatprep.subr.mxu0 0.0
  %798 = vmatpush1.msra.mxu0 0.0
  %799 = vmatprep.subr.mxu0 0.0
  %800 = vmatpush1.msra.mxu0 0.0
  %801 = vmatprep.subr.mxu0 0.0
  %802 = vmatpush1.msra.mxu0 0.0
  %803 = vmatprep.subr.mxu0 0.0
  %804 = vmatpush1.msra.mxu0 0.0
  %805 = vmatprep.subr.mxu0 0.0
  %806 = vmatpush1.msra.mxu0 0.0
  %807 = vmatprep.subr.mxu0 0.0
  %808 = vmatpush1.msra.mxu0 0.0
  %809 = vmatprep.subr.mxu0 0.0
  %810 = vmatpush1.msra.mxu0 0.0
  %811 = vmatprep.subr.mxu0 0.0
  %812 = vmatpush1.msra.mxu0 %v782
  %813 = vmatprep.subr.mxu0 0.0
  %814 = vmatpush1.msra.mxu0 %v781
  %815 = vmatprep.subr.mxu0 0.0
  %816 = vmatpush1.msra.mxu0 %v780
  %817 = vmatprep.subr.mxu0 0.0
  %818 = vmatpush1.msra.mxu0 %v779
  %819 = vmatprep.subr.mxu0 0.0
  %820 = vmatpush1.msra.mxu0 %v778
  %821 = vmatprep.subr.mxu0 0.0
  %822 = vmatpush1.msra.mxu0 %v777
  %823 = vmatprep.subr.mxu0 0.0
  %824 = vmatpush2.msra.mxu0 0.0
  %825 = vmatprep.subr.mxu0 0.0
  %826 = vmatpush2.msra.mxu0 0.0
  %827 = vmatprep.subr.mxu0 0.0
  %828 = vmatpush2.msra.mxu0 0.0
  %829 = vmatprep.subr.mxu0 0.0
  %830 = vmatpush2.msra.mxu0 0.0
  %831 = vmatprep.subr.mxu0 0.0
  %832 = vmatpush2.msra.mxu0 0.0
  %833 = vmatprep.subr.mxu0 0.0
  %834 = vmatpush2.msra.mxu0 0.0
  %835 = vmatprep.subr.mxu0 0.0
  %836 = vmatpush2.msra.mxu0 0.0
  %837 = vmatprep.subr.mxu0 0.0
  %838 = vmatpush2.msra.mxu0 0.0
  %839 = vmatprep.subr.mxu0 0.0
  %840 = vmatpush2.msra.mxu0 0.0
  %841 = vmatprep.subr.mxu0 0.0
  %842 = vmatpush2.msra.mxu0 0.0
  %843 = vmatprep.subr.mxu0 0.0
  %844 = vmatpush2.msra.mxu0 0.0
  %845 = vmatprep.subr.mxu0 0.0
  %846 = vmatpush2.msra.mxu0 0.0
  %847 = vmatprep.subr.mxu0 0.0
  %848 = vmatpush2.msra.mxu0 0.0
  %849 = vmatprep.subr.mxu0 0.0
  %850 = vmatpush2.msra.mxu0 0.0
  %851 = vmatprep.subr.mxu0 0.0
  %852 = vmatpush2.msra.mxu0 0.0
  %853 = vmatprep.subr.mxu0 0.0
  %854 = vmatpush2.msra.mxu0 0.0
  %855 = vmatprep.mubr.f32.mxu0 0.0
  %856 = vmatmul.mubr.f32.gmra.mxu0 %v787
  %v857 = vpop.f32.mrf.mxu0
  %v858 = vadd.f32 0.0, %v857
  %v859 = vpop.f32.mrf.mxu0
  %860 = vmatprep.mubr.f32.mxu0 0.0
  %861 = vmatmul.mubr.f32.gmra.mxu0 %v789
  %v862 = vpop.f32.mrf.mxu0
  %v863 = vadd.f32 0.0, %v862
  %v864 = vpop.f32.mrf.mxu0
  %865 = vdwg.mxu0
  %v866 = vadd.f32 %v774, %v858
  %v867 = vadd.f32 %v775, %v863
  %v868 = vld [vmem:[%s2] sm:$0x1]
  %v870 = vlaneseq
  %v871 = vshrl.u32 %v870, 7
  %v872 = vsub.s32 0, %v871
  %v873 = vrot.slane %v868, %v872
  %v875 = vadd.f32 %v866, %v873
  %v876 = vadd.f32 %v867, %v873
  %v877 = vadd.f32 %v875, %v876
  %v878 = vrot.slane %v877, 4
  %v879 = vadd.f32 %v877, %v878
  %v880 = vrot.slane %v879, 2
  %v881 = vadd.f32 %v879, %v880
  %v882 = vrot.slane %v881, 1
  %v883 = vadd.f32 %v881, %v882
  %v884 = vld [vmem:[%s5] sm:$0xff]
  %v885 = vld [vmem:[%s5 + $0x8] sm:$0xff]
  %v886 = vld [vmem:[%s5 + $0x10] sm:$0xff]
  %v887 = vld [vmem:[%s5 + $0x18] sm:$0xff]
  %v888 = vld [vmem:[%s5 + $0x20] sm:$0xff]
  %v889 = vld [vmem:[%s5 + $0x28] sm:$0xff]
  %v890 = vld [vmem:[%s5 + $0x30] sm:$0xff]
  %v891 = vld [vmem:[%s5 + $0x38] sm:$0xff]
  %v892 = vld [vmem:[%s5 + $0x40] sm:$0xff]
  %v893 = vld [vmem:[%s5 + $0x48] sm:$0xff]
  %v894 = vld [vmem:[%s5 + $0x50] sm:$0xff]
  %v895 = vld [vmem:[%s5 + $0x58] sm:$0xff]
  %v896 = vld [vmem:[%s5 + $0x60] sm:$0xff]
  %v897 = vld [vmem:[%s5 + $0x68] sm:$0xff]
  %v898 = vld [vmem:[%s5 + $0x70] sm:$0xff]
  %v899 = vld [vmem:[%s5 + $0x78] sm:$0xff]
  %v900 = vmul.f32 %v875, %v875
  %v901 = vmul.f32 %v876, %v876
  %v902 = vadd.f32 %v900, %v901
  %v903 = vrot.slane %v902, 4
  %v904 = vadd.f32 %v902, %v903
  %v905 = vrot.slane %v904, 2
  %v906 = vadd.f32 %v904, %v905
  %v907 = vrot.slane %v906, 1
  %v908 = vadd.f32 %v906, %v907
  %s909 = scalar_lea.vmem %s0, 24
  %v910 = vld [vmem:[%s909] sm:$0xff]
  %v911 = vld [vmem:[%s909 + $0x8] sm:$0xff]
  %914 = vrot.lane.b32.xlu0 %v910, 125
  %v915 = vpop.permute.xlu0 %914
  %916 = vrot.lane.b32.xlu0 %v911, 125
  %v917 = vpop.permute.xlu0 %916
  %v918 = vsel %vm65, %v915, 0
  %v920 = vsel %vm65, %v917, 0
  %922 = vmatprep.subr.mxu0 0.0
  %923 = vmatpush1.msra.mxu0 0.0
  %924 = vmatprep.subr.mxu0 0.0
  %925 = vmatpush1.msra.mxu0 0.0
  %926 = vmatprep.subr.mxu0 0.0
  %927 = vmatpush1.msra.mxu0 0.0
  %928 = vmatprep.subr.mxu0 0.0
  %929 = vmatpush1.msra.mxu0 0.0
  %930 = vmatprep.subr.mxu0 0.0
  %931 = vmatpush1.msra.mxu0 0.0
  %932 = vmatprep.subr.mxu0 0.0
  %933 = vmatpush1.msra.mxu0 0.0
  %934 = vmatprep.subr.mxu0 0.0
  %935 = vmatpush1.msra.mxu0 0.0
  %936 = vmatprep.subr.mxu0 0.0
  %937 = vmatpush1.msra.mxu0 0.0
  %938 = vmatprep.subr.mxu0 0.0
  %939 = vmatpush1.msra.mxu0 0.0
  %940 = vmatprep.subr.mxu0 0.0
  %941 = vmatpush1.msra.mxu0 0.0
  %942 = vmatprep.subr.mxu0 0.0
  %943 = vmatpush1.msra.mxu0 %v58
  %944 = vmatprep.subr.mxu0 0.0
  %945 = vmatpush1.msra.mxu0 %v57
  %946 = vmatprep.subr.mxu0 0.0
  %947 = vmatpush1.msra.mxu0 %v56
  %948 = vmatprep.subr.mxu0 0.0
  %949 = vmatpush1.msra.mxu0 %v55
  %950 = vmatprep.subr.mxu0 0.0
  %951 = vmatpush1.msra.mxu0 %v54
  %952 = vmatprep.subr.mxu0 0.0
  %953 = vmatpush1.msra.mxu0 %v53
  %954 = vmatprep.subr.mxu0 0.0
  %955 = vmatpush2.msra.mxu0 0.0
  %956 = vmatprep.subr.mxu0 0.0
  %957 = vmatpush2.msra.mxu0 0.0
  %958 = vmatprep.subr.mxu0 0.0
  %959 = vmatpush2.msra.mxu0 0.0
  %960 = vmatprep.subr.mxu0 0.0
  %961 = vmatpush2.msra.mxu0 0.0
  %962 = vmatprep.subr.mxu0 0.0
  %963 = vmatpush2.msra.mxu0 0.0
  %964 = vmatprep.subr.mxu0 0.0
  %965 = vmatpush2.msra.mxu0 0.0
  %966 = vmatprep.subr.mxu0 0.0
  %967 = vmatpush2.msra.mxu0 0.0
  %968 = vmatprep.subr.mxu0 0.0
  %969 = vmatpush2.msra.mxu0 0.0
  %970 = vmatprep.subr.mxu0 0.0
  %971 = vmatpush2.msra.mxu0 0.0
  %972 = vmatprep.subr.mxu0 0.0
  %973 = vmatpush2.msra.mxu0 0.0
  %974 = vmatprep.subr.mxu0 0.0
  %975 = vmatpush2.msra.mxu0 0.0
  %976 = vmatprep.subr.mxu0 0.0
  %977 = vmatpush2.msra.mxu0 0.0
  %978 = vmatprep.subr.mxu0 0.0
  %979 = vmatpush2.msra.mxu0 0.0
  %980 = vmatprep.subr.mxu0 0.0
  %981 = vmatpush2.msra.mxu0 0.0
  %982 = vmatprep.subr.mxu0 0.0
  %983 = vmatpush2.msra.mxu0 0.0
  %984 = vmatprep.subr.mxu0 0.0
  %985 = vmatpush2.msra.mxu0 0.0
  %986 = vmatprep.mubr.f32.mxu0 0.0
  %987 = vmatmul.mubr.f32.gmra.mxu0 %v918
  %v988 = vpop.f32.mrf.mxu0
  %v989 = vadd.f32 0.0, %v988
  %v990 = vpop.f32.mrf.mxu0
  %991 = vmatprep.mubr.f32.mxu0 0.0
  %992 = vmatmul.mubr.f32.gmra.mxu0 %v920
  %v993 = vpop.f32.mrf.mxu0
  %v994 = vadd.f32 0.0, %v993
  %v995 = vpop.f32.mrf.mxu0
  %996 = vdwg.mxu0
  %v997 = vsel %vm65, %v910, 0
  %v999 = vsel %vm65, %v911, 0
  %1001 = vmatprep.subr.mxu0 0.0
  %1002 = vmatpush1.msra.mxu0 0.0
  %1003 = vmatprep.subr.mxu0 0.0
  %1004 = vmatpush1.msra.mxu0 0.0
  %1005 = vmatprep.subr.mxu0 0.0
  %1006 = vmatpush1.msra.mxu0 0.0
  %1007 = vmatprep.subr.mxu0 0.0
  %1008 = vmatpush1.msra.mxu0 0.0
  %1009 = vmatprep.subr.mxu0 0.0
  %1010 = vmatpush1.msra.mxu0 0.0
  %1011 = vmatprep.subr.mxu0 0.0
  %1012 = vmatpush1.msra.mxu0 0.0
  %1013 = vmatprep.subr.mxu0 0.0
  %1014 = vmatpush1.msra.mxu0 0.0
  %1015 = vmatprep.subr.mxu0 0.0
  %1016 = vmatpush1.msra.mxu0 0.0
  %1017 = vmatprep.subr.mxu0 0.0
  %1018 = vmatpush1.msra.mxu0 0.0
  %1019 = vmatprep.subr.mxu0 0.0
  %1020 = vmatpush1.msra.mxu0 0.0
  %1021 = vmatprep.subr.mxu0 0.0
  %1022 = vmatpush1.msra.mxu0 %v51
  %1023 = vmatprep.subr.mxu0 0.0
  %1024 = vmatpush1.msra.mxu0 %v50
  %1025 = vmatprep.subr.mxu0 0.0
  %1026 = vmatpush1.msra.mxu0 %v49
  %1027 = vmatprep.subr.mxu0 0.0
  %1028 = vmatpush1.msra.mxu0 %v48
  %1029 = vmatprep.subr.mxu0 0.0
  %1030 = vmatpush1.msra.mxu0 %v47
  %1031 = vmatprep.subr.mxu0 0.0
  %1032 = vmatpush1.msra.mxu0 %v46
  %1033 = vmatprep.subr.mxu0 0.0
  %1034 = vmatpush2.msra.mxu0 0.0
  %1035 = vmatprep.subr.mxu0 0.0
  %1036 = vmatpush2.msra.mxu0 0.0
  %1037 = vmatprep.subr.mxu0 0.0
  %1038 = vmatpush2.msra.mxu0 0.0
  %1039 = vmatprep.subr.mxu0 0.0
  %1040 = vmatpush2.msra.mxu0 0.0
  %1041 = vmatprep.subr.mxu0 0.0
  %1042 = vmatpush2.msra.mxu0 0.0
  %1043 = vmatprep.subr.mxu0 0.0
  %1044 = vmatpush2.msra.mxu0 0.0
  %1045 = vmatprep.subr.mxu0 0.0
  %1046 = vmatpush2.msra.mxu0 0.0
  %1047 = vmatprep.subr.mxu0 0.0
  %1048 = vmatpush2.msra.mxu0 0.0
  %1049 = vmatprep.subr.mxu0 0.0
  %1050 = vmatpush2.msra.mxu0 0.0
  %1051 = vmatprep.subr.mxu0 0.0
  %1052 = vmatpush2.msra.mxu0 0.0
  %1053 = vmatprep.subr.mxu0 0.0
  %1054 = vmatpush2.msra.mxu0 0.0
  %1055 = vmatprep.subr.mxu0 0.0
  %1056 = vmatpush2.msra.mxu0 0.0
  %1057 = vmatprep.subr.mxu0 0.0
  %1058 = vmatpush2.msra.mxu0 0.0
  %1059 = vmatprep.subr.mxu0 0.0
  %1060 = vmatpush2.msra.mxu0 0.0
  %1061 = vmatprep.subr.mxu0 0.0
  %1062 = vmatpush2.msra.mxu0 0.0
  %1063 = vmatprep.subr.mxu0 0.0
  %1064 = vmatpush2.msra.mxu0 0.0
  %1065 = vmatprep.mubr.f32.mxu0 0.0
  %1066 = vmatmul.mubr.f32.gmra.mxu0 %v997
  %v1067 = vpop.f32.mrf.mxu0
  %v1068 = vadd.f32 %v989, %v1067
  %v1069 = vpop.f32.mrf.mxu0
  %1070 = vmatprep.mubr.f32.mxu0 0.0
  %1071 = vmatmul.mubr.f32.gmra.mxu0 %v999
  %v1072 = vpop.f32.mrf.mxu0
  %v1073 = vadd.f32 %v994, %v1072
  %v1074 = vpop.f32.mrf.mxu0
  %1075 = vdwg.mxu0
  %1076 = vrot.lane.b32.xlu0 %v910, 122
  %v1077 = vpop.permute.xlu0 %1076
  %1078 = vrot.lane.b32.xlu0 %v911, 122
  %v1079 = vpop.permute.xlu0 %1078
  %v1080 = vsel %vm65, %v1077, 0
  %v1082 = vsel %vm65, %v1079, 0
  %1084 = vmatprep.subr.mxu0 0.0
  %1085 = vmatpush1.msra.mxu0 0.0
  %1086 = vmatprep.subr.mxu0 0.0
  %1087 = vmatpush1.msra.mxu0 0.0
  %1088 = vmatprep.subr.mxu0 0.0
  %1089 = vmatpush1.msra.mxu0 0.0
  %1090 = vmatprep.subr.mxu0 0.0
  %1091 = vmatpush1.msra.mxu0 0.0
  %1092 = vmatprep.subr.mxu0 0.0
  %1093 = vmatpush1.msra.mxu0 0.0
  %1094 = vmatprep.subr.mxu0 0.0
  %1095 = vmatpush1.msra.mxu0 0.0
  %1096 = vmatprep.subr.mxu0 0.0
  %1097 = vmatpush1.msra.mxu0 0.0
  %1098 = vmatprep.subr.mxu0 0.0
  %1099 = vmatpush1.msra.mxu0 0.0
  %1100 = vmatprep.subr.mxu0 0.0
  %1101 = vmatpush1.msra.mxu0 0.0
  %1102 = vmatprep.subr.mxu0 0.0
  %1103 = vmatpush1.msra.mxu0 0.0
  %1104 = vmatprep.subr.mxu0 0.0
  %1105 = vmatpush1.msra.mxu0 %v230
  %1106 = vmatprep.subr.mxu0 0.0
  %1107 = vmatpush1.msra.mxu0 %v229
  %1108 = vmatprep.subr.mxu0 0.0
  %1109 = vmatpush1.msra.mxu0 %v228
  %1110 = vmatprep.subr.mxu0 0.0
  %1111 = vmatpush1.msra.mxu0 %v227
  %1112 = vmatprep.subr.mxu0 0.0
  %1113 = vmatpush1.msra.mxu0 %v226
  %1114 = vmatprep.subr.mxu0 0.0
  %1115 = vmatpush1.msra.mxu0 %v225
  %1116 = vmatprep.subr.mxu0 0.0
  %1117 = vmatpush2.msra.mxu0 0.0
  %1118 = vmatprep.subr.mxu0 0.0
  %1119 = vmatpush2.msra.mxu0 0.0
  %1120 = vmatprep.subr.mxu0 0.0
  %1121 = vmatpush2.msra.mxu0 0.0
  %1122 = vmatprep.subr.mxu0 0.0
  %1123 = vmatpush2.msra.mxu0 0.0
  %1124 = vmatprep.subr.mxu0 0.0
  %1125 = vmatpush2.msra.mxu0 0.0
  %1126 = vmatprep.subr.mxu0 0.0
  %1127 = vmatpush2.msra.mxu0 0.0
  %1128 = vmatprep.subr.mxu0 0.0
  %1129 = vmatpush2.msra.mxu0 0.0
  %1130 = vmatprep.subr.mxu0 0.0
  %1131 = vmatpush2.msra.mxu0 0.0
  %1132 = vmatprep.subr.mxu0 0.0
  %1133 = vmatpush2.msra.mxu0 0.0
  %1134 = vmatprep.subr.mxu0 0.0
  %1135 = vmatpush2.msra.mxu0 0.0
  %1136 = vmatprep.subr.mxu0 0.0
  %1137 = vmatpush2.msra.mxu0 0.0
  %1138 = vmatprep.subr.mxu0 0.0
  %1139 = vmatpush2.msra.mxu0 0.0
  %1140 = vmatprep.subr.mxu0 0.0
  %1141 = vmatpush2.msra.mxu0 0.0
  %1142 = vmatprep.subr.mxu0 0.0
  %1143 = vmatpush2.msra.mxu0 0.0
  %1144 = vmatprep.subr.mxu0 0.0
  %1145 = vmatpush2.msra.mxu0 0.0
  %1146 = vmatprep.subr.mxu0 0.0
  %1147 = vmatpush2.msra.mxu0 0.0
  %1148 = vmatprep.mubr.f32.mxu0 0.0
  %1149 = vmatmul.mubr.f32.gmra.mxu0 %v1080
  %v1150 = vpop.f32.mrf.mxu0
  %v1151 = vadd.f32 0.0, %v1150
  %v1152 = vpop.f32.mrf.mxu0
  %1153 = vmatprep.mubr.f32.mxu0 0.0
  %1154 = vmatmul.mubr.f32.gmra.mxu0 %v1082
  %v1155 = vpop.f32.mrf.mxu0
  %v1156 = vadd.f32 0.0, %v1155
  %v1157 = vpop.f32.mrf.mxu0
  %1158 = vdwg.mxu0
  %v1159 = vadd.f32 %v1068, %v1151
  %v1160 = vadd.f32 %v1073, %v1156
  %v1161 = vld [vmem:[%s909 + $0x1] sm:$0xff]
  %v1162 = vld [vmem:[%s909 + $0x9] sm:$0xff]
  %v1164 = vsel %vm65, %v1161, 0
  %v1167 = vsel %vm65, %v1162, 0
  %1169 = vmatprep.subr.mxu0 0.0
  %1170 = vmatpush1.msra.mxu0 0.0
  %1171 = vmatprep.subr.mxu0 0.0
  %1172 = vmatpush1.msra.mxu0 0.0
  %1173 = vmatprep.subr.mxu0 0.0
  %1174 = vmatpush1.msra.mxu0 0.0
  %1175 = vmatprep.subr.mxu0 0.0
  %1176 = vmatpush1.msra.mxu0 0.0
  %1177 = vmatprep.subr.mxu0 0.0
  %1178 = vmatpush1.msra.mxu0 0.0
  %1179 = vmatprep.subr.mxu0 0.0
  %1180 = vmatpush1.msra.mxu0 0.0
  %1181 = vmatprep.subr.mxu0 0.0
  %1182 = vmatpush1.msra.mxu0 0.0
  %1183 = vmatprep.subr.mxu0 0.0
  %1184 = vmatpush1.msra.mxu0 0.0
  %1185 = vmatprep.subr.mxu0 0.0
  %1186 = vmatpush1.msra.mxu0 0.0
  %1187 = vmatprep.subr.mxu0 0.0
  %1188 = vmatpush1.msra.mxu0 0.0
  %1189 = vmatprep.subr.mxu0 0.0
  %1190 = vmatpush1.msra.mxu0 %v324
  %1191 = vmatprep.subr.mxu0 0.0
  %1192 = vmatpush1.msra.mxu0 %v323
  %1193 = vmatprep.subr.mxu0 0.0
  %1194 = vmatpush1.msra.mxu0 %v322
  %1195 = vmatprep.subr.mxu0 0.0
  %1196 = vmatpush1.msra.mxu0 %v321
  %1197 = vmatprep.subr.mxu0 0.0
  %1198 = vmatpush1.msra.mxu0 %v320
  %1199 = vmatprep.subr.mxu0 0.0
  %1200 = vmatpush1.msra.mxu0 %v319
  %1201 = vmatprep.subr.mxu0 0.0
  %1202 = vmatpush2.msra.mxu0 0.0
  %1203 = vmatprep.subr.mxu0 0.0
  %1204 = vmatpush2.msra.mxu0 0.0
  %1205 = vmatprep.subr.mxu0 0.0
  %1206 = vmatpush2.msra.mxu0 0.0
  %1207 = vmatprep.subr.mxu0 0.0
  %1208 = vmatpush2.msra.mxu0 0.0
  %1209 = vmatprep.subr.mxu0 0.0
  %1210 = vmatpush2.msra.mxu0 0.0
  %1211 = vmatprep.subr.mxu0 0.0
  %1212 = vmatpush2.msra.mxu0 0.0
  %1213 = vmatprep.subr.mxu0 0.0
  %1214 = vmatpush2.msra.mxu0 0.0
  %1215 = vmatprep.subr.mxu0 0.0
  %1216 = vmatpush2.msra.mxu0 0.0
  %1217 = vmatprep.subr.mxu0 0.0
  %1218 = vmatpush2.msra.mxu0 0.0
  %1219 = vmatprep.subr.mxu0 0.0
  %1220 = vmatpush2.msra.mxu0 0.0
  %1221 = vmatprep.subr.mxu0 0.0
  %1222 = vmatpush2.msra.mxu0 0.0
  %1223 = vmatprep.subr.mxu0 0.0
  %1224 = vmatpush2.msra.mxu0 0.0
  %1225 = vmatprep.subr.mxu0 0.0
  %1226 = vmatpush2.msra.mxu0 0.0
  %1227 = vmatprep.subr.mxu0 0.0
  %1228 = vmatpush2.msra.mxu0 0.0
  %1229 = vmatprep.subr.mxu0 0.0
  %1230 = vmatpush2.msra.mxu0 0.0
  %1231 = vmatprep.subr.mxu0 0.0
  %1232 = vmatpush2.msra.mxu0 0.0
  %1233 = vmatprep.mubr.f32.mxu0 0.0
  %1234 = vmatmul.mubr.f32.gmra.mxu0 %v1164
  %v1235 = vpop.f32.mrf.mxu0
  %v1236 = vadd.f32 0.0, %v1235
  %v1237 = vpop.f32.mrf.mxu0
  %1238 = vmatprep.mubr.f32.mxu0 0.0
  %1239 = vmatmul.mubr.f32.gmra.mxu0 %v1167
  %v1240 = vpop.f32.mrf.mxu0
  %v1241 = vadd.f32 0.0, %v1240
  %v1242 = vpop.f32.mrf.mxu0
  %1243 = vdwg.mxu0
  %v1244 = vadd.f32 %v1159, %v1236
  %v1245 = vadd.f32 %v1160, %v1241
  %1246 = vrot.lane.b32.xlu0 %v1161, 125
  %v1247 = vpop.permute.xlu0 %1246
  %1248 = vrot.lane.b32.xlu0 %v1162, 125
  %v1249 = vpop.permute.xlu0 %1248
  %v1250 = vsel %vm65, %v1247, 0
  %v1252 = vsel %vm65, %v1249, 0
  %1254 = vmatprep.subr.mxu0 0.0
  %1255 = vmatpush1.msra.mxu0 0.0
  %1256 = vmatprep.subr.mxu0 0.0
  %1257 = vmatpush1.msra.mxu0 0.0
  %1258 = vmatprep.subr.mxu0 0.0
  %1259 = vmatpush1.msra.mxu0 0.0
  %1260 = vmatprep.subr.mxu0 0.0
  %1261 = vmatpush1.msra.mxu0 0.0
  %1262 = vmatprep.subr.mxu0 0.0
  %1263 = vmatpush1.msra.mxu0 0.0
  %1264 = vmatprep.subr.mxu0 0.0
  %1265 = vmatpush1.msra.mxu0 0.0
  %1266 = vmatprep.subr.mxu0 0.0
  %1267 = vmatpush1.msra.mxu0 0.0
  %1268 = vmatprep.subr.mxu0 0.0
  %1269 = vmatpush1.msra.mxu0 0.0
  %1270 = vmatprep.subr.mxu0 0.0
  %1271 = vmatpush1.msra.mxu0 0.0
  %1272 = vmatprep.subr.mxu0 0.0
  %1273 = vmatpush1.msra.mxu0 0.0
  %1274 = vmatprep.subr.mxu0 0.0
  %1275 = vmatpush1.msra.mxu0 %v414
  %1276 = vmatprep.subr.mxu0 0.0
  %1277 = vmatpush1.msra.mxu0 %v413
  %1278 = vmatprep.subr.mxu0 0.0
  %1279 = vmatpush1.msra.mxu0 %v412
  %1280 = vmatprep.subr.mxu0 0.0
  %1281 = vmatpush1.msra.mxu0 %v411
  %1282 = vmatprep.subr.mxu0 0.0
  %1283 = vmatpush1.msra.mxu0 %v410
  %1284 = vmatprep.subr.mxu0 0.0
  %1285 = vmatpush1.msra.mxu0 %v409
  %1286 = vmatprep.subr.mxu0 0.0
  %1287 = vmatpush2.msra.mxu0 0.0
  %1288 = vmatprep.subr.mxu0 0.0
  %1289 = vmatpush2.msra.mxu0 0.0
  %1290 = vmatprep.subr.mxu0 0.0
  %1291 = vmatpush2.msra.mxu0 0.0
  %1292 = vmatprep.subr.mxu0 0.0
  %1293 = vmatpush2.msra.mxu0 0.0
  %1294 = vmatprep.subr.mxu0 0.0
  %1295 = vmatpush2.msra.mxu0 0.0
  %1296 = vmatprep.subr.mxu0 0.0
  %1297 = vmatpush2.msra.mxu0 0.0
  %1298 = vmatprep.subr.mxu0 0.0
  %1299 = vmatpush2.msra.mxu0 0.0
  %1300 = vmatprep.subr.mxu0 0.0
  %1301 = vmatpush2.msra.mxu0 0.0
  %1302 = vmatprep.subr.mxu0 0.0
  %1303 = vmatpush2.msra.mxu0 0.0
  %1304 = vmatprep.subr.mxu0 0.0
  %1305 = vmatpush2.msra.mxu0 0.0
  %1306 = vmatprep.subr.mxu0 0.0
  %1307 = vmatpush2.msra.mxu0 0.0
  %1308 = vmatprep.subr.mxu0 0.0
  %1309 = vmatpush2.msra.mxu0 0.0
  %1310 = vmatprep.subr.mxu0 0.0
  %1311 = vmatpush2.msra.mxu0 0.0
  %1312 = vmatprep.subr.mxu0 0.0
  %1313 = vmatpush2.msra.mxu0 0.0
  %1314 = vmatprep.subr.mxu0 0.0
  %1315 = vmatpush2.msra.mxu0 0.0
  %1316 = vmatprep.subr.mxu0 0.0
  %1317 = vmatpush2.msra.mxu0 0.0
  %1318 = vmatprep.mubr.f32.mxu0 0.0
  %1319 = vmatmul.mubr.f32.gmra.mxu0 %v1250
  %v1320 = vpop.f32.mrf.mxu0
  %v1321 = vadd.f32 0.0, %v1320
  %v1322 = vpop.f32.mrf.mxu0
  %1323 = vmatprep.mubr.f32.mxu0 0.0
  %1324 = vmatmul.mubr.f32.gmra.mxu0 %v1252
  %v1325 = vpop.f32.mrf.mxu0
  %v1326 = vadd.f32 0.0, %v1325
  %v1327 = vpop.f32.mrf.mxu0
  %1328 = vdwg.mxu0
  %v1329 = vadd.f32 %v1244, %v1321
  %v1330 = vadd.f32 %v1245, %v1326
  %1331 = vrot.lane.b32.xlu0 %v1161, 122
  %v1332 = vpop.permute.xlu0 %1331
  %1333 = vrot.lane.b32.xlu0 %v1162, 122
  %v1334 = vpop.permute.xlu0 %1333
  %v1335 = vsel %vm65, %v1332, 0
  %v1337 = vsel %vm65, %v1334, 0
  %1339 = vmatprep.subr.mxu0 0.0
  %1340 = vmatpush1.msra.mxu0 0.0
  %1341 = vmatprep.subr.mxu0 0.0
  %1342 = vmatpush1.msra.mxu0 0.0
  %1343 = vmatprep.subr.mxu0 0.0
  %1344 = vmatpush1.msra.mxu0 0.0
  %1345 = vmatprep.subr.mxu0 0.0
  %1346 = vmatpush1.msra.mxu0 0.0
  %1347 = vmatprep.subr.mxu0 0.0
  %1348 = vmatpush1.msra.mxu0 0.0
  %1349 = vmatprep.subr.mxu0 0.0
  %1350 = vmatpush1.msra.mxu0 0.0
  %1351 = vmatprep.subr.mxu0 0.0
  %1352 = vmatpush1.msra.mxu0 0.0
  %1353 = vmatprep.subr.mxu0 0.0
  %1354 = vmatpush1.msra.mxu0 0.0
  %1355 = vmatprep.subr.mxu0 0.0
  %1356 = vmatpush1.msra.mxu0 0.0
  %1357 = vmatprep.subr.mxu0 0.0
  %1358 = vmatpush1.msra.mxu0 0.0
  %1359 = vmatprep.subr.mxu0 0.0
  %1360 = vmatpush1.msra.mxu0 %v506
  %1361 = vmatprep.subr.mxu0 0.0
  %1362 = vmatpush1.msra.mxu0 %v505
  %1363 = vmatprep.subr.mxu0 0.0
  %1364 = vmatpush1.msra.mxu0 %v504
  %1365 = vmatprep.subr.mxu0 0.0
  %1366 = vmatpush1.msra.mxu0 %v503
  %1367 = vmatprep.subr.mxu0 0.0
  %1368 = vmatpush1.msra.mxu0 %v502
  %1369 = vmatprep.subr.mxu0 0.0
  %1370 = vmatpush1.msra.mxu0 %v501
  %1371 = vmatprep.subr.mxu0 0.0
  %1372 = vmatpush2.msra.mxu0 0.0
  %1373 = vmatprep.subr.mxu0 0.0
  %1374 = vmatpush2.msra.mxu0 0.0
  %1375 = vmatprep.subr.mxu0 0.0
  %1376 = vmatpush2.msra.mxu0 0.0
  %1377 = vmatprep.subr.mxu0 0.0
  %1378 = vmatpush2.msra.mxu0 0.0
  %1379 = vmatprep.subr.mxu0 0.0
  %1380 = vmatpush2.msra.mxu0 0.0
  %1381 = vmatprep.subr.mxu0 0.0
  %1382 = vmatpush2.msra.mxu0 0.0
  %1383 = vmatprep.subr.mxu0 0.0
  %1384 = vmatpush2.msra.mxu0 0.0
  %1385 = vmatprep.subr.mxu0 0.0
  %1386 = vmatpush2.msra.mxu0 0.0
  %1387 = vmatprep.subr.mxu0 0.0
  %1388 = vmatpush2.msra.mxu0 0.0
  %1389 = vmatprep.subr.mxu0 0.0
  %1390 = vmatpush2.msra.mxu0 0.0
  %1391 = vmatprep.subr.mxu0 0.0
  %1392 = vmatpush2.msra.mxu0 0.0
  %1393 = vmatprep.subr.mxu0 0.0
  %1394 = vmatpush2.msra.mxu0 0.0
  %1395 = vmatprep.subr.mxu0 0.0
  %1396 = vmatpush2.msra.mxu0 0.0
  %1397 = vmatprep.subr.mxu0 0.0
  %1398 = vmatpush2.msra.mxu0 0.0
  %1399 = vmatprep.subr.mxu0 0.0
  %1400 = vmatpush2.msra.mxu0 0.0
  %1401 = vmatprep.subr.mxu0 0.0
  %1402 = vmatpush2.msra.mxu0 0.0
  %1403 = vmatprep.mubr.f32.mxu0 0.0
  %1404 = vmatmul.mubr.f32.gmra.mxu0 %v1335
  %v1405 = vpop.f32.mrf.mxu0
  %v1406 = vadd.f32 0.0, %v1405
  %v1407 = vpop.f32.mrf.mxu0
  %1408 = vmatprep.mubr.f32.mxu0 0.0
  %1409 = vmatmul.mubr.f32.gmra.mxu0 %v1337
  %v1410 = vpop.f32.mrf.mxu0
  %v1411 = vadd.f32 0.0, %v1410
  %v1412 = vpop.f32.mrf.mxu0
  %1413 = vdwg.mxu0
  %v1414 = vadd.f32 %v1329, %v1406
  %v1415 = vadd.f32 %v1330, %v1411
  %v1416 = vld [vmem:[%s909 + $0x2] sm:$0xff]
  %v1417 = vld [vmem:[%s909 + $0xa] sm:$0xff]
  %v1419 = vsel %vm65, %v1416, 0
  %v1422 = vsel %vm65, %v1417, 0
  %1424 = vmatprep.subr.mxu0 0.0
  %1425 = vmatpush1.msra.mxu0 0.0
  %1426 = vmatprep.subr.mxu0 0.0
  %1427 = vmatpush1.msra.mxu0 0.0
  %1428 = vmatprep.subr.mxu0 0.0
  %1429 = vmatpush1.msra.mxu0 0.0
  %1430 = vmatprep.subr.mxu0 0.0
  %1431 = vmatpush1.msra.mxu0 0.0
  %1432 = vmatprep.subr.mxu0 0.0
  %1433 = vmatpush1.msra.mxu0 0.0
  %1434 = vmatprep.subr.mxu0 0.0
  %1435 = vmatpush1.msra.mxu0 0.0
  %1436 = vmatprep.subr.mxu0 0.0
  %1437 = vmatpush1.msra.mxu0 0.0
  %1438 = vmatprep.subr.mxu0 0.0
  %1439 = vmatpush1.msra.mxu0 0.0
  %1440 = vmatprep.subr.mxu0 0.0
  %1441 = vmatpush1.msra.mxu0 0.0
  %1442 = vmatprep.subr.mxu0 0.0
  %1443 = vmatpush1.msra.mxu0 0.0
  %1444 = vmatprep.subr.mxu0 0.0
  %1445 = vmatpush1.msra.mxu0 %v600
  %1446 = vmatprep.subr.mxu0 0.0
  %1447 = vmatpush1.msra.mxu0 %v599
  %1448 = vmatprep.subr.mxu0 0.0
  %1449 = vmatpush1.msra.mxu0 %v598
  %1450 = vmatprep.subr.mxu0 0.0
  %1451 = vmatpush1.msra.mxu0 %v597
  %1452 = vmatprep.subr.mxu0 0.0
  %1453 = vmatpush1.msra.mxu0 %v596
  %1454 = vmatprep.subr.mxu0 0.0
  %1455 = vmatpush1.msra.mxu0 %v595
  %1456 = vmatprep.subr.mxu0 0.0
  %1457 = vmatpush2.msra.mxu0 0.0
  %1458 = vmatprep.subr.mxu0 0.0
  %1459 = vmatpush2.msra.mxu0 0.0
  %1460 = vmatprep.subr.mxu0 0.0
  %1461 = vmatpush2.msra.mxu0 0.0
  %1462 = vmatprep.subr.mxu0 0.0
  %1463 = vmatpush2.msra.mxu0 0.0
  %1464 = vmatprep.subr.mxu0 0.0
  %1465 = vmatpush2.msra.mxu0 0.0
  %1466 = vmatprep.subr.mxu0 0.0
  %1467 = vmatpush2.msra.mxu0 0.0
  %1468 = vmatprep.subr.mxu0 0.0
  %1469 = vmatpush2.msra.mxu0 0.0
  %1470 = vmatprep.subr.mxu0 0.0
  %1471 = vmatpush2.msra.mxu0 0.0
  %1472 = vmatprep.subr.mxu0 0.0
  %1473 = vmatpush2.msra.mxu0 0.0
  %1474 = vmatprep.subr.mxu0 0.0
  %1475 = vmatpush2.msra.mxu0 0.0
  %1476 = vmatprep.subr.mxu0 0.0
  %1477 = vmatpush2.msra.mxu0 0.0
  %1478 = vmatprep.subr.mxu0 0.0
  %1479 = vmatpush2.msra.mxu0 0.0
  %1480 = vmatprep.subr.mxu0 0.0
  %1481 = vmatpush2.msra.mxu0 0.0
  %1482 = vmatprep.subr.mxu0 0.0
  %1483 = vmatpush2.msra.mxu0 0.0
  %1484 = vmatprep.subr.mxu0 0.0
  %1485 = vmatpush2.msra.mxu0 0.0
  %1486 = vmatprep.subr.mxu0 0.0
  %1487 = vmatpush2.msra.mxu0 0.0
  %1488 = vmatprep.mubr.f32.mxu0 0.0
  %1489 = vmatmul.mubr.f32.gmra.mxu0 %v1419
  %v1490 = vpop.f32.mrf.mxu0
  %v1491 = vadd.f32 0.0, %v1490
  %v1492 = vpop.f32.mrf.mxu0
  %1493 = vmatprep.mubr.f32.mxu0 0.0
  %1494 = vmatmul.mubr.f32.gmra.mxu0 %v1422
  %v1495 = vpop.f32.mrf.mxu0
  %v1496 = vadd.f32 0.0, %v1495
  %v1497 = vpop.f32.mrf.mxu0
  %1498 = vdwg.mxu0
  %v1499 = vadd.f32 %v1414, %v1491
  %v1500 = vadd.f32 %v1415, %v1496
  %1501 = vrot.lane.b32.xlu0 %v1416, 125
  %v1502 = vpop.permute.xlu0 %1501
  %1503 = vrot.lane.b32.xlu0 %v1417, 125
  %v1504 = vpop.permute.xlu0 %1503
  %v1505 = vsel %vm65, %v1502, 0
  %v1507 = vsel %vm65, %v1504, 0
  %1509 = vmatprep.subr.mxu0 0.0
  %1510 = vmatpush1.msra.mxu0 0.0
  %1511 = vmatprep.subr.mxu0 0.0
  %1512 = vmatpush1.msra.mxu0 0.0
  %1513 = vmatprep.subr.mxu0 0.0
  %1514 = vmatpush1.msra.mxu0 0.0
  %1515 = vmatprep.subr.mxu0 0.0
  %1516 = vmatpush1.msra.mxu0 0.0
  %1517 = vmatprep.subr.mxu0 0.0
  %1518 = vmatpush1.msra.mxu0 0.0
  %1519 = vmatprep.subr.mxu0 0.0
  %1520 = vmatpush1.msra.mxu0 0.0
  %1521 = vmatprep.subr.mxu0 0.0
  %1522 = vmatpush1.msra.mxu0 0.0
  %1523 = vmatprep.subr.mxu0 0.0
  %1524 = vmatpush1.msra.mxu0 0.0
  %1525 = vmatprep.subr.mxu0 0.0
  %1526 = vmatpush1.msra.mxu0 0.0
  %1527 = vmatprep.subr.mxu0 0.0
  %1528 = vmatpush1.msra.mxu0 0.0
  %1529 = vmatprep.subr.mxu0 0.0
  %1530 = vmatpush1.msra.mxu0 %v690
  %1531 = vmatprep.subr.mxu0 0.0
  %1532 = vmatpush1.msra.mxu0 %v689
  %1533 = vmatprep.subr.mxu0 0.0
  %1534 = vmatpush1.msra.mxu0 %v688
  %1535 = vmatprep.subr.mxu0 0.0
  %1536 = vmatpush1.msra.mxu0 %v687
  %1537 = vmatprep.subr.mxu0 0.0
  %1538 = vmatpush1.msra.mxu0 %v686
  %1539 = vmatprep.subr.mxu0 0.0
  %1540 = vmatpush1.msra.mxu0 %v685
  %1541 = vmatprep.subr.mxu0 0.0
  %1542 = vmatpush2.msra.mxu0 0.0
  %1543 = vmatprep.subr.mxu0 0.0
  %1544 = vmatpush2.msra.mxu0 0.0
  %1545 = vmatprep.subr.mxu0 0.0
  %1546 = vmatpush2.msra.mxu0 0.0
  %1547 = vmatprep.subr.mxu0 0.0
  %1548 = vmatpush2.msra.mxu0 0.0
  %1549 = vmatprep.subr.mxu0 0.0
  %1550 = vmatpush2.msra.mxu0 0.0
  %1551 = vmatprep.subr.mxu0 0.0
  %1552 = vmatpush2.msra.mxu0 0.0
  %1553 = vmatprep.subr.mxu0 0.0
  %1554 = vmatpush2.msra.mxu0 0.0
  %1555 = vmatprep.subr.mxu0 0.0
  %1556 = vmatpush2.msra.mxu0 0.0
  %1557 = vmatprep.subr.mxu0 0.0
  %1558 = vmatpush2.msra.mxu0 0.0
  %1559 = vmatprep.subr.mxu0 0.0
  %1560 = vmatpush2.msra.mxu0 0.0
  %1561 = vmatprep.subr.mxu0 0.0
  %1562 = vmatpush2.msra.mxu0 0.0
  %1563 = vmatprep.subr.mxu0 0.0
  %1564 = vmatpush2.msra.mxu0 0.0
  %1565 = vmatprep.subr.mxu0 0.0
  %1566 = vmatpush2.msra.mxu0 0.0
  %1567 = vmatprep.subr.mxu0 0.0
  %1568 = vmatpush2.msra.mxu0 0.0
  %1569 = vmatprep.subr.mxu0 0.0
  %1570 = vmatpush2.msra.mxu0 0.0
  %1571 = vmatprep.subr.mxu0 0.0
  %1572 = vmatpush2.msra.mxu0 0.0
  %1573 = vmatprep.mubr.f32.mxu0 0.0
  %1574 = vmatmul.mubr.f32.gmra.mxu0 %v1505
  %v1575 = vpop.f32.mrf.mxu0
  %v1576 = vadd.f32 0.0, %v1575
  %v1577 = vpop.f32.mrf.mxu0
  %1578 = vmatprep.mubr.f32.mxu0 0.0
  %1579 = vmatmul.mubr.f32.gmra.mxu0 %v1507
  %v1580 = vpop.f32.mrf.mxu0
  %v1581 = vadd.f32 0.0, %v1580
  %v1582 = vpop.f32.mrf.mxu0
  %1583 = vdwg.mxu0
  %v1584 = vadd.f32 %v1499, %v1576
  %v1585 = vadd.f32 %v1500, %v1581
  %1586 = vrot.lane.b32.xlu0 %v1416, 122
  %v1587 = vpop.permute.xlu0 %1586
  %1588 = vrot.lane.b32.xlu0 %v1417, 122
  %v1589 = vpop.permute.xlu0 %1588
  %v1590 = vsel %vm65, %v1587, 0
  %v1592 = vsel %vm65, %v1589, 0
  %1594 = vmatprep.subr.mxu0 0.0
  %1595 = vmatpush1.msra.mxu0 0.0
  %1596 = vmatprep.subr.mxu0 0.0
  %1597 = vmatpush1.msra.mxu0 0.0
  %1598 = vmatprep.subr.mxu0 0.0
  %1599 = vmatpush1.msra.mxu0 0.0
  %1600 = vmatprep.subr.mxu0 0.0
  %1601 = vmatpush1.msra.mxu0 0.0
  %1602 = vmatprep.subr.mxu0 0.0
  %1603 = vmatpush1.msra.mxu0 0.0
  %1604 = vmatprep.subr.mxu0 0.0
  %1605 = vmatpush1.msra.mxu0 0.0
  %1606 = vmatprep.subr.mxu0 0.0
  %1607 = vmatpush1.msra.mxu0 0.0
  %1608 = vmatprep.subr.mxu0 0.0
  %1609 = vmatpush1.msra.mxu0 0.0
  %1610 = vmatprep.subr.mxu0 0.0
  %1611 = vmatpush1.msra.mxu0 0.0
  %1612 = vmatprep.subr.mxu0 0.0
  %1613 = vmatpush1.msra.mxu0 0.0
  %1614 = vmatprep.subr.mxu0 0.0
  %1615 = vmatpush1.msra.mxu0 %v782
  %1616 = vmatprep.subr.mxu0 0.0
  %1617 = vmatpush1.msra.mxu0 %v781
  %1618 = vmatprep.subr.mxu0 0.0
  %1619 = vmatpush1.msra.mxu0 %v780
  %1620 = vmatprep.subr.mxu0 0.0
  %1621 = vmatpush1.msra.mxu0 %v779
  %1622 = vmatprep.subr.mxu0 0.0
  %1623 = vmatpush1.msra.mxu0 %v778
  %1624 = vmatprep.subr.mxu0 0.0
  %1625 = vmatpush1.msra.mxu0 %v777
  %1626 = vmatprep.subr.mxu0 0.0
  %1627 = vmatpush2.msra.mxu0 0.0
  %1628 = vmatprep.subr.mxu0 0.0
  %1629 = vmatpush2.msra.mxu0 0.0
  %1630 = vmatprep.subr.mxu0 0.0
  %1631 = vmatpush2.msra.mxu0 0.0
  %1632 = vmatprep.subr.mxu0 0.0
  %1633 = vmatpush2.msra.mxu0 0.0
  %1634 = vmatprep.subr.mxu0 0.0
  %1635 = vmatpush2.msra.mxu0 0.0
  %1636 = vmatprep.subr.mxu0 0.0
  %1637 = vmatpush2.msra.mxu0 0.0
  %1638 = vmatprep.subr.mxu0 0.0
  %1639 = vmatpush2.msra.mxu0 0.0
  %1640 = vmatprep.subr.mxu0 0.0
  %1641 = vmatpush2.msra.mxu0 0.0
  %1642 = vmatprep.subr.mxu0 0.0
  %1643 = vmatpush2.msra.mxu0 0.0
  %1644 = vmatprep.subr.mxu0 0.0
  %1645 = vmatpush2.msra.mxu0 0.0
  %1646 = vmatprep.subr.mxu0 0.0
  %1647 = vmatpush2.msra.mxu0 0.0
  %1648 = vmatprep.subr.mxu0 0.0
  %1649 = vmatpush2.msra.mxu0 0.0
  %1650 = vmatprep.subr.mxu0 0.0
  %1651 = vmatpush2.msra.mxu0 0.0
  %1652 = vmatprep.subr.mxu0 0.0
  %1653 = vmatpush2.msra.mxu0 0.0
  %1654 = vmatprep.subr.mxu0 0.0
  %1655 = vmatpush2.msra.mxu0 0.0
  %1656 = vmatprep.subr.mxu0 0.0
  %1657 = vmatpush2.msra.mxu0 0.0
  %1658 = vmatprep.mubr.f32.mxu0 0.0
  %1659 = vmatmul.mubr.f32.gmra.mxu0 %v1590
  %v1660 = vpop.f32.mrf.mxu0
  %v1661 = vadd.f32 0.0, %v1660
  %v1662 = vpop.f32.mrf.mxu0
  %1663 = vmatprep.mubr.f32.mxu0 0.0
  %1664 = vmatmul.mubr.f32.gmra.mxu0 %v1592
  %v1665 = vpop.f32.mrf.mxu0
  %v1666 = vadd.f32 0.0, %v1665
  %v1667 = vpop.f32.mrf.mxu0
  %1668 = vdwg.mxu0
  %v1669 = vadd.f32 %v1584, %v1661
  %v1670 = vadd.f32 %v1585, %v1666
  %v1671 = vadd.f32 %v1669, %v873
  %v1672 = vadd.f32 %v1670, %v873
  %v1673 = vadd.f32 %v1671, %v1672
  %v1674 = vrot.slane %v1673, 4
  %v1675 = vadd.f32 %v1673, %v1674
  %v1676 = vrot.slane %v1675, 2
  %v1677 = vadd.f32 %v1675, %v1676
  %v1678 = vrot.slane %v1677, 1
  %v1679 = vadd.f32 %v1677, %v1678
  %1680 = vmatprep.subr.mxu0 0.0
  %1681 = vmatpush1.msra.mxu0 %v899
  %1682 = vmatprep.subr.mxu0 0.0
  %1683 = vmatpush1.msra.mxu0 %v898
  %1684 = vmatprep.subr.mxu0 0.0
  %1685 = vmatpush1.msra.mxu0 %v897
  %1686 = vmatprep.subr.mxu0 0.0
  %1687 = vmatpush1.msra.mxu0 %v896
  %1688 = vmatprep.subr.mxu0 0.0
  %1689 = vmatpush1.msra.mxu0 %v895
  %1690 = vmatprep.subr.mxu0 0.0
  %1691 = vmatpush1.msra.mxu0 %v894
  %1692 = vmatprep.subr.mxu0 0.0
  %1693 = vmatpush1.msra.mxu0 %v893
  %1694 = vmatprep.subr.mxu0 0.0
  %1695 = vmatpush1.msra.mxu0 %v892
  %1696 = vmatprep.subr.mxu0 0.0
  %1697 = vmatpush1.msra.mxu0 %v891
  %1698 = vmatprep.subr.mxu0 0.0
  %1699 = vmatpush1.msra.mxu0 %v890
  %1700 = vmatprep.subr.mxu0 0.0
  %1701 = vmatpush1.msra.mxu0 %v889
  %1702 = vmatprep.subr.mxu0 0.0
  %1703 = vmatpush1.msra.mxu0 %v888
  %1704 = vmatprep.subr.mxu0 0.0
  %1705 = vmatpush1.msra.mxu0 %v887
  %1706 = vmatprep.subr.mxu0 0.0
  %1707 = vmatpush1.msra.mxu0 %v886
  %1708 = vmatprep.subr.mxu0 0.0
  %1709 = vmatpush1.msra.mxu0 %v885
  %1710 = vmatprep.subr.mxu0 0.0
  %1711 = vmatpush1.msra.mxu0 %v884
  %1712 = vmatprep.subr.mxu0 0.0
  %1713 = vmatpush2.msra.mxu0 0.0
  %1714 = vmatprep.subr.mxu0 0.0
  %1715 = vmatpush2.msra.mxu0 0.0
  %1716 = vmatprep.subr.mxu0 0.0
  %1717 = vmatpush2.msra.mxu0 0.0
  %1718 = vmatprep.subr.mxu0 0.0
  %1719 = vmatpush2.msra.mxu0 0.0
  %1720 = vmatprep.subr.mxu0 0.0
  %1721 = vmatpush2.msra.mxu0 0.0
  %1722 = vmatprep.subr.mxu0 0.0
  %1723 = vmatpush2.msra.mxu0 0.0
  %1724 = vmatprep.subr.mxu0 0.0
  %1725 = vmatpush2.msra.mxu0 0.0
  %1726 = vmatprep.subr.mxu0 0.0
  %1727 = vmatpush2.msra.mxu0 0.0
  %1728 = vmatprep.subr.mxu0 0.0
  %1729 = vmatpush2.msra.mxu0 0.0
  %1730 = vmatprep.subr.mxu0 0.0
  %1731 = vmatpush2.msra.mxu0 0.0
  %1732 = vmatprep.subr.mxu0 0.0
  %1733 = vmatpush2.msra.mxu0 0.0
  %1734 = vmatprep.subr.mxu0 0.0
  %1735 = vmatpush2.msra.mxu0 0.0
  %1736 = vmatprep.subr.mxu0 0.0
  %1737 = vmatpush2.msra.mxu0 0.0
  %1738 = vmatprep.subr.mxu0 0.0
  %1739 = vmatpush2.msra.mxu0 0.0
  %1740 = vmatprep.subr.mxu0 0.0
  %1741 = vmatpush2.msra.mxu0 0.0
  %1742 = vmatprep.subr.mxu0 0.0
  %1743 = vmatpush2.msra.mxu0 0.0
  %1744 = vmatprep.mubr.f32.mxu0 0.0
  %1745 = vmatmul.mubr.f32.gmra.mxu0 %v1679
  %v1746 = vpop.f32.mrf.mxu0
  %v1747 = vadd.f32 0.0, %v1746
  %v1748 = vpop.f32.mrf.mxu0
  %1749 = vdwg.mxu0
  %1750 = vmatprep.subr.mxu0 0.0
  %1751 = vmatpush1.msra.mxu0 %v899
  %1752 = vmatprep.subr.mxu0 0.0
  %1753 = vmatpush1.msra.mxu0 %v898
  %1754 = vmatprep.subr.mxu0 0.0
  %1755 = vmatpush1.msra.mxu0 %v897
  %1756 = vmatprep.subr.mxu0 0.0
  %1757 = vmatpush1.msra.mxu0 %v896
  %1758 = vmatprep.subr.mxu0 0.0
  %1759 = vmatpush1.msra.mxu0 %v895
  %1760 = vmatprep.subr.mxu0 0.0
  %1761 = vmatpush1.msra.mxu0 %v894
  %1762 = vmatprep.subr.mxu0 0.0
  %1763 = vmatpush1.msra.mxu0 %v893
  %1764 = vmatprep.subr.mxu0 0.0
  %1765 = vmatpush1.msra.mxu0 %v892
  %1766 = vmatprep.subr.mxu0 0.0
  %1767 = vmatpush1.msra.mxu0 %v891
  %1768 = vmatprep.subr.mxu0 0.0
  %1769 = vmatpush1.msra.mxu0 %v890
  %1770 = vmatprep.subr.mxu0 0.0
  %1771 = vmatpush1.msra.mxu0 %v889
  %1772 = vmatprep.subr.mxu0 0.0
  %1773 = vmatpush1.msra.mxu0 %v888
  %1774 = vmatprep.subr.mxu0 0.0
  %1775 = vmatpush1.msra.mxu0 %v887
  %1776 = vmatprep.subr.mxu0 0.0
  %1777 = vmatpush1.msra.mxu0 %v886
  %1778 = vmatprep.subr.mxu0 0.0
  %1779 = vmatpush1.msra.mxu0 %v885
  %1780 = vmatprep.subr.mxu0 0.0
  %1781 = vmatpush1.msra.mxu0 %v884
  %1782 = vmatprep.subr.mxu0 0.0
  %1783 = vmatpush2.msra.mxu0 0.0
  %1784 = vmatprep.subr.mxu0 0.0
  %1785 = vmatpush2.msra.mxu0 0.0
  %1786 = vmatprep.subr.mxu0 0.0
  %1787 = vmatpush2.msra.mxu0 0.0
  %1788 = vmatprep.subr.mxu0 0.0
  %1789 = vmatpush2.msra.mxu0 0.0
  %1790 = vmatprep.subr.mxu0 0.0
  %1791 = vmatpush2.msra.mxu0 0.0
  %1792 = vmatprep.subr.mxu0 0.0
  %1793 = vmatpush2.msra.mxu0 0.0
  %1794 = vmatprep.subr.mxu0 0.0
  %1795 = vmatpush2.msra.mxu0 0.0
  %1796 = vmatprep.subr.mxu0 0.0
  %1797 = vmatpush2.msra.mxu0 0.0
  %1798 = vmatprep.subr.mxu0 0.0
  %1799 = vmatpush2.msra.mxu0 0.0
  %1800 = vmatprep.subr.mxu0 0.0
  %1801 = vmatpush2.msra.mxu0 0.0
  %1802 = vmatprep.subr.mxu0 0.0
  %1803 = vmatpush2.msra.mxu0 0.0
  %1804 = vmatprep.subr.mxu0 0.0
  %1805 = vmatpush2.msra.mxu0 0.0
  %1806 = vmatprep.subr.mxu0 0.0
  %1807 = vmatpush2.msra.mxu0 0.0
  %1808 = vmatprep.subr.mxu0 0.0
  %1809 = vmatpush2.msra.mxu0 0.0
  %1810 = vmatprep.subr.mxu0 0.0
  %1811 = vmatpush2.msra.mxu0 0.0
  %1812 = vmatprep.subr.mxu0 0.0
  %1813 = vmatpush2.msra.mxu0 0.0
  %1814 = vmatprep.mubr.f32.mxu0 0.0
  %1815 = vmatmul.mubr.f32.gmra.mxu0 %v883
  %v1816 = vpop.f32.mrf.mxu0
  %v1817 = vadd.f32 %v1747, %v1816
  %v1818 = vpop.f32.mrf.mxu0
  %1819 = vdwg.mxu0
  %v1820 = vmul.f32 %v1671, %v1671
  %v1821 = vmul.f32 %v1672, %v1672
  %v1822 = vadd.f32 %v1820, %v1821
  %v1823 = vrot.slane %v1822, 4
  %v1824 = vadd.f32 %v1822, %v1823
  %v1825 = vrot.slane %v1824, 2
  %v1826 = vadd.f32 %v1824, %v1825
  %v1827 = vrot.slane %v1826, 1
  %v1828 = vadd.f32 %v1826, %v1827
  %1829 = vmatprep.subr.mxu0 0.0
  %1830 = vmatpush1.msra.mxu0 %v899
  %1831 = vmatprep.subr.mxu0 0.0
  %1832 = vmatpush1.msra.mxu0 %v898
  %1833 = vmatprep.subr.mxu0 0.0
  %1834 = vmatpush1.msra.mxu0 %v897
  %1835 = vmatprep.subr.mxu0 0.0
  %1836 = vmatpush1.msra.mxu0 %v896
  %1837 = vmatprep.subr.mxu0 0.0
  %1838 = vmatpush1.msra.mxu0 %v895
  %1839 = vmatprep.subr.mxu0 0.0
  %1840 = vmatpush1.msra.mxu0 %v894
  %1841 = vmatprep.subr.mxu0 0.0
  %1842 = vmatpush1.msra.mxu0 %v893
  %1843 = vmatprep.subr.mxu0 0.0
  %1844 = vmatpush1.msra.mxu0 %v892
  %1845 = vmatprep.subr.mxu0 0.0
  %1846 = vmatpush1.msra.mxu0 %v891
  %1847 = vmatprep.subr.mxu0 0.0
  %1848 = vmatpush1.msra.mxu0 %v890
  %1849 = vmatprep.subr.mxu0 0.0
  %1850 = vmatpush1.msra.mxu0 %v889
  %1851 = vmatprep.subr.mxu0 0.0
  %1852 = vmatpush1.msra.mxu0 %v888
  %1853 = vmatprep.subr.mxu0 0.0
  %1854 = vmatpush1.msra.mxu0 %v887
  %1855 = vmatprep.subr.mxu0 0.0
  %1856 = vmatpush1.msra.mxu0 %v886
  %1857 = vmatprep.subr.mxu0 0.0
  %1858 = vmatpush1.msra.mxu0 %v885
  %1859 = vmatprep.subr.mxu0 0.0
  %1860 = vmatpush1.msra.mxu0 %v884
  %1861 = vmatprep.subr.mxu0 0.0
  %1862 = vmatpush2.msra.mxu0 0.0
  %1863 = vmatprep.subr.mxu0 0.0
  %1864 = vmatpush2.msra.mxu0 0.0
  %1865 = vmatprep.subr.mxu0 0.0
  %1866 = vmatpush2.msra.mxu0 0.0
  %1867 = vmatprep.subr.mxu0 0.0
  %1868 = vmatpush2.msra.mxu0 0.0
  %1869 = vmatprep.subr.mxu0 0.0
  %1870 = vmatpush2.msra.mxu0 0.0
  %1871 = vmatprep.subr.mxu0 0.0
  %1872 = vmatpush2.msra.mxu0 0.0
  %1873 = vmatprep.subr.mxu0 0.0
  %1874 = vmatpush2.msra.mxu0 0.0
  %1875 = vmatprep.subr.mxu0 0.0
  %1876 = vmatpush2.msra.mxu0 0.0
  %1877 = vmatprep.subr.mxu0 0.0
  %1878 = vmatpush2.msra.mxu0 0.0
  %1879 = vmatprep.subr.mxu0 0.0
  %1880 = vmatpush2.msra.mxu0 0.0
  %1881 = vmatprep.subr.mxu0 0.0
  %1882 = vmatpush2.msra.mxu0 0.0
  %1883 = vmatprep.subr.mxu0 0.0
  %1884 = vmatpush2.msra.mxu0 0.0
  %1885 = vmatprep.subr.mxu0 0.0
  %1886 = vmatpush2.msra.mxu0 0.0
  %1887 = vmatprep.subr.mxu0 0.0
  %1888 = vmatpush2.msra.mxu0 0.0
  %1889 = vmatprep.subr.mxu0 0.0
  %1890 = vmatpush2.msra.mxu0 0.0
  %1891 = vmatprep.subr.mxu0 0.0
  %1892 = vmatpush2.msra.mxu0 0.0
  %1893 = vmatprep.mubr.f32.mxu0 0.0
  %1894 = vmatmul.mubr.f32.gmra.mxu0 %v1828
  %v1895 = vpop.f32.mrf.mxu0
  %v1896 = vadd.f32 0.0, %v1895
  %v1897 = vpop.f32.mrf.mxu0
  %1898 = vdwg.mxu0
  %1899 = vmatprep.subr.mxu0 0.0
  %1900 = vmatpush1.msra.mxu0 %v899
  %1901 = vmatprep.subr.mxu0 0.0
  %1902 = vmatpush1.msra.mxu0 %v898
  %1903 = vmatprep.subr.mxu0 0.0
  %1904 = vmatpush1.msra.mxu0 %v897
  %1905 = vmatprep.subr.mxu0 0.0
  %1906 = vmatpush1.msra.mxu0 %v896
  %1907 = vmatprep.subr.mxu0 0.0
  %1908 = vmatpush1.msra.mxu0 %v895
  %1909 = vmatprep.subr.mxu0 0.0
  %1910 = vmatpush1.msra.mxu0 %v894
  %1911 = vmatprep.subr.mxu0 0.0
  %1912 = vmatpush1.msra.mxu0 %v893
  %1913 = vmatprep.subr.mxu0 0.0
  %1914 = vmatpush1.msra.mxu0 %v892
  %1915 = vmatprep.subr.mxu0 0.0
  %1916 = vmatpush1.msra.mxu0 %v891
  %1917 = vmatprep.subr.mxu0 0.0
  %1918 = vmatpush1.msra.mxu0 %v890
  %1919 = vmatprep.subr.mxu0 0.0
  %1920 = vmatpush1.msra.mxu0 %v889
  %1921 = vmatprep.subr.mxu0 0.0
  %1922 = vmatpush1.msra.mxu0 %v888
  %1923 = vmatprep.subr.mxu0 0.0
  %1924 = vmatpush1.msra.mxu0 %v887
  %1925 = vmatprep.subr.mxu0 0.0
  %1926 = vmatpush1.msra.mxu0 %v886
  %1927 = vmatprep.subr.mxu0 0.0
  %1928 = vmatpush1.msra.mxu0 %v885
  %1929 = vmatprep.subr.mxu0 0.0
  %1930 = vmatpush1.msra.mxu0 %v884
  %1931 = vmatprep.subr.mxu0 0.0
  %1932 = vmatpush2.msra.mxu0 0.0
  %1933 = vmatprep.subr.mxu0 0.0
  %1934 = vmatpush2.msra.mxu0 0.0
  %1935 = vmatprep.subr.mxu0 0.0
  %1936 = vmatpush2.msra.mxu0 0.0
  %1937 = vmatprep.subr.mxu0 0.0
  %1938 = vmatpush2.msra.mxu0 0.0
  %1939 = vmatprep.subr.mxu0 0.0
  %1940 = vmatpush2.msra.mxu0 0.0
  %1941 = vmatprep.subr.mxu0 0.0
  %1942 = vmatpush2.msra.mxu0 0.0
  %1943 = vmatprep.subr.mxu0 0.0
  %1944 = vmatpush2.msra.mxu0 0.0
  %1945 = vmatprep.subr.mxu0 0.0
  %1946 = vmatpush2.msra.mxu0 0.0
  %1947 = vmatprep.subr.mxu0 0.0
  %1948 = vmatpush2.msra.mxu0 0.0
  %1949 = vmatprep.subr.mxu0 0.0
  %1950 = vmatpush2.msra.mxu0 0.0
  %1951 = vmatprep.subr.mxu0 0.0
  %1952 = vmatpush2.msra.mxu0 0.0
  %1953 = vmatprep.subr.mxu0 0.0
  %1954 = vmatpush2.msra.mxu0 0.0
  %1955 = vmatprep.subr.mxu0 0.0
  %1956 = vmatpush2.msra.mxu0 0.0
  %1957 = vmatprep.subr.mxu0 0.0
  %1958 = vmatpush2.msra.mxu0 0.0
  %1959 = vmatprep.subr.mxu0 0.0
  %1960 = vmatpush2.msra.mxu0 0.0
  %1961 = vmatprep.subr.mxu0 0.0
  %1962 = vmatpush2.msra.mxu0 0.0
  %1963 = vmatprep.mubr.f32.mxu0 0.0
  %1964 = vmatmul.mubr.f32.gmra.mxu0 %v908
  %v1965 = vpop.f32.mrf.mxu0
  %v1966 = vadd.f32 %v1896, %v1965
  %v1967 = vpop.f32.mrf.mxu0
  %1968 = vdwg.mxu0
  %v1969 = vrcp.pop 512.0
  %v1970 = vmul.f32 %v1817, %v1969
  %v1971 = vmul.f32 %v1966, %v1969
  %v1972 = vmul.f32 %v1970, %v1970
  %v1973 = vsub.f32 %v1971, %v1972
  %v1974 = vmax.f32 %v1973, 0.0
  %v1975 = vld [vmem:[%s3] sm:$0x1]
  %v1976 = vadd.f32 %v1974, 1e-05
  %v1977 = vrsqrt.pop %v1976
  %v1978 = vmul.f32 %v1975, %v1977
  %v1979 = vld [vmem:[%s4] sm:$0x1]
  %v1980 = vmul.f32 %v1970, %v1978
  %v1981 = vsub.f32 %v1979, %v1980
  %v1982 = vld [vmem:[%s6] sm:$0xff]
  %vm1983 = vcmask 64512
  %v1985 = vsel %vm1983, %v1978, 0
  %1987 = vmatprep.subr.mxu0 0.0
  %1988 = vmatpush1.msra.mxu0 0.0
  %1989 = vmatprep.subr.mxu0 0.0
  %1990 = vmatpush1.msra.mxu0 0.0
  %1991 = vmatprep.subr.mxu0 0.0
  %1992 = vmatpush1.msra.mxu0 0.0
  %1993 = vmatprep.subr.mxu0 0.0
  %1994 = vmatpush1.msra.mxu0 0.0
  %1995 = vmatprep.subr.mxu0 0.0
  %1996 = vmatpush1.msra.mxu0 0.0
  %1997 = vmatprep.subr.mxu0 0.0
  %1998 = vmatpush1.msra.mxu0 0.0
  %1999 = vmatprep.subr.mxu0 0.0
  %2000 = vmatpush1.msra.mxu0 0.0
  %2001 = vmatprep.subr.mxu0 0.0
  %2002 = vmatpush1.msra.mxu0 0.0
  %2003 = vmatprep.subr.mxu0 0.0
  %2004 = vmatpush1.msra.mxu0 0.0
  %2005 = vmatprep.subr.mxu0 0.0
  %2006 = vmatpush1.msra.mxu0 0.0
  %2007 = vmatprep.subr.mxu0 0.0
  %2008 = vmatpush1.msra.mxu0 0.0
  %2009 = vmatprep.subr.mxu0 0.0
  %2010 = vmatpush1.msra.mxu0 0.0
  %2011 = vmatprep.subr.mxu0 0.0
  %2012 = vmatpush1.msra.mxu0 0.0
  %2013 = vmatprep.subr.mxu0 0.0
  %2014 = vmatpush1.msra.mxu0 0.0
  %2015 = vmatprep.subr.mxu0 0.0
  %2016 = vmatpush1.msra.mxu0 0.0
  %2017 = vmatprep.subr.mxu0 0.0
  %2018 = vmatpush1.msra.mxu0 %v1982
  %2019 = vmatprep.subr.mxu0 0.0
  %2020 = vmatpush2.msra.mxu0 0.0
  %2021 = vmatprep.subr.mxu0 0.0
  %2022 = vmatpush2.msra.mxu0 0.0
  %2023 = vmatprep.subr.mxu0 0.0
  %2024 = vmatpush2.msra.mxu0 0.0
  %2025 = vmatprep.subr.mxu0 0.0
  %2026 = vmatpush2.msra.mxu0 0.0
  %2027 = vmatprep.subr.mxu0 0.0
  %2028 = vmatpush2.msra.mxu0 0.0
  %2029 = vmatprep.subr.mxu0 0.0
  %2030 = vmatpush2.msra.mxu0 0.0
  %2031 = vmatprep.subr.mxu0 0.0
  %2032 = vmatpush2.msra.mxu0 0.0
  %2033 = vmatprep.subr.mxu0 0.0
  %2034 = vmatpush2.msra.mxu0 0.0
  %2035 = vmatprep.subr.mxu0 0.0
  %2036 = vmatpush2.msra.mxu0 0.0
  %2037 = vmatprep.subr.mxu0 0.0
  %2038 = vmatpush2.msra.mxu0 0.0
  %2039 = vmatprep.subr.mxu0 0.0
  %2040 = vmatpush2.msra.mxu0 0.0
  %2041 = vmatprep.subr.mxu0 0.0
  %2042 = vmatpush2.msra.mxu0 0.0
  %2043 = vmatprep.subr.mxu0 0.0
  %2044 = vmatpush2.msra.mxu0 0.0
  %2045 = vmatprep.subr.mxu0 0.0
  %2046 = vmatpush2.msra.mxu0 0.0
  %2047 = vmatprep.subr.mxu0 0.0
  %2048 = vmatpush2.msra.mxu0 0.0
  %2049 = vmatprep.subr.mxu0 0.0
  %2050 = vmatpush2.msra.mxu0 0.0
  %2051 = vmatprep.mubr.f32.mxu0 0.0
  %2052 = vmatmul.mubr.f32.gmra.mxu0 %v1985
  %v2053 = vpop.f32.mrf.mxu0
  %v2054 = vadd.f32 0.0, %v2053
  %v2055 = vpop.f32.mrf.mxu0
  %2056 = vdwg.mxu0
  %v2058 = vsel %vm1983, %v1981, 0
  %2060 = vmatprep.subr.mxu0 0.0
  %2061 = vmatpush1.msra.mxu0 0.0
  %2062 = vmatprep.subr.mxu0 0.0
  %2063 = vmatpush1.msra.mxu0 0.0
  %2064 = vmatprep.subr.mxu0 0.0
  %2065 = vmatpush1.msra.mxu0 0.0
  %2066 = vmatprep.subr.mxu0 0.0
  %2067 = vmatpush1.msra.mxu0 0.0
  %2068 = vmatprep.subr.mxu0 0.0
  %2069 = vmatpush1.msra.mxu0 0.0
  %2070 = vmatprep.subr.mxu0 0.0
  %2071 = vmatpush1.msra.mxu0 0.0
  %2072 = vmatprep.subr.mxu0 0.0
  %2073 = vmatpush1.msra.mxu0 0.0
  %2074 = vmatprep.subr.mxu0 0.0
  %2075 = vmatpush1.msra.mxu0 0.0
  %2076 = vmatprep.subr.mxu0 0.0
  %2077 = vmatpush1.msra.mxu0 0.0
  %2078 = vmatprep.subr.mxu0 0.0
  %2079 = vmatpush1.msra.mxu0 0.0
  %2080 = vmatprep.subr.mxu0 0.0
  %2081 = vmatpush1.msra.mxu0 0.0
  %2082 = vmatprep.subr.mxu0 0.0
  %2083 = vmatpush1.msra.mxu0 0.0
  %2084 = vmatprep.subr.mxu0 0.0
  %2085 = vmatpush1.msra.mxu0 0.0
  %2086 = vmatprep.subr.mxu0 0.0
  %2087 = vmatpush1.msra.mxu0 0.0
  %2088 = vmatprep.subr.mxu0 0.0
  %2089 = vmatpush1.msra.mxu0 0.0
  %2090 = vmatprep.subr.mxu0 0.0
  %2091 = vmatpush1.msra.mxu0 %v1982
  %2092 = vmatprep.subr.mxu0 0.0
  %2093 = vmatpush2.msra.mxu0 0.0
  %2094 = vmatprep.subr.mxu0 0.0
  %2095 = vmatpush2.msra.mxu0 0.0
  %2096 = vmatprep.subr.mxu0 0.0
  %2097 = vmatpush2.msra.mxu0 0.0
  %2098 = vmatprep.subr.mxu0 0.0
  %2099 = vmatpush2.msra.mxu0 0.0
  %2100 = vmatprep.subr.mxu0 0.0
  %2101 = vmatpush2.msra.mxu0 0.0
  %2102 = vmatprep.subr.mxu0 0.0
  %2103 = vmatpush2.msra.mxu0 0.0
  %2104 = vmatprep.subr.mxu0 0.0
  %2105 = vmatpush2.msra.mxu0 0.0
  %2106 = vmatprep.subr.mxu0 0.0
  %2107 = vmatpush2.msra.mxu0 0.0
  %2108 = vmatprep.subr.mxu0 0.0
  %2109 = vmatpush2.msra.mxu0 0.0
  %2110 = vmatprep.subr.mxu0 0.0
  %2111 = vmatpush2.msra.mxu0 0.0
  %2112 = vmatprep.subr.mxu0 0.0
  %2113 = vmatpush2.msra.mxu0 0.0
  %2114 = vmatprep.subr.mxu0 0.0
  %2115 = vmatpush2.msra.mxu0 0.0
  %2116 = vmatprep.subr.mxu0 0.0
  %2117 = vmatpush2.msra.mxu0 0.0
  %2118 = vmatprep.subr.mxu0 0.0
  %2119 = vmatpush2.msra.mxu0 0.0
  %2120 = vmatprep.subr.mxu0 0.0
  %2121 = vmatpush2.msra.mxu0 0.0
  %2122 = vmatprep.subr.mxu0 0.0
  %2123 = vmatpush2.msra.mxu0 0.0
  %2124 = vmatprep.mubr.f32.mxu0 0.0
  %2125 = vmatmul.mubr.f32.gmra.mxu0 %v2058
  %v2126 = vpop.f32.mrf.mxu0
  %v2127 = vadd.f32 0.0, %v2126
  %v2128 = vpop.f32.mrf.mxu0
  %2129 = vdwg.mxu0
  %v2130 = vlaneseq
  %v2131 = vshrl.u32 %v2130, 7
  %v2132 = vsub.s32 0, %v2131
  %v2133 = vrot.slane %v2054, %v2132
  %v2134 = vmul.f32 %v875, %v2133
  %v2135 = vmul.f32 %v876, %v2133
  %v2136 = vlaneseq
  %v2137 = vshrl.u32 %v2136, 7
  %v2138 = vsub.s32 0, %v2137
  %v2139 = vrot.slane %v2127, %v2138
  %v2140 = vadd.f32 %v2134, %v2139
  %v2141 = vadd.f32 %v2135, %v2139
  %v2142 = vmax.f32 %v2140, 0.0
  %v2143 = vmax.f32 %v2141, 0.0
  %v2144 = vld [vmem:[%s7] sm:$0xff]
  %v2145 = vld [vmem:[%s7 + $0x8] sm:$0xff]
  %v2146 = vld [vmem:[%s7 + $0x10] sm:$0xff]
  %v2147 = vld [vmem:[%s7 + $0x18] sm:$0xff]
  %v2148 = vld [vmem:[%s7 + $0x20] sm:$0xff]
  %v2149 = vld [vmem:[%s7 + $0x28] sm:$0xff]
  %v2150 = vld [vmem:[%s7 + $0x30] sm:$0xff]
  %v2151 = vld [vmem:[%s7 + $0x38] sm:$0xff]
  %v2152 = vld [vmem:[%s7 + $0x40] sm:$0xff]
  %v2153 = vld [vmem:[%s7 + $0x48] sm:$0xff]
  %v2154 = vld [vmem:[%s7 + $0x50] sm:$0xff]
  %v2155 = vld [vmem:[%s7 + $0x58] sm:$0xff]
  %v2156 = vld [vmem:[%s7 + $0x60] sm:$0xff]
  %v2157 = vld [vmem:[%s7 + $0x68] sm:$0xff]
  %v2158 = vld [vmem:[%s7 + $0x70] sm:$0xff]
  %v2159 = vld [vmem:[%s7 + $0x78] sm:$0xff]
  %2160 = vmatprep.subr.mxu0 0.0
  %2161 = vmatpush1.msra.mxu0 %v2159
  %2162 = vmatprep.subr.mxu0 0.0
  %2163 = vmatpush1.msra.mxu0 %v2158
  %2164 = vmatprep.subr.mxu0 0.0
  %2165 = vmatpush1.msra.mxu0 %v2157
  %2166 = vmatprep.subr.mxu0 0.0
  %2167 = vmatpush1.msra.mxu0 %v2156
  %2168 = vmatprep.subr.mxu0 0.0
  %2169 = vmatpush1.msra.mxu0 %v2155
  %2170 = vmatprep.subr.mxu0 0.0
  %2171 = vmatpush1.msra.mxu0 %v2154
  %2172 = vmatprep.subr.mxu0 0.0
  %2173 = vmatpush1.msra.mxu0 %v2153
  %2174 = vmatprep.subr.mxu0 0.0
  %2175 = vmatpush1.msra.mxu0 %v2152
  %2176 = vmatprep.subr.mxu0 0.0
  %2177 = vmatpush1.msra.mxu0 %v2151
  %2178 = vmatprep.subr.mxu0 0.0
  %2179 = vmatpush1.msra.mxu0 %v2150
  %2180 = vmatprep.subr.mxu0 0.0
  %2181 = vmatpush1.msra.mxu0 %v2149
  %2182 = vmatprep.subr.mxu0 0.0
  %2183 = vmatpush1.msra.mxu0 %v2148
  %2184 = vmatprep.subr.mxu0 0.0
  %2185 = vmatpush1.msra.mxu0 %v2147
  %2186 = vmatprep.subr.mxu0 0.0
  %2187 = vmatpush1.msra.mxu0 %v2146
  %2188 = vmatprep.subr.mxu0 0.0
  %2189 = vmatpush1.msra.mxu0 %v2145
  %2190 = vmatprep.subr.mxu0 0.0
  %2191 = vmatpush1.msra.mxu0 %v2144
  %2192 = vmatprep.subr.mxu0 0.0
  %2193 = vmatpush2.msra.mxu0 0.0
  %2194 = vmatprep.subr.mxu0 0.0
  %2195 = vmatpush2.msra.mxu0 0.0
  %2196 = vmatprep.subr.mxu0 0.0
  %2197 = vmatpush2.msra.mxu0 0.0
  %2198 = vmatprep.subr.mxu0 0.0
  %2199 = vmatpush2.msra.mxu0 0.0
  %2200 = vmatprep.subr.mxu0 0.0
  %2201 = vmatpush2.msra.mxu0 0.0
  %2202 = vmatprep.subr.mxu0 0.0
  %2203 = vmatpush2.msra.mxu0 0.0
  %2204 = vmatprep.subr.mxu0 0.0
  %2205 = vmatpush2.msra.mxu0 0.0
  %2206 = vmatprep.subr.mxu0 0.0
  %2207 = vmatpush2.msra.mxu0 0.0
  %2208 = vmatprep.subr.mxu0 0.0
  %2209 = vmatpush2.msra.mxu0 0.0
  %2210 = vmatprep.subr.mxu0 0.0
  %2211 = vmatpush2.msra.mxu0 0.0
  %2212 = vmatprep.subr.mxu0 0.0
  %2213 = vmatpush2.msra.mxu0 0.0
  %2214 = vmatprep.subr.mxu0 0.0
  %2215 = vmatpush2.msra.mxu0 0.0
  %2216 = vmatprep.subr.mxu0 0.0
  %2217 = vmatpush2.msra.mxu0 0.0
  %2218 = vmatprep.subr.mxu0 0.0
  %2219 = vmatpush2.msra.mxu0 0.0
  %2220 = vmatprep.subr.mxu0 0.0
  %2221 = vmatpush2.msra.mxu0 0.0
  %2222 = vmatprep.subr.mxu0 0.0
  %2223 = vmatpush2.msra.mxu0 0.0
  %2224 = vmatprep.mubr.f32.mxu0 0.0
  %2225 = vmatmul.mubr.f32.gmra.mxu0 %v2142
  %v2226 = vpop.f32.mrf.mxu0
  %v2227 = vadd.f32 0.0, %v2226
  %v2228 = vpop.f32.mrf.mxu0
  %2229 = vmatprep.mubr.f32.mxu0 0.0
  %2230 = vmatmul.mubr.f32.gmra.mxu0 %v2143
  %v2231 = vpop.f32.mrf.mxu0
  %v2232 = vadd.f32 0.0, %v2231
  %v2233 = vpop.f32.mrf.mxu0
  %2234 = vdwg.mxu0
  %v2235 = vld [vmem:[%s8] sm:$0xff]
  %v2236 = vld [vmem:[%s8 + $0x8] sm:$0xff]
  %v2237 = vld [vmem:[%s8 + $0x10] sm:$0xff]
  %v2238 = vld [vmem:[%s8 + $0x18] sm:$0xff]
  %v2239 = vld [vmem:[%s8 + $0x20] sm:$0xff]
  %v2240 = vld [vmem:[%s8 + $0x28] sm:$0xff]
  %v2241 = vld [vmem:[%s8 + $0x30] sm:$0xff]
  %v2242 = vld [vmem:[%s8 + $0x38] sm:$0xff]
  %v2243 = vld [vmem:[%s8 + $0x40] sm:$0xff]
  %v2244 = vld [vmem:[%s8 + $0x48] sm:$0xff]
  %v2245 = vld [vmem:[%s8 + $0x50] sm:$0xff]
  %v2246 = vld [vmem:[%s8 + $0x58] sm:$0xff]
  %v2247 = vld [vmem:[%s8 + $0x60] sm:$0xff]
  %v2248 = vld [vmem:[%s8 + $0x68] sm:$0xff]
  %v2249 = vld [vmem:[%s8 + $0x70] sm:$0xff]
  %v2250 = vld [vmem:[%s8 + $0x78] sm:$0xff]
  %2251 = vmatprep.subr.mxu0 0.0
  %2252 = vmatpush1.msra.mxu0 %v2250
  %2253 = vmatprep.subr.mxu0 0.0
  %2254 = vmatpush1.msra.mxu0 %v2249
  %2255 = vmatprep.subr.mxu0 0.0
  %2256 = vmatpush1.msra.mxu0 %v2248
  %2257 = vmatprep.subr.mxu0 0.0
  %2258 = vmatpush1.msra.mxu0 %v2247
  %2259 = vmatprep.subr.mxu0 0.0
  %2260 = vmatpush1.msra.mxu0 %v2246
  %2261 = vmatprep.subr.mxu0 0.0
  %2262 = vmatpush1.msra.mxu0 %v2245
  %2263 = vmatprep.subr.mxu0 0.0
  %2264 = vmatpush1.msra.mxu0 %v2244
  %2265 = vmatprep.subr.mxu0 0.0
  %2266 = vmatpush1.msra.mxu0 %v2243
  %2267 = vmatprep.subr.mxu0 0.0
  %2268 = vmatpush1.msra.mxu0 %v2242
  %2269 = vmatprep.subr.mxu0 0.0
  %2270 = vmatpush1.msra.mxu0 %v2241
  %2271 = vmatprep.subr.mxu0 0.0
  %2272 = vmatpush1.msra.mxu0 %v2240
  %2273 = vmatprep.subr.mxu0 0.0
  %2274 = vmatpush1.msra.mxu0 %v2239
  %2275 = vmatprep.subr.mxu0 0.0
  %2276 = vmatpush1.msra.mxu0 %v2238
  %2277 = vmatprep.subr.mxu0 0.0
  %2278 = vmatpush1.msra.mxu0 %v2237
  %2279 = vmatprep.subr.mxu0 0.0
  %2280 = vmatpush1.msra.mxu0 %v2236
  %2281 = vmatprep.subr.mxu0 0.0
  %2282 = vmatpush1.msra.mxu0 %v2235
  %2283 = vmatprep.subr.mxu0 0.0
  %2284 = vmatpush2.msra.mxu0 0.0
  %2285 = vmatprep.subr.mxu0 0.0
  %2286 = vmatpush2.msra.mxu0 0.0
  %2287 = vmatprep.subr.mxu0 0.0
  %2288 = vmatpush2.msra.mxu0 0.0
  %2289 = vmatprep.subr.mxu0 0.0
  %2290 = vmatpush2.msra.mxu0 0.0
  %2291 = vmatprep.subr.mxu0 0.0
  %2292 = vmatpush2.msra.mxu0 0.0
  %2293 = vmatprep.subr.mxu0 0.0
  %2294 = vmatpush2.msra.mxu0 0.0
  %2295 = vmatprep.subr.mxu0 0.0
  %2296 = vmatpush2.msra.mxu0 0.0
  %2297 = vmatprep.subr.mxu0 0.0
  %2298 = vmatpush2.msra.mxu0 0.0
  %2299 = vmatprep.subr.mxu0 0.0
  %2300 = vmatpush2.msra.mxu0 0.0
  %2301 = vmatprep.subr.mxu0 0.0
  %2302 = vmatpush2.msra.mxu0 0.0
  %2303 = vmatprep.subr.mxu0 0.0
  %2304 = vmatpush2.msra.mxu0 0.0
  %2305 = vmatprep.subr.mxu0 0.0
  %2306 = vmatpush2.msra.mxu0 0.0
  %2307 = vmatprep.subr.mxu0 0.0
  %2308 = vmatpush2.msra.mxu0 0.0
  %2309 = vmatprep.subr.mxu0 0.0
  %2310 = vmatpush2.msra.mxu0 0.0
  %2311 = vmatprep.subr.mxu0 0.0
  %2312 = vmatpush2.msra.mxu0 0.0
  %2313 = vmatprep.subr.mxu0 0.0
  %2314 = vmatpush2.msra.mxu0 0.0
  %2315 = vmatprep.mubr.f32.mxu0 0.0
  %2316 = vmatmul.mubr.f32.gmra.mxu0 %v2142
  %v2317 = vpop.f32.mrf.mxu0
  %v2318 = vadd.f32 0.0, %v2317
  %v2319 = vpop.f32.mrf.mxu0
  %2320 = vmatprep.mubr.f32.mxu0 0.0
  %2321 = vmatmul.mubr.f32.gmra.mxu0 %v2143
  %v2322 = vpop.f32.mrf.mxu0
  %v2323 = vadd.f32 0.0, %v2322
  %v2324 = vpop.f32.mrf.mxu0
  %2325 = vdwg.mxu0
  %v2326 = vmax.f32 %v2227, %v2318
  %v2327 = vmax.f32 %v2232, %v2323
  %v2328 = vld [vmem:[%s9] sm:$0xff]
  %vm2329 = vcmask 130048
  %v2331 = vsel %vm2329, %v2328, 0
  %2333 = vmatprep.subr.mxu0 0.0
  %2334 = vmatpush1.msra.mxu0 0.0
  %2335 = vmatprep.subr.mxu0 0.0
  %2336 = vmatpush1.msra.mxu0 0.0
  %2337 = vmatprep.subr.mxu0 0.0
  %2338 = vmatpush1.msra.mxu0 0.0
  %2339 = vmatprep.subr.mxu0 0.0
  %2340 = vmatpush1.msra.mxu0 0.0
  %2341 = vmatprep.subr.mxu0 0.0
  %2342 = vmatpush1.msra.mxu0 0.0
  %2343 = vmatprep.subr.mxu0 0.0
  %2344 = vmatpush1.msra.mxu0 0.0
  %2345 = vmatprep.subr.mxu0 0.0
  %2346 = vmatpush1.msra.mxu0 0.0
  %2347 = vmatprep.subr.mxu0 0.0
  %2348 = vmatpush1.msra.mxu0 0.0
  %2349 = vmatprep.subr.mxu0 0.0
  %2350 = vmatpush1.msra.mxu0 0.0
  %2351 = vmatprep.subr.mxu0 0.0
  %2352 = vmatpush1.msra.mxu0 0.0
  %2353 = vmatprep.subr.mxu0 0.0
  %2354 = vmatpush1.msra.mxu0 0.0
  %2355 = vmatprep.subr.mxu0 0.0
  %2356 = vmatpush1.msra.mxu0 0.0
  %2357 = vmatprep.subr.mxu0 0.0
  %2358 = vmatpush1.msra.mxu0 0.0
  %2359 = vmatprep.subr.mxu0 0.0
  %2360 = vmatpush1.msra.mxu0 0.0
  %2361 = vmatprep.subr.mxu0 0.0
  %2362 = vmatpush1.msra.mxu0 %v2327
  %2363 = vmatprep.subr.mxu0 0.0
  %2364 = vmatpush1.msra.mxu0 %v2326
  %2365 = vmatprep.subr.mxu0 0.0
  %2366 = vmatpush2.msra.mxu0 0.0
  %2367 = vmatprep.subr.mxu0 0.0
  %2368 = vmatpush2.msra.mxu0 0.0
  %2369 = vmatprep.subr.mxu0 0.0
  %2370 = vmatpush2.msra.mxu0 0.0
  %2371 = vmatprep.subr.mxu0 0.0
  %2372 = vmatpush2.msra.mxu0 0.0
  %2373 = vmatprep.subr.mxu0 0.0
  %2374 = vmatpush2.msra.mxu0 0.0
  %2375 = vmatprep.subr.mxu0 0.0
  %2376 = vmatpush2.msra.mxu0 0.0
  %2377 = vmatprep.subr.mxu0 0.0
  %2378 = vmatpush2.msra.mxu0 0.0
  %2379 = vmatprep.subr.mxu0 0.0
  %2380 = vmatpush2.msra.mxu0 0.0
  %2381 = vmatprep.subr.mxu0 0.0
  %2382 = vmatpush2.msra.mxu0 0.0
  %2383 = vmatprep.subr.mxu0 0.0
  %2384 = vmatpush2.msra.mxu0 0.0
  %2385 = vmatprep.subr.mxu0 0.0
  %2386 = vmatpush2.msra.mxu0 0.0
  %2387 = vmatprep.subr.mxu0 0.0
  %2388 = vmatpush2.msra.mxu0 0.0
  %2389 = vmatprep.subr.mxu0 0.0
  %2390 = vmatpush2.msra.mxu0 0.0
  %2391 = vmatprep.subr.mxu0 0.0
  %2392 = vmatpush2.msra.mxu0 0.0
  %2393 = vmatprep.subr.mxu0 0.0
  %2394 = vmatpush2.msra.mxu0 0.0
  %2395 = vmatprep.subr.mxu0 0.0
  %2396 = vmatpush2.msra.mxu0 0.0
  %2397 = vmatprep.mubr.f32.mxu0 0.0
  %2398 = vmatmul.mubr.f32.gmra.mxu0 %v2331
  %v2399 = vpop.f32.mrf.mxu0
  %v2400 = vadd.f32 0.0, %v2399
  %v2401 = vpop.f32.mrf.mxu0
  %2402 = vdwg.mxu0
  %v2403 = vld [vmem:[%s10] sm:$0xff]
  %v2405 = vsel %vm2329, %v2403, 0
  %2407 = vmatprep.subr.mxu0 0.0
  %2408 = vmatpush1.msra.mxu0 0.0
  %2409 = vmatprep.subr.mxu0 0.0
  %2410 = vmatpush1.msra.mxu0 0.0
  %2411 = vmatprep.subr.mxu0 0.0
  %2412 = vmatpush1.msra.mxu0 0.0
  %2413 = vmatprep.subr.mxu0 0.0
  %2414 = vmatpush1.msra.mxu0 0.0
  %2415 = vmatprep.subr.mxu0 0.0
  %2416 = vmatpush1.msra.mxu0 0.0
  %2417 = vmatprep.subr.mxu0 0.0
  %2418 = vmatpush1.msra.mxu0 0.0
  %2419 = vmatprep.subr.mxu0 0.0
  %2420 = vmatpush1.msra.mxu0 0.0
  %2421 = vmatprep.subr.mxu0 0.0
  %2422 = vmatpush1.msra.mxu0 0.0
  %2423 = vmatprep.subr.mxu0 0.0
  %2424 = vmatpush1.msra.mxu0 0.0
  %2425 = vmatprep.subr.mxu0 0.0
  %2426 = vmatpush1.msra.mxu0 0.0
  %2427 = vmatprep.subr.mxu0 0.0
  %2428 = vmatpush1.msra.mxu0 0.0
  %2429 = vmatprep.subr.mxu0 0.0
  %2430 = vmatpush1.msra.mxu0 0.0
  %2431 = vmatprep.subr.mxu0 0.0
  %2432 = vmatpush1.msra.mxu0 0.0
  %2433 = vmatprep.subr.mxu0 0.0
  %2434 = vmatpush1.msra.mxu0 0.0
  %2435 = vmatprep.subr.mxu0 0.0
  %2436 = vmatpush1.msra.mxu0 %v2327
  %2437 = vmatprep.subr.mxu0 0.0
  %2438 = vmatpush1.msra.mxu0 %v2326
  %2439 = vmatprep.subr.mxu0 0.0
  %2440 = vmatpush2.msra.mxu0 0.0
  %2441 = vmatprep.subr.mxu0 0.0
  %2442 = vmatpush2.msra.mxu0 0.0
  %2443 = vmatprep.subr.mxu0 0.0
  %2444 = vmatpush2.msra.mxu0 0.0
  %2445 = vmatprep.subr.mxu0 0.0
  %2446 = vmatpush2.msra.mxu0 0.0
  %2447 = vmatprep.subr.mxu0 0.0
  %2448 = vmatpush2.msra.mxu0 0.0
  %2449 = vmatprep.subr.mxu0 0.0
  %2450 = vmatpush2.msra.mxu0 0.0
  %2451 = vmatprep.subr.mxu0 0.0
  %2452 = vmatpush2.msra.mxu0 0.0
  %2453 = vmatprep.subr.mxu0 0.0
  %2454 = vmatpush2.msra.mxu0 0.0
  %2455 = vmatprep.subr.mxu0 0.0
  %2456 = vmatpush2.msra.mxu0 0.0
  %2457 = vmatprep.subr.mxu0 0.0
  %2458 = vmatpush2.msra.mxu0 0.0
  %2459 = vmatprep.subr.mxu0 0.0
  %2460 = vmatpush2.msra.mxu0 0.0
  %2461 = vmatprep.subr.mxu0 0.0
  %2462 = vmatpush2.msra.mxu0 0.0
  %2463 = vmatprep.subr.mxu0 0.0
  %2464 = vmatpush2.msra.mxu0 0.0
  %2465 = vmatprep.subr.mxu0 0.0
  %2466 = vmatpush2.msra.mxu0 0.0
  %2467 = vmatprep.subr.mxu0 0.0
  %2468 = vmatpush2.msra.mxu0 0.0
  %2469 = vmatprep.subr.mxu0 0.0
  %2470 = vmatpush2.msra.mxu0 0.0
  %2471 = vmatprep.mubr.f32.mxu0 0.0
  %2472 = vmatmul.mubr.f32.gmra.mxu0 %v2405
  %v2473 = vpop.f32.mrf.mxu0
  %v2474 = vadd.f32 0.0, %v2473
  %v2475 = vpop.f32.mrf.mxu0
  %2476 = vdwg.mxu0
  %v2477 = vmax.f32 %v2400, %v2474
  %v2478 = vld [vmem:[%s11] sm:$0xff]
  %v2479 = vld [vmem:[%s11 + $0x8] sm:$0x3]
  %v2481 = vsel %vm1983, %v2478, 0
  %v2484 = vsel %vm1983, %v2479, 0
  %2486 = vmatprep.subr.mxu0 0.0
  %2487 = vmatpush1.msra.mxu0 0.0
  %2488 = vmatprep.subr.mxu0 0.0
  %2489 = vmatpush1.msra.mxu0 0.0
  %2490 = vmatprep.subr.mxu0 0.0
  %2491 = vmatpush1.msra.mxu0 0.0
  %2492 = vmatprep.subr.mxu0 0.0
  %2493 = vmatpush1.msra.mxu0 0.0
  %2494 = vmatprep.subr.mxu0 0.0
  %2495 = vmatpush1.msra.mxu0 0.0
  %2496 = vmatprep.subr.mxu0 0.0
  %2497 = vmatpush1.msra.mxu0 0.0
  %2498 = vmatprep.subr.mxu0 0.0
  %2499 = vmatpush1.msra.mxu0 0.0
  %2500 = vmatprep.subr.mxu0 0.0
  %2501 = vmatpush1.msra.mxu0 0.0
  %2502 = vmatprep.subr.mxu0 0.0
  %2503 = vmatpush1.msra.mxu0 0.0
  %2504 = vmatprep.subr.mxu0 0.0
  %2505 = vmatpush1.msra.mxu0 0.0
  %2506 = vmatprep.subr.mxu0 0.0
  %2507 = vmatpush1.msra.mxu0 0.0
  %2508 = vmatprep.subr.mxu0 0.0
  %2509 = vmatpush1.msra.mxu0 0.0
  %2510 = vmatprep.subr.mxu0 0.0
  %2511 = vmatpush1.msra.mxu0 0.0
  %2512 = vmatprep.subr.mxu0 0.0
  %2513 = vmatpush1.msra.mxu0 0.0
  %2514 = vmatprep.subr.mxu0 0.0
  %2515 = vmatpush1.msra.mxu0 0.0
  %2516 = vmatprep.subr.mxu0 0.0
  %2517 = vmatpush1.msra.mxu0 %v2477
  %2518 = vmatprep.subr.mxu0 0.0
  %2519 = vmatpush2.msra.mxu0 0.0
  %2520 = vmatprep.subr.mxu0 0.0
  %2521 = vmatpush2.msra.mxu0 0.0
  %2522 = vmatprep.subr.mxu0 0.0
  %2523 = vmatpush2.msra.mxu0 0.0
  %2524 = vmatprep.subr.mxu0 0.0
  %2525 = vmatpush2.msra.mxu0 0.0
  %2526 = vmatprep.subr.mxu0 0.0
  %2527 = vmatpush2.msra.mxu0 0.0
  %2528 = vmatprep.subr.mxu0 0.0
  %2529 = vmatpush2.msra.mxu0 0.0
  %2530 = vmatprep.subr.mxu0 0.0
  %2531 = vmatpush2.msra.mxu0 0.0
  %2532 = vmatprep.subr.mxu0 0.0
  %2533 = vmatpush2.msra.mxu0 0.0
  %2534 = vmatprep.subr.mxu0 0.0
  %2535 = vmatpush2.msra.mxu0 0.0
  %2536 = vmatprep.subr.mxu0 0.0
  %2537 = vmatpush2.msra.mxu0 0.0
  %2538 = vmatprep.subr.mxu0 0.0
  %2539 = vmatpush2.msra.mxu0 0.0
  %2540 = vmatprep.subr.mxu0 0.0
  %2541 = vmatpush2.msra.mxu0 0.0
  %2542 = vmatprep.subr.mxu0 0.0
  %2543 = vmatpush2.msra.mxu0 0.0
  %2544 = vmatprep.subr.mxu0 0.0
  %2545 = vmatpush2.msra.mxu0 0.0
  %2546 = vmatprep.subr.mxu0 0.0
  %2547 = vmatpush2.msra.mxu0 0.0
  %2548 = vmatprep.subr.mxu0 0.0
  %2549 = vmatpush2.msra.mxu0 0.0
  %2550 = vmatprep.mubr.f32.mxu0 0.0
  %2551 = vmatmul.mubr.f32.gmra.mxu0 %v2481
  %v2552 = vpop.f32.mrf.mxu0
  %v2553 = vadd.f32 0.0, %v2552
  %v2554 = vpop.f32.mrf.mxu0
  %2555 = vmatprep.mubr.f32.mxu0 0.0
  %2556 = vmatmul.mubr.f32.gmra.mxu0 %v2484
  %v2557 = vpop.f32.mrf.mxu0
  %v2558 = vadd.f32 0.0, %v2557
  %v2559 = vpop.f32.mrf.mxu0
  %2560 = vdwg.mxu0
  %v2561 = vld [vmem:[%s12] sm:$0xff]
  %v2562 = vld [vmem:[%s12 + $0x8] sm:$0xff]
  %v2563 = vld [vmem:[%s12 + $0x10] sm:$0xff]
  %v2564 = vld [vmem:[%s12 + $0x18] sm:$0xff]
  %v2565 = vld [vmem:[%s12 + $0x20] sm:$0xff]
  %v2566 = vld [vmem:[%s12 + $0x28] sm:$0xff]
  %v2567 = vld [vmem:[%s12 + $0x30] sm:$0xff]
  %v2568 = vld [vmem:[%s12 + $0x38] sm:$0xff]
  %vm2569 = vcmask 523264
  %v2571 = vsel %vm2569, %v2553, 0
  %v2574 = vsel %vm2569, %v2558, 0
  %2576 = vmatprep.subr.mxu0 0.0
  %2577 = vmatpush1.msra.mxu0 0.0
  %2578 = vmatprep.subr.mxu0 0.0
  %2579 = vmatpush1.msra.mxu0 0.0
  %2580 = vmatprep.subr.mxu0 0.0
  %2581 = vmatpush1.msra.mxu0 0.0
  %2582 = vmatprep.subr.mxu0 0.0
  %2583 = vmatpush1.msra.mxu0 0.0
  %2584 = vmatprep.subr.mxu0 0.0
  %2585 = vmatpush1.msra.mxu0 0.0
  %2586 = vmatprep.subr.mxu0 0.0
  %2587 = vmatpush1.msra.mxu0 0.0
  %2588 = vmatprep.subr.mxu0 0.0
  %2589 = vmatpush1.msra.mxu0 0.0
  %2590 = vmatprep.subr.mxu0 0.0
  %2591 = vmatpush1.msra.mxu0 0.0
  %2592 = vmatprep.subr.mxu0 0.0
  %2593 = vmatpush1.msra.mxu0 %v2568
  %2594 = vmatprep.subr.mxu0 0.0
  %2595 = vmatpush1.msra.mxu0 %v2567
  %2596 = vmatprep.subr.mxu0 0.0
  %2597 = vmatpush1.msra.mxu0 %v2566
  %2598 = vmatprep.subr.mxu0 0.0
  %2599 = vmatpush1.msra.mxu0 %v2565
  %2600 = vmatprep.subr.mxu0 0.0
  %2601 = vmatpush1.msra.mxu0 %v2564
  %2602 = vmatprep.subr.mxu0 0.0
  %2603 = vmatpush1.msra.mxu0 %v2563
  %2604 = vmatprep.subr.mxu0 0.0
  %2605 = vmatpush1.msra.mxu0 %v2562
  %2606 = vmatprep.subr.mxu0 0.0
  %2607 = vmatpush1.msra.mxu0 %v2561
  %2608 = vmatprep.subr.mxu0 0.0
  %2609 = vmatpush2.msra.mxu0 0.0
  %2610 = vmatprep.subr.mxu0 0.0
  %2611 = vmatpush2.msra.mxu0 0.0
  %2612 = vmatprep.subr.mxu0 0.0
  %2613 = vmatpush2.msra.mxu0 0.0
  %2614 = vmatprep.subr.mxu0 0.0
  %2615 = vmatpush2.msra.mxu0 0.0
  %2616 = vmatprep.subr.mxu0 0.0
  %2617 = vmatpush2.msra.mxu0 0.0
  %2618 = vmatprep.subr.mxu0 0.0
  %2619 = vmatpush2.msra.mxu0 0.0
  %2620 = vmatprep.subr.mxu0 0.0
  %2621 = vmatpush2.msra.mxu0 0.0
  %2622 = vmatprep.subr.mxu0 0.0
  %2623 = vmatpush2.msra.mxu0 0.0
  %2624 = vmatprep.subr.mxu0 0.0
  %2625 = vmatpush2.msra.mxu0 0.0
  %2626 = vmatprep.subr.mxu0 0.0
  %2627 = vmatpush2.msra.mxu0 0.0
  %2628 = vmatprep.subr.mxu0 0.0
  %2629 = vmatpush2.msra.mxu0 0.0
  %2630 = vmatprep.subr.mxu0 0.0
  %2631 = vmatpush2.msra.mxu0 0.0
  %2632 = vmatprep.subr.mxu0 0.0
  %2633 = vmatpush2.msra.mxu0 0.0
  %2634 = vmatprep.subr.mxu0 0.0
  %2635 = vmatpush2.msra.mxu0 0.0
  %2636 = vmatprep.subr.mxu0 0.0
  %2637 = vmatpush2.msra.mxu0 0.0
  %2638 = vmatprep.subr.mxu0 0.0
  %2639 = vmatpush2.msra.mxu0 0.0
  %2640 = vmatprep.mubr.f32.mxu0 0.0
  %2641 = vmatmul.mubr.f32.gmra.mxu0 %v2571
  %v2642 = vpop.f32.mrf.mxu0
  %v2643 = vadd.f32 0.0, %v2642
  %v2644 = vpop.f32.mrf.mxu0
  %2645 = vmatprep.mubr.f32.mxu0 0.0
  %2646 = vmatmul.mubr.f32.gmra.mxu0 %v2574
  %v2647 = vpop.f32.mrf.mxu0
  %v2648 = vadd.f32 0.0, %v2647
  %v2649 = vpop.f32.mrf.mxu0
  %2650 = vdwg.mxu0
  %vm2651 = vcmask 654336
  %2652 = vst.msk [vmem:[%s13] sm:$0xff] %vm2651, %v2643
  %vm2653 = vcmask 648192
  %2654 = vst.msk [vmem:[%s13 + $0x8] sm:$0x3] %vm2653, %v2648
  %v2655 = vmul.f32 %v1671, %v2133
  %v2656 = vmul.f32 %v1672, %v2133
  %v2657 = vadd.f32 %v2655, %v2139
  %v2658 = vadd.f32 %v2656, %v2139
  %v2659 = vmax.f32 %v2657, 0.0
  %v2660 = vmax.f32 %v2658, 0.0
  %v2661 = vld [vmem:[%s7] sm:$0xff]
  %v2662 = vld [vmem:[%s7 + $0x8] sm:$0xff]
  %v2663 = vld [vmem:[%s7 + $0x10] sm:$0xff]
  %v2664 = vld [vmem:[%s7 + $0x18] sm:$0xff]
  %v2665 = vld [vmem:[%s7 + $0x20] sm:$0xff]
  %v2666 = vld [vmem:[%s7 + $0x28] sm:$0xff]
  %v2667 = vld [vmem:[%s7 + $0x30] sm:$0xff]
  %v2668 = vld [vmem:[%s7 + $0x38] sm:$0xff]
  %v2669 = vld [vmem:[%s7 + $0x40] sm:$0xff]
  %v2670 = vld [vmem:[%s7 + $0x48] sm:$0xff]
  %v2671 = vld [vmem:[%s7 + $0x50] sm:$0xff]
  %v2672 = vld [vmem:[%s7 + $0x58] sm:$0xff]
  %v2673 = vld [vmem:[%s7 + $0x60] sm:$0xff]
  %v2674 = vld [vmem:[%s7 + $0x68] sm:$0xff]
  %v2675 = vld [vmem:[%s7 + $0x70] sm:$0xff]
  %v2676 = vld [vmem:[%s7 + $0x78] sm:$0xff]
  %2677 = vmatprep.subr.mxu0 0.0
  %2678 = vmatpush1.msra.mxu0 %v2676
  %2679 = vmatprep.subr.mxu0 0.0
  %2680 = vmatpush1.msra.mxu0 %v2675
  %2681 = vmatprep.subr.mxu0 0.0
  %2682 = vmatpush1.msra.mxu0 %v2674
  %2683 = vmatprep.subr.mxu0 0.0
  %2684 = vmatpush1.msra.mxu0 %v2673
  %2685 = vmatprep.subr.mxu0 0.0
  %2686 = vmatpush1.msra.mxu0 %v2672
  %2687 = vmatprep.subr.mxu0 0.0
  %2688 = vmatpush1.msra.mxu0 %v2671
  %2689 = vmatprep.subr.mxu0 0.0
  %2690 = vmatpush1.msra.mxu0 %v2670
  %2691 = vmatprep.subr.mxu0 0.0
  %2692 = vmatpush1.msra.mxu0 %v2669
  %2693 = vmatprep.subr.mxu0 0.0
  %2694 = vmatpush1.msra.mxu0 %v2668
  %2695 = vmatprep.subr.mxu0 0.0
  %2696 = vmatpush1.msra.mxu0 %v2667
  %2697 = vmatprep.subr.mxu0 0.0
  %2698 = vmatpush1.msra.mxu0 %v2666
  %2699 = vmatprep.subr.mxu0 0.0
  %2700 = vmatpush1.msra.mxu0 %v2665
  %2701 = vmatprep.subr.mxu0 0.0
  %2702 = vmatpush1.msra.mxu0 %v2664
  %2703 = vmatprep.subr.mxu0 0.0
  %2704 = vmatpush1.msra.mxu0 %v2663
  %2705 = vmatprep.subr.mxu0 0.0
  %2706 = vmatpush1.msra.mxu0 %v2662
  %2707 = vmatprep.subr.mxu0 0.0
  %2708 = vmatpush1.msra.mxu0 %v2661
  %2709 = vmatprep.subr.mxu0 0.0
  %2710 = vmatpush2.msra.mxu0 0.0
  %2711 = vmatprep.subr.mxu0 0.0
  %2712 = vmatpush2.msra.mxu0 0.0
  %2713 = vmatprep.subr.mxu0 0.0
  %2714 = vmatpush2.msra.mxu0 0.0
  %2715 = vmatprep.subr.mxu0 0.0
  %2716 = vmatpush2.msra.mxu0 0.0
  %2717 = vmatprep.subr.mxu0 0.0
  %2718 = vmatpush2.msra.mxu0 0.0
  %2719 = vmatprep.subr.mxu0 0.0
  %2720 = vmatpush2.msra.mxu0 0.0
  %2721 = vmatprep.subr.mxu0 0.0
  %2722 = vmatpush2.msra.mxu0 0.0
  %2723 = vmatprep.subr.mxu0 0.0
  %2724 = vmatpush2.msra.mxu0 0.0
  %2725 = vmatprep.subr.mxu0 0.0
  %2726 = vmatpush2.msra.mxu0 0.0
  %2727 = vmatprep.subr.mxu0 0.0
  %2728 = vmatpush2.msra.mxu0 0.0
  %2729 = vmatprep.subr.mxu0 0.0
  %2730 = vmatpush2.msra.mxu0 0.0
  %2731 = vmatprep.subr.mxu0 0.0
  %2732 = vmatpush2.msra.mxu0 0.0
  %2733 = vmatprep.subr.mxu0 0.0
  %2734 = vmatpush2.msra.mxu0 0.0
  %2735 = vmatprep.subr.mxu0 0.0
  %2736 = vmatpush2.msra.mxu0 0.0
  %2737 = vmatprep.subr.mxu0 0.0
  %2738 = vmatpush2.msra.mxu0 0.0
  %2739 = vmatprep.subr.mxu0 0.0
  %2740 = vmatpush2.msra.mxu0 0.0
  %2741 = vmatprep.mubr.f32.mxu0 0.0
  %2742 = vmatmul.mubr.f32.gmra.mxu0 %v2659
  %v2743 = vpop.f32.mrf.mxu0
  %v2744 = vadd.f32 0.0, %v2743
  %v2745 = vpop.f32.mrf.mxu0
  %2746 = vmatprep.mubr.f32.mxu0 0.0
  %2747 = vmatmul.mubr.f32.gmra.mxu0 %v2660
  %v2748 = vpop.f32.mrf.mxu0
  %v2749 = vadd.f32 0.0, %v2748
  %v2750 = vpop.f32.mrf.mxu0
  %2751 = vdwg.mxu0
  %v2752 = vld [vmem:[%s8] sm:$0xff]
  %v2753 = vld [vmem:[%s8 + $0x8] sm:$0xff]
  %v2754 = vld [vmem:[%s8 + $0x10] sm:$0xff]
  %v2755 = vld [vmem:[%s8 + $0x18] sm:$0xff]
  %v2756 = vld [vmem:[%s8 + $0x20] sm:$0xff]
  %v2757 = vld [vmem:[%s8 + $0x28] sm:$0xff]
  %v2758 = vld [vmem:[%s8 + $0x30] sm:$0xff]
  %v2759 = vld [vmem:[%s8 + $0x38] sm:$0xff]
  %v2760 = vld [vmem:[%s8 + $0x40] sm:$0xff]
  %v2761 = vld [vmem:[%s8 + $0x48] sm:$0xff]
  %v2762 = vld [vmem:[%s8 + $0x50] sm:$0xff]
  %v2763 = vld [vmem:[%s8 + $0x58] sm:$0xff]
  %v2764 = vld [vmem:[%s8 + $0x60] sm:$0xff]
  %v2765 = vld [vmem:[%s8 + $0x68] sm:$0xff]
  %v2766 = vld [vmem:[%s8 + $0x70] sm:$0xff]
  %v2767 = vld [vmem:[%s8 + $0x78] sm:$0xff]
  %2768 = vmatprep.subr.mxu0 0.0
  %2769 = vmatpush1.msra.mxu0 %v2767
  %2770 = vmatprep.subr.mxu0 0.0
  %2771 = vmatpush1.msra.mxu0 %v2766
  %2772 = vmatprep.subr.mxu0 0.0
  %2773 = vmatpush1.msra.mxu0 %v2765
  %2774 = vmatprep.subr.mxu0 0.0
  %2775 = vmatpush1.msra.mxu0 %v2764
  %2776 = vmatprep.subr.mxu0 0.0
  %2777 = vmatpush1.msra.mxu0 %v2763
  %2778 = vmatprep.subr.mxu0 0.0
  %2779 = vmatpush1.msra.mxu0 %v2762
  %2780 = vmatprep.subr.mxu0 0.0
  %2781 = vmatpush1.msra.mxu0 %v2761
  %2782 = vmatprep.subr.mxu0 0.0
  %2783 = vmatpush1.msra.mxu0 %v2760
  %2784 = vmatprep.subr.mxu0 0.0
  %2785 = vmatpush1.msra.mxu0 %v2759
  %2786 = vmatprep.subr.mxu0 0.0
  %2787 = vmatpush1.msra.mxu0 %v2758
  %2788 = vmatprep.subr.mxu0 0.0
  %2789 = vmatpush1.msra.mxu0 %v2757
  %2790 = vmatprep.subr.mxu0 0.0
  %2791 = vmatpush1.msra.mxu0 %v2756
  %2792 = vmatprep.subr.mxu0 0.0
  %2793 = vmatpush1.msra.mxu0 %v2755
  %2794 = vmatprep.subr.mxu0 0.0
  %2795 = vmatpush1.msra.mxu0 %v2754
  %2796 = vmatprep.subr.mxu0 0.0
  %2797 = vmatpush1.msra.mxu0 %v2753
  %2798 = vmatprep.subr.mxu0 0.0
  %2799 = vmatpush1.msra.mxu0 %v2752
  %2800 = vmatprep.subr.mxu0 0.0
  %2801 = vmatpush2.msra.mxu0 0.0
  %2802 = vmatprep.subr.mxu0 0.0
  %2803 = vmatpush2.msra.mxu0 0.0
  %2804 = vmatprep.subr.mxu0 0.0
  %2805 = vmatpush2.msra.mxu0 0.0
  %2806 = vmatprep.subr.mxu0 0.0
  %2807 = vmatpush2.msra.mxu0 0.0
  %2808 = vmatprep.subr.mxu0 0.0
  %2809 = vmatpush2.msra.mxu0 0.0
  %2810 = vmatprep.subr.mxu0 0.0
  %2811 = vmatpush2.msra.mxu0 0.0
  %2812 = vmatprep.subr.mxu0 0.0
  %2813 = vmatpush2.msra.mxu0 0.0
  %2814 = vmatprep.subr.mxu0 0.0
  %2815 = vmatpush2.msra.mxu0 0.0
  %2816 = vmatprep.subr.mxu0 0.0
  %2817 = vmatpush2.msra.mxu0 0.0
  %2818 = vmatprep.subr.mxu0 0.0
  %2819 = vmatpush2.msra.mxu0 0.0
  %2820 = vmatprep.subr.mxu0 0.0
  %2821 = vmatpush2.msra.mxu0 0.0
  %2822 = vmatprep.subr.mxu0 0.0
  %2823 = vmatpush2.msra.mxu0 0.0
  %2824 = vmatprep.subr.mxu0 0.0
  %2825 = vmatpush2.msra.mxu0 0.0
  %2826 = vmatprep.subr.mxu0 0.0
  %2827 = vmatpush2.msra.mxu0 0.0
  %2828 = vmatprep.subr.mxu0 0.0
  %2829 = vmatpush2.msra.mxu0 0.0
  %2830 = vmatprep.subr.mxu0 0.0
  %2831 = vmatpush2.msra.mxu0 0.0
  %2832 = vmatprep.mubr.f32.mxu0 0.0
  %2833 = vmatmul.mubr.f32.gmra.mxu0 %v2659
  %v2834 = vpop.f32.mrf.mxu0
  %v2835 = vadd.f32 0.0, %v2834
  %v2836 = vpop.f32.mrf.mxu0
  %2837 = vmatprep.mubr.f32.mxu0 0.0
  %2838 = vmatmul.mubr.f32.gmra.mxu0 %v2660
  %v2839 = vpop.f32.mrf.mxu0
  %v2840 = vadd.f32 0.0, %v2839
  %v2841 = vpop.f32.mrf.mxu0
  %2842 = vdwg.mxu0
  %v2843 = vmax.f32 %v2744, %v2835
  %v2844 = vmax.f32 %v2749, %v2840
  %v2845 = vld [vmem:[%s9] sm:$0xff]
  %v2847 = vsel %vm2329, %v2845, 0
  %2849 = vmatprep.subr.mxu0 0.0
  %2850 = vmatpush1.msra.mxu0 0.0
  %2851 = vmatprep.subr.mxu0 0.0
  %2852 = vmatpush1.msra.mxu0 0.0
  %2853 = vmatprep.subr.mxu0 0.0
  %2854 = vmatpush1.msra.mxu0 0.0
  %2855 = vmatprep.subr.mxu0 0.0
  %2856 = vmatpush1.msra.mxu0 0.0
  %2857 = vmatprep.subr.mxu0 0.0
  %2858 = vmatpush1.msra.mxu0 0.0
  %2859 = vmatprep.subr.mxu0 0.0
  %2860 = vmatpush1.msra.mxu0 0.0
  %2861 = vmatprep.subr.mxu0 0.0
  %2862 = vmatpush1.msra.mxu0 0.0
  %2863 = vmatprep.subr.mxu0 0.0
  %2864 = vmatpush1.msra.mxu0 0.0
  %2865 = vmatprep.subr.mxu0 0.0
  %2866 = vmatpush1.msra.mxu0 0.0
  %2867 = vmatprep.subr.mxu0 0.0
  %2868 = vmatpush1.msra.mxu0 0.0
  %2869 = vmatprep.subr.mxu0 0.0
  %2870 = vmatpush1.msra.mxu0 0.0
  %2871 = vmatprep.subr.mxu0 0.0
  %2872 = vmatpush1.msra.mxu0 0.0
  %2873 = vmatprep.subr.mxu0 0.0
  %2874 = vmatpush1.msra.mxu0 0.0
  %2875 = vmatprep.subr.mxu0 0.0
  %2876 = vmatpush1.msra.mxu0 0.0
  %2877 = vmatprep.subr.mxu0 0.0
  %2878 = vmatpush1.msra.mxu0 %v2844
  %2879 = vmatprep.subr.mxu0 0.0
  %2880 = vmatpush1.msra.mxu0 %v2843
  %2881 = vmatprep.subr.mxu0 0.0
  %2882 = vmatpush2.msra.mxu0 0.0
  %2883 = vmatprep.subr.mxu0 0.0
  %2884 = vmatpush2.msra.mxu0 0.0
  %2885 = vmatprep.subr.mxu0 0.0
  %2886 = vmatpush2.msra.mxu0 0.0
  %2887 = vmatprep.subr.mxu0 0.0
  %2888 = vmatpush2.msra.mxu0 0.0
  %2889 = vmatprep.subr.mxu0 0.0
  %2890 = vmatpush2.msra.mxu0 0.0
  %2891 = vmatprep.subr.mxu0 0.0
  %2892 = vmatpush2.msra.mxu0 0.0
  %2893 = vmatprep.subr.mxu0 0.0
  %2894 = vmatpush2.msra.mxu0 0.0
  %2895 = vmatprep.subr.mxu0 0.0
  %2896 = vmatpush2.msra.mxu0 0.0
  %2897 = vmatprep.subr.mxu0 0.0
  %2898 = vmatpush2.msra.mxu0 0.0
  %2899 = vmatprep.subr.mxu0 0.0
  %2900 = vmatpush2.msra.mxu0 0.0
  %2901 = vmatprep.subr.mxu0 0.0
  %2902 = vmatpush2.msra.mxu0 0.0
  %2903 = vmatprep.subr.mxu0 0.0
  %2904 = vmatpush2.msra.mxu0 0.0
  %2905 = vmatprep.subr.mxu0 0.0
  %2906 = vmatpush2.msra.mxu0 0.0
  %2907 = vmatprep.subr.mxu0 0.0
  %2908 = vmatpush2.msra.mxu0 0.0
  %2909 = vmatprep.subr.mxu0 0.0
  %2910 = vmatpush2.msra.mxu0 0.0
  %2911 = vmatprep.subr.mxu0 0.0
  %2912 = vmatpush2.msra.mxu0 0.0
  %2913 = vmatprep.mubr.f32.mxu0 0.0
  %2914 = vmatmul.mubr.f32.gmra.mxu0 %v2847
  %v2915 = vpop.f32.mrf.mxu0
  %v2916 = vadd.f32 0.0, %v2915
  %v2917 = vpop.f32.mrf.mxu0
  %2918 = vdwg.mxu0
  %v2919 = vld [vmem:[%s10] sm:$0xff]
  %v2921 = vsel %vm2329, %v2919, 0
  %2923 = vmatprep.subr.mxu0 0.0
  %2924 = vmatpush1.msra.mxu0 0.0
  %2925 = vmatprep.subr.mxu0 0.0
  %2926 = vmatpush1.msra.mxu0 0.0
  %2927 = vmatprep.subr.mxu0 0.0
  %2928 = vmatpush1.msra.mxu0 0.0
  %2929 = vmatprep.subr.mxu0 0.0
  %2930 = vmatpush1.msra.mxu0 0.0
  %2931 = vmatprep.subr.mxu0 0.0
  %2932 = vmatpush1.msra.mxu0 0.0
  %2933 = vmatprep.subr.mxu0 0.0
  %2934 = vmatpush1.msra.mxu0 0.0
  %2935 = vmatprep.subr.mxu0 0.0
  %2936 = vmatpush1.msra.mxu0 0.0
  %2937 = vmatprep.subr.mxu0 0.0
  %2938 = vmatpush1.msra.mxu0 0.0
  %2939 = vmatprep.subr.mxu0 0.0
  %2940 = vmatpush1.msra.mxu0 0.0
  %2941 = vmatprep.subr.mxu0 0.0
  %2942 = vmatpush1.msra.mxu0 0.0
  %2943 = vmatprep.subr.mxu0 0.0
  %2944 = vmatpush1.msra.mxu0 0.0
  %2945 = vmatprep.subr.mxu0 0.0
  %2946 = vmatpush1.msra.mxu0 0.0
  %2947 = vmatprep.subr.mxu0 0.0
  %2948 = vmatpush1.msra.mxu0 0.0
  %2949 = vmatprep.subr.mxu0 0.0
  %2950 = vmatpush1.msra.mxu0 0.0
  %2951 = vmatprep.subr.mxu0 0.0
  %2952 = vmatpush1.msra.mxu0 %v2844
  %2953 = vmatprep.subr.mxu0 0.0
  %2954 = vmatpush1.msra.mxu0 %v2843
  %2955 = vmatprep.subr.mxu0 0.0
  %2956 = vmatpush2.msra.mxu0 0.0
  %2957 = vmatprep.subr.mxu0 0.0
  %2958 = vmatpush2.msra.mxu0 0.0
  %2959 = vmatprep.subr.mxu0 0.0
  %2960 = vmatpush2.msra.mxu0 0.0
  %2961 = vmatprep.subr.mxu0 0.0
  %2962 = vmatpush2.msra.mxu0 0.0
  %2963 = vmatprep.subr.mxu0 0.0
  %2964 = vmatpush2.msra.mxu0 0.0
  %2965 = vmatprep.subr.mxu0 0.0
  %2966 = vmatpush2.msra.mxu0 0.0
  %2967 = vmatprep.subr.mxu0 0.0
  %2968 = vmatpush2.msra.mxu0 0.0
  %2969 = vmatprep.subr.mxu0 0.0
  %2970 = vmatpush2.msra.mxu0 0.0
  %2971 = vmatprep.subr.mxu0 0.0
  %2972 = vmatpush2.msra.mxu0 0.0
  %2973 = vmatprep.subr.mxu0 0.0
  %2974 = vmatpush2.msra.mxu0 0.0
  %2975 = vmatprep.subr.mxu0 0.0
  %2976 = vmatpush2.msra.mxu0 0.0
  %2977 = vmatprep.subr.mxu0 0.0
  %2978 = vmatpush2.msra.mxu0 0.0
  %2979 = vmatprep.subr.mxu0 0.0
  %2980 = vmatpush2.msra.mxu0 0.0
  %2981 = vmatprep.subr.mxu0 0.0
  %2982 = vmatpush2.msra.mxu0 0.0
  %2983 = vmatprep.subr.mxu0 0.0
  %2984 = vmatpush2.msra.mxu0 0.0
  %2985 = vmatprep.subr.mxu0 0.0
  %2986 = vmatpush2.msra.mxu0 0.0
  %2987 = vmatprep.mubr.f32.mxu0 0.0
  %2988 = vmatmul.mubr.f32.gmra.mxu0 %v2921
  %v2989 = vpop.f32.mrf.mxu0
  %v2990 = vadd.f32 0.0, %v2989
  %v2991 = vpop.f32.mrf.mxu0
  %2992 = vdwg.mxu0
  %v2993 = vmax.f32 %v2916, %v2990
  %v2994 = vld [vmem:[%s11] sm:$0xff]
  %v2995 = vld [vmem:[%s11 + $0x8] sm:$0x3]
  %v2997 = vsel %vm1983, %v2994, 0
  %v3000 = vsel %vm1983, %v2995, 0
  %3002 = vmatprep.subr.mxu0 0.0
  %3003 = vmatpush1.msra.mxu0 0.0
  %3004 = vmatprep.subr.mxu0 0.0
  %3005 = vmatpush1.msra.mxu0 0.0
  %3006 = vmatprep.subr.mxu0 0.0
  %3007 = vmatpush1.msra.mxu0 0.0
  %3008 = vmatprep.subr.mxu0 0.0
  %3009 = vmatpush1.msra.mxu0 0.0
  %3010 = vmatprep.subr.mxu0 0.0
  %3011 = vmatpush1.msra.mxu0 0.0
  %3012 = vmatprep.subr.mxu0 0.0
  %3013 = vmatpush1.msra.mxu0 0.0
  %3014 = vmatprep.subr.mxu0 0.0
  %3015 = vmatpush1.msra.mxu0 0.0
  %3016 = vmatprep.subr.mxu0 0.0
  %3017 = vmatpush1.msra.mxu0 0.0
  %3018 = vmatprep.subr.mxu0 0.0
  %3019 = vmatpush1.msra.mxu0 0.0
  %3020 = vmatprep.subr.mxu0 0.0
  %3021 = vmatpush1.msra.mxu0 0.0
  %3022 = vmatprep.subr.mxu0 0.0
  %3023 = vmatpush1.msra.mxu0 0.0
  %3024 = vmatprep.subr.mxu0 0.0
  %3025 = vmatpush1.msra.mxu0 0.0
  %3026 = vmatprep.subr.mxu0 0.0
  %3027 = vmatpush1.msra.mxu0 0.0
  %3028 = vmatprep.subr.mxu0 0.0
  %3029 = vmatpush1.msra.mxu0 0.0
  %3030 = vmatprep.subr.mxu0 0.0
  %3031 = vmatpush1.msra.mxu0 0.0
  %3032 = vmatprep.subr.mxu0 0.0
  %3033 = vmatpush1.msra.mxu0 %v2993
  %3034 = vmatprep.subr.mxu0 0.0
  %3035 = vmatpush2.msra.mxu0 0.0
  %3036 = vmatprep.subr.mxu0 0.0
  %3037 = vmatpush2.msra.mxu0 0.0
  %3038 = vmatprep.subr.mxu0 0.0
  %3039 = vmatpush2.msra.mxu0 0.0
  %3040 = vmatprep.subr.mxu0 0.0
  %3041 = vmatpush2.msra.mxu0 0.0
  %3042 = vmatprep.subr.mxu0 0.0
  %3043 = vmatpush2.msra.mxu0 0.0
  %3044 = vmatprep.subr.mxu0 0.0
  %3045 = vmatpush2.msra.mxu0 0.0
  %3046 = vmatprep.subr.mxu0 0.0
  %3047 = vmatpush2.msra.mxu0 0.0
  %3048 = vmatprep.subr.mxu0 0.0
  %3049 = vmatpush2.msra.mxu0 0.0
  %3050 = vmatprep.subr.mxu0 0.0
  %3051 = vmatpush2.msra.mxu0 0.0
  %3052 = vmatprep.subr.mxu0 0.0
  %3053 = vmatpush2.msra.mxu0 0.0
  %3054 = vmatprep.subr.mxu0 0.0
  %3055 = vmatpush2.msra.mxu0 0.0
  %3056 = vmatprep.subr.mxu0 0.0
  %3057 = vmatpush2.msra.mxu0 0.0
  %3058 = vmatprep.subr.mxu0 0.0
  %3059 = vmatpush2.msra.mxu0 0.0
  %3060 = vmatprep.subr.mxu0 0.0
  %3061 = vmatpush2.msra.mxu0 0.0
  %3062 = vmatprep.subr.mxu0 0.0
  %3063 = vmatpush2.msra.mxu0 0.0
  %3064 = vmatprep.subr.mxu0 0.0
  %3065 = vmatpush2.msra.mxu0 0.0
  %3066 = vmatprep.mubr.f32.mxu0 0.0
  %3067 = vmatmul.mubr.f32.gmra.mxu0 %v2997
  %v3068 = vpop.f32.mrf.mxu0
  %v3069 = vadd.f32 0.0, %v3068
  %v3070 = vpop.f32.mrf.mxu0
  %3071 = vmatprep.mubr.f32.mxu0 0.0
  %3072 = vmatmul.mubr.f32.gmra.mxu0 %v3000
  %v3073 = vpop.f32.mrf.mxu0
  %v3074 = vadd.f32 0.0, %v3073
  %v3075 = vpop.f32.mrf.mxu0
  %3076 = vdwg.mxu0
  %v3077 = vld [vmem:[%s12] sm:$0xff]
  %v3078 = vld [vmem:[%s12 + $0x8] sm:$0xff]
  %v3079 = vld [vmem:[%s12 + $0x10] sm:$0xff]
  %v3080 = vld [vmem:[%s12 + $0x18] sm:$0xff]
  %v3081 = vld [vmem:[%s12 + $0x20] sm:$0xff]
  %v3082 = vld [vmem:[%s12 + $0x28] sm:$0xff]
  %v3083 = vld [vmem:[%s12 + $0x30] sm:$0xff]
  %v3084 = vld [vmem:[%s12 + $0x38] sm:$0xff]
  %v3086 = vsel %vm2569, %v3069, 0
  %v3089 = vsel %vm2569, %v3074, 0
  %3091 = vmatprep.subr.mxu0 0.0
  %3092 = vmatpush1.msra.mxu0 0.0
  %3093 = vmatprep.subr.mxu0 0.0
  %3094 = vmatpush1.msra.mxu0 0.0
  %3095 = vmatprep.subr.mxu0 0.0
  %3096 = vmatpush1.msra.mxu0 0.0
  %3097 = vmatprep.subr.mxu0 0.0
  %3098 = vmatpush1.msra.mxu0 0.0
  %3099 = vmatprep.subr.mxu0 0.0
  %3100 = vmatpush1.msra.mxu0 0.0
  %3101 = vmatprep.subr.mxu0 0.0
  %3102 = vmatpush1.msra.mxu0 0.0
  %3103 = vmatprep.subr.mxu0 0.0
  %3104 = vmatpush1.msra.mxu0 0.0
  %3105 = vmatprep.subr.mxu0 0.0
  %3106 = vmatpush1.msra.mxu0 0.0
  %3107 = vmatprep.subr.mxu0 0.0
  %3108 = vmatpush1.msra.mxu0 %v3084
  %3109 = vmatprep.subr.mxu0 0.0
  %3110 = vmatpush1.msra.mxu0 %v3083
  %3111 = vmatprep.subr.mxu0 0.0
  %3112 = vmatpush1.msra.mxu0 %v3082
  %3113 = vmatprep.subr.mxu0 0.0
  %3114 = vmatpush1.msra.mxu0 %v3081
  %3115 = vmatprep.subr.mxu0 0.0
  %3116 = vmatpush1.msra.mxu0 %v3080
  %3117 = vmatprep.subr.mxu0 0.0
  %3118 = vmatpush1.msra.mxu0 %v3079
  %3119 = vmatprep.subr.mxu0 0.0
  %3120 = vmatpush1.msra.mxu0 %v3078
  %3121 = vmatprep.subr.mxu0 0.0
  %3122 = vmatpush1.msra.mxu0 %v3077
  %3123 = vmatprep.subr.mxu0 0.0
  %3124 = vmatpush2.msra.mxu0 0.0
  %3125 = vmatprep.subr.mxu0 0.0
  %3126 = vmatpush2.msra.mxu0 0.0
  %3127 = vmatprep.subr.mxu0 0.0
  %3128 = vmatpush2.msra.mxu0 0.0
  %3129 = vmatprep.subr.mxu0 0.0
  %3130 = vmatpush2.msra.mxu0 0.0
  %3131 = vmatprep.subr.mxu0 0.0
  %3132 = vmatpush2.msra.mxu0 0.0
  %3133 = vmatprep.subr.mxu0 0.0
  %3134 = vmatpush2.msra.mxu0 0.0
  %3135 = vmatprep.subr.mxu0 0.0
  %3136 = vmatpush2.msra.mxu0 0.0
  %3137 = vmatprep.subr.mxu0 0.0
  %3138 = vmatpush2.msra.mxu0 0.0
  %3139 = vmatprep.subr.mxu0 0.0
  %3140 = vmatpush2.msra.mxu0 0.0
  %3141 = vmatprep.subr.mxu0 0.0
  %3142 = vmatpush2.msra.mxu0 0.0
  %3143 = vmatprep.subr.mxu0 0.0
  %3144 = vmatpush2.msra.mxu0 0.0
  %3145 = vmatprep.subr.mxu0 0.0
  %3146 = vmatpush2.msra.mxu0 0.0
  %3147 = vmatprep.subr.mxu0 0.0
  %3148 = vmatpush2.msra.mxu0 0.0
  %3149 = vmatprep.subr.mxu0 0.0
  %3150 = vmatpush2.msra.mxu0 0.0
  %3151 = vmatprep.subr.mxu0 0.0
  %3152 = vmatpush2.msra.mxu0 0.0
  %3153 = vmatprep.subr.mxu0 0.0
  %3154 = vmatpush2.msra.mxu0 0.0
  %3155 = vmatprep.mubr.f32.mxu0 0.0
  %3156 = vmatmul.mubr.f32.gmra.mxu0 %v3086
  %v3157 = vpop.f32.mrf.mxu0
  %v3158 = vadd.f32 0.0, %v3157
  %v3159 = vpop.f32.mrf.mxu0
  %3160 = vmatprep.mubr.f32.mxu0 0.0
  %3161 = vmatmul.mubr.f32.gmra.mxu0 %v3089
  %v3162 = vpop.f32.mrf.mxu0
  %v3163 = vadd.f32 0.0, %v3162
  %v3164 = vpop.f32.mrf.mxu0
  %3165 = vdwg.mxu0
  %s3166 = scalar_lea.vmem %s13, 16
  %3167 = vst.msk [vmem:[%s3166] sm:$0xff] %vm2651, %v3158
  %3168 = vst.msk [vmem:[%s3166 + $0x8] sm:$0x3] %vm2653, %v3163
  // Predicated region
  $region54: #{cnn_forward.4} parent=0 // pred_check
    _
  $region55: #{cnn_forward.4} parent=0 // pred_check_branch
    %3170 = sbr.rel (0) target = $region57
  $region56: #{cnn_forward.4} parent=0 // pred_region
    _
  $region57: #{cnn_forward.4} parent=0 // pred_fallthru
    _
  // Predicated region
  $region58: #{cnn_forward.4} parent=0 // pred_check
    _
  $region59: #{cnn_forward.4} parent=0 // pred_check_branch
    %3172 = sbr.rel (0) target = $region61
  $region60: #{cnn_forward.4} parent=0 // pred_region
    _
  $region61: #{cnn_forward.4} parent=0 // pred_fallthru
    _

// kernel: tile.53
$region0: #{tile.53}
  #allocation0 [shape = 's32[1]{0}', space=sflag, size = 0x4, scoped, tag = 'scoped memory for tile.53']
  %s0 = inlined_call_operand.vmem [shape: f32[32], index: 0, kind: input, shape index: {}]
  %s1 = inlined_call_operand.vmem [shape: f32[4,32], index: 1, kind: output, shape index: {}]
  // Predicated region
  $region2: #{tile.53} parent=0 // pred_check
    _
  $region3: #{tile.53} parent=0 // pred_check_branch
    %3 = sbr.rel (0) target = $region5
  $region4: #{tile.53} parent=0 // pred_region
    _
  $region5: #{tile.53} parent=0 // pred_fallthru
    _
  %v4 = vld [vmem:[%s0] ss:$0 sm:$0xff]
  %5 = vst [vmem:[%s1] sm:$0xf] %v4

// kernel: tile.54
$region0: #{tile.54}
  %s0 = inlined_call_operand.vmem [shape: f32[4,32], index: 0, kind: input, shape index: {}]
  %s1 = inlined_call_operand.vmem [shape: f32[1,128], index: 1, kind: output, shape index: {}]
  $region1: #{tile.54} parent=0
    #allocation0 [shape = 'u8[4096]{0}', space=vmem, size = 0x1000, scoped, tag = 'scoped mem for output reshape']
    #allocation1 [shape = 'u8[4096]{0}', space=vmem, size = 0x1000, scoped, tag = 'scoped mem for input reshape']
    %s3 = sshll.u32 1, 4
    %s4 = ssub.s32 %s3, 1
    %v5 = vld [vmem:[%s0] sm:%s4]
    %6 = vst [vmem:[#allocation1] sm:%s4] %v5
    %v7 = vld [vmem:[#allocation1] sm:$0x1]
    %vm8 = vcmask 261120
    %9 = vst.msk [vmem:[#allocation0] sm:$0x1] %vm8, %v7
    %s10 = scalar_lea.vmem [#allocation1], 3
    %v11 = vld [vmem:[%s10] sm:$0x1]
    %12 = vrot.lane.b32.xlu0 %v11, 96
    %v13 = vpop.permute.xlu0 %12
    %vm14 = vcmask 1048320
    %15 = vst.msk [vmem:[#allocation0] sm:$0x1] %vm14, %v13
    %s16 = scalar_lea.vmem [#allocation1], 2
    %v17 = vld [vmem:[%s16] sm:$0x1]
    %18 = vrot.lane.b32.xlu0 %v17, 64
    %v19 = vpop.permute.xlu0 %18
    %vm20 = vcmask 785920
    %21 = vst.msk [vmem:[#allocation0] sm:$0x1] %vm20, %v19
    %s22 = scalar_lea.vmem [#allocation1], 1
    %v23 = vld [vmem:[%s22] sm:$0x1]
    %24 = vrot.lane.b32.xlu0 %v23, 32
    %v25 = vpop.permute.xlu0 %24
    %vm26 = vcmask 523520
    %27 = vst.msk [vmem:[#allocation0] sm:$0x1] %vm26, %v25
    %s29 = sshll.u32 1, 1
    %s30 = ssub.s32 %s29, 1
    %v32 = vld [vmem:[#allocation0] sm:%s30]
    %s33 = sshll.u32 1, 1
    %s34 = ssub.s32 %s33, 1
    %35 = vst [vmem:[%s1] sm:%s34] %v32

// kernel: tile.59
$region0: #{tile.59}
  %s0 = inlined_call_operand.vmem [shape: f32[4,32,32], index: 0, kind: input, shape index: {}]
  %s1 = inlined_call_operand.vmem [shape: f32[128,32], index: 1, kind: output, shape index: {}]
  $region1: #{tile.59} parent=0
    #allocation0 [shape = 'u8[131072]{0}', space=vmem, size = 0x20000, scoped, tag = 'scoped mem for input reshape']
    %s3 = sshll.u32 1, 4
    %s4 = ssub.s32 %s3, 1
    %s5 = smul.addr 4, 31
    %s6 = scalar_lea.vmem %s0, %s5
    %v7 = vld [vmem:[%s6] sm:%s4]
    %s8 = scalar_lea.vmem [#allocation0], 248
    %9 = vst [vmem:[%s8] sm:%s4] %v7
    %s10 = smul.addr 4, 30
    %s11 = scalar_lea.vmem %s0, %s10
    %v12 = vld [vmem:[%s11] sm:%s4]
    %s13 = scalar_lea.vmem [#allocation0], 240
    %14 = vst [vmem:[%s13] sm:%s4] %v12
    %s15 = smul.addr 4, 29
    %s16 = scalar_lea.vmem %s0, %s15
    %v17 = vld [vmem:[%s16] sm:%s4]
    %s18 = scalar_lea.vmem [#allocation0], 232
    %19 = vst [vmem:[%s18] sm:%s4] %v17
    %s20 = smul.addr 4, 28
    %s21 = scalar_lea.vmem %s0, %s20
    %v22 = vld [vmem:[%s21] sm:%s4]
    %s23 = scalar_lea.vmem [#allocation0], 224
    %24 = vst [vmem:[%s23] sm:%s4] %v22
    %s25 = smul.addr 4, 27
    %s26 = scalar_lea.vmem %s0, %s25
    %v27 = vld [vmem:[%s26] sm:%s4]
    %s28 = scalar_lea.vmem [#allocation0], 216
    %29 = vst [vmem:[%s28] sm:%s4] %v27
    %s30 = smul.addr 4, 26
    %s31 = scalar_lea.vmem %s0, %s30
    %v32 = vld [vmem:[%s31] sm:%s4]
    %s33 = scalar_lea.vmem [#allocation0], 208
    %34 = vst [vmem:[%s33] sm:%s4] %v32
    %s35 = smul.addr 4, 25
    %s36 = scalar_lea.vmem %s0, %s35
    %v37 = vld [vmem:[%s36] sm:%s4]
    %s38 = scalar_lea.vmem [#allocation0], 200
    %39 = vst [vmem:[%s38] sm:%s4] %v37
    %s40 = smul.addr 4, 24
    %s41 = scalar_lea.vmem %s0, %s40
    %v42 = vld [vmem:[%s41] sm:%s4]
    %s43 = scalar_lea.vmem [#allocation0], 192
    %44 = vst [vmem:[%s43] sm:%s4] %v42
    %s45 = smul.addr 4, 23
    %s46 = scalar_lea.vmem %s0, %s45
    %v47 = vld [vmem:[%s46] sm:%s4]
    %s48 = scalar_lea.vmem [#allocation0], 184
    %49 = vst [vmem:[%s48] sm:%s4] %v47
    %s50 = smul.addr 4, 22
    %s51 = scalar_lea.vmem %s0, %s50
    %v52 = vld [vmem:[%s51] sm:%s4]
    %s53 = scalar_lea.vmem [#allocation0], 176
    %54 = vst [vmem:[%s53] sm:%s4] %v52
    %s55 = smul.addr 4, 21
    %s56 = scalar_lea.vmem %s0, %s55
    %v57 = vld [vmem:[%s56] sm:%s4]
    %s58 = scalar_lea.vmem [#allocation0], 168
    %59 = vst [vmem:[%s58] sm:%s4] %v57
    %s60 = smul.addr 4, 20
    %s61 = scalar_lea.vmem %s0, %s60
    %v62 = vld [vmem:[%s61] sm:%s4]
    %s63 = scalar_lea.vmem [#allocation0], 160
    %64 = vst [vmem:[%s63] sm:%s4] %v62
    %s65 = smul.addr 4, 19
    %s66 = scalar_lea.vmem %s0, %s65
    %v67 = vld [vmem:[%s66] sm:%s4]
    %s68 = scalar_lea.vmem [#allocation0], 152
    %69 = vst [vmem:[%s68] sm:%s4] %v67
    %s70 = smul.addr 4, 18
    %s71 = scalar_lea.vmem %s0, %s70
    %v72 = vld [vmem:[%s71] sm:%s4]
    %s73 = scalar_lea.vmem [#allocation0], 144
    %74 = vst [vmem:[%s73] sm:%s4] %v72
    %s75 = smul.addr 4, 17
    %s76 = scalar_lea.vmem %s0, %s75
    %v77 = vld [vmem:[%s76] sm:%s4]
    %s78 = scalar_lea.vmem [#allocation0], 136
    %79 = vst [vmem:[%s78] sm:%s4] %v77
    %s80 = smul.addr 4, 16
    %s81 = scalar_lea.vmem %s0, %s80
    %v82 = vld [vmem:[%s81] sm:%s4]
    %s83 = scalar_lea.vmem [#allocation0], 128
    %84 = vst [vmem:[%s83] sm:%s4] %v82
    %s85 = smul.addr 4, 15
    %s86 = scalar_lea.vmem %s0, %s85
    %v87 = vld [vmem:[%s86] sm:%s4]
    %s88 = scalar_lea.vmem [#allocation0], 120
    %89 = vst [vmem:[%s88] sm:%s4] %v87
    %s90 = smul.addr 4, 14
    %s91 = scalar_lea.vmem %s0, %s90
    %v92 = vld [vmem:[%s91] sm:%s4]
    %s93 = scalar_lea.vmem [#allocation0], 112
    %94 = vst [vmem:[%s93] sm:%s4] %v92
    %s95 = smul.addr 4, 13
    %s96 = scalar_lea.vmem %s0, %s95
    %v97 = vld [vmem:[%s96] sm:%s4]
    %s98 = scalar_lea.vmem [#allocation0], 104
    %99 = vst [vmem:[%s98] sm:%s4] %v97
    %s100 = smul.addr 4, 12
    %s101 = scalar_lea.vmem %s0, %s100
    %v102 = vld [vmem:[%s101] sm:%s4]
    %s103 = scalar_lea.vmem [#allocation0], 96
    %104 = vst [vmem:[%s103] sm:%s4] %v102
    %s105 = smul.addr 4, 11
    %s106 = scalar_lea.vmem %s0, %s105
    %v107 = vld [vmem:[%s106] sm:%s4]
    %s108 = scalar_lea.vmem [#allocation0], 88
    %109 = vst [vmem:[%s108] sm:%s4] %v107
    %s110 = smul.addr 4, 10
    %s111 = scalar_lea.vmem %s0, %s110
    %v112 = vld [vmem:[%s111] sm:%s4]
    %s113 = scalar_lea.vmem [#allocation0], 80
    %114 = vst [vmem:[%s113] sm:%s4] %v112
    %s115 = smul.addr 4, 9
    %s116 = scalar_lea.vmem %s0, %s115
    %v117 = vld [vmem:[%s116] sm:%s4]
    %s118 = scalar_lea.vmem [#allocation0], 72
    %119 = vst [vmem:[%s118] sm:%s4] %v117
    %s120 = smul.addr 4, 8
    %s121 = scalar_lea.vmem %s0, %s120
    %v122 = vld [vmem:[%s121] sm:%s4]
    %s123 = scalar_lea.vmem [#allocation0], 64
    %124 = vst [vmem:[%s123] sm:%s4] %v122
    %s125 = smul.addr 4, 7
    %s126 = scalar_lea.vmem %s0, %s125
    %v127 = vld [vmem:[%s126] sm:%s4]
    %s128 = scalar_lea.vmem [#allocation0], 56
    %129 = vst [vmem:[%s128] sm:%s4] %v127
    %s130 = smul.addr 4, 6
    %s131 = scalar_lea.vmem %s0, %s130
    %v132 = vld [vmem:[%s131] sm:%s4]
    %s133 = scalar_lea.vmem [#allocation0], 48
    %134 = vst [vmem:[%s133] sm:%s4] %v132
    %s135 = smul.addr 4, 5
    %s136 = scalar_lea.vmem %s0, %s135
    %v137 = vld [vmem:[%s136] sm:%s4]
    %s138 = scalar_lea.vmem [#allocation0], 40
    %139 = vst [vmem:[%s138] sm:%s4] %v137
    %s140 = smul.addr 4, 4
    %s141 = scalar_lea.vmem %s0, %s140
    %v142 = vld [vmem:[%s141] sm:%s4]
    %s143 = scalar_lea.vmem [#allocation0], 32
    %144 = vst [vmem:[%s143] sm:%s4] %v142
    %s145 = smul.addr 4, 3
    %s146 = scalar_lea.vmem %s0, %s145
    %v147 = vld [vmem:[%s146] sm:%s4]
    %s148 = scalar_lea.vmem [#allocation0], 24
    %149 = vst [vmem:[%s148] sm:%s4] %v147
    %s150 = smul.addr 4, 2
    %s151 = scalar_lea.vmem %s0, %s150
    %v152 = vld [vmem:[%s151] sm:%s4]
    %s153 = scalar_lea.vmem [#allocation0], 16
    %154 = vst [vmem:[%s153] sm:%s4] %v152
    %s155 = scalar_lea.vmem %s0, 4
    %v156 = vld [vmem:[%s155] sm:%s4]
    %s157 = scalar_lea.vmem [#allocation0], 8
    %158 = vst [vmem:[%s157] sm:%s4] %v156
    %v159 = vld [vmem:[%s0] sm:%s4]
    %160 = vst [vmem:[#allocation0] sm:%s4] %v159
    %v161 = vld [vmem:[#allocation0] ss:$8 sm:$0xf]
    %v162 = vld [vmem:[#allocation0] ss:$8 sm:$0xf0]
    %vm163 = vcmask 1047556
    %v164 = vsel %vm163, %v162, %v161
    %vm165 = vcmask 261120
    %166 = vst.msk [vmem:[%s1] sm:$0xff] %vm165, %v164
    %s167 = scalar_lea.vmem [#allocation0], 64
    %v168 = vld [vmem:[%s167] ss:$8 sm:$0xf]
    %s169 = scalar_lea.vmem [#allocation0], 64
    %v170 = vld [vmem:[%s169] ss:$8 sm:$0xf0]
    %vm171 = vcmask 1047556
    %v172 = vsel %vm171, %v170, %v168
    %vm173 = vcmask 261120
    %s174 = scalar_lea.vmem %s1, 8
    %175 = vst.msk [vmem:[%s174] sm:$0xff] %vm173, %v172
    %s176 = scalar_lea.vmem [#allocation0], 128
    %v177 = vld [vmem:[%s176] ss:$8 sm:$0xf]
    %s178 = scalar_lea.vmem [#allocation0], 128
    %v179 = vld [vmem:[%s178] ss:$8 sm:$0xf0]
    %vm180 = vcmask 1047556
    %v181 = vsel %vm180, %v179, %v177
    %vm182 = vcmask 261120
    %s183 = scalar_lea.vmem %s1, 16
    %184 = vst.msk [vmem:[%s183] sm:$0xff] %vm182, %v181
    %s185 = scalar_lea.vmem [#allocation0], 192
    %v186 = vld [vmem:[%s185] ss:$8 sm:$0xf]
    %s187 = scalar_lea.vmem [#allocation0], 192
    %v188 = vld [vmem:[%s187] ss:$8 sm:$0xf0]
    %vm189 = vcmask 1047556
    %v190 = vsel %vm189, %v188, %v186
    %vm191 = vcmask 261120
    %s192 = scalar_lea.vmem %s1, 24
    %193 = vst.msk [vmem:[%s192] sm:$0xff] %vm191, %v190
    %s194 = scalar_lea.vmem [#allocation0], 3
    %v195 = vld [vmem:[%s194] ss:$8 sm:$0xf]
    %s196 = scalar_lea.vmem [#allocation0], 3
    %v197 = vld [vmem:[%s196] ss:$8 sm:$0xf0]
    %vm198 = vcmask 1047556
    %v199 = vsel %vm198, %v197, %v195
    %200 = vrot.lane.b32.xlu0 %v199, 96
    %v201 = vpop.permute.xlu0 %200
    %vm202 = vcmask 1048320
    %203 = vst.msk [vmem:[%s1] sm:$0xff] %vm202, %v201
    %s204 = scalar_lea.vmem [#allocation0], 67
    %v205 = vld [vmem:[%s204] ss:$8 sm:$0xf]
    %s206 = scalar_lea.vmem [#allocation0], 67
    %v207 = vld [vmem:[%s206] ss:$8 sm:$0xf0]
    %vm208 = vcmask 1047556
    %v209 = vsel %vm208, %v207, %v205
    %210 = vrot.lane.b32.xlu0 %v209, 96
    %v211 = vpop.permute.xlu0 %210
    %vm212 = vcmask 1048320
    %s213 = scalar_lea.vmem %s1, 8
    %214 = vst.msk [vmem:[%s213] sm:$0xff] %vm212, %v211
    %s215 = scalar_lea.vmem [#allocation0], 131
    %v216 = vld [vmem:[%s215] ss:$8 sm:$0xf]
    %s217 = scalar_lea.vmem [#allocation0], 131
    %v218 = vld [vmem:[%s217] ss:$8 sm:$0xf0]
    %vm219 = vcmask 1047556
    %v220 = vsel %vm219, %v218, %v216
    %221 = vrot.lane.b32.xlu0 %v220, 96
    %v222 = vpop.permute.xlu0 %221
    %vm223 = vcmask 1048320
    %s224 = scalar_lea.vmem %s1, 16
    %225 = vst.msk [vmem:[%s224] sm:$0xff] %vm223, %v222
    %s226 = scalar_lea.vmem [#allocation0], 195
    %v227 = vld [vmem:[%s226] ss:$8 sm:$0xf]
    %s228 = scalar_lea.vmem [#allocation0], 195
    %v229 = vld [vmem:[%s228] ss:$8 sm:$0xf0]
    %vm230 = vcmask 1047556
    %v231 = vsel %vm230, %v229, %v227
    %232 = vrot.lane.b32.xlu0 %v231, 96
    %v233 = vpop.permute.xlu0 %232
    %vm234 = vcmask 1048320
    %s235 = scalar_lea.vmem %s1, 24
    %236 = vst.msk [vmem:[%s235] sm:$0xff] %vm234, %v233
    %s237 = scalar_lea.vmem [#allocation0], 2
    %v238 = vld [vmem:[%s237] ss:$8 sm:$0xf]
    %s239 = scalar_lea.vmem [#allocation0], 2
    %v240 = vld [vmem:[%s239] ss:$8 sm:$0xf0]
    %vm241 = vcmask 1047556
    %v242 = vsel %vm241, %v240, %v238
    %243 = vrot.lane.b32.xlu0 %v242, 64
    %v244 = vpop.permute.xlu0 %243
    %vm245 = vcmask 785920
    %246 = vst.msk [vmem:[%s1] sm:$0xff] %vm245, %v244
    %s247 = scalar_lea.vmem [#allocation0], 66
    %v248 = vld [vmem:[%s247] ss:$8 sm:$0xf]
    %s249 = scalar_lea.vmem [#allocation0], 66
    %v250 = vld [vmem:[%s249] ss:$8 sm:$0xf0]
    %vm251 = vcmask 1047556
    %v252 = vsel %vm251, %v250, %v248
    %253 = vrot.lane.b32.xlu0 %v252, 64
    %v254 = vpop.permute.xlu0 %253
    %vm255 = vcmask 785920
    %s256 = scalar_lea.vmem %s1, 8
    %257 = vst.msk [vmem:[%s256] sm:$0xff] %vm255, %v254
    %s258 = scalar_lea.vmem [#allocation0], 130
    %v259 = vld [vmem:[%s258] ss:$8 sm:$0xf]
    %s260 = scalar_lea.vmem [#allocation0], 130
    %v261 = vld [vmem:[%s260] ss:$8 sm:$0xf0]
    %vm262 = vcmask 1047556
    %v263 = vsel %vm262, %v261, %v259
    %264 = vrot.lane.b32.xlu0 %v263, 64
    %v265 = vpop.permute.xlu0 %264
    %vm266 = vcmask 785920
    %s267 = scalar_lea.vmem %s1, 16
    %268 = vst.msk [vmem:[%s267] sm:$0xff] %vm266, %v265
    %s269 = scalar_lea.vmem [#allocation0], 194
    %v270 = vld [vmem:[%s269] ss:$8 sm:$0xf]
    %s271 = scalar_lea.vmem [#allocation0], 194
    %v272 = vld [vmem:[%s271] ss:$8 sm:$0xf0]
    %vm273 = vcmask 1047556
    %v274 = vsel %vm273, %v272, %v270
    %275 = vrot.lane.b32.xlu0 %v274, 64
    %v276 = vpop.permute.xlu0 %275
    %vm277 = vcmask 785920
    %s278 = scalar_lea.vmem %s1, 24
    %279 = vst.msk [vmem:[%s278] sm:$0xff] %vm277, %v276
    %s280 = scalar_lea.vmem [#allocation0], 1
    %v281 = vld [vmem:[%s280] ss:$8 sm:$0xf]
    %s282 = scalar_lea.vmem [#allocation0], 1
    %v283 = vld [vmem:[%s282] ss:$8 sm:$0xf0]
    %vm284 = vcmask 1047556
    %v285 = vsel %vm284, %v283, %v281
    %286 = vrot.lane.b32.xlu0 %v285, 32
    %v287 = vpop.permute.xlu0 %286
    %vm288 = vcmask 523520
    %289 = vst.msk [vmem:[%s1] sm:$0xff] %vm288, %v287
    %s290 = scalar_lea.vmem [#allocation0], 65
    %v291 = vld [vmem:[%s290] ss:$8 sm:$0xf]
    %s292 = scalar_lea.vmem [#allocation0], 65
    %v293 = vld [vmem:[%s292] ss:$8 sm:$0xf0]
    %vm294 = vcmask 1047556
    %v295 = vsel %vm294, %v293, %v291
    %296 = vrot.lane.b32.xlu0 %v295, 32
    %v297 = vpop.permute.xlu0 %296
    %vm298 = vcmask 523520
    %s299 = scalar_lea.vmem %s1, 8
    %300 = vst.msk [vmem:[%s299] sm:$0xff] %vm298, %v297
    %s301 = scalar_lea.vmem [#allocation0], 129
    %v302 = vld [vmem:[%s301] ss:$8 sm:$0xf]
    %s303 = scalar_lea.vmem [#allocation0], 129
    %v304 = vld [vmem:[%s303] ss:$8 sm:$0xf0]
    %vm305 = vcmask 1047556
    %v306 = vsel %vm305, %v304, %v302
    %307 = vrot.lane.b32.xlu0 %v306, 32
    %v308 = vpop.permute.xlu0 %307
    %vm309 = vcmask 523520
    %s310 = scalar_lea.vmem %s1, 16
    %311 = vst.msk [vmem:[%s310] sm:$0xff] %vm309, %v308
    %s312 = scalar_lea.vmem [#allocation0], 193
    %v313 = vld [vmem:[%s312] ss:$8 sm:$0xf]
    %s314 = scalar_lea.vmem [#allocation0], 193
    %v315 = vld [vmem:[%s314] ss:$8 sm:$0xf0]
    %vm316 = vcmask 1047556
    %v317 = vsel %vm316, %v315, %v313
    %318 = vrot.lane.b32.xlu0 %v317, 32
    %v319 = vpop.permute.xlu0 %318
    %vm320 = vcmask 523520
    %s321 = scalar_lea.vmem %s1, 24
    %322 = vst.msk [vmem:[%s321] sm:$0xff] %vm320, %v319

// kernel: cnn_forward.5
$region0: #{cnn_forward.5}
  #allocation0 [shape = 'u32[]', space=smem, size = 0x4, offset = 0x4, fixed_abs, tag = 'smem constant byte address 0x4 - core index']
  #allocation1 [shape = 'u32[144,128]{1,0:T(1,128)}', space=vmem, size = 0x12000, scoped, tag = 'internal scratch']
  %s0 = inlined_call_operand.vmem [shape: f32[2,10,80], index: 0, kind: input, shape index: {}]
  %s1 = inlined_call_operand.vmem [shape: f32[9,64,128], index: 1, kind: input, shape index: {}]
  %s2 = inlined_call_operand.vmem [shape: f32[1,128], index: 2, kind: input, shape index: {}]
  %s3 = inlined_call_operand.vmem [shape: f32[1,16], index: 3, kind: input, shape index: {}]
  %s4 = inlined_call_operand.vmem [shape: f32[1,16], index: 4, kind: input, shape index: {}]
  %s5 = inlined_call_operand.vmem [shape: f32[128,16], index: 5, kind: input, shape index: {}]
  %s6 = inlined_call_operand.vmem [shape: f32[16,128], index: 6, kind: input, shape index: {}]
  %s7 = inlined_call_operand.vmem [shape: f32[128,64], index: 7, kind: input, shape index: {}]
  %s8 = inlined_call_operand.vmem [shape: f32[128,64], index: 8, kind: input, shape index: {}]
  %s9 = inlined_call_operand.vmem [shape: f32[4,8], index: 9, kind: input, shape index: {}]
  %s10 = inlined_call_operand.vmem [shape: f32[4,8], index: 10, kind: input, shape index: {}]
  %s11 = inlined_call_operand.vmem [shape: f32[6,4], index: 11, kind: input, shape index: {}]
  %s12 = inlined_call_operand.vmem [shape: f32[64,96], index: 12, kind: input, shape index: {}]
  %s13 = inlined_call_operand.vmem [shape: f32[2,6,96], index: 13, kind: output, shape index: {}]
  %s14 = sld [smem:[#allocation0]]
  $region62: #{cnn_forward.5} parent=0
    _
  %s16 = ssub.s32 1, %s14
  %s17 = scalar_select 0, %s16, %s14
  // Predicated region
  $region2: #{cnn_forward.5} parent=0 // pred_check
    _
  $region3: #{cnn_forward.5} parent=0 // pred_check_branch
    %19 = sbr.rel (0) target = $region5
  $region4: #{cnn_forward.5} parent=0 // pred_region
    _
  $region5: #{cnn_forward.5} parent=0 // pred_fallthru
    _
  // Predicated region
  $region6: #{cnn_forward.5} parent=0 // pred_check
    _
  $region7: #{cnn_forward.5} parent=0 // pred_check_branch
    %21 = sbr.rel (0) target = $region9
  $region8: #{cnn_forward.5} parent=0 // pred_region
    _
  $region9: #{cnn_forward.5} parent=0 // pred_fallthru
    _
  // Predicated region
  $region10: #{cnn_forward.5} parent=0 // pred_check
    _
  $region11: #{cnn_forward.5} parent=0 // pred_check_branch
    %23 = sbr.rel (0) target = $region13
  $region12: #{cnn_forward.5} parent=0 // pred_region
    _
  $region13: #{cnn_forward.5} parent=0 // pred_fallthru
    _
  // Predicated region
  $region14: #{cnn_forward.5} parent=0 // pred_check
    _
  $region15: #{cnn_forward.5} parent=0 // pred_check_branch
    %25 = sbr.rel (0) target = $region17
  $region16: #{cnn_forward.5} parent=0 // pred_region
    _
  $region17: #{cnn_forward.5} parent=0 // pred_fallthru
    _
  // Predicated region
  $region18: #{cnn_forward.5} parent=0 // pred_check
    _
  $region19: #{cnn_forward.5} parent=0 // pred_check_branch
    %27 = sbr.rel (0) target = $region21
  $region20: #{cnn_forward.5} parent=0 // pred_region
    _
  $region21: #{cnn_forward.5} parent=0 // pred_fallthru
    _
  // Predicated region
  $region22: #{cnn_forward.5} parent=0 // pred_check
    _
  $region23: #{cnn_forward.5} parent=0 // pred_check_branch
    %29 = sbr.rel (0) target = $region25
  $region24: #{cnn_forward.5} parent=0 // pred_region
    _
  $region25: #{cnn_forward.5} parent=0 // pred_fallthru
    _
  // Predicated region
  $region26: #{cnn_forward.5} parent=0 // pred_check
    _
  $region27: #{cnn_forward.5} parent=0 // pred_check_branch
    %31 = sbr.rel (0) target = $region29
  $region28: #{cnn_forward.5} parent=0 // pred_region
    _
  $region29: #{cnn_forward.5} parent=0 // pred_fallthru
    _
  // Predicated region
  $region30: #{cnn_forward.5} parent=0 // pred_check
    _
  $region31: #{cnn_forward.5} parent=0 // pred_check_branch
    %33 = sbr.rel (0) target = $region33
  $region32: #{cnn_forward.5} parent=0 // pred_region
    _
  $region33: #{cnn_forward.5} parent=0 // pred_fallthru
    _
  // Predicated region
  $region34: #{cnn_forward.5} parent=0 // pred_check
    _
  $region35: #{cnn_forward.5} parent=0 // pred_check_branch
    %35 = sbr.rel (0) target = $region37
  $region36: #{cnn_forward.5} parent=0 // pred_region
    _
  $region37: #{cnn_forward.5} parent=0 // pred_fallthru
    _
  // Predicated region
  $region38: #{cnn_forward.5} parent=0 // pred_check
    _
  $region39: #{cnn_forward.5} parent=0 // pred_check_branch
    %37 = sbr.rel (0) target = $region41
  $region40: #{cnn_forward.5} parent=0 // pred_region
    _
  $region41: #{cnn_forward.5} parent=0 // pred_fallthru
    _
  // Predicated region
  $region42: #{cnn_forward.5} parent=0 // pred_check
    _
  $region43: #{cnn_forward.5} parent=0 // pred_check_branch
    %39 = sbr.rel (0) target = $region45
  $region44: #{cnn_forward.5} parent=0 // pred_region
    _
  $region45: #{cnn_forward.5} parent=0 // pred_fallthru
    _
  // Predicated region
  $region46: #{cnn_forward.5} parent=0 // pred_check
    _
  $region47: #{cnn_forward.5} parent=0 // pred_check_branch
    %41 = sbr.rel (0) target = $region49
  $region48: #{cnn_forward.5} parent=0 // pred_region
    _
  $region49: #{cnn_forward.5} parent=0 // pred_fallthru
    _
  // Predicated region
  $region50: #{cnn_forward.5} parent=0 // pred_check
    _
  $region51: #{cnn_forward.5} parent=0 // pred_check_branch
    %43 = sbr.rel (0) target = $region53
  $region52: #{cnn_forward.5} parent=0 // pred_region
    _
  $region53: #{cnn_forward.5} parent=0 // pred_fallthru
    _
  %v44 = vld [vmem:[%s0] sm:$0xff]
  %v45 = vld [vmem:[%s1] sm:$0xff]
  %v46 = vld [vmem:[%s1 + $0x8] sm:$0xff]
  %v47 = vld [vmem:[%s1 + $0x10] sm:$0xff]
  %v48 = vld [vmem:[%s1 + $0x18] sm:$0xff]
  %v49 = vld [vmem:[%s1 + $0x20] sm:$0xff]
  %v50 = vld [vmem:[%s1 + $0x28] sm:$0xff]
  %v51 = vld [vmem:[%s1 + $0x30] sm:$0xff]
  %v52 = vld [vmem:[%s1 + $0x38] sm:$0xff]
  %s53 = scalar_lea.vmem %s1, 64
  %v54 = vld [vmem:[%s53] sm:$0xff]
  %v55 = vld [vmem:[%s53 + $0x8] sm:$0xff]
  %v56 = vld [vmem:[%s53 + $0x10] sm:$0xff]
  %v57 = vld [vmem:[%s53 + $0x18] sm:$0xff]
  %v58 = vld [vmem:[%s53 + $0x20] sm:$0xff]
  %v59 = vld [vmem:[%s53 + $0x28] sm:$0xff]
  %v60 = vld [vmem:[%s53 + $0x30] sm:$0xff]
  %v61 = vld [vmem:[%s53 + $0x38] sm:$0xff]
  %63 = vrot.lane.b32.xlu0 %v44, 120
  %v64 = vpop.permute.xlu0 %63
  %vm65 = vcmask 523264
  %v66 = vsel %vm65, %v64, 0
  %68 = vmatprep.subr.mxu0 0.0
  %69 = vmatpush1.msra.mxu0 0.0
  %70 = vmatprep.subr.mxu0 0.0
  %71 = vmatpush1.msra.mxu0 0.0
  %72 = vmatprep.subr.mxu0 0.0
  %73 = vmatpush1.msra.mxu0 0.0
  %74 = vmatprep.subr.mxu0 0.0
  %75 = vmatpush1.msra.mxu0 0.0
  %76 = vmatprep.subr.mxu0 0.0
  %77 = vmatpush1.msra.mxu0 0.0
  %78 = vmatprep.subr.mxu0 0.0
  %79 = vmatpush1.msra.mxu0 0.0
  %80 = vmatprep.subr.mxu0 0.0
  %81 = vmatpush1.msra.mxu0 0.0
  %82 = vmatprep.subr.mxu0 0.0
  %83 = vmatpush1.msra.mxu0 0.0
  %84 = vmatprep.subr.mxu0 0.0
  %85 = vmatpush1.msra.mxu0 %v61
  %86 = vmatprep.subr.mxu0 0.0
  %87 = vmatpush1.msra.mxu0 %v60
  %88 = vmatprep.subr.mxu0 0.0
  %89 = vmatpush1.msra.mxu0 %v59
  %90 = vmatprep.subr.mxu0 0.0
  %91 = vmatpush1.msra.mxu0 %v58
  %92 = vmatprep.subr.mxu0 0.0
  %93 = vmatpush1.msra.mxu0 %v57
  %94 = vmatprep.subr.mxu0 0.0
  %95 = vmatpush1.msra.mxu0 %v56
  %96 = vmatprep.subr.mxu0 0.0
  %97 = vmatpush1.msra.mxu0 %v55
  %98 = vmatprep.subr.mxu0 0.0
  %99 = vmatpush1.msra.mxu0 %v54
  %100 = vmatprep.subr.mxu0 0.0
  %101 = vmatpush2.msra.mxu0 0.0
  %102 = vmatprep.subr.mxu0 0.0
  %103 = vmatpush2.msra.mxu0 0.0
  %104 = vmatprep.subr.mxu0 0.0
  %105 = vmatpush2.msra.mxu0 0.0
  %106 = vmatprep.subr.mxu0 0.0
  %107 = vmatpush2.msra.mxu0 0.0
  %108 = vmatprep.subr.mxu0 0.0
  %109 = vmatpush2.msra.mxu0 0.0
  %110 = vmatprep.subr.mxu0 0.0
  %111 = vmatpush2.msra.mxu0 0.0
  %112 = vmatprep.subr.mxu0 0.0
  %113 = vmatpush2.msra.mxu0 0.0
  %114 = vmatprep.subr.mxu0 0.0
  %115 = vmatpush2.msra.mxu0 0.0
  %116 = vmatprep.subr.mxu0 0.0
  %117 = vmatpush2.msra.mxu0 0.0
  %118 = vmatprep.subr.mxu0 0.0
  %119 = vmatpush2.msra.mxu0 0.0
  %120 = vmatprep.subr.mxu0 0.0
  %121 = vmatpush2.msra.mxu0 0.0
  %122 = vmatprep.subr.mxu0 0.0
  %123 = vmatpush2.msra.mxu0 0.0
  %124 = vmatprep.subr.mxu0 0.0
  %125 = vmatpush2.msra.mxu0 0.0
  %126 = vmatprep.subr.mxu0 0.0
  %127 = vmatpush2.msra.mxu0 0.0
  %128 = vmatprep.subr.mxu0 0.0
  %129 = vmatpush2.msra.mxu0 0.0
  %130 = vmatprep.subr.mxu0 0.0
  %131 = vmatpush2.msra.mxu0 0.0
  %132 = vmatprep.mubr.f32.mxu0 0.0
  %133 = vmatmul.mubr.f32.gmra.mxu0 %v66
  %v134 = vpop.f32.mrf.mxu0
  %v135 = vadd.f32 0.0, %v134
  %v136 = vpop.f32.mrf.mxu0
  %137 = vdwg.mxu0
  %v138 = vsel %vm65, %v44, 0
  %140 = vmatprep.subr.mxu0 0.0
  %141 = vmatpush1.msra.mxu0 0.0
  %142 = vmatprep.subr.mxu0 0.0
  %143 = vmatpush1.msra.mxu0 0.0
  %144 = vmatprep.subr.mxu0 0.0
  %145 = vmatpush1.msra.mxu0 0.0
  %146 = vmatprep.subr.mxu0 0.0
  %147 = vmatpush1.msra.mxu0 0.0
  %148 = vmatprep.subr.mxu0 0.0
  %149 = vmatpush1.msra.mxu0 0.0
  %150 = vmatprep.subr.mxu0 0.0
  %151 = vmatpush1.msra.mxu0 0.0
  %152 = vmatprep.subr.mxu0 0.0
  %153 = vmatpush1.msra.mxu0 0.0
  %154 = vmatprep.subr.mxu0 0.0
  %155 = vmatpush1.msra.mxu0 0.0
  %156 = vmatprep.subr.mxu0 0.0
  %157 = vmatpush1.msra.mxu0 %v52
  %158 = vmatprep.subr.mxu0 0.0
  %159 = vmatpush1.msra.mxu0 %v51
  %160 = vmatprep.subr.mxu0 0.0
  %161 = vmatpush1.msra.mxu0 %v50
  %162 = vmatprep.subr.mxu0 0.0
  %163 = vmatpush1.msra.mxu0 %v49
  %164 = vmatprep.subr.mxu0 0.0
  %165 = vmatpush1.msra.mxu0 %v48
  %166 = vmatprep.subr.mxu0 0.0
  %167 = vmatpush1.msra.mxu0 %v47
  %168 = vmatprep.subr.mxu0 0.0
  %169 = vmatpush1.msra.mxu0 %v46
  %170 = vmatprep.subr.mxu0 0.0
  %171 = vmatpush1.msra.mxu0 %v45
  %172 = vmatprep.subr.mxu0 0.0
  %173 = vmatpush2.msra.mxu0 0.0
  %174 = vmatprep.subr.mxu0 0.0
  %175 = vmatpush2.msra.mxu0 0.0
  %176 = vmatprep.subr.mxu0 0.0
  %177 = vmatpush2.msra.mxu0 0.0
  %178 = vmatprep.subr.mxu0 0.0
  %179 = vmatpush2.msra.mxu0 0.0
  %180 = vmatprep.subr.mxu0 0.0
  %181 = vmatpush2.msra.mxu0 0.0
  %182 = vmatprep.subr.mxu0 0.0
  %183 = vmatpush2.msra.mxu0 0.0
  %184 = vmatprep.subr.mxu0 0.0
  %185 = vmatpush2.msra.mxu0 0.0
  %186 = vmatprep.subr.mxu0 0.0
  %187 = vmatpush2.msra.mxu0 0.0
  %188 = vmatprep.subr.mxu0 0.0
  %189 = vmatpush2.msra.mxu0 0.0
  %190 = vmatprep.subr.mxu0 0.0
  %191 = vmatpush2.msra.mxu0 0.0
  %192 = vmatprep.subr.mxu0 0.0
  %193 = vmatpush2.msra.mxu0 0.0
  %194 = vmatprep.subr.mxu0 0.0
  %195 = vmatpush2.msra.mxu0 0.0
  %196 = vmatprep.subr.mxu0 0.0
  %197 = vmatpush2.msra.mxu0 0.0
  %198 = vmatprep.subr.mxu0 0.0
  %199 = vmatpush2.msra.mxu0 0.0
  %200 = vmatprep.subr.mxu0 0.0
  %201 = vmatpush2.msra.mxu0 0.0
  %202 = vmatprep.subr.mxu0 0.0
  %203 = vmatpush2.msra.mxu0 0.0
  %204 = vmatprep.mubr.f32.mxu0 0.0
  %205 = vmatmul.mubr.f32.gmra.mxu0 %v138
  %v206 = vpop.f32.mrf.mxu0
  %v207 = vadd.f32 %v135, %v206
  %v208 = vpop.f32.mrf.mxu0
  %209 = vdwg.mxu0
  %s210 = scalar_lea.vmem %s1, 128
  %v211 = vld [vmem:[%s210] sm:$0xff]
  %v212 = vld [vmem:[%s210 + $0x8] sm:$0xff]
  %v213 = vld [vmem:[%s210 + $0x10] sm:$0xff]
  %v214 = vld [vmem:[%s210 + $0x18] sm:$0xff]
  %v215 = vld [vmem:[%s210 + $0x20] sm:$0xff]
  %v216 = vld [vmem:[%s210 + $0x28] sm:$0xff]
  %v217 = vld [vmem:[%s210 + $0x30] sm:$0xff]
  %v218 = vld [vmem:[%s210 + $0x38] sm:$0xff]
  %219 = vrot.lane.b32.xlu0 %v44, 112
  %v220 = vpop.permute.xlu0 %219
  %v221 = vsel %vm65, %v220, 0
  %223 = vmatprep.subr.mxu0 0.0
  %224 = vmatpush1.msra.mxu0 0.0
  %225 = vmatprep.subr.mxu0 0.0
  %226 = vmatpush1.msra.mxu0 0.0
  %227 = vmatprep.subr.mxu0 0.0
  %228 = vmatpush1.msra.mxu0 0.0
  %229 = vmatprep.subr.mxu0 0.0
  %230 = vmatpush1.msra.mxu0 0.0
  %231 = vmatprep.subr.mxu0 0.0
  %232 = vmatpush1.msra.mxu0 0.0
  %233 = vmatprep.subr.mxu0 0.0
  %234 = vmatpush1.msra.mxu0 0.0
  %235 = vmatprep.subr.mxu0 0.0
  %236 = vmatpush1.msra.mxu0 0.0
  %237 = vmatprep.subr.mxu0 0.0
  %238 = vmatpush1.msra.mxu0 0.0
  %239 = vmatprep.subr.mxu0 0.0
  %240 = vmatpush1.msra.mxu0 %v218
  %241 = vmatprep.subr.mxu0 0.0
  %242 = vmatpush1.msra.mxu0 %v217
  %243 = vmatprep.subr.mxu0 0.0
  %244 = vmatpush1.msra.mxu0 %v216
  %245 = vmatprep.subr.mxu0 0.0
  %246 = vmatpush1.msra.mxu0 %v215
  %247 = vmatprep.subr.mxu0 0.0
  %248 = vmatpush1.msra.mxu0 %v214
  %249 = vmatprep.subr.mxu0 0.0
  %250 = vmatpush1.msra.mxu0 %v213
  %251 = vmatprep.subr.mxu0 0.0
  %252 = vmatpush1.msra.mxu0 %v212
  %253 = vmatprep.subr.mxu0 0.0
  %254 = vmatpush1.msra.mxu0 %v211
  %255 = vmatprep.subr.mxu0 0.0
  %256 = vmatpush2.msra.mxu0 0.0
  %257 = vmatprep.subr.mxu0 0.0
  %258 = vmatpush2.msra.mxu0 0.0
  %259 = vmatprep.subr.mxu0 0.0
  %260 = vmatpush2.msra.mxu0 0.0
  %261 = vmatprep.subr.mxu0 0.0
  %262 = vmatpush2.msra.mxu0 0.0
  %263 = vmatprep.subr.mxu0 0.0
  %264 = vmatpush2.msra.mxu0 0.0
  %265 = vmatprep.subr.mxu0 0.0
  %266 = vmatpush2.msra.mxu0 0.0
  %267 = vmatprep.subr.mxu0 0.0
  %268 = vmatpush2.msra.mxu0 0.0
  %269 = vmatprep.subr.mxu0 0.0
  %270 = vmatpush2.msra.mxu0 0.0
  %271 = vmatprep.subr.mxu0 0.0
  %272 = vmatpush2.msra.mxu0 0.0
  %273 = vmatprep.subr.mxu0 0.0
  %274 = vmatpush2.msra.mxu0 0.0
  %275 = vmatprep.subr.mxu0 0.0
  %276 = vmatpush2.msra.mxu0 0.0
  %277 = vmatprep.subr.mxu0 0.0
  %278 = vmatpush2.msra.mxu0 0.0
  %279 = vmatprep.subr.mxu0 0.0
  %280 = vmatpush2.msra.mxu0 0.0
  %281 = vmatprep.subr.mxu0 0.0
  %282 = vmatpush2.msra.mxu0 0.0
  %283 = vmatprep.subr.mxu0 0.0
  %284 = vmatpush2.msra.mxu0 0.0
  %285 = vmatprep.subr.mxu0 0.0
  %286 = vmatpush2.msra.mxu0 0.0
  %287 = vmatprep.mubr.f32.mxu0 0.0
  %288 = vmatmul.mubr.f32.gmra.mxu0 %v221
  %v289 = vpop.f32.mrf.mxu0
  %v290 = vadd.f32 0.0, %v289
  %v291 = vpop.f32.mrf.mxu0
  %292 = vdwg.mxu0
  %v293 = vadd.f32 %v207, %v290
  %v294 = vld [vmem:[%s0 + $0x1] sm:$0xff]
  %s295 = scalar_lea.vmem %s1, 192
  %v296 = vld [vmem:[%s295] sm:$0xff]
  %v297 = vld [vmem:[%s295 + $0x8] sm:$0xff]
  %v298 = vld [vmem:[%s295 + $0x10] sm:$0xff]
  %v299 = vld [vmem:[%s295 + $0x18] sm:$0xff]
  %v300 = vld [vmem:[%s295 + $0x20] sm:$0xff]
  %v301 = vld [vmem:[%s295 + $0x28] sm:$0xff]
  %v302 = vld [vmem:[%s295 + $0x30] sm:$0xff]
  %v303 = vld [vmem:[%s295 + $0x38] sm:$0xff]
  %v305 = vsel %vm65, %v294, 0
  %307 = vmatprep.subr.mxu0 0.0
  %308 = vmatpush1.msra.mxu0 0.0
  %309 = vmatprep.subr.mxu0 0.0
  %310 = vmatpush1.msra.mxu0 0.0
  %311 = vmatprep.subr.mxu0 0.0
  %312 = vmatpush1.msra.mxu0 0.0
  %313 = vmatprep.subr.mxu0 0.0
  %314 = vmatpush1.msra.mxu0 0.0
  %315 = vmatprep.subr.mxu0 0.0
  %316 = vmatpush1.msra.mxu0 0.0
  %317 = vmatprep.subr.mxu0 0.0
  %318 = vmatpush1.msra.mxu0 0.0
  %319 = vmatprep.subr.mxu0 0.0
  %320 = vmatpush1.msra.mxu0 0.0
  %321 = vmatprep.subr.mxu0 0.0
  %322 = vmatpush1.msra.mxu0 0.0
  %323 = vmatprep.subr.mxu0 0.0
  %324 = vmatpush1.msra.mxu0 %v303
  %325 = vmatprep.subr.mxu0 0.0
  %326 = vmatpush1.msra.mxu0 %v302
  %327 = vmatprep.subr.mxu0 0.0
  %328 = vmatpush1.msra.mxu0 %v301
  %329 = vmatprep.subr.mxu0 0.0
  %330 = vmatpush1.msra.mxu0 %v300
  %331 = vmatprep.subr.mxu0 0.0
  %332 = vmatpush1.msra.mxu0 %v299
  %333 = vmatprep.subr.mxu0 0.0
  %334 = vmatpush1.msra.mxu0 %v298
  %335 = vmatprep.subr.mxu0 0.0
  %336 = vmatpush1.msra.mxu0 %v297
  %337 = vmatprep.subr.mxu0 0.0
  %338 = vmatpush1.msra.mxu0 %v296
  %339 = vmatprep.subr.mxu0 0.0
  %340 = vmatpush2.msra.mxu0 0.0
  %341 = vmatprep.subr.mxu0 0.0
  %342 = vmatpush2.msra.mxu0 0.0
  %343 = vmatprep.subr.mxu0 0.0
  %344 = vmatpush2.msra.mxu0 0.0
  %345 = vmatprep.subr.mxu0 0.0
  %346 = vmatpush2.msra.mxu0 0.0
  %347 = vmatprep.subr.mxu0 0.0
  %348 = vmatpush2.msra.mxu0 0.0
  %349 = vmatprep.subr.mxu0 0.0
  %350 = vmatpush2.msra.mxu0 0.0
  %351 = vmatprep.subr.mxu0 0.0
  %352 = vmatpush2.msra.mxu0 0.0
  %353 = vmatprep.subr.mxu0 0.0
  %354 = vmatpush2.msra.mxu0 0.0
  %355 = vmatprep.subr.mxu0 0.0
  %356 = vmatpush2.msra.mxu0 0.0
  %357 = vmatprep.subr.mxu0 0.0
  %358 = vmatpush2.msra.mxu0 0.0
  %359 = vmatprep.subr.mxu0 0.0
  %360 = vmatpush2.msra.mxu0 0.0
  %361 = vmatprep.subr.mxu0 0.0
  %362 = vmatpush2.msra.mxu0 0.0
  %363 = vmatprep.subr.mxu0 0.0
  %364 = vmatpush2.msra.mxu0 0.0
  %365 = vmatprep.subr.mxu0 0.0
  %366 = vmatpush2.msra.mxu0 0.0
  %367 = vmatprep.subr.mxu0 0.0
  %368 = vmatpush2.msra.mxu0 0.0
  %369 = vmatprep.subr.mxu0 0.0
  %370 = vmatpush2.msra.mxu0 0.0
  %371 = vmatprep.mubr.f32.mxu0 0.0
  %372 = vmatmul.mubr.f32.gmra.mxu0 %v305
  %v373 = vpop.f32.mrf.mxu0
  %v374 = vadd.f32 0.0, %v373
  %v375 = vpop.f32.mrf.mxu0
  %376 = vdwg.mxu0
  %v377 = vadd.f32 %v293, %v374
  %s378 = scalar_lea.vmem %s1, 256
  %v379 = vld [vmem:[%s378] sm:$0xff]
  %v380 = vld [vmem:[%s378 + $0x8] sm:$0xff]
  %v381 = vld [vmem:[%s378 + $0x10] sm:$0xff]
  %v382 = vld [vmem:[%s378 + $0x18] sm:$0xff]
  %v383 = vld [vmem:[%s378 + $0x20] sm:$0xff]
  %v384 = vld [vmem:[%s378 + $0x28] sm:$0xff]
  %v385 = vld [vmem:[%s378 + $0x30] sm:$0xff]
  %v386 = vld [vmem:[%s378 + $0x38] sm:$0xff]
  %387 = vrot.lane.b32.xlu0 %v294, 120
  %v388 = vpop.permute.xlu0 %387
  %v389 = vsel %vm65, %v388, 0
  %391 = vmatprep.subr.mxu0 0.0
  %392 = vmatpush1.msra.mxu0 0.0
  %393 = vmatprep.subr.mxu0 0.0
  %394 = vmatpush1.msra.mxu0 0.0
  %395 = vmatprep.subr.mxu0 0.0
  %396 = vmatpush1.msra.mxu0 0.0
  %397 = vmatprep.subr.mxu0 0.0
  %398 = vmatpush1.msra.mxu0 0.0
  %399 = vmatprep.subr.mxu0 0.0
  %400 = vmatpush1.msra.mxu0 0.0
  %401 = vmatprep.subr.mxu0 0.0
  %402 = vmatpush1.msra.mxu0 0.0
  %403 = vmatprep.subr.mxu0 0.0
  %404 = vmatpush1.msra.mxu0 0.0
  %405 = vmatprep.subr.mxu0 0.0
  %406 = vmatpush1.msra.mxu0 0.0
  %407 = vmatprep.subr.mxu0 0.0
  %408 = vmatpush1.msra.mxu0 %v386
  %409 = vmatprep.subr.mxu0 0.0
  %410 = vmatpush1.msra.mxu0 %v385
  %411 = vmatprep.subr.mxu0 0.0
  %412 = vmatpush1.msra.mxu0 %v384
  %413 = vmatprep.subr.mxu0 0.0
  %414 = vmatpush1.msra.mxu0 %v383
  %415 = vmatprep.subr.mxu0 0.0
  %416 = vmatpush1.msra.mxu0 %v382
  %417 = vmatprep.subr.mxu0 0.0
  %418 = vmatpush1.msra.mxu0 %v381
  %419 = vmatprep.subr.mxu0 0.0
  %420 = vmatpush1.msra.mxu0 %v380
  %421 = vmatprep.subr.mxu0 0.0
  %422 = vmatpush1.msra.mxu0 %v379
  %423 = vmatprep.subr.mxu0 0.0
  %424 = vmatpush2.msra.mxu0 0.0
  %425 = vmatprep.subr.mxu0 0.0
  %426 = vmatpush2.msra.mxu0 0.0
  %427 = vmatprep.subr.mxu0 0.0
  %428 = vmatpush2.msra.mxu0 0.0
  %429 = vmatprep.subr.mxu0 0.0
  %430 = vmatpush2.msra.mxu0 0.0
  %431 = vmatprep.subr.mxu0 0.0
  %432 = vmatpush2.msra.mxu0 0.0
  %433 = vmatprep.subr.mxu0 0.0
  %434 = vmatpush2.msra.mxu0 0.0
  %435 = vmatprep.subr.mxu0 0.0
  %436 = vmatpush2.msra.mxu0 0.0
  %437 = vmatprep.subr.mxu0 0.0
  %438 = vmatpush2.msra.mxu0 0.0
  %439 = vmatprep.subr.mxu0 0.0
  %440 = vmatpush2.msra.mxu0 0.0
  %441 = vmatprep.subr.mxu0 0.0
  %442 = vmatpush2.msra.mxu0 0.0
  %443 = vmatprep.subr.mxu0 0.0
  %444 = vmatpush2.msra.mxu0 0.0
  %445 = vmatprep.subr.mxu0 0.0
  %446 = vmatpush2.msra.mxu0 0.0
  %447 = vmatprep.subr.mxu0 0.0
  %448 = vmatpush2.msra.mxu0 0.0
  %449 = vmatprep.subr.mxu0 0.0
  %450 = vmatpush2.msra.mxu0 0.0
  %451 = vmatprep.subr.mxu0 0.0
  %452 = vmatpush2.msra.mxu0 0.0
  %453 = vmatprep.subr.mxu0 0.0
  %454 = vmatpush2.msra.mxu0 0.0
  %455 = vmatprep.mubr.f32.mxu0 0.0
  %456 = vmatmul.mubr.f32.gmra.mxu0 %v389
  %v457 = vpop.f32.mrf.mxu0
  %v458 = vadd.f32 0.0, %v457
  %v459 = vpop.f32.mrf.mxu0
  %460 = vdwg.mxu0
  %v461 = vadd.f32 %v377, %v458
  %s462 = scalar_lea.vmem %s1, 320
  %v463 = vld [vmem:[%s462] sm:$0xff]
  %v464 = vld [vmem:[%s462 + $0x8] sm:$0xff]
  %v465 = vld [vmem:[%s462 + $0x10] sm:$0xff]
  %v466 = vld [vmem:[%s462 + $0x18] sm:$0xff]
  %v467 = vld [vmem:[%s462 + $0x20] sm:$0xff]
  %v468 = vld [vmem:[%s462 + $0x28] sm:$0xff]
  %v469 = vld [vmem:[%s462 + $0x30] sm:$0xff]
  %v470 = vld [vmem:[%s462 + $0x38] sm:$0xff]
  %471 = vrot.lane.b32.xlu0 %v294, 112
  %v472 = vpop.permute.xlu0 %471
  %v473 = vsel %vm65, %v472, 0
  %475 = vmatprep.subr.mxu0 0.0
  %476 = vmatpush1.msra.mxu0 0.0
  %477 = vmatprep.subr.mxu0 0.0
  %478 = vmatpush1.msra.mxu0 0.0
  %479 = vmatprep.subr.mxu0 0.0
  %480 = vmatpush1.msra.mxu0 0.0
  %481 = vmatprep.subr.mxu0 0.0
  %482 = vmatpush1.msra.mxu0 0.0
  %483 = vmatprep.subr.mxu0 0.0
  %484 = vmatpush1.msra.mxu0 0.0
  %485 = vmatprep.subr.mxu0 0.0
  %486 = vmatpush1.msra.mxu0 0.0
  %487 = vmatprep.subr.mxu0 0.0
  %488 = vmatpush1.msra.mxu0 0.0
  %489 = vmatprep.subr.mxu0 0.0
  %490 = vmatpush1.msra.mxu0 0.0
  %491 = vmatprep.subr.mxu0 0.0
  %492 = vmatpush1.msra.mxu0 %v470
  %493 = vmatprep.subr.mxu0 0.0
  %494 = vmatpush1.msra.mxu0 %v469
  %495 = vmatprep.subr.mxu0 0.0
  %496 = vmatpush1.msra.mxu0 %v468
  %497 = vmatprep.subr.mxu0 0.0
  %498 = vmatpush1.msra.mxu0 %v467
  %499 = vmatprep.subr.mxu0 0.0
  %500 = vmatpush1.msra.mxu0 %v466
  %501 = vmatprep.subr.mxu0 0.0
  %502 = vmatpush1.msra.mxu0 %v465
  %503 = vmatprep.subr.mxu0 0.0
  %504 = vmatpush1.msra.mxu0 %v464
  %505 = vmatprep.subr.mxu0 0.0
  %506 = vmatpush1.msra.mxu0 %v463
  %507 = vmatprep.subr.mxu0 0.0
  %508 = vmatpush2.msra.mxu0 0.0
  %509 = vmatprep.subr.mxu0 0.0
  %510 = vmatpush2.msra.mxu0 0.0
  %511 = vmatprep.subr.mxu0 0.0
  %512 = vmatpush2.msra.mxu0 0.0
  %513 = vmatprep.subr.mxu0 0.0
  %514 = vmatpush2.msra.mxu0 0.0
  %515 = vmatprep.subr.mxu0 0.0
  %516 = vmatpush2.msra.mxu0 0.0
  %517 = vmatprep.subr.mxu0 0.0
  %518 = vmatpush2.msra.mxu0 0.0
  %519 = vmatprep.subr.mxu0 0.0
  %520 = vmatpush2.msra.mxu0 0.0
  %521 = vmatprep.subr.mxu0 0.0
  %522 = vmatpush2.msra.mxu0 0.0
  %523 = vmatprep.subr.mxu0 0.0
  %524 = vmatpush2.msra.mxu0 0.0
  %525 = vmatprep.subr.mxu0 0.0
  %526 = vmatpush2.msra.mxu0 0.0
  %527 = vmatprep.subr.mxu0 0.0
  %528 = vmatpush2.msra.mxu0 0.0
  %529 = vmatprep.subr.mxu0 0.0
  %530 = vmatpush2.msra.mxu0 0.0
  %531 = vmatprep.subr.mxu0 0.0
  %532 = vmatpush2.msra.mxu0 0.0
  %533 = vmatprep.subr.mxu0 0.0
  %534 = vmatpush2.msra.mxu0 0.0
  %535 = vmatprep.subr.mxu0 0.0
  %536 = vmatpush2.msra.mxu0 0.0
  %537 = vmatprep.subr.mxu0 0.0
  %538 = vmatpush2.msra.mxu0 0.0
  %539 = vmatprep.mubr.f32.mxu0 0.0
  %540 = vmatmul.mubr.f32.gmra.mxu0 %v473
  %v541 = vpop.f32.mrf.mxu0
  %v542 = vadd.f32 0.0, %v541
  %v543 = vpop.f32.mrf.mxu0
  %544 = vdwg.mxu0
  %v545 = vadd.f32 %v461, %v542
  %v546 = vld [vmem:[%s0 + $0x2] sm:$0xff]
  %s547 = scalar_lea.vmem %s1, 384
  %v548 = vld [vmem:[%s547] sm:$0xff]
  %v549 = vld [vmem:[%s547 + $0x8] sm:$0xff]
  %v550 = vld [vmem:[%s547 + $0x10] sm:$0xff]
  %v551 = vld [vmem:[%s547 + $0x18] sm:$0xff]
  %v552 = vld [vmem:[%s547 + $0x20] sm:$0xff]
  %v553 = vld [vmem:[%s547 + $0x28] sm:$0xff]
  %v554 = vld [vmem:[%s547 + $0x30] sm:$0xff]
  %v555 = vld [vmem:[%s547 + $0x38] sm:$0xff]
  %v557 = vsel %vm65, %v546, 0
  %559 = vmatprep.subr.mxu0 0.0
  %560 = vmatpush1.msra.mxu0 0.0
  %561 = vmatprep.subr.mxu0 0.0
  %562 = vmatpush1.msra.mxu0 0.0
  %563 = vmatprep.subr.mxu0 0.0
  %564 = vmatpush1.msra.mxu0 0.0
  %565 = vmatprep.subr.mxu0 0.0
  %566 = vmatpush1.msra.mxu0 0.0
  %567 = vmatprep.subr.mxu0 0.0
  %568 = vmatpush1.msra.mxu0 0.0
  %569 = vmatprep.subr.mxu0 0.0
  %570 = vmatpush1.msra.mxu0 0.0
  %571 = vmatprep.subr.mxu0 0.0
  %572 = vmatpush1.msra.mxu0 0.0
  %573 = vmatprep.subr.mxu0 0.0
  %574 = vmatpush1.msra.mxu0 0.0
  %575 = vmatprep.subr.mxu0 0.0
  %576 = vmatpush1.msra.mxu0 %v555
  %577 = vmatprep.subr.mxu0 0.0
  %578 = vmatpush1.msra.mxu0 %v554
  %579 = vmatprep.subr.mxu0 0.0
  %580 = vmatpush1.msra.mxu0 %v553
  %581 = vmatprep.subr.mxu0 0.0
  %582 = vmatpush1.msra.mxu0 %v552
  %583 = vmatprep.subr.mxu0 0.0
  %584 = vmatpush1.msra.mxu0 %v551
  %585 = vmatprep.subr.mxu0 0.0
  %586 = vmatpush1.msra.mxu0 %v550
  %587 = vmatprep.subr.mxu0 0.0
  %588 = vmatpush1.msra.mxu0 %v549
  %589 = vmatprep.subr.mxu0 0.0
  %590 = vmatpush1.msra.mxu0 %v548
  %591 = vmatprep.subr.mxu0 0.0
  %592 = vmatpush2.msra.mxu0 0.0
  %593 = vmatprep.subr.mxu0 0.0
  %594 = vmatpush2.msra.mxu0 0.0
  %595 = vmatprep.subr.mxu0 0.0
  %596 = vmatpush2.msra.mxu0 0.0
  %597 = vmatprep.subr.mxu0 0.0
  %598 = vmatpush2.msra.mxu0 0.0
  %599 = vmatprep.subr.mxu0 0.0
  %600 = vmatpush2.msra.mxu0 0.0
  %601 = vmatprep.subr.mxu0 0.0
  %602 = vmatpush2.msra.mxu0 0.0
  %603 = vmatprep.subr.mxu0 0.0
  %604 = vmatpush2.msra.mxu0 0.0
  %605 = vmatprep.subr.mxu0 0.0
  %606 = vmatpush2.msra.mxu0 0.0
  %607 = vmatprep.subr.mxu0 0.0
  %608 = vmatpush2.msra.mxu0 0.0
  %609 = vmatprep.subr.mxu0 0.0
  %610 = vmatpush2.msra.mxu0 0.0
  %611 = vmatprep.subr.mxu0 0.0
  %612 = vmatpush2.msra.mxu0 0.0
  %613 = vmatprep.subr.mxu0 0.0
  %614 = vmatpush2.msra.mxu0 0.0
  %615 = vmatprep.subr.mxu0 0.0
  %616 = vmatpush2.msra.mxu0 0.0
  %617 = vmatprep.subr.mxu0 0.0
  %618 = vmatpush2.msra.mxu0 0.0
  %619 = vmatprep.subr.mxu0 0.0
  %620 = vmatpush2.msra.mxu0 0.0
  %621 = vmatprep.subr.mxu0 0.0
  %622 = vmatpush2.msra.mxu0 0.0
  %623 = vmatprep.mubr.f32.mxu0 0.0
  %624 = vmatmul.mubr.f32.gmra.mxu0 %v557
  %v625 = vpop.f32.mrf.mxu0
  %v626 = vadd.f32 0.0, %v625
  %v627 = vpop.f32.mrf.mxu0
  %628 = vdwg.mxu0
  %v629 = vadd.f32 %v545, %v626
  %s630 = scalar_lea.vmem %s1, 448
  %v631 = vld [vmem:[%s630] sm:$0xff]
  %v632 = vld [vmem:[%s630 + $0x8] sm:$0xff]
  %v633 = vld [vmem:[%s630 + $0x10] sm:$0xff]
  %v634 = vld [vmem:[%s630 + $0x18] sm:$0xff]
  %v635 = vld [vmem:[%s630 + $0x20] sm:$0xff]
  %v636 = vld [vmem:[%s630 + $0x28] sm:$0xff]
  %v637 = vld [vmem:[%s630 + $0x30] sm:$0xff]
  %v638 = vld [vmem:[%s630 + $0x38] sm:$0xff]
  %639 = vrot.lane.b32.xlu0 %v546, 120
  %v640 = vpop.permute.xlu0 %639
  %v641 = vsel %vm65, %v640, 0
  %643 = vmatprep.subr.mxu0 0.0
  %644 = vmatpush1.msra.mxu0 0.0
  %645 = vmatprep.subr.mxu0 0.0
  %646 = vmatpush1.msra.mxu0 0.0
  %647 = vmatprep.subr.mxu0 0.0
  %648 = vmatpush1.msra.mxu0 0.0
  %649 = vmatprep.subr.mxu0 0.0
  %650 = vmatpush1.msra.mxu0 0.0
  %651 = vmatprep.subr.mxu0 0.0
  %652 = vmatpush1.msra.mxu0 0.0
  %653 = vmatprep.subr.mxu0 0.0
  %654 = vmatpush1.msra.mxu0 0.0
  %655 = vmatprep.subr.mxu0 0.0
  %656 = vmatpush1.msra.mxu0 0.0
  %657 = vmatprep.subr.mxu0 0.0
  %658 = vmatpush1.msra.mxu0 0.0
  %659 = vmatprep.subr.mxu0 0.0
  %660 = vmatpush1.msra.mxu0 %v638
  %661 = vmatprep.subr.mxu0 0.0
  %662 = vmatpush1.msra.mxu0 %v637
  %663 = vmatprep.subr.mxu0 0.0
  %664 = vmatpush1.msra.mxu0 %v636
  %665 = vmatprep.subr.mxu0 0.0
  %666 = vmatpush1.msra.mxu0 %v635
  %667 = vmatprep.subr.mxu0 0.0
  %668 = vmatpush1.msra.mxu0 %v634
  %669 = vmatprep.subr.mxu0 0.0
  %670 = vmatpush1.msra.mxu0 %v633
  %671 = vmatprep.subr.mxu0 0.0
  %672 = vmatpush1.msra.mxu0 %v632
  %673 = vmatprep.subr.mxu0 0.0
  %674 = vmatpush1.msra.mxu0 %v631
  %675 = vmatprep.subr.mxu0 0.0
  %676 = vmatpush2.msra.mxu0 0.0
  %677 = vmatprep.subr.mxu0 0.0
  %678 = vmatpush2.msra.mxu0 0.0
  %679 = vmatprep.subr.mxu0 0.0
  %680 = vmatpush2.msra.mxu0 0.0
  %681 = vmatprep.subr.mxu0 0.0
  %682 = vmatpush2.msra.mxu0 0.0
  %683 = vmatprep.subr.mxu0 0.0
  %684 = vmatpush2.msra.mxu0 0.0
  %685 = vmatprep.subr.mxu0 0.0
  %686 = vmatpush2.msra.mxu0 0.0
  %687 = vmatprep.subr.mxu0 0.0
  %688 = vmatpush2.msra.mxu0 0.0
  %689 = vmatprep.subr.mxu0 0.0
  %690 = vmatpush2.msra.mxu0 0.0
  %691 = vmatprep.subr.mxu0 0.0
  %692 = vmatpush2.msra.mxu0 0.0
  %693 = vmatprep.subr.mxu0 0.0
  %694 = vmatpush2.msra.mxu0 0.0
  %695 = vmatprep.subr.mxu0 0.0
  %696 = vmatpush2.msra.mxu0 0.0
  %697 = vmatprep.subr.mxu0 0.0
  %698 = vmatpush2.msra.mxu0 0.0
  %699 = vmatprep.subr.mxu0 0.0
  %700 = vmatpush2.msra.mxu0 0.0
  %701 = vmatprep.subr.mxu0 0.0
  %702 = vmatpush2.msra.mxu0 0.0
  %703 = vmatprep.subr.mxu0 0.0
  %704 = vmatpush2.msra.mxu0 0.0
  %705 = vmatprep.subr.mxu0 0.0
  %706 = vmatpush2.msra.mxu0 0.0
  %707 = vmatprep.mubr.f32.mxu0 0.0
  %708 = vmatmul.mubr.f32.gmra.mxu0 %v641
  %v709 = vpop.f32.mrf.mxu0
  %v710 = vadd.f32 0.0, %v709
  %v711 = vpop.f32.mrf.mxu0
  %712 = vdwg.mxu0
  %v713 = vadd.f32 %v629, %v710
  %s714 = scalar_lea.vmem %s1, 512
  %v715 = vld [vmem:[%s714] sm:$0xff]
  %v716 = vld [vmem:[%s714 + $0x8] sm:$0xff]
  %v717 = vld [vmem:[%s714 + $0x10] sm:$0xff]
  %v718 = vld [vmem:[%s714 + $0x18] sm:$0xff]
  %v719 = vld [vmem:[%s714 + $0x20] sm:$0xff]
  %v720 = vld [vmem:[%s714 + $0x28] sm:$0xff]
  %v721 = vld [vmem:[%s714 + $0x30] sm:$0xff]
  %v722 = vld [vmem:[%s714 + $0x38] sm:$0xff]
  %723 = vrot.lane.b32.xlu0 %v546, 112
  %v724 = vpop.permute.xlu0 %723
  %v725 = vsel %vm65, %v724, 0
  %727 = vmatprep.subr.mxu0 0.0
  %728 = vmatpush1.msra.mxu0 0.0
  %729 = vmatprep.subr.mxu0 0.0
  %730 = vmatpush1.msra.mxu0 0.0
  %731 = vmatprep.subr.mxu0 0.0
  %732 = vmatpush1.msra.mxu0 0.0
  %733 = vmatprep.subr.mxu0 0.0
  %734 = vmatpush1.msra.mxu0 0.0
  %735 = vmatprep.subr.mxu0 0.0
  %736 = vmatpush1.msra.mxu0 0.0
  %737 = vmatprep.subr.mxu0 0.0
  %738 = vmatpush1.msra.mxu0 0.0
  %739 = vmatprep.subr.mxu0 0.0
  %740 = vmatpush1.msra.mxu0 0.0
  %741 = vmatprep.subr.mxu0 0.0
  %742 = vmatpush1.msra.mxu0 0.0
  %743 = vmatprep.subr.mxu0 0.0
  %744 = vmatpush1.msra.mxu0 %v722
  %745 = vmatprep.subr.mxu0 0.0
  %746 = vmatpush1.msra.mxu0 %v721
  %747 = vmatprep.subr.mxu0 0.0
  %748 = vmatpush1.msra.mxu0 %v720
  %749 = vmatprep.subr.mxu0 0.0
  %750 = vmatpush1.msra.mxu0 %v719
  %751 = vmatprep.subr.mxu0 0.0
  %752 = vmatpush1.msra.mxu0 %v718
  %753 = vmatprep.subr.mxu0 0.0
  %754 = vmatpush1.msra.mxu0 %v717
  %755 = vmatprep.subr.mxu0 0.0
  %756 = vmatpush1.msra.mxu0 %v716
  %757 = vmatprep.subr.mxu0 0.0
  %758 = vmatpush1.msra.mxu0 %v715
  %759 = vmatprep.subr.mxu0 0.0
  %760 = vmatpush2.msra.mxu0 0.0
  %761 = vmatprep.subr.mxu0 0.0
  %762 = vmatpush2.msra.mxu0 0.0
  %763 = vmatprep.subr.mxu0 0.0
  %764 = vmatpush2.msra.mxu0 0.0
  %765 = vmatprep.subr.mxu0 0.0
  %766 = vmatpush2.msra.mxu0 0.0
  %767 = vmatprep.subr.mxu0 0.0
  %768 = vmatpush2.msra.mxu0 0.0
  %769 = vmatprep.subr.mxu0 0.0
  %770 = vmatpush2.msra.mxu0 0.0
  %771 = vmatprep.subr.mxu0 0.0
  %772 = vmatpush2.msra.mxu0 0.0
  %773 = vmatprep.subr.mxu0 0.0
  %774 = vmatpush2.msra.mxu0 0.0
  %775 = vmatprep.subr.mxu0 0.0
  %776 = vmatpush2.msra.mxu0 0.0
  %777 = vmatprep.subr.mxu0 0.0
  %778 = vmatpush2.msra.mxu0 0.0
  %779 = vmatprep.subr.mxu0 0.0
  %780 = vmatpush2.msra.mxu0 0.0
  %781 = vmatprep.subr.mxu0 0.0
  %782 = vmatpush2.msra.mxu0 0.0
  %783 = vmatprep.subr.mxu0 0.0
  %784 = vmatpush2.msra.mxu0 0.0
  %785 = vmatprep.subr.mxu0 0.0
  %786 = vmatpush2.msra.mxu0 0.0
  %787 = vmatprep.subr.mxu0 0.0
  %788 = vmatpush2.msra.mxu0 0.0
  %789 = vmatprep.subr.mxu0 0.0
  %790 = vmatpush2.msra.mxu0 0.0
  %791 = vmatprep.mubr.f32.mxu0 0.0
  %792 = vmatmul.mubr.f32.gmra.mxu0 %v725
  %v793 = vpop.f32.mrf.mxu0
  %v794 = vadd.f32 0.0, %v793
  %v795 = vpop.f32.mrf.mxu0
  %796 = vdwg.mxu0
  %v797 = vadd.f32 %v713, %v794
  %v798 = vld [vmem:[%s2] sm:$0x1]
  %v800 = vlaneseq
  %v801 = vshrl.u32 %v800, 7
  %v802 = vsub.s32 0, %v801
  %v803 = vrot.slane %v798, %v802
  %v805 = vadd.f32 %v797, %v803
  %v806 = vrot.slane %v805, 4
  %v807 = vadd.f32 %v805, %v806
  %v808 = vrot.slane %v807, 2
  %v809 = vadd.f32 %v807, %v808
  %v810 = vrot.slane %v809, 1
  %v811 = vadd.f32 %v809, %v810
  %v812 = vld [vmem:[%s5] sm:$0xff]
  %v813 = vld [vmem:[%s5 + $0x8] sm:$0xff]
  %v814 = vld [vmem:[%s5 + $0x10] sm:$0xff]
  %v815 = vld [vmem:[%s5 + $0x18] sm:$0xff]
  %v816 = vld [vmem:[%s5 + $0x20] sm:$0xff]
  %v817 = vld [vmem:[%s5 + $0x28] sm:$0xff]
  %v818 = vld [vmem:[%s5 + $0x30] sm:$0xff]
  %v819 = vld [vmem:[%s5 + $0x38] sm:$0xff]
  %v820 = vld [vmem:[%s5 + $0x40] sm:$0xff]
  %v821 = vld [vmem:[%s5 + $0x48] sm:$0xff]
  %v822 = vld [vmem:[%s5 + $0x50] sm:$0xff]
  %v823 = vld [vmem:[%s5 + $0x58] sm:$0xff]
  %v824 = vld [vmem:[%s5 + $0x60] sm:$0xff]
  %v825 = vld [vmem:[%s5 + $0x68] sm:$0xff]
  %v826 = vld [vmem:[%s5 + $0x70] sm:$0xff]
  %v827 = vld [vmem:[%s5 + $0x78] sm:$0xff]
  %v828 = vmul.f32 %v805, %v805
  %v829 = vrot.slane %v828, 4
  %v830 = vadd.f32 %v828, %v829
  %v831 = vrot.slane %v830, 2
  %v832 = vadd.f32 %v830, %v831
  %v833 = vrot.slane %v832, 1
  %v834 = vadd.f32 %v832, %v833
  %s835 = scalar_lea.vmem %s0, 16
  %v836 = vld [vmem:[%s835] sm:$0xff]
  %838 = vrot.lane.b32.xlu0 %v836, 120
  %v839 = vpop.permute.xlu0 %838
  %v840 = vsel %vm65, %v839, 0
  %842 = vmatprep.subr.mxu0 0.0
  %843 = vmatpush1.msra.mxu0 0.0
  %844 = vmatprep.subr.mxu0 0.0
  %845 = vmatpush1.msra.mxu0 0.0
  %846 = vmatprep.subr.mxu0 0.0
  %847 = vmatpush1.msra.mxu0 0.0
  %848 = vmatprep.subr.mxu0 0.0
  %849 = vmatpush1.msra.mxu0 0.0
  %850 = vmatprep.subr.mxu0 0.0
  %851 = vmatpush1.msra.mxu0 0.0
  %852 = vmatprep.subr.mxu0 0.0
  %853 = vmatpush1.msra.mxu0 0.0
  %854 = vmatprep.subr.mxu0 0.0
  %855 = vmatpush1.msra.mxu0 0.0
  %856 = vmatprep.subr.mxu0 0.0
  %857 = vmatpush1.msra.mxu0 0.0
  %858 = vmatprep.subr.mxu0 0.0
  %859 = vmatpush1.msra.mxu0 %v61
  %860 = vmatprep.subr.mxu0 0.0
  %861 = vmatpush1.msra.mxu0 %v60
  %862 = vmatprep.subr.mxu0 0.0
  %863 = vmatpush1.msra.mxu0 %v59
  %864 = vmatprep.subr.mxu0 0.0
  %865 = vmatpush1.msra.mxu0 %v58
  %866 = vmatprep.subr.mxu0 0.0
  %867 = vmatpush1.msra.mxu0 %v57
  %868 = vmatprep.subr.mxu0 0.0
  %869 = vmatpush1.msra.mxu0 %v56
  %870 = vmatprep.subr.mxu0 0.0
  %871 = vmatpush1.msra.mxu0 %v55
  %872 = vmatprep.subr.mxu0 0.0
  %873 = vmatpush1.msra.mxu0 %v54
  %874 = vmatprep.subr.mxu0 0.0
  %875 = vmatpush2.msra.mxu0 0.0
  %876 = vmatprep.subr.mxu0 0.0
  %877 = vmatpush2.msra.mxu0 0.0
  %878 = vmatprep.subr.mxu0 0.0
  %879 = vmatpush2.msra.mxu0 0.0
  %880 = vmatprep.subr.mxu0 0.0
  %881 = vmatpush2.msra.mxu0 0.0
  %882 = vmatprep.subr.mxu0 0.0
  %883 = vmatpush2.msra.mxu0 0.0
  %884 = vmatprep.subr.mxu0 0.0
  %885 = vmatpush2.msra.mxu0 0.0
  %886 = vmatprep.subr.mxu0 0.0
  %887 = vmatpush2.msra.mxu0 0.0
  %888 = vmatprep.subr.mxu0 0.0
  %889 = vmatpush2.msra.mxu0 0.0
  %890 = vmatprep.subr.mxu0 0.0
  %891 = vmatpush2.msra.mxu0 0.0
  %892 = vmatprep.subr.mxu0 0.0
  %893 = vmatpush2.msra.mxu0 0.0
  %894 = vmatprep.subr.mxu0 0.0
  %895 = vmatpush2.msra.mxu0 0.0
  %896 = vmatprep.subr.mxu0 0.0
  %897 = vmatpush2.msra.mxu0 0.0
  %898 = vmatprep.subr.mxu0 0.0
  %899 = vmatpush2.msra.mxu0 0.0
  %900 = vmatprep.subr.mxu0 0.0
  %901 = vmatpush2.msra.mxu0 0.0
  %902 = vmatprep.subr.mxu0 0.0
  %903 = vmatpush2.msra.mxu0 0.0
  %904 = vmatprep.subr.mxu0 0.0
  %905 = vmatpush2.msra.mxu0 0.0
  %906 = vmatprep.mubr.f32.mxu0 0.0
  %907 = vmatmul.mubr.f32.gmra.mxu0 %v840
  %v908 = vpop.f32.mrf.mxu0
  %v909 = vadd.f32 0.0, %v908
  %v910 = vpop.f32.mrf.mxu0
  %911 = vdwg.mxu0
  %v912 = vsel %vm65, %v836, 0
  %914 = vmatprep.subr.mxu0 0.0
  %915 = vmatpush1.msra.mxu0 0.0
  %916 = vmatprep.subr.mxu0 0.0
  %917 = vmatpush1.msra.mxu0 0.0
  %918 = vmatprep.subr.mxu0 0.0
  %919 = vmatpush1.msra.mxu0 0.0
  %920 = vmatprep.subr.mxu0 0.0
  %921 = vmatpush1.msra.mxu0 0.0
  %922 = vmatprep.subr.mxu0 0.0
  %923 = vmatpush1.msra.mxu0 0.0
  %924 = vmatprep.subr.mxu0 0.0
  %925 = vmatpush1.msra.mxu0 0.0
  %926 = vmatprep.subr.mxu0 0.0
  %927 = vmatpush1.msra.mxu0 0.0
  %928 = vmatprep.subr.mxu0 0.0
  %929 = vmatpush1.msra.mxu0 0.0
  %930 = vmatprep.subr.mxu0 0.0
  %931 = vmatpush1.msra.mxu0 %v52
  %932 = vmatprep.subr.mxu0 0.0
  %933 = vmatpush1.msra.mxu0 %v51
  %934 = vmatprep.subr.mxu0 0.0
  %935 = vmatpush1.msra.mxu0 %v50
  %936 = vmatprep.subr.mxu0 0.0
  %937 = vmatpush1.msra.mxu0 %v49
  %938 = vmatprep.subr.mxu0 0.0
  %939 = vmatpush1.msra.mxu0 %v48
  %940 = vmatprep.subr.mxu0 0.0
  %941 = vmatpush1.msra.mxu0 %v47
  %942 = vmatprep.subr.mxu0 0.0
  %943 = vmatpush1.msra.mxu0 %v46
  %944 = vmatprep.subr.mxu0 0.0
  %945 = vmatpush1.msra.mxu0 %v45
  %946 = vmatprep.subr.mxu0 0.0
  %947 = vmatpush2.msra.mxu0 0.0
  %948 = vmatprep.subr.mxu0 0.0
  %949 = vmatpush2.msra.mxu0 0.0
  %950 = vmatprep.subr.mxu0 0.0
  %951 = vmatpush2.msra.mxu0 0.0
  %952 = vmatprep.subr.mxu0 0.0
  %953 = vmatpush2.msra.mxu0 0.0
  %954 = vmatprep.subr.mxu0 0.0
  %955 = vmatpush2.msra.mxu0 0.0
  %956 = vmatprep.subr.mxu0 0.0
  %957 = vmatpush2.msra.mxu0 0.0
  %958 = vmatprep.subr.mxu0 0.0
  %959 = vmatpush2.msra.mxu0 0.0
  %960 = vmatprep.subr.mxu0 0.0
  %961 = vmatpush2.msra.mxu0 0.0
  %962 = vmatprep.subr.mxu0 0.0
  %963 = vmatpush2.msra.mxu0 0.0
  %964 = vmatprep.subr.mxu0 0.0
  %965 = vmatpush2.msra.mxu0 0.0
  %966 = vmatprep.subr.mxu0 0.0
  %967 = vmatpush2.msra.mxu0 0.0
  %968 = vmatprep.subr.mxu0 0.0
  %969 = vmatpush2.msra.mxu0 0.0
  %970 = vmatprep.subr.mxu0 0.0
  %971 = vmatpush2.msra.mxu0 0.0
  %972 = vmatprep.subr.mxu0 0.0
  %973 = vmatpush2.msra.mxu0 0.0
  %974 = vmatprep.subr.mxu0 0.0
  %975 = vmatpush2.msra.mxu0 0.0
  %976 = vmatprep.subr.mxu0 0.0
  %977 = vmatpush2.msra.mxu0 0.0
  %978 = vmatprep.mubr.f32.mxu0 0.0
  %979 = vmatmul.mubr.f32.gmra.mxu0 %v912
  %v980 = vpop.f32.mrf.mxu0
  %v981 = vadd.f32 %v909, %v980
  %v982 = vpop.f32.mrf.mxu0
  %983 = vdwg.mxu0
  %984 = vrot.lane.b32.xlu0 %v836, 112
  %v985 = vpop.permute.xlu0 %984
  %v986 = vsel %vm65, %v985, 0
  %988 = vmatprep.subr.mxu0 0.0
  %989 = vmatpush1.msra.mxu0 0.0
  %990 = vmatprep.subr.mxu0 0.0
  %991 = vmatpush1.msra.mxu0 0.0
  %992 = vmatprep.subr.mxu0 0.0
  %993 = vmatpush1.msra.mxu0 0.0
  %994 = vmatprep.subr.mxu0 0.0
  %995 = vmatpush1.msra.mxu0 0.0
  %996 = vmatprep.subr.mxu0 0.0
  %997 = vmatpush1.msra.mxu0 0.0
  %998 = vmatprep.subr.mxu0 0.0
  %999 = vmatpush1.msra.mxu0 0.0
  %1000 = vmatprep.subr.mxu0 0.0
  %1001 = vmatpush1.msra.mxu0 0.0
  %1002 = vmatprep.subr.mxu0 0.0
  %1003 = vmatpush1.msra.mxu0 0.0
  %1004 = vmatprep.subr.mxu0 0.0
  %1005 = vmatpush1.msra.mxu0 %v218
  %1006 = vmatprep.subr.mxu0 0.0
  %1007 = vmatpush1.msra.mxu0 %v217
  %1008 = vmatprep.subr.mxu0 0.0
  %1009 = vmatpush1.msra.mxu0 %v216
  %1010 = vmatprep.subr.mxu0 0.0
  %1011 = vmatpush1.msra.mxu0 %v215
  %1012 = vmatprep.subr.mxu0 0.0
  %1013 = vmatpush1.msra.mxu0 %v214
  %1014 = vmatprep.subr.mxu0 0.0
  %1015 = vmatpush1.msra.mxu0 %v213
  %1016 = vmatprep.subr.mxu0 0.0
  %1017 = vmatpush1.msra.mxu0 %v212
  %1018 = vmatprep.subr.mxu0 0.0
  %1019 = vmatpush1.msra.mxu0 %v211
  %1020 = vmatprep.subr.mxu0 0.0
  %1021 = vmatpush2.msra.mxu0 0.0
  %1022 = vmatprep.subr.mxu0 0.0
  %1023 = vmatpush2.msra.mxu0 0.0
  %1024 = vmatprep.subr.mxu0 0.0
  %1025 = vmatpush2.msra.mxu0 0.0
  %1026 = vmatprep.subr.mxu0 0.0
  %1027 = vmatpush2.msra.mxu0 0.0
  %1028 = vmatprep.subr.mxu0 0.0
  %1029 = vmatpush2.msra.mxu0 0.0
  %1030 = vmatprep.subr.mxu0 0.0
  %1031 = vmatpush2.msra.mxu0 0.0
  %1032 = vmatprep.subr.mxu0 0.0
  %1033 = vmatpush2.msra.mxu0 0.0
  %1034 = vmatprep.subr.mxu0 0.0
  %1035 = vmatpush2.msra.mxu0 0.0
  %1036 = vmatprep.subr.mxu0 0.0
  %1037 = vmatpush2.msra.mxu0 0.0
  %1038 = vmatprep.subr.mxu0 0.0
  %1039 = vmatpush2.msra.mxu0 0.0
  %1040 = vmatprep.subr.mxu0 0.0
  %1041 = vmatpush2.msra.mxu0 0.0
  %1042 = vmatprep.subr.mxu0 0.0
  %1043 = vmatpush2.msra.mxu0 0.0
  %1044 = vmatprep.subr.mxu0 0.0
  %1045 = vmatpush2.msra.mxu0 0.0
  %1046 = vmatprep.subr.mxu0 0.0
  %1047 = vmatpush2.msra.mxu0 0.0
  %1048 = vmatprep.subr.mxu0 0.0
  %1049 = vmatpush2.msra.mxu0 0.0
  %1050 = vmatprep.subr.mxu0 0.0
  %1051 = vmatpush2.msra.mxu0 0.0
  %1052 = vmatprep.mubr.f32.mxu0 0.0
  %1053 = vmatmul.mubr.f32.gmra.mxu0 %v986
  %v1054 = vpop.f32.mrf.mxu0
  %v1055 = vadd.f32 0.0, %v1054
  %v1056 = vpop.f32.mrf.mxu0
  %1057 = vdwg.mxu0
  %v1058 = vadd.f32 %v981, %v1055
  %v1059 = vld [vmem:[%s835 + $0x1] sm:$0xff]
  %v1061 = vsel %vm65, %v1059, 0
  %1063 = vmatprep.subr.mxu0 0.0
  %1064 = vmatpush1.msra.mxu0 0.0
  %1065 = vmatprep.subr.mxu0 0.0
  %1066 = vmatpush1.msra.mxu0 0.0
  %1067 = vmatprep.subr.mxu0 0.0
  %1068 = vmatpush1.msra.mxu0 0.0
  %1069 = vmatprep.subr.mxu0 0.0
  %1070 = vmatpush1.msra.mxu0 0.0
  %1071 = vmatprep.subr.mxu0 0.0
  %1072 = vmatpush1.msra.mxu0 0.0
  %1073 = vmatprep.subr.mxu0 0.0
  %1074 = vmatpush1.msra.mxu0 0.0
  %1075 = vmatprep.subr.mxu0 0.0
  %1076 = vmatpush1.msra.mxu0 0.0
  %1077 = vmatprep.subr.mxu0 0.0
  %1078 = vmatpush1.msra.mxu0 0.0
  %1079 = vmatprep.subr.mxu0 0.0
  %1080 = vmatpush1.msra.mxu0 %v303
  %1081 = vmatprep.subr.mxu0 0.0
  %1082 = vmatpush1.msra.mxu0 %v302
  %1083 = vmatprep.subr.mxu0 0.0
  %1084 = vmatpush1.msra.mxu0 %v301
  %1085 = vmatprep.subr.mxu0 0.0
  %1086 = vmatpush1.msra.mxu0 %v300
  %1087 = vmatprep.subr.mxu0 0.0
  %1088 = vmatpush1.msra.mxu0 %v299
  %1089 = vmatprep.subr.mxu0 0.0
  %1090 = vmatpush1.msra.mxu0 %v298
  %1091 = vmatprep.subr.mxu0 0.0
  %1092 = vmatpush1.msra.mxu0 %v297
  %1093 = vmatprep.subr.mxu0 0.0
  %1094 = vmatpush1.msra.mxu0 %v296
  %1095 = vmatprep.subr.mxu0 0.0
  %1096 = vmatpush2.msra.mxu0 0.0
  %1097 = vmatprep.subr.mxu0 0.0
  %1098 = vmatpush2.msra.mxu0 0.0
  %1099 = vmatprep.subr.mxu0 0.0
  %1100 = vmatpush2.msra.mxu0 0.0
  %1101 = vmatprep.subr.mxu0 0.0
  %1102 = vmatpush2.msra.mxu0 0.0
  %1103 = vmatprep.subr.mxu0 0.0
  %1104 = vmatpush2.msra.mxu0 0.0
  %1105 = vmatprep.subr.mxu0 0.0
  %1106 = vmatpush2.msra.mxu0 0.0
  %1107 = vmatprep.subr.mxu0 0.0
  %1108 = vmatpush2.msra.mxu0 0.0
  %1109 = vmatprep.subr.mxu0 0.0
  %1110 = vmatpush2.msra.mxu0 0.0
  %1111 = vmatprep.subr.mxu0 0.0
  %1112 = vmatpush2.msra.mxu0 0.0
  %1113 = vmatprep.subr.mxu0 0.0
  %1114 = vmatpush2.msra.mxu0 0.0
  %1115 = vmatprep.subr.mxu0 0.0
  %1116 = vmatpush2.msra.mxu0 0.0
  %1117 = vmatprep.subr.mxu0 0.0
  %1118 = vmatpush2.msra.mxu0 0.0
  %1119 = vmatprep.subr.mxu0 0.0
  %1120 = vmatpush2.msra.mxu0 0.0
  %1121 = vmatprep.subr.mxu0 0.0
  %1122 = vmatpush2.msra.mxu0 0.0
  %1123 = vmatprep.subr.mxu0 0.0
  %1124 = vmatpush2.msra.mxu0 0.0
  %1125 = vmatprep.subr.mxu0 0.0
  %1126 = vmatpush2.msra.mxu0 0.0
  %1127 = vmatprep.mubr.f32.mxu0 0.0
  %1128 = vmatmul.mubr.f32.gmra.mxu0 %v1061
  %v1129 = vpop.f32.mrf.mxu0
  %v1130 = vadd.f32 0.0, %v1129
  %v1131 = vpop.f32.mrf.mxu0
  %1132 = vdwg.mxu0
  %v1133 = vadd.f32 %v1058, %v1130
  %1134 = vrot.lane.b32.xlu0 %v1059, 120
  %v1135 = vpop.permute.xlu0 %1134
  %v1136 = vsel %vm65, %v1135, 0
  %1138 = vmatprep.subr.mxu0 0.0
  %1139 = vmatpush1.msra.mxu0 0.0
  %1140 = vmatprep.subr.mxu0 0.0
  %1141 = vmatpush1.msra.mxu0 0.0
  %1142 = vmatprep.subr.mxu0 0.0
  %1143 = vmatpush1.msra.mxu0 0.0
  %1144 = vmatprep.subr.mxu0 0.0
  %1145 = vmatpush1.msra.mxu0 0.0
  %1146 = vmatprep.subr.mxu0 0.0
  %1147 = vmatpush1.msra.mxu0 0.0
  %1148 = vmatprep.subr.mxu0 0.0
  %1149 = vmatpush1.msra.mxu0 0.0
  %1150 = vmatprep.subr.mxu0 0.0
  %1151 = vmatpush1.msra.mxu0 0.0
  %1152 = vmatprep.subr.mxu0 0.0
  %1153 = vmatpush1.msra.mxu0 0.0
  %1154 = vmatprep.subr.mxu0 0.0
  %1155 = vmatpush1.msra.mxu0 %v386
  %1156 = vmatprep.subr.mxu0 0.0
  %1157 = vmatpush1.msra.mxu0 %v385
  %1158 = vmatprep.subr.mxu0 0.0
  %1159 = vmatpush1.msra.mxu0 %v384
  %1160 = vmatprep.subr.mxu0 0.0
  %1161 = vmatpush1.msra.mxu0 %v383
  %1162 = vmatprep.subr.mxu0 0.0
  %1163 = vmatpush1.msra.mxu0 %v382
  %1164 = vmatprep.subr.mxu0 0.0
  %1165 = vmatpush1.msra.mxu0 %v381
  %1166 = vmatprep.subr.mxu0 0.0
  %1167 = vmatpush1.msra.mxu0 %v380
  %1168 = vmatprep.subr.mxu0 0.0
  %1169 = vmatpush1.msra.mxu0 %v379
  %1170 = vmatprep.subr.mxu0 0.0
  %1171 = vmatpush2.msra.mxu0 0.0
  %1172 = vmatprep.subr.mxu0 0.0
  %1173 = vmatpush2.msra.mxu0 0.0
  %1174 = vmatprep.subr.mxu0 0.0
  %1175 = vmatpush2.msra.mxu0 0.0
  %1176 = vmatprep.subr.mxu0 0.0
  %1177 = vmatpush2.msra.mxu0 0.0
  %1178 = vmatprep.subr.mxu0 0.0
  %1179 = vmatpush2.msra.mxu0 0.0
  %1180 = vmatprep.subr.mxu0 0.0
  %1181 = vmatpush2.msra.mxu0 0.0
  %1182 = vmatprep.subr.mxu0 0.0
  %1183 = vmatpush2.msra.mxu0 0.0
  %1184 = vmatprep.subr.mxu0 0.0
  %1185 = vmatpush2.msra.mxu0 0.0
  %1186 = vmatprep.subr.mxu0 0.0
  %1187 = vmatpush2.msra.mxu0 0.0
  %1188 = vmatprep.subr.mxu0 0.0
  %1189 = vmatpush2.msra.mxu0 0.0
  %1190 = vmatprep.subr.mxu0 0.0
  %1191 = vmatpush2.msra.mxu0 0.0
  %1192 = vmatprep.subr.mxu0 0.0
  %1193 = vmatpush2.msra.mxu0 0.0
  %1194 = vmatprep.subr.mxu0 0.0
  %1195 = vmatpush2.msra.mxu0 0.0
  %1196 = vmatprep.subr.mxu0 0.0
  %1197 = vmatpush2.msra.mxu0 0.0
  %1198 = vmatprep.subr.mxu0 0.0
  %1199 = vmatpush2.msra.mxu0 0.0
  %1200 = vmatprep.subr.mxu0 0.0
  %1201 = vmatpush2.msra.mxu0 0.0
  %1202 = vmatprep.mubr.f32.mxu0 0.0
  %1203 = vmatmul.mubr.f32.gmra.mxu0 %v1136
  %v1204 = vpop.f32.mrf.mxu0
  %v1205 = vadd.f32 0.0, %v1204
  %v1206 = vpop.f32.mrf.mxu0
  %1207 = vdwg.mxu0
  %v1208 = vadd.f32 %v1133, %v1205
  %1209 = vrot.lane.b32.xlu0 %v1059, 112
  %v1210 = vpop.permute.xlu0 %1209
  %v1211 = vsel %vm65, %v1210, 0
  %1213 = vmatprep.subr.mxu0 0.0
  %1214 = vmatpush1.msra.mxu0 0.0
  %1215 = vmatprep.subr.mxu0 0.0
  %1216 = vmatpush1.msra.mxu0 0.0
  %1217 = vmatprep.subr.mxu0 0.0
  %1218 = vmatpush1.msra.mxu0 0.0
  %1219 = vmatprep.subr.mxu0 0.0
  %1220 = vmatpush1.msra.mxu0 0.0
  %1221 = vmatprep.subr.mxu0 0.0
  %1222 = vmatpush1.msra.mxu0 0.0
  %1223 = vmatprep.subr.mxu0 0.0
  %1224 = vmatpush1.msra.mxu0 0.0
  %1225 = vmatprep.subr.mxu0 0.0
  %1226 = vmatpush1.msra.mxu0 0.0
  %1227 = vmatprep.subr.mxu0 0.0
  %1228 = vmatpush1.msra.mxu0 0.0
  %1229 = vmatprep.subr.mxu0 0.0
  %1230 = vmatpush1.msra.mxu0 %v470
  %1231 = vmatprep.subr.mxu0 0.0
  %1232 = vmatpush1.msra.mxu0 %v469
  %1233 = vmatprep.subr.mxu0 0.0
  %1234 = vmatpush1.msra.mxu0 %v468
  %1235 = vmatprep.subr.mxu0 0.0
  %1236 = vmatpush1.msra.mxu0 %v467
  %1237 = vmatprep.subr.mxu0 0.0
  %1238 = vmatpush1.msra.mxu0 %v466
  %1239 = vmatprep.subr.mxu0 0.0
  %1240 = vmatpush1.msra.mxu0 %v465
  %1241 = vmatprep.subr.mxu0 0.0
  %1242 = vmatpush1.msra.mxu0 %v464
  %1243 = vmatprep.subr.mxu0 0.0
  %1244 = vmatpush1.msra.mxu0 %v463
  %1245 = vmatprep.subr.mxu0 0.0
  %1246 = vmatpush2.msra.mxu0 0.0
  %1247 = vmatprep.subr.mxu0 0.0
  %1248 = vmatpush2.msra.mxu0 0.0
  %1249 = vmatprep.subr.mxu0 0.0
  %1250 = vmatpush2.msra.mxu0 0.0
  %1251 = vmatprep.subr.mxu0 0.0
  %1252 = vmatpush2.msra.mxu0 0.0
  %1253 = vmatprep.subr.mxu0 0.0
  %1254 = vmatpush2.msra.mxu0 0.0
  %1255 = vmatprep.subr.mxu0 0.0
  %1256 = vmatpush2.msra.mxu0 0.0
  %1257 = vmatprep.subr.mxu0 0.0
  %1258 = vmatpush2.msra.mxu0 0.0
  %1259 = vmatprep.subr.mxu0 0.0
  %1260 = vmatpush2.msra.mxu0 0.0
  %1261 = vmatprep.subr.mxu0 0.0
  %1262 = vmatpush2.msra.mxu0 0.0
  %1263 = vmatprep.subr.mxu0 0.0
  %1264 = vmatpush2.msra.mxu0 0.0
  %1265 = vmatprep.subr.mxu0 0.0
  %1266 = vmatpush2.msra.mxu0 0.0
  %1267 = vmatprep.subr.mxu0 0.0
  %1268 = vmatpush2.msra.mxu0 0.0
  %1269 = vmatprep.subr.mxu0 0.0
  %1270 = vmatpush2.msra.mxu0 0.0
  %1271 = vmatprep.subr.mxu0 0.0
  %1272 = vmatpush2.msra.mxu0 0.0
  %1273 = vmatprep.subr.mxu0 0.0
  %1274 = vmatpush2.msra.mxu0 0.0
  %1275 = vmatprep.subr.mxu0 0.0
  %1276 = vmatpush2.msra.mxu0 0.0
  %1277 = vmatprep.mubr.f32.mxu0 0.0
  %1278 = vmatmul.mubr.f32.gmra.mxu0 %v1211
  %v1279 = vpop.f32.mrf.mxu0
  %v1280 = vadd.f32 0.0, %v1279
  %v1281 = vpop.f32.mrf.mxu0
  %1282 = vdwg.mxu0
  %v1283 = vadd.f32 %v1208, %v1280
  %v1284 = vld [vmem:[%s835 + $0x2] sm:$0xff]
  %v1286 = vsel %vm65, %v1284, 0
  %1288 = vmatprep.subr.mxu0 0.0
  %1289 = vmatpush1.msra.mxu0 0.0
  %1290 = vmatprep.subr.mxu0 0.0
  %1291 = vmatpush1.msra.mxu0 0.0
  %1292 = vmatprep.subr.mxu0 0.0
  %1293 = vmatpush1.msra.mxu0 0.0
  %1294 = vmatprep.subr.mxu0 0.0
  %1295 = vmatpush1.msra.mxu0 0.0
  %1296 = vmatprep.subr.mxu0 0.0
  %1297 = vmatpush1.msra.mxu0 0.0
  %1298 = vmatprep.subr.mxu0 0.0
  %1299 = vmatpush1.msra.mxu0 0.0
  %1300 = vmatprep.subr.mxu0 0.0
  %1301 = vmatpush1.msra.mxu0 0.0
  %1302 = vmatprep.subr.mxu0 0.0
  %1303 = vmatpush1.msra.mxu0 0.0
  %1304 = vmatprep.subr.mxu0 0.0
  %1305 = vmatpush1.msra.mxu0 %v555
  %1306 = vmatprep.subr.mxu0 0.0
  %1307 = vmatpush1.msra.mxu0 %v554
  %1308 = vmatprep.subr.mxu0 0.0
  %1309 = vmatpush1.msra.mxu0 %v553
  %1310 = vmatprep.subr.mxu0 0.0
  %1311 = vmatpush1.msra.mxu0 %v552
  %1312 = vmatprep.subr.mxu0 0.0
  %1313 = vmatpush1.msra.mxu0 %v551
  %1314 = vmatprep.subr.mxu0 0.0
  %1315 = vmatpush1.msra.mxu0 %v550
  %1316 = vmatprep.subr.mxu0 0.0
  %1317 = vmatpush1.msra.mxu0 %v549
  %1318 = vmatprep.subr.mxu0 0.0
  %1319 = vmatpush1.msra.mxu0 %v548
  %1320 = vmatprep.subr.mxu0 0.0
  %1321 = vmatpush2.msra.mxu0 0.0
  %1322 = vmatprep.subr.mxu0 0.0
  %1323 = vmatpush2.msra.mxu0 0.0
  %1324 = vmatprep.subr.mxu0 0.0
  %1325 = vmatpush2.msra.mxu0 0.0
  %1326 = vmatprep.subr.mxu0 0.0
  %1327 = vmatpush2.msra.mxu0 0.0
  %1328 = vmatprep.subr.mxu0 0.0
  %1329 = vmatpush2.msra.mxu0 0.0
  %1330 = vmatprep.subr.mxu0 0.0
  %1331 = vmatpush2.msra.mxu0 0.0
  %1332 = vmatprep.subr.mxu0 0.0
  %1333 = vmatpush2.msra.mxu0 0.0
  %1334 = vmatprep.subr.mxu0 0.0
  %1335 = vmatpush2.msra.mxu0 0.0
  %1336 = vmatprep.subr.mxu0 0.0
  %1337 = vmatpush2.msra.mxu0 0.0
  %1338 = vmatprep.subr.mxu0 0.0
  %1339 = vmatpush2.msra.mxu0 0.0
  %1340 = vmatprep.subr.mxu0 0.0
  %1341 = vmatpush2.msra.mxu0 0.0
  %1342 = vmatprep.subr.mxu0 0.0
  %1343 = vmatpush2.msra.mxu0 0.0
  %1344 = vmatprep.subr.mxu0 0.0
  %1345 = vmatpush2.msra.mxu0 0.0
  %1346 = vmatprep.subr.mxu0 0.0
  %1347 = vmatpush2.msra.mxu0 0.0
  %1348 = vmatprep.subr.mxu0 0.0
  %1349 = vmatpush2.msra.mxu0 0.0
  %1350 = vmatprep.subr.mxu0 0.0
  %1351 = vmatpush2.msra.mxu0 0.0
  %1352 = vmatprep.mubr.f32.mxu0 0.0
  %1353 = vmatmul.mubr.f32.gmra.mxu0 %v1286
  %v1354 = vpop.f32.mrf.mxu0
  %v1355 = vadd.f32 0.0, %v1354
  %v1356 = vpop.f32.mrf.mxu0
  %1357 = vdwg.mxu0
  %v1358 = vadd.f32 %v1283, %v1355
  %1359 = vrot.lane.b32.xlu0 %v1284, 120
  %v1360 = vpop.permute.xlu0 %1359
  %v1361 = vsel %vm65, %v1360, 0
  %1363 = vmatprep.subr.mxu0 0.0
  %1364 = vmatpush1.msra.mxu0 0.0
  %1365 = vmatprep.subr.mxu0 0.0
  %1366 = vmatpush1.msra.mxu0 0.0
  %1367 = vmatprep.subr.mxu0 0.0
  %1368 = vmatpush1.msra.mxu0 0.0
  %1369 = vmatprep.subr.mxu0 0.0
  %1370 = vmatpush1.msra.mxu0 0.0
  %1371 = vmatprep.subr.mxu0 0.0
  %1372 = vmatpush1.msra.mxu0 0.0
  %1373 = vmatprep.subr.mxu0 0.0
  %1374 = vmatpush1.msra.mxu0 0.0
  %1375 = vmatprep.subr.mxu0 0.0
  %1376 = vmatpush1.msra.mxu0 0.0
  %1377 = vmatprep.subr.mxu0 0.0
  %1378 = vmatpush1.msra.mxu0 0.0
  %1379 = vmatprep.subr.mxu0 0.0
  %1380 = vmatpush1.msra.mxu0 %v638
  %1381 = vmatprep.subr.mxu0 0.0
  %1382 = vmatpush1.msra.mxu0 %v637
  %1383 = vmatprep.subr.mxu0 0.0
  %1384 = vmatpush1.msra.mxu0 %v636
  %1385 = vmatprep.subr.mxu0 0.0
  %1386 = vmatpush1.msra.mxu0 %v635
  %1387 = vmatprep.subr.mxu0 0.0
  %1388 = vmatpush1.msra.mxu0 %v634
  %1389 = vmatprep.subr.mxu0 0.0
  %1390 = vmatpush1.msra.mxu0 %v633
  %1391 = vmatprep.subr.mxu0 0.0
  %1392 = vmatpush1.msra.mxu0 %v632
  %1393 = vmatprep.subr.mxu0 0.0
  %1394 = vmatpush1.msra.mxu0 %v631
  %1395 = vmatprep.subr.mxu0 0.0
  %1396 = vmatpush2.msra.mxu0 0.0
  %1397 = vmatprep.subr.mxu0 0.0
  %1398 = vmatpush2.msra.mxu0 0.0
  %1399 = vmatprep.subr.mxu0 0.0
  %1400 = vmatpush2.msra.mxu0 0.0
  %1401 = vmatprep.subr.mxu0 0.0
  %1402 = vmatpush2.msra.mxu0 0.0
  %1403 = vmatprep.subr.mxu0 0.0
  %1404 = vmatpush2.msra.mxu0 0.0
  %1405 = vmatprep.subr.mxu0 0.0
  %1406 = vmatpush2.msra.mxu0 0.0
  %1407 = vmatprep.subr.mxu0 0.0
  %1408 = vmatpush2.msra.mxu0 0.0
  %1409 = vmatprep.subr.mxu0 0.0
  %1410 = vmatpush2.msra.mxu0 0.0
  %1411 = vmatprep.subr.mxu0 0.0
  %1412 = vmatpush2.msra.mxu0 0.0
  %1413 = vmatprep.subr.mxu0 0.0
  %1414 = vmatpush2.msra.mxu0 0.0
  %1415 = vmatprep.subr.mxu0 0.0
  %1416 = vmatpush2.msra.mxu0 0.0
  %1417 = vmatprep.subr.mxu0 0.0
  %1418 = vmatpush2.msra.mxu0 0.0
  %1419 = vmatprep.subr.mxu0 0.0
  %1420 = vmatpush2.msra.mxu0 0.0
  %1421 = vmatprep.subr.mxu0 0.0
  %1422 = vmatpush2.msra.mxu0 0.0
  %1423 = vmatprep.subr.mxu0 0.0
  %1424 = vmatpush2.msra.mxu0 0.0
  %1425 = vmatprep.subr.mxu0 0.0
  %1426 = vmatpush2.msra.mxu0 0.0
  %1427 = vmatprep.mubr.f32.mxu0 0.0
  %1428 = vmatmul.mubr.f32.gmra.mxu0 %v1361
  %v1429 = vpop.f32.mrf.mxu0
  %v1430 = vadd.f32 0.0, %v1429
  %v1431 = vpop.f32.mrf.mxu0
  %1432 = vdwg.mxu0
  %v1433 = vadd.f32 %v1358, %v1430
  %1434 = vrot.lane.b32.xlu0 %v1284, 112
  %v1435 = vpop.permute.xlu0 %1434
  %v1436 = vsel %vm65, %v1435, 0
  %1438 = vmatprep.subr.mxu0 0.0
  %1439 = vmatpush1.msra.mxu0 0.0
  %1440 = vmatprep.subr.mxu0 0.0
  %1441 = vmatpush1.msra.mxu0 0.0
  %1442 = vmatprep.subr.mxu0 0.0
  %1443 = vmatpush1.msra.mxu0 0.0
  %1444 = vmatprep.subr.mxu0 0.0
  %1445 = vmatpush1.msra.mxu0 0.0
  %1446 = vmatprep.subr.mxu0 0.0
  %1447 = vmatpush1.msra.mxu0 0.0
  %1448 = vmatprep.subr.mxu0 0.0
  %1449 = vmatpush1.msra.mxu0 0.0
  %1450 = vmatprep.subr.mxu0 0.0
  %1451 = vmatpush1.msra.mxu0 0.0
  %1452 = vmatprep.subr.mxu0 0.0
  %1453 = vmatpush1.msra.mxu0 0.0
  %1454 = vmatprep.subr.mxu0 0.0
  %1455 = vmatpush1.msra.mxu0 %v722
  %1456 = vmatprep.subr.mxu0 0.0
  %1457 = vmatpush1.msra.mxu0 %v721
  %1458 = vmatprep.subr.mxu0 0.0
  %1459 = vmatpush1.msra.mxu0 %v720
  %1460 = vmatprep.subr.mxu0 0.0
  %1461 = vmatpush1.msra.mxu0 %v719
  %1462 = vmatprep.subr.mxu0 0.0
  %1463 = vmatpush1.msra.mxu0 %v718
  %1464 = vmatprep.subr.mxu0 0.0
  %1465 = vmatpush1.msra.mxu0 %v717
  %1466 = vmatprep.subr.mxu0 0.0
  %1467 = vmatpush1.msra.mxu0 %v716
  %1468 = vmatprep.subr.mxu0 0.0
  %1469 = vmatpush1.msra.mxu0 %v715
  %1470 = vmatprep.subr.mxu0 0.0
  %1471 = vmatpush2.msra.mxu0 0.0
  %1472 = vmatprep.subr.mxu0 0.0
  %1473 = vmatpush2.msra.mxu0 0.0
  %1474 = vmatprep.subr.mxu0 0.0
  %1475 = vmatpush2.msra.mxu0 0.0
  %1476 = vmatprep.subr.mxu0 0.0
  %1477 = vmatpush2.msra.mxu0 0.0
  %1478 = vmatprep.subr.mxu0 0.0
  %1479 = vmatpush2.msra.mxu0 0.0
  %1480 = vmatprep.subr.mxu0 0.0
  %1481 = vmatpush2.msra.mxu0 0.0
  %1482 = vmatprep.subr.mxu0 0.0
  %1483 = vmatpush2.msra.mxu0 0.0
  %1484 = vmatprep.subr.mxu0 0.0
  %1485 = vmatpush2.msra.mxu0 0.0
  %1486 = vmatprep.subr.mxu0 0.0
  %1487 = vmatpush2.msra.mxu0 0.0
  %1488 = vmatprep.subr.mxu0 0.0
  %1489 = vmatpush2.msra.mxu0 0.0
  %1490 = vmatprep.subr.mxu0 0.0
  %1491 = vmatpush2.msra.mxu0 0.0
  %1492 = vmatprep.subr.mxu0 0.0
  %1493 = vmatpush2.msra.mxu0 0.0
  %1494 = vmatprep.subr.mxu0 0.0
  %1495 = vmatpush2.msra.mxu0 0.0
  %1496 = vmatprep.subr.mxu0 0.0
  %1497 = vmatpush2.msra.mxu0 0.0
  %1498 = vmatprep.subr.mxu0 0.0
  %1499 = vmatpush2.msra.mxu0 0.0
  %1500 = vmatprep.subr.mxu0 0.0
  %1501 = vmatpush2.msra.mxu0 0.0
  %1502 = vmatprep.mubr.f32.mxu0 0.0
  %1503 = vmatmul.mubr.f32.gmra.mxu0 %v1436
  %v1504 = vpop.f32.mrf.mxu0
  %v1505 = vadd.f32 0.0, %v1504
  %v1506 = vpop.f32.mrf.mxu0
  %1507 = vdwg.mxu0
  %v1508 = vadd.f32 %v1433, %v1505
  %v1509 = vadd.f32 %v1508, %v803
  %v1510 = vrot.slane %v1509, 4
  %v1511 = vadd.f32 %v1509, %v1510
  %v1512 = vrot.slane %v1511, 2
  %v1513 = vadd.f32 %v1511, %v1512
  %v1514 = vrot.slane %v1513, 1
  %v1515 = vadd.f32 %v1513, %v1514
  %1516 = vmatprep.subr.mxu0 0.0
  %1517 = vmatpush1.msra.mxu0 %v827
  %1518 = vmatprep.subr.mxu0 0.0
  %1519 = vmatpush1.msra.mxu0 %v826
  %1520 = vmatprep.subr.mxu0 0.0
  %1521 = vmatpush1.msra.mxu0 %v825
  %1522 = vmatprep.subr.mxu0 0.0
  %1523 = vmatpush1.msra.mxu0 %v824
  %1524 = vmatprep.subr.mxu0 0.0
  %1525 = vmatpush1.msra.mxu0 %v823
  %1526 = vmatprep.subr.mxu0 0.0
  %1527 = vmatpush1.msra.mxu0 %v822
  %1528 = vmatprep.subr.mxu0 0.0
  %1529 = vmatpush1.msra.mxu0 %v821
  %1530 = vmatprep.subr.mxu0 0.0
  %1531 = vmatpush1.msra.mxu0 %v820
  %1532 = vmatprep.subr.mxu0 0.0
  %1533 = vmatpush1.msra.mxu0 %v819
  %1534 = vmatprep.subr.mxu0 0.0
  %1535 = vmatpush1.msra.mxu0 %v818
  %1536 = vmatprep.subr.mxu0 0.0
  %1537 = vmatpush1.msra.mxu0 %v817
  %1538 = vmatprep.subr.mxu0 0.0
  %1539 = vmatpush1.msra.mxu0 %v816
  %1540 = vmatprep.subr.mxu0 0.0
  %1541 = vmatpush1.msra.mxu0 %v815
  %1542 = vmatprep.subr.mxu0 0.0
  %1543 = vmatpush1.msra.mxu0 %v814
  %1544 = vmatprep.subr.mxu0 0.0
  %1545 = vmatpush1.msra.mxu0 %v813
  %1546 = vmatprep.subr.mxu0 0.0
  %1547 = vmatpush1.msra.mxu0 %v812
  %1548 = vmatprep.subr.mxu0 0.0
  %1549 = vmatpush2.msra.mxu0 0.0
  %1550 = vmatprep.subr.mxu0 0.0
  %1551 = vmatpush2.msra.mxu0 0.0
  %1552 = vmatprep.subr.mxu0 0.0
  %1553 = vmatpush2.msra.mxu0 0.0
  %1554 = vmatprep.subr.mxu0 0.0
  %1555 = vmatpush2.msra.mxu0 0.0
  %1556 = vmatprep.subr.mxu0 0.0
  %1557 = vmatpush2.msra.mxu0 0.0
  %1558 = vmatprep.subr.mxu0 0.0
  %1559 = vmatpush2.msra.mxu0 0.0
  %1560 = vmatprep.subr.mxu0 0.0
  %1561 = vmatpush2.msra.mxu0 0.0
  %1562 = vmatprep.subr.mxu0 0.0
  %1563 = vmatpush2.msra.mxu0 0.0
  %1564 = vmatprep.subr.mxu0 0.0
  %1565 = vmatpush2.msra.mxu0 0.0
  %1566 = vmatprep.subr.mxu0 0.0
  %1567 = vmatpush2.msra.mxu0 0.0
  %1568 = vmatprep.subr.mxu0 0.0
  %1569 = vmatpush2.msra.mxu0 0.0
  %1570 = vmatprep.subr.mxu0 0.0
  %1571 = vmatpush2.msra.mxu0 0.0
  %1572 = vmatprep.subr.mxu0 0.0
  %1573 = vmatpush2.msra.mxu0 0.0
  %1574 = vmatprep.subr.mxu0 0.0
  %1575 = vmatpush2.msra.mxu0 0.0
  %1576 = vmatprep.subr.mxu0 0.0
  %1577 = vmatpush2.msra.mxu0 0.0
  %1578 = vmatprep.subr.mxu0 0.0
  %1579 = vmatpush2.msra.mxu0 0.0
  %1580 = vmatprep.mubr.f32.mxu0 0.0
  %1581 = vmatmul.mubr.f32.gmra.mxu0 %v1515
  %v1582 = vpop.f32.mrf.mxu0
  %v1583 = vadd.f32 0.0, %v1582
  %v1584 = vpop.f32.mrf.mxu0
  %1585 = vdwg.mxu0
  %1586 = vmatprep.subr.mxu0 0.0
  %1587 = vmatpush1.msra.mxu0 %v827
  %1588 = vmatprep.subr.mxu0 0.0
  %1589 = vmatpush1.msra.mxu0 %v826
  %1590 = vmatprep.subr.mxu0 0.0
  %1591 = vmatpush1.msra.mxu0 %v825
  %1592 = vmatprep.subr.mxu0 0.0
  %1593 = vmatpush1.msra.mxu0 %v824
  %1594 = vmatprep.subr.mxu0 0.0
  %1595 = vmatpush1.msra.mxu0 %v823
  %1596 = vmatprep.subr.mxu0 0.0
  %1597 = vmatpush1.msra.mxu0 %v822
  %1598 = vmatprep.subr.mxu0 0.0
  %1599 = vmatpush1.msra.mxu0 %v821
  %1600 = vmatprep.subr.mxu0 0.0
  %1601 = vmatpush1.msra.mxu0 %v820
  %1602 = vmatprep.subr.mxu0 0.0
  %1603 = vmatpush1.msra.mxu0 %v819
  %1604 = vmatprep.subr.mxu0 0.0
  %1605 = vmatpush1.msra.mxu0 %v818
  %1606 = vmatprep.subr.mxu0 0.0
  %1607 = vmatpush1.msra.mxu0 %v817
  %1608 = vmatprep.subr.mxu0 0.0
  %1609 = vmatpush1.msra.mxu0 %v816
  %1610 = vmatprep.subr.mxu0 0.0
  %1611 = vmatpush1.msra.mxu0 %v815
  %1612 = vmatprep.subr.mxu0 0.0
  %1613 = vmatpush1.msra.mxu0 %v814
  %1614 = vmatprep.subr.mxu0 0.0
  %1615 = vmatpush1.msra.mxu0 %v813
  %1616 = vmatprep.subr.mxu0 0.0
  %1617 = vmatpush1.msra.mxu0 %v812
  %1618 = vmatprep.subr.mxu0 0.0
  %1619 = vmatpush2.msra.mxu0 0.0
  %1620 = vmatprep.subr.mxu0 0.0
  %1621 = vmatpush2.msra.mxu0 0.0
  %1622 = vmatprep.subr.mxu0 0.0
  %1623 = vmatpush2.msra.mxu0 0.0
  %1624 = vmatprep.subr.mxu0 0.0
  %1625 = vmatpush2.msra.mxu0 0.0
  %1626 = vmatprep.subr.mxu0 0.0
  %1627 = vmatpush2.msra.mxu0 0.0
  %1628 = vmatprep.subr.mxu0 0.0
  %1629 = vmatpush2.msra.mxu0 0.0
  %1630 = vmatprep.subr.mxu0 0.0
  %1631 = vmatpush2.msra.mxu0 0.0
  %1632 = vmatprep.subr.mxu0 0.0
  %1633 = vmatpush2.msra.mxu0 0.0
  %1634 = vmatprep.subr.mxu0 0.0
  %1635 = vmatpush2.msra.mxu0 0.0
  %1636 = vmatprep.subr.mxu0 0.0
  %1637 = vmatpush2.msra.mxu0 0.0
  %1638 = vmatprep.subr.mxu0 0.0
  %1639 = vmatpush2.msra.mxu0 0.0
  %1640 = vmatprep.subr.mxu0 0.0
  %1641 = vmatpush2.msra.mxu0 0.0
  %1642 = vmatprep.subr.mxu0 0.0
  %1643 = vmatpush2.msra.mxu0 0.0
  %1644 = vmatprep.subr.mxu0 0.0
  %1645 = vmatpush2.msra.mxu0 0.0
  %1646 = vmatprep.subr.mxu0 0.0
  %1647 = vmatpush2.msra.mxu0 0.0
  %1648 = vmatprep.subr.mxu0 0.0
  %1649 = vmatpush2.msra.mxu0 0.0
  %1650 = vmatprep.mubr.f32.mxu0 0.0
  %1651 = vmatmul.mubr.f32.gmra.mxu0 %v811
  %v1652 = vpop.f32.mrf.mxu0
  %v1653 = vadd.f32 %v1583, %v1652
  %v1654 = vpop.f32.mrf.mxu0
  %1655 = vdwg.mxu0
  %v1656 = vmul.f32 %v1509, %v1509
  %v1657 = vrot.slane %v1656, 4
  %v1658 = vadd.f32 %v1656, %v1657
  %v1659 = vrot.slane %v1658, 2
  %v1660 = vadd.f32 %v1658, %v1659
  %v1661 = vrot.slane %v1660, 1
  %v1662 = vadd.f32 %v1660, %v1661
  %1663 = vmatprep.subr.mxu0 0.0
  %1664 = vmatpush1.msra.mxu0 %v827
  %1665 = vmatprep.subr.mxu0 0.0
  %1666 = vmatpush1.msra.mxu0 %v826
  %1667 = vmatprep.subr.mxu0 0.0
  %1668 = vmatpush1.msra.mxu0 %v825
  %1669 = vmatprep.subr.mxu0 0.0
  %1670 = vmatpush1.msra.mxu0 %v824
  %1671 = vmatprep.subr.mxu0 0.0
  %1672 = vmatpush1.msra.mxu0 %v823
  %1673 = vmatprep.subr.mxu0 0.0
  %1674 = vmatpush1.msra.mxu0 %v822
  %1675 = vmatprep.subr.mxu0 0.0
  %1676 = vmatpush1.msra.mxu0 %v821
  %1677 = vmatprep.subr.mxu0 0.0
  %1678 = vmatpush1.msra.mxu0 %v820
  %1679 = vmatprep.subr.mxu0 0.0
  %1680 = vmatpush1.msra.mxu0 %v819
  %1681 = vmatprep.subr.mxu0 0.0
  %1682 = vmatpush1.msra.mxu0 %v818
  %1683 = vmatprep.subr.mxu0 0.0
  %1684 = vmatpush1.msra.mxu0 %v817
  %1685 = vmatprep.subr.mxu0 0.0
  %1686 = vmatpush1.msra.mxu0 %v816
  %1687 = vmatprep.subr.mxu0 0.0
  %1688 = vmatpush1.msra.mxu0 %v815
  %1689 = vmatprep.subr.mxu0 0.0
  %1690 = vmatpush1.msra.mxu0 %v814
  %1691 = vmatprep.subr.mxu0 0.0
  %1692 = vmatpush1.msra.mxu0 %v813
  %1693 = vmatprep.subr.mxu0 0.0
  %1694 = vmatpush1.msra.mxu0 %v812
  %1695 = vmatprep.subr.mxu0 0.0
  %1696 = vmatpush2.msra.mxu0 0.0
  %1697 = vmatprep.subr.mxu0 0.0
  %1698 = vmatpush2.msra.mxu0 0.0
  %1699 = vmatprep.subr.mxu0 0.0
  %1700 = vmatpush2.msra.mxu0 0.0
  %1701 = vmatprep.subr.mxu0 0.0
  %1702 = vmatpush2.msra.mxu0 0.0
  %1703 = vmatprep.subr.mxu0 0.0
  %1704 = vmatpush2.msra.mxu0 0.0
  %1705 = vmatprep.subr.mxu0 0.0
  %1706 = vmatpush2.msra.mxu0 0.0
  %1707 = vmatprep.subr.mxu0 0.0
  %1708 = vmatpush2.msra.mxu0 0.0
  %1709 = vmatprep.subr.mxu0 0.0
  %1710 = vmatpush2.msra.mxu0 0.0
  %1711 = vmatprep.subr.mxu0 0.0
  %1712 = vmatpush2.msra.mxu0 0.0
  %1713 = vmatprep.subr.mxu0 0.0
  %1714 = vmatpush2.msra.mxu0 0.0
  %1715 = vmatprep.subr.mxu0 0.0
  %1716 = vmatpush2.msra.mxu0 0.0
  %1717 = vmatprep.subr.mxu0 0.0
  %1718 = vmatpush2.msra.mxu0 0.0
  %1719 = vmatprep.subr.mxu0 0.0
  %1720 = vmatpush2.msra.mxu0 0.0
  %1721 = vmatprep.subr.mxu0 0.0
  %1722 = vmatpush2.msra.mxu0 0.0
  %1723 = vmatprep.subr.mxu0 0.0
  %1724 = vmatpush2.msra.mxu0 0.0
  %1725 = vmatprep.subr.mxu0 0.0
  %1726 = vmatpush2.msra.mxu0 0.0
  %1727 = vmatprep.mubr.f32.mxu0 0.0
  %1728 = vmatmul.mubr.f32.gmra.mxu0 %v1662
  %v1729 = vpop.f32.mrf.mxu0
  %v1730 = vadd.f32 0.0, %v1729
  %v1731 = vpop.f32.mrf.mxu0
  %1732 = vdwg.mxu0
  %1733 = vmatprep.subr.mxu0 0.0
  %1734 = vmatpush1.msra.mxu0 %v827
  %1735 = vmatprep.subr.mxu0 0.0
  %1736 = vmatpush1.msra.mxu0 %v826
  %1737 = vmatprep.subr.mxu0 0.0
  %1738 = vmatpush1.msra.mxu0 %v825
  %1739 = vmatprep.subr.mxu0 0.0
  %1740 = vmatpush1.msra.mxu0 %v824
  %1741 = vmatprep.subr.mxu0 0.0
  %1742 = vmatpush1.msra.mxu0 %v823
  %1743 = vmatprep.subr.mxu0 0.0
  %1744 = vmatpush1.msra.mxu0 %v822
  %1745 = vmatprep.subr.mxu0 0.0
  %1746 = vmatpush1.msra.mxu0 %v821
  %1747 = vmatprep.subr.mxu0 0.0
  %1748 = vmatpush1.msra.mxu0 %v820
  %1749 = vmatprep.subr.mxu0 0.0
  %1750 = vmatpush1.msra.mxu0 %v819
  %1751 = vmatprep.subr.mxu0 0.0
  %1752 = vmatpush1.msra.mxu0 %v818
  %1753 = vmatprep.subr.mxu0 0.0
  %1754 = vmatpush1.msra.mxu0 %v817
  %1755 = vmatprep.subr.mxu0 0.0
  %1756 = vmatpush1.msra.mxu0 %v816
  %1757 = vmatprep.subr.mxu0 0.0
  %1758 = vmatpush1.msra.mxu0 %v815
  %1759 = vmatprep.subr.mxu0 0.0
  %1760 = vmatpush1.msra.mxu0 %v814
  %1761 = vmatprep.subr.mxu0 0.0
  %1762 = vmatpush1.msra.mxu0 %v813
  %1763 = vmatprep.subr.mxu0 0.0
  %1764 = vmatpush1.msra.mxu0 %v812
  %1765 = vmatprep.subr.mxu0 0.0
  %1766 = vmatpush2.msra.mxu0 0.0
  %1767 = vmatprep.subr.mxu0 0.0
  %1768 = vmatpush2.msra.mxu0 0.0
  %1769 = vmatprep.subr.mxu0 0.0
  %1770 = vmatpush2.msra.mxu0 0.0
  %1771 = vmatprep.subr.mxu0 0.0
  %1772 = vmatpush2.msra.mxu0 0.0
  %1773 = vmatprep.subr.mxu0 0.0
  %1774 = vmatpush2.msra.mxu0 0.0
  %1775 = vmatprep.subr.mxu0 0.0
  %1776 = vmatpush2.msra.mxu0 0.0
  %1777 = vmatprep.subr.mxu0 0.0
  %1778 = vmatpush2.msra.mxu0 0.0
  %1779 = vmatprep.subr.mxu0 0.0
  %1780 = vmatpush2.msra.mxu0 0.0
  %1781 = vmatprep.subr.mxu0 0.0
  %1782 = vmatpush2.msra.mxu0 0.0
  %1783 = vmatprep.subr.mxu0 0.0
  %1784 = vmatpush2.msra.mxu0 0.0
  %1785 = vmatprep.subr.mxu0 0.0
  %1786 = vmatpush2.msra.mxu0 0.0
  %1787 = vmatprep.subr.mxu0 0.0
  %1788 = vmatpush2.msra.mxu0 0.0
  %1789 = vmatprep.subr.mxu0 0.0
  %1790 = vmatpush2.msra.mxu0 0.0
  %1791 = vmatprep.subr.mxu0 0.0
  %1792 = vmatpush2.msra.mxu0 0.0
  %1793 = vmatprep.subr.mxu0 0.0
  %1794 = vmatpush2.msra.mxu0 0.0
  %1795 = vmatprep.subr.mxu0 0.0
  %1796 = vmatpush2.msra.mxu0 0.0
  %1797 = vmatprep.mubr.f32.mxu0 0.0
  %1798 = vmatmul.mubr.f32.gmra.mxu0 %v834
  %v1799 = vpop.f32.mrf.mxu0
  %v1800 = vadd.f32 %v1730, %v1799
  %v1801 = vpop.f32.mrf.mxu0
  %1802 = vdwg.mxu0
  %v1803 = vrcp.pop 128.0
  %v1804 = vmul.f32 %v1653, %v1803
  %v1805 = vmul.f32 %v1800, %v1803
  %v1806 = vmul.f32 %v1804, %v1804
  %v1807 = vsub.f32 %v1805, %v1806
  %v1808 = vmax.f32 %v1807, 0.0
  %v1809 = vld [vmem:[%s3] sm:$0x1]
  %v1810 = vadd.f32 %v1808, 1e-05
  %v1811 = vrsqrt.pop %v1810
  %v1812 = vmul.f32 %v1809, %v1811
  %v1813 = vld [vmem:[%s4] sm:$0x1]
  %v1814 = vmul.f32 %v1804, %v1812
  %v1815 = vsub.f32 %v1813, %v1814
  %v1816 = vld [vmem:[%s6] sm:$0xff]
  %v1817 = vld [vmem:[%s6 + $0x8] sm:$0xff]
  %vm1818 = vcmask 130048
  %v1820 = vsel %vm1818, %v1812, 0
  %1822 = vmatprep.subr.mxu0 0.0
  %1823 = vmatpush1.msra.mxu0 0.0
  %1824 = vmatprep.subr.mxu0 0.0
  %1825 = vmatpush1.msra.mxu0 0.0
  %1826 = vmatprep.subr.mxu0 0.0
  %1827 = vmatpush1.msra.mxu0 0.0
  %1828 = vmatprep.subr.mxu0 0.0
  %1829 = vmatpush1.msra.mxu0 0.0
  %1830 = vmatprep.subr.mxu0 0.0
  %1831 = vmatpush1.msra.mxu0 0.0
  %1832 = vmatprep.subr.mxu0 0.0
  %1833 = vmatpush1.msra.mxu0 0.0
  %1834 = vmatprep.subr.mxu0 0.0
  %1835 = vmatpush1.msra.mxu0 0.0
  %1836 = vmatprep.subr.mxu0 0.0
  %1837 = vmatpush1.msra.mxu0 0.0
  %1838 = vmatprep.subr.mxu0 0.0
  %1839 = vmatpush1.msra.mxu0 0.0
  %1840 = vmatprep.subr.mxu0 0.0
  %1841 = vmatpush1.msra.mxu0 0.0
  %1842 = vmatprep.subr.mxu0 0.0
  %1843 = vmatpush1.msra.mxu0 0.0
  %1844 = vmatprep.subr.mxu0 0.0
  %1845 = vmatpush1.msra.mxu0 0.0
  %1846 = vmatprep.subr.mxu0 0.0
  %1847 = vmatpush1.msra.mxu0 0.0
  %1848 = vmatprep.subr.mxu0 0.0
  %1849 = vmatpush1.msra.mxu0 0.0
  %1850 = vmatprep.subr.mxu0 0.0
  %1851 = vmatpush1.msra.mxu0 %v1817
  %1852 = vmatprep.subr.mxu0 0.0
  %1853 = vmatpush1.msra.mxu0 %v1816
  %1854 = vmatprep.subr.mxu0 0.0
  %1855 = vmatpush2.msra.mxu0 0.0
  %1856 = vmatprep.subr.mxu0 0.0
  %1857 = vmatpush2.msra.mxu0 0.0
  %1858 = vmatprep.subr.mxu0 0.0
  %1859 = vmatpush2.msra.mxu0 0.0
  %1860 = vmatprep.subr.mxu0 0.0
  %1861 = vmatpush2.msra.mxu0 0.0
  %1862 = vmatprep.subr.mxu0 0.0
  %1863 = vmatpush2.msra.mxu0 0.0
  %1864 = vmatprep.subr.mxu0 0.0
  %1865 = vmatpush2.msra.mxu0 0.0
  %1866 = vmatprep.subr.mxu0 0.0
  %1867 = vmatpush2.msra.mxu0 0.0
  %1868 = vmatprep.subr.mxu0 0.0
  %1869 = vmatpush2.msra.mxu0 0.0
  %1870 = vmatprep.subr.mxu0 0.0
  %1871 = vmatpush2.msra.mxu0 0.0
  %1872 = vmatprep.subr.mxu0 0.0
  %1873 = vmatpush2.msra.mxu0 0.0
  %1874 = vmatprep.subr.mxu0 0.0
  %1875 = vmatpush2.msra.mxu0 0.0
  %1876 = vmatprep.subr.mxu0 0.0
  %1877 = vmatpush2.msra.mxu0 0.0
  %1878 = vmatprep.subr.mxu0 0.0
  %1879 = vmatpush2.msra.mxu0 0.0
  %1880 = vmatprep.subr.mxu0 0.0
  %1881 = vmatpush2.msra.mxu0 0.0
  %1882 = vmatprep.subr.mxu0 0.0
  %1883 = vmatpush2.msra.mxu0 0.0
  %1884 = vmatprep.subr.mxu0 0.0
  %1885 = vmatpush2.msra.mxu0 0.0
  %1886 = vmatprep.mubr.f32.mxu0 0.0
  %1887 = vmatmul.mubr.f32.gmra.mxu0 %v1820
  %v1888 = vpop.f32.mrf.mxu0
  %v1889 = vadd.f32 0.0, %v1888
  %v1890 = vpop.f32.mrf.mxu0
  %1891 = vdwg.mxu0
  %v1893 = vsel %vm1818, %v1815, 0
  %1895 = vmatprep.subr.mxu0 0.0
  %1896 = vmatpush1.msra.mxu0 0.0
  %1897 = vmatprep.subr.mxu0 0.0
  %1898 = vmatpush1.msra.mxu0 0.0
  %1899 = vmatprep.subr.mxu0 0.0
  %1900 = vmatpush1.msra.mxu0 0.0
  %1901 = vmatprep.subr.mxu0 0.0
  %1902 = vmatpush1.msra.mxu0 0.0
  %1903 = vmatprep.subr.mxu0 0.0
  %1904 = vmatpush1.msra.mxu0 0.0
  %1905 = vmatprep.subr.mxu0 0.0
  %1906 = vmatpush1.msra.mxu0 0.0
  %1907 = vmatprep.subr.mxu0 0.0
  %1908 = vmatpush1.msra.mxu0 0.0
  %1909 = vmatprep.subr.mxu0 0.0
  %1910 = vmatpush1.msra.mxu0 0.0
  %1911 = vmatprep.subr.mxu0 0.0
  %1912 = vmatpush1.msra.mxu0 0.0
  %1913 = vmatprep.subr.mxu0 0.0
  %1914 = vmatpush1.msra.mxu0 0.0
  %1915 = vmatprep.subr.mxu0 0.0
  %1916 = vmatpush1.msra.mxu0 0.0
  %1917 = vmatprep.subr.mxu0 0.0
  %1918 = vmatpush1.msra.mxu0 0.0
  %1919 = vmatprep.subr.mxu0 0.0
  %1920 = vmatpush1.msra.mxu0 0.0
  %1921 = vmatprep.subr.mxu0 0.0
  %1922 = vmatpush1.msra.mxu0 0.0
  %1923 = vmatprep.subr.mxu0 0.0
  %1924 = vmatpush1.msra.mxu0 %v1817
  %1925 = vmatprep.subr.mxu0 0.0
  %1926 = vmatpush1.msra.mxu0 %v1816
  %1927 = vmatprep.subr.mxu0 0.0
  %1928 = vmatpush2.msra.mxu0 0.0
  %1929 = vmatprep.subr.mxu0 0.0
  %1930 = vmatpush2.msra.mxu0 0.0
  %1931 = vmatprep.subr.mxu0 0.0
  %1932 = vmatpush2.msra.mxu0 0.0
  %1933 = vmatprep.subr.mxu0 0.0
  %1934 = vmatpush2.msra.mxu0 0.0
  %1935 = vmatprep.subr.mxu0 0.0
  %1936 = vmatpush2.msra.mxu0 0.0
  %1937 = vmatprep.subr.mxu0 0.0
  %1938 = vmatpush2.msra.mxu0 0.0
  %1939 = vmatprep.subr.mxu0 0.0
  %1940 = vmatpush2.msra.mxu0 0.0
  %1941 = vmatprep.subr.mxu0 0.0
  %1942 = vmatpush2.msra.mxu0 0.0
  %1943 = vmatprep.subr.mxu0 0.0
  %1944 = vmatpush2.msra.mxu0 0.0
  %1945 = vmatprep.subr.mxu0 0.0
  %1946 = vmatpush2.msra.mxu0 0.0
  %1947 = vmatprep.subr.mxu0 0.0
  %1948 = vmatpush2.msra.mxu0 0.0
  %1949 = vmatprep.subr.mxu0 0.0
  %1950 = vmatpush2.msra.mxu0 0.0
  %1951 = vmatprep.subr.mxu0 0.0
  %1952 = vmatpush2.msra.mxu0 0.0
  %1953 = vmatprep.subr.mxu0 0.0
  %1954 = vmatpush2.msra.mxu0 0.0
  %1955 = vmatprep.subr.mxu0 0.0
  %1956 = vmatpush2.msra.mxu0 0.0
  %1957 = vmatprep.subr.mxu0 0.0
  %1958 = vmatpush2.msra.mxu0 0.0
  %1959 = vmatprep.mubr.f32.mxu0 0.0
  %1960 = vmatmul.mubr.f32.gmra.mxu0 %v1893
  %v1961 = vpop.f32.mrf.mxu0
  %v1962 = vadd.f32 0.0, %v1961
  %v1963 = vpop.f32.mrf.mxu0
  %1964 = vdwg.mxu0
  %v1965 = vlaneseq
  %v1966 = vshrl.u32 %v1965, 7
  %v1967 = vsub.s32 0, %v1966
  %v1968 = vrot.slane %v1889, %v1967
  %v1969 = vmul.f32 %v805, %v1968
  %v1970 = vlaneseq
  %v1971 = vshrl.u32 %v1970, 7
  %v1972 = vsub.s32 0, %v1971
  %v1973 = vrot.slane %v1962, %v1972
  %v1974 = vadd.f32 %v1969, %v1973
  %v1975 = vmax.f32 %v1974, 0.0
  %v1976 = vld [vmem:[%s7] sm:$0xff]
  %v1977 = vld [vmem:[%s7 + $0x8] sm:$0xff]
  %v1978 = vld [vmem:[%s7 + $0x10] sm:$0xff]
  %v1979 = vld [vmem:[%s7 + $0x18] sm:$0xff]
  %v1980 = vld [vmem:[%s7 + $0x20] sm:$0xff]
  %v1981 = vld [vmem:[%s7 + $0x28] sm:$0xff]
  %v1982 = vld [vmem:[%s7 + $0x30] sm:$0xff]
  %v1983 = vld [vmem:[%s7 + $0x38] sm:$0xff]
  %v1984 = vld [vmem:[%s7 + $0x40] sm:$0xff]
  %v1985 = vld [vmem:[%s7 + $0x48] sm:$0xff]
  %v1986 = vld [vmem:[%s7 + $0x50] sm:$0xff]
  %v1987 = vld [vmem:[%s7 + $0x58] sm:$0xff]
  %v1988 = vld [vmem:[%s7 + $0x60] sm:$0xff]
  %v1989 = vld [vmem:[%s7 + $0x68] sm:$0xff]
  %v1990 = vld [vmem:[%s7 + $0x70] sm:$0xff]
  %v1991 = vld [vmem:[%s7 + $0x78] sm:$0xff]
  %1992 = vmatprep.subr.mxu0 0.0
  %1993 = vmatpush1.msra.mxu0 %v1991
  %1994 = vmatprep.subr.mxu0 0.0
  %1995 = vmatpush1.msra.mxu0 %v1990
  %1996 = vmatprep.subr.mxu0 0.0
  %1997 = vmatpush1.msra.mxu0 %v1989
  %1998 = vmatprep.subr.mxu0 0.0
  %1999 = vmatpush1.msra.mxu0 %v1988
  %2000 = vmatprep.subr.mxu0 0.0
  %2001 = vmatpush1.msra.mxu0 %v1987
  %2002 = vmatprep.subr.mxu0 0.0
  %2003 = vmatpush1.msra.mxu0 %v1986
  %2004 = vmatprep.subr.mxu0 0.0
  %2005 = vmatpush1.msra.mxu0 %v1985
  %2006 = vmatprep.subr.mxu0 0.0
  %2007 = vmatpush1.msra.mxu0 %v1984
  %2008 = vmatprep.subr.mxu0 0.0
  %2009 = vmatpush1.msra.mxu0 %v1983
  %2010 = vmatprep.subr.mxu0 0.0
  %2011 = vmatpush1.msra.mxu0 %v1982
  %2012 = vmatprep.subr.mxu0 0.0
  %2013 = vmatpush1.msra.mxu0 %v1981
  %2014 = vmatprep.subr.mxu0 0.0
  %2015 = vmatpush1.msra.mxu0 %v1980
  %2016 = vmatprep.subr.mxu0 0.0
  %2017 = vmatpush1.msra.mxu0 %v1979
  %2018 = vmatprep.subr.mxu0 0.0
  %2019 = vmatpush1.msra.mxu0 %v1978
  %2020 = vmatprep.subr.mxu0 0.0
  %2021 = vmatpush1.msra.mxu0 %v1977
  %2022 = vmatprep.subr.mxu0 0.0
  %2023 = vmatpush1.msra.mxu0 %v1976
  %2024 = vmatprep.subr.mxu0 0.0
  %2025 = vmatpush2.msra.mxu0 0.0
  %2026 = vmatprep.subr.mxu0 0.0
  %2027 = vmatpush2.msra.mxu0 0.0
  %2028 = vmatprep.subr.mxu0 0.0
  %2029 = vmatpush2.msra.mxu0 0.0
  %2030 = vmatprep.subr.mxu0 0.0
  %2031 = vmatpush2.msra.mxu0 0.0
  %2032 = vmatprep.subr.mxu0 0.0
  %2033 = vmatpush2.msra.mxu0 0.0
  %2034 = vmatprep.subr.mxu0 0.0
  %2035 = vmatpush2.msra.mxu0 0.0
  %2036 = vmatprep.subr.mxu0 0.0
  %2037 = vmatpush2.msra.mxu0 0.0
  %2038 = vmatprep.subr.mxu0 0.0
  %2039 = vmatpush2.msra.mxu0 0.0
  %2040 = vmatprep.subr.mxu0 0.0
  %2041 = vmatpush2.msra.mxu0 0.0
  %2042 = vmatprep.subr.mxu0 0.0
  %2043 = vmatpush2.msra.mxu0 0.0
  %2044 = vmatprep.subr.mxu0 0.0
  %2045 = vmatpush2.msra.mxu0 0.0
  %2046 = vmatprep.subr.mxu0 0.0
  %2047 = vmatpush2.msra.mxu0 0.0
  %2048 = vmatprep.subr.mxu0 0.0
  %2049 = vmatpush2.msra.mxu0 0.0
  %2050 = vmatprep.subr.mxu0 0.0
  %2051 = vmatpush2.msra.mxu0 0.0
  %2052 = vmatprep.subr.mxu0 0.0
  %2053 = vmatpush2.msra.mxu0 0.0
  %2054 = vmatprep.subr.mxu0 0.0
  %2055 = vmatpush2.msra.mxu0 0.0
  %2056 = vmatprep.mubr.f32.mxu0 0.0
  %2057 = vmatmul.mubr.f32.gmra.mxu0 %v1975
  %v2058 = vpop.f32.mrf.mxu0
  %v2059 = vadd.f32 0.0, %v2058
  %v2060 = vpop.f32.mrf.mxu0
  %2061 = vdwg.mxu0
  %v2062 = vld [vmem:[%s8] sm:$0xff]
  %v2063 = vld [vmem:[%s8 + $0x8] sm:$0xff]
  %v2064 = vld [vmem:[%s8 + $0x10] sm:$0xff]
  %v2065 = vld [vmem:[%s8 + $0x18] sm:$0xff]
  %v2066 = vld [vmem:[%s8 + $0x20] sm:$0xff]
  %v2067 = vld [vmem:[%s8 + $0x28] sm:$0xff]
  %v2068 = vld [vmem:[%s8 + $0x30] sm:$0xff]
  %v2069 = vld [vmem:[%s8 + $0x38] sm:$0xff]
  %v2070 = vld [vmem:[%s8 + $0x40] sm:$0xff]
  %v2071 = vld [vmem:[%s8 + $0x48] sm:$0xff]
  %v2072 = vld [vmem:[%s8 + $0x50] sm:$0xff]
  %v2073 = vld [vmem:[%s8 + $0x58] sm:$0xff]
  %v2074 = vld [vmem:[%s8 + $0x60] sm:$0xff]
  %v2075 = vld [vmem:[%s8 + $0x68] sm:$0xff]
  %v2076 = vld [vmem:[%s8 + $0x70] sm:$0xff]
  %v2077 = vld [vmem:[%s8 + $0x78] sm:$0xff]
  %2078 = vmatprep.subr.mxu0 0.0
  %2079 = vmatpush1.msra.mxu0 %v2077
  %2080 = vmatprep.subr.mxu0 0.0
  %2081 = vmatpush1.msra.mxu0 %v2076
  %2082 = vmatprep.subr.mxu0 0.0
  %2083 = vmatpush1.msra.mxu0 %v2075
  %2084 = vmatprep.subr.mxu0 0.0
  %2085 = vmatpush1.msra.mxu0 %v2074
  %2086 = vmatprep.subr.mxu0 0.0
  %2087 = vmatpush1.msra.mxu0 %v2073
  %2088 = vmatprep.subr.mxu0 0.0
  %2089 = vmatpush1.msra.mxu0 %v2072
  %2090 = vmatprep.subr.mxu0 0.0
  %2091 = vmatpush1.msra.mxu0 %v2071
  %2092 = vmatprep.subr.mxu0 0.0
  %2093 = vmatpush1.msra.mxu0 %v2070
  %2094 = vmatprep.subr.mxu0 0.0
  %2095 = vmatpush1.msra.mxu0 %v2069
  %2096 = vmatprep.subr.mxu0 0.0
  %2097 = vmatpush1.msra.mxu0 %v2068
  %2098 = vmatprep.subr.mxu0 0.0
  %2099 = vmatpush1.msra.mxu0 %v2067
  %2100 = vmatprep.subr.mxu0 0.0
  %2101 = vmatpush1.msra.mxu0 %v2066
  %2102 = vmatprep.subr.mxu0 0.0
  %2103 = vmatpush1.msra.mxu0 %v2065
  %2104 = vmatprep.subr.mxu0 0.0
  %2105 = vmatpush1.msra.mxu0 %v2064
  %2106 = vmatprep.subr.mxu0 0.0
  %2107 = vmatpush1.msra.mxu0 %v2063
  %2108 = vmatprep.subr.mxu0 0.0
  %2109 = vmatpush1.msra.mxu0 %v2062
  %2110 = vmatprep.subr.mxu0 0.0
  %2111 = vmatpush2.msra.mxu0 0.0
  %2112 = vmatprep.subr.mxu0 0.0
  %2113 = vmatpush2.msra.mxu0 0.0
  %2114 = vmatprep.subr.mxu0 0.0
  %2115 = vmatpush2.msra.mxu0 0.0
  %2116 = vmatprep.subr.mxu0 0.0
  %2117 = vmatpush2.msra.mxu0 0.0
  %2118 = vmatprep.subr.mxu0 0.0
  %2119 = vmatpush2.msra.mxu0 0.0
  %2120 = vmatprep.subr.mxu0 0.0
  %2121 = vmatpush2.msra.mxu0 0.0
  %2122 = vmatprep.subr.mxu0 0.0
  %2123 = vmatpush2.msra.mxu0 0.0
  %2124 = vmatprep.subr.mxu0 0.0
  %2125 = vmatpush2.msra.mxu0 0.0
  %2126 = vmatprep.subr.mxu0 0.0
  %2127 = vmatpush2.msra.mxu0 0.0
  %2128 = vmatprep.subr.mxu0 0.0
  %2129 = vmatpush2.msra.mxu0 0.0
  %2130 = vmatprep.subr.mxu0 0.0
  %2131 = vmatpush2.msra.mxu0 0.0
  %2132 = vmatprep.subr.mxu0 0.0
  %2133 = vmatpush2.msra.mxu0 0.0
  %2134 = vmatprep.subr.mxu0 0.0
  %2135 = vmatpush2.msra.mxu0 0.0
  %2136 = vmatprep.subr.mxu0 0.0
  %2137 = vmatpush2.msra.mxu0 0.0
  %2138 = vmatprep.subr.mxu0 0.0
  %2139 = vmatpush2.msra.mxu0 0.0
  %2140 = vmatprep.subr.mxu0 0.0
  %2141 = vmatpush2.msra.mxu0 0.0
  %2142 = vmatprep.mubr.f32.mxu0 0.0
  %2143 = vmatmul.mubr.f32.gmra.mxu0 %v1975
  %v2144 = vpop.f32.mrf.mxu0
  %v2145 = vadd.f32 0.0, %v2144
  %v2146 = vpop.f32.mrf.mxu0
  %2147 = vdwg.mxu0
  %v2148 = vmax.f32 %v2059, %v2145
  %v2149 = vld [vmem:[%s9] sm:$0xf]
  %vm2150 = vcmask 64512
  %v2152 = vsel %vm2150, %v2149, 0
  %2154 = vmatprep.subr.mxu0 0.0
  %2155 = vmatpush1.msra.mxu0 0.0
  %2156 = vmatprep.subr.mxu0 0.0
  %2157 = vmatpush1.msra.mxu0 0.0
  %2158 = vmatprep.subr.mxu0 0.0
  %2159 = vmatpush1.msra.mxu0 0.0
  %2160 = vmatprep.subr.mxu0 0.0
  %2161 = vmatpush1.msra.mxu0 0.0
  %2162 = vmatprep.subr.mxu0 0.0
  %2163 = vmatpush1.msra.mxu0 0.0
  %2164 = vmatprep.subr.mxu0 0.0
  %2165 = vmatpush1.msra.mxu0 0.0
  %2166 = vmatprep.subr.mxu0 0.0
  %2167 = vmatpush1.msra.mxu0 0.0
  %2168 = vmatprep.subr.mxu0 0.0
  %2169 = vmatpush1.msra.mxu0 0.0
  %2170 = vmatprep.subr.mxu0 0.0
  %2171 = vmatpush1.msra.mxu0 0.0
  %2172 = vmatprep.subr.mxu0 0.0
  %2173 = vmatpush1.msra.mxu0 0.0
  %2174 = vmatprep.subr.mxu0 0.0
  %2175 = vmatpush1.msra.mxu0 0.0
  %2176 = vmatprep.subr.mxu0 0.0
  %2177 = vmatpush1.msra.mxu0 0.0
  %2178 = vmatprep.subr.mxu0 0.0
  %2179 = vmatpush1.msra.mxu0 0.0
  %2180 = vmatprep.subr.mxu0 0.0
  %2181 = vmatpush1.msra.mxu0 0.0
  %2182 = vmatprep.subr.mxu0 0.0
  %2183 = vmatpush1.msra.mxu0 0.0
  %2184 = vmatprep.subr.mxu0 0.0
  %2185 = vmatpush1.msra.mxu0 %v2148
  %2186 = vmatprep.subr.mxu0 0.0
  %2187 = vmatpush2.msra.mxu0 0.0
  %2188 = vmatprep.subr.mxu0 0.0
  %2189 = vmatpush2.msra.mxu0 0.0
  %2190 = vmatprep.subr.mxu0 0.0
  %2191 = vmatpush2.msra.mxu0 0.0
  %2192 = vmatprep.subr.mxu0 0.0
  %2193 = vmatpush2.msra.mxu0 0.0
  %2194 = vmatprep.subr.mxu0 0.0
  %2195 = vmatpush2.msra.mxu0 0.0
  %2196 = vmatprep.subr.mxu0 0.0
  %2197 = vmatpush2.msra.mxu0 0.0
  %2198 = vmatprep.subr.mxu0 0.0
  %2199 = vmatpush2.msra.mxu0 0.0
  %2200 = vmatprep.subr.mxu0 0.0
  %2201 = vmatpush2.msra.mxu0 0.0
  %2202 = vmatprep.subr.mxu0 0.0
  %2203 = vmatpush2.msra.mxu0 0.0
  %2204 = vmatprep.subr.mxu0 0.0
  %2205 = vmatpush2.msra.mxu0 0.0
  %2206 = vmatprep.subr.mxu0 0.0
  %2207 = vmatpush2.msra.mxu0 0.0
  %2208 = vmatprep.subr.mxu0 0.0
  %2209 = vmatpush2.msra.mxu0 0.0
  %2210 = vmatprep.subr.mxu0 0.0
  %2211 = vmatpush2.msra.mxu0 0.0
  %2212 = vmatprep.subr.mxu0 0.0
  %2213 = vmatpush2.msra.mxu0 0.0
  %2214 = vmatprep.subr.mxu0 0.0
  %2215 = vmatpush2.msra.mxu0 0.0
  %2216 = vmatprep.subr.mxu0 0.0
  %2217 = vmatpush2.msra.mxu0 0.0
  %2218 = vmatprep.mubr.f32.mxu0 0.0
  %2219 = vmatmul.mubr.f32.gmra.mxu0 %v2152
  %v2220 = vpop.f32.mrf.mxu0
  %v2221 = vadd.f32 0.0, %v2220
  %v2222 = vpop.f32.mrf.mxu0
  %2223 = vdwg.mxu0
  %v2224 = vld [vmem:[%s10] sm:$0xf]
  %v2226 = vsel %vm2150, %v2224, 0
  %2228 = vmatprep.subr.mxu0 0.0
  %2229 = vmatpush1.msra.mxu0 0.0
  %2230 = vmatprep.subr.mxu0 0.0
  %2231 = vmatpush1.msra.mxu0 0.0
  %2232 = vmatprep.subr.mxu0 0.0
  %2233 = vmatpush1.msra.mxu0 0.0
  %2234 = vmatprep.subr.mxu0 0.0
  %2235 = vmatpush1.msra.mxu0 0.0
  %2236 = vmatprep.subr.mxu0 0.0
  %2237 = vmatpush1.msra.mxu0 0.0
  %2238 = vmatprep.subr.mxu0 0.0
  %2239 = vmatpush1.msra.mxu0 0.0
  %2240 = vmatprep.subr.mxu0 0.0
  %2241 = vmatpush1.msra.mxu0 0.0
  %2242 = vmatprep.subr.mxu0 0.0
  %2243 = vmatpush1.msra.mxu0 0.0
  %2244 = vmatprep.subr.mxu0 0.0
  %2245 = vmatpush1.msra.mxu0 0.0
  %2246 = vmatprep.subr.mxu0 0.0
  %2247 = vmatpush1.msra.mxu0 0.0
  %2248 = vmatprep.subr.mxu0 0.0
  %2249 = vmatpush1.msra.mxu0 0.0
  %2250 = vmatprep.subr.mxu0 0.0
  %2251 = vmatpush1.msra.mxu0 0.0
  %2252 = vmatprep.subr.mxu0 0.0
  %2253 = vmatpush1.msra.mxu0 0.0
  %2254 = vmatprep.subr.mxu0 0.0
  %2255 = vmatpush1.msra.mxu0 0.0
  %2256 = vmatprep.subr.mxu0 0.0
  %2257 = vmatpush1.msra.mxu0 0.0
  %2258 = vmatprep.subr.mxu0 0.0
  %2259 = vmatpush1.msra.mxu0 %v2148
  %2260 = vmatprep.subr.mxu0 0.0
  %2261 = vmatpush2.msra.mxu0 0.0
  %2262 = vmatprep.subr.mxu0 0.0
  %2263 = vmatpush2.msra.mxu0 0.0
  %2264 = vmatprep.subr.mxu0 0.0
  %2265 = vmatpush2.msra.mxu0 0.0
  %2266 = vmatprep.subr.mxu0 0.0
  %2267 = vmatpush2.msra.mxu0 0.0
  %2268 = vmatprep.subr.mxu0 0.0
  %2269 = vmatpush2.msra.mxu0 0.0
  %2270 = vmatprep.subr.mxu0 0.0
  %2271 = vmatpush2.msra.mxu0 0.0
  %2272 = vmatprep.subr.mxu0 0.0
  %2273 = vmatpush2.msra.mxu0 0.0
  %2274 = vmatprep.subr.mxu0 0.0
  %2275 = vmatpush2.msra.mxu0 0.0
  %2276 = vmatprep.subr.mxu0 0.0
  %2277 = vmatpush2.msra.mxu0 0.0
  %2278 = vmatprep.subr.mxu0 0.0
  %2279 = vmatpush2.msra.mxu0 0.0
  %2280 = vmatprep.subr.mxu0 0.0
  %2281 = vmatpush2.msra.mxu0 0.0
  %2282 = vmatprep.subr.mxu0 0.0
  %2283 = vmatpush2.msra.mxu0 0.0
  %2284 = vmatprep.subr.mxu0 0.0
  %2285 = vmatpush2.msra.mxu0 0.0
  %2286 = vmatprep.subr.mxu0 0.0
  %2287 = vmatpush2.msra.mxu0 0.0
  %2288 = vmatprep.subr.mxu0 0.0
  %2289 = vmatpush2.msra.mxu0 0.0
  %2290 = vmatprep.subr.mxu0 0.0
  %2291 = vmatpush2.msra.mxu0 0.0
  %2292 = vmatprep.mubr.f32.mxu0 0.0
  %2293 = vmatmul.mubr.f32.gmra.mxu0 %v2226
  %v2294 = vpop.f32.mrf.mxu0
  %v2295 = vadd.f32 0.0, %v2294
  %v2296 = vpop.f32.mrf.mxu0
  %2297 = vdwg.mxu0
  %v2298 = vmax.f32 %v2221, %v2295
  %v2299 = vld [vmem:[%s11] sm:$0x3f]
  %vm2300 = vcmask 31744
  %v2302 = vsel %vm2300, %v2299, 0
  %vm2304 = vcmask 1043456
  %v2306 = vsel %vm2304, %v2298, 0
  %2308 = vmatprep.subr.mxu0 0.0
  %2309 = vmatpush1.msra.mxu0 0.0
  %2310 = vmatprep.subr.mxu0 0.0
  %2311 = vmatpush1.msra.mxu0 0.0
  %2312 = vmatprep.subr.mxu0 0.0
  %2313 = vmatpush1.msra.mxu0 0.0
  %2314 = vmatprep.subr.mxu0 0.0
  %2315 = vmatpush1.msra.mxu0 0.0
  %2316 = vmatprep.subr.mxu0 0.0
  %2317 = vmatpush1.msra.mxu0 0.0
  %2318 = vmatprep.subr.mxu0 0.0
  %2319 = vmatpush1.msra.mxu0 0.0
  %2320 = vmatprep.subr.mxu0 0.0
  %2321 = vmatpush1.msra.mxu0 0.0
  %2322 = vmatprep.subr.mxu0 0.0
  %2323 = vmatpush1.msra.mxu0 0.0
  %2324 = vmatprep.subr.mxu0 0.0
  %2325 = vmatpush1.msra.mxu0 0.0
  %2326 = vmatprep.subr.mxu0 0.0
  %2327 = vmatpush1.msra.mxu0 0.0
  %2328 = vmatprep.subr.mxu0 0.0
  %2329 = vmatpush1.msra.mxu0 0.0
  %2330 = vmatprep.subr.mxu0 0.0
  %2331 = vmatpush1.msra.mxu0 0.0
  %2332 = vmatprep.subr.mxu0 0.0
  %2333 = vmatpush1.msra.mxu0 0.0
  %2334 = vmatprep.subr.mxu0 0.0
  %2335 = vmatpush1.msra.mxu0 0.0
  %2336 = vmatprep.subr.mxu0 0.0
  %2337 = vmatpush1.msra.mxu0 0.0
  %2338 = vmatprep.subr.mxu0 0.0
  %2339 = vmatpush1.msra.mxu0 %v2306
  %2340 = vmatprep.subr.mxu0 0.0
  %2341 = vmatpush2.msra.mxu0 0.0
  %2342 = vmatprep.subr.mxu0 0.0
  %2343 = vmatpush2.msra.mxu0 0.0
  %2344 = vmatprep.subr.mxu0 0.0
  %2345 = vmatpush2.msra.mxu0 0.0
  %2346 = vmatprep.subr.mxu0 0.0
  %2347 = vmatpush2.msra.mxu0 0.0
  %2348 = vmatprep.subr.mxu0 0.0
  %2349 = vmatpush2.msra.mxu0 0.0
  %2350 = vmatprep.subr.mxu0 0.0
  %2351 = vmatpush2.msra.mxu0 0.0
  %2352 = vmatprep.subr.mxu0 0.0
  %2353 = vmatpush2.msra.mxu0 0.0
  %2354 = vmatprep.subr.mxu0 0.0
  %2355 = vmatpush2.msra.mxu0 0.0
  %2356 = vmatprep.subr.mxu0 0.0
  %2357 = vmatpush2.msra.mxu0 0.0
  %2358 = vmatprep.subr.mxu0 0.0
  %2359 = vmatpush2.msra.mxu0 0.0
  %2360 = vmatprep.subr.mxu0 0.0
  %2361 = vmatpush2.msra.mxu0 0.0
  %2362 = vmatprep.subr.mxu0 0.0
  %2363 = vmatpush2.msra.mxu0 0.0
  %2364 = vmatprep.subr.mxu0 0.0
  %2365 = vmatpush2.msra.mxu0 0.0
  %2366 = vmatprep.subr.mxu0 0.0
  %2367 = vmatpush2.msra.mxu0 0.0
  %2368 = vmatprep.subr.mxu0 0.0
  %2369 = vmatpush2.msra.mxu0 0.0
  %2370 = vmatprep.subr.mxu0 0.0
  %2371 = vmatpush2.msra.mxu0 0.0
  %2372 = vmatprep.mubr.f32.mxu0 0.0
  %2373 = vmatmul.mubr.f32.gmra.mxu0 %v2302
  %v2374 = vpop.f32.mrf.mxu0
  %v2375 = vadd.f32 0.0, %v2374
  %v2376 = vpop.f32.mrf.mxu0
  %2377 = vdwg.mxu0
  %v2378 = vld [vmem:[%s12] sm:$0xff]
  %v2379 = vld [vmem:[%s12 + $0x8] sm:$0xff]
  %v2380 = vld [vmem:[%s12 + $0x10] sm:$0xff]
  %v2381 = vld [vmem:[%s12 + $0x18] sm:$0xff]
  %v2382 = vld [vmem:[%s12 + $0x20] sm:$0xff]
  %v2383 = vld [vmem:[%s12 + $0x28] sm:$0xff]
  %v2384 = vld [vmem:[%s12 + $0x30] sm:$0xff]
  %v2385 = vld [vmem:[%s12 + $0x38] sm:$0xff]
  %v2387 = vsel %vm65, %v2375, 0
  %2389 = vmatprep.subr.mxu0 0.0
  %2390 = vmatpush1.msra.mxu0 0.0
  %2391 = vmatprep.subr.mxu0 0.0
  %2392 = vmatpush1.msra.mxu0 0.0
  %2393 = vmatprep.subr.mxu0 0.0
  %2394 = vmatpush1.msra.mxu0 0.0
  %2395 = vmatprep.subr.mxu0 0.0
  %2396 = vmatpush1.msra.mxu0 0.0
  %2397 = vmatprep.subr.mxu0 0.0
  %2398 = vmatpush1.msra.mxu0 0.0
  %2399 = vmatprep.subr.mxu0 0.0
  %2400 = vmatpush1.msra.mxu0 0.0
  %2401 = vmatprep.subr.mxu0 0.0
  %2402 = vmatpush1.msra.mxu0 0.0
  %2403 = vmatprep.subr.mxu0 0.0
  %2404 = vmatpush1.msra.mxu0 0.0
  %2405 = vmatprep.subr.mxu0 0.0
  %2406 = vmatpush1.msra.mxu0 %v2385
  %2407 = vmatprep.subr.mxu0 0.0
  %2408 = vmatpush1.msra.mxu0 %v2384
  %2409 = vmatprep.subr.mxu0 0.0
  %2410 = vmatpush1.msra.mxu0 %v2383
  %2411 = vmatprep.subr.mxu0 0.0
  %2412 = vmatpush1.msra.mxu0 %v2382
  %2413 = vmatprep.subr.mxu0 0.0
  %2414 = vmatpush1.msra.mxu0 %v2381
  %2415 = vmatprep.subr.mxu0 0.0
  %2416 = vmatpush1.msra.mxu0 %v2380
  %2417 = vmatprep.subr.mxu0 0.0
  %2418 = vmatpush1.msra.mxu0 %v2379
  %2419 = vmatprep.subr.mxu0 0.0
  %2420 = vmatpush1.msra.mxu0 %v2378
  %2421 = vmatprep.subr.mxu0 0.0
  %2422 = vmatpush2.msra.mxu0 0.0
  %2423 = vmatprep.subr.mxu0 0.0
  %2424 = vmatpush2.msra.mxu0 0.0
  %2425 = vmatprep.subr.mxu0 0.0
  %2426 = vmatpush2.msra.mxu0 0.0
  %2427 = vmatprep.subr.mxu0 0.0
  %2428 = vmatpush2.msra.mxu0 0.0
  %2429 = vmatprep.subr.mxu0 0.0
  %2430 = vmatpush2.msra.mxu0 0.0
  %2431 = vmatprep.subr.mxu0 0.0
  %2432 = vmatpush2.msra.mxu0 0.0
  %2433 = vmatprep.subr.mxu0 0.0
  %2434 = vmatpush2.msra.mxu0 0.0
  %2435 = vmatprep.subr.mxu0 0.0
  %2436 = vmatpush2.msra.mxu0 0.0
  %2437 = vmatprep.subr.mxu0 0.0
  %2438 = vmatpush2.msra.mxu0 0.0
  %2439 = vmatprep.subr.mxu0 0.0
  %2440 = vmatpush2.msra.mxu0 0.0
  %2441 = vmatprep.subr.mxu0 0.0
  %2442 = vmatpush2.msra.mxu0 0.0
  %2443 = vmatprep.subr.mxu0 0.0
  %2444 = vmatpush2.msra.mxu0 0.0
  %2445 = vmatprep.subr.mxu0 0.0
  %2446 = vmatpush2.msra.mxu0 0.0
  %2447 = vmatprep.subr.mxu0 0.0
  %2448 = vmatpush2.msra.mxu0 0.0
  %2449 = vmatprep.subr.mxu0 0.0
  %2450 = vmatpush2.msra.mxu0 0.0
  %2451 = vmatprep.subr.mxu0 0.0
  %2452 = vmatpush2.msra.mxu0 0.0
  %2453 = vmatprep.mubr.f32.mxu0 0.0
  %2454 = vmatmul.mubr.f32.gmra.mxu0 %v2387
  %v2455 = vpop.f32.mrf.mxu0
  %v2456 = vadd.f32 0.0, %v2455
  %v2457 = vpop.f32.mrf.mxu0
  %2458 = vdwg.mxu0
  %vm2459 = vcmask 783360
  %2460 = vst.msk [vmem:[%s13] sm:$0x3f] %vm2459, %v2456
  %v2461 = vmul.f32 %v1509, %v1968
  %v2462 = vadd.f32 %v2461, %v1973
  %v2463 = vmax.f32 %v2462, 0.0
  %v2464 = vld [vmem:[%s7] sm:$0xff]
  %v2465 = vld [vmem:[%s7 + $0x8] sm:$0xff]
  %v2466 = vld [vmem:[%s7 + $0x10] sm:$0xff]
  %v2467 = vld [vmem:[%s7 + $0x18] sm:$0xff]
  %v2468 = vld [vmem:[%s7 + $0x20] sm:$0xff]
  %v2469 = vld [vmem:[%s7 + $0x28] sm:$0xff]
  %v2470 = vld [vmem:[%s7 + $0x30] sm:$0xff]
  %v2471 = vld [vmem:[%s7 + $0x38] sm:$0xff]
  %v2472 = vld [vmem:[%s7 + $0x40] sm:$0xff]
  %v2473 = vld [vmem:[%s7 + $0x48] sm:$0xff]
  %v2474 = vld [vmem:[%s7 + $0x50] sm:$0xff]
  %v2475 = vld [vmem:[%s7 + $0x58] sm:$0xff]
  %v2476 = vld [vmem:[%s7 + $0x60] sm:$0xff]
  %v2477 = vld [vmem:[%s7 + $0x68] sm:$0xff]
  %v2478 = vld [vmem:[%s7 + $0x70] sm:$0xff]
  %v2479 = vld [vmem:[%s7 + $0x78] sm:$0xff]
  %2480 = vmatprep.subr.mxu0 0.0
  %2481 = vmatpush1.msra.mxu0 %v2479
  %2482 = vmatprep.subr.mxu0 0.0
  %2483 = vmatpush1.msra.mxu0 %v2478
  %2484 = vmatprep.subr.mxu0 0.0
  %2485 = vmatpush1.msra.mxu0 %v2477
  %2486 = vmatprep.subr.mxu0 0.0
  %2487 = vmatpush1.msra.mxu0 %v2476
  %2488 = vmatprep.subr.mxu0 0.0
  %2489 = vmatpush1.msra.mxu0 %v2475
  %2490 = vmatprep.subr.mxu0 0.0
  %2491 = vmatpush1.msra.mxu0 %v2474
  %2492 = vmatprep.subr.mxu0 0.0
  %2493 = vmatpush1.msra.mxu0 %v2473
  %2494 = vmatprep.subr.mxu0 0.0
  %2495 = vmatpush1.msra.mxu0 %v2472
  %2496 = vmatprep.subr.mxu0 0.0
  %2497 = vmatpush1.msra.mxu0 %v2471
  %2498 = vmatprep.subr.mxu0 0.0
  %2499 = vmatpush1.msra.mxu0 %v2470
  %2500 = vmatprep.subr.mxu0 0.0
  %2501 = vmatpush1.msra.mxu0 %v2469
  %2502 = vmatprep.subr.mxu0 0.0
  %2503 = vmatpush1.msra.mxu0 %v2468
  %2504 = vmatprep.subr.mxu0 0.0
  %2505 = vmatpush1.msra.mxu0 %v2467
  %2506 = vmatprep.subr.mxu0 0.0
  %2507 = vmatpush1.msra.mxu0 %v2466
  %2508 = vmatprep.subr.mxu0 0.0
  %2509 = vmatpush1.msra.mxu0 %v2465
  %2510 = vmatprep.subr.mxu0 0.0
  %2511 = vmatpush1.msra.mxu0 %v2464
  %2512 = vmatprep.subr.mxu0 0.0
  %2513 = vmatpush2.msra.mxu0 0.0
  %2514 = vmatprep.subr.mxu0 0.0
  %2515 = vmatpush2.msra.mxu0 0.0
  %2516 = vmatprep.subr.mxu0 0.0
  %2517 = vmatpush2.msra.mxu0 0.0
  %2518 = vmatprep.subr.mxu0 0.0
  %2519 = vmatpush2.msra.mxu0 0.0
  %2520 = vmatprep.subr.mxu0 0.0
  %2521 = vmatpush2.msra.mxu0 0.0
  %2522 = vmatprep.subr.mxu0 0.0
  %2523 = vmatpush2.msra.mxu0 0.0
  %2524 = vmatprep.subr.mxu0 0.0
  %2525 = vmatpush2.msra.mxu0 0.0
  %2526 = vmatprep.subr.mxu0 0.0
  %2527 = vmatpush2.msra.mxu0 0.0
  %2528 = vmatprep.subr.mxu0 0.0
  %2529 = vmatpush2.msra.mxu0 0.0
  %2530 = vmatprep.subr.mxu0 0.0
  %2531 = vmatpush2.msra.mxu0 0.0
  %2532 = vmatprep.subr.mxu0 0.0
  %2533 = vmatpush2.msra.mxu0 0.0
  %2534 = vmatprep.subr.mxu0 0.0
  %2535 = vmatpush2.msra.mxu0 0.0
  %2536 = vmatprep.subr.mxu0 0.0
  %2537 = vmatpush2.msra.mxu0 0.0
  %2538 = vmatprep.subr.mxu0 0.0
  %2539 = vmatpush2.msra.mxu0 0.0
  %2540 = vmatprep.subr.mxu0 0.0
  %2541 = vmatpush2.msra.mxu0 0.0
  %2542 = vmatprep.subr.mxu0 0.0
  %2543 = vmatpush2.msra.mxu0 0.0
  %2544 = vmatprep.mubr.f32.mxu0 0.0
  %2545 = vmatmul.mubr.f32.gmra.mxu0 %v2463
  %v2546 = vpop.f32.mrf.mxu0
  %v2547 = vadd.f32 0.0, %v2546
  %v2548 = vpop.f32.mrf.mxu0
  %2549 = vdwg.mxu0
  %v2550 = vld [vmem:[%s8] sm:$0xff]
  %v2551 = vld [vmem:[%s8 + $0x8] sm:$0xff]
  %v2552 = vld [vmem:[%s8 + $0x10] sm:$0xff]
  %v2553 = vld [vmem:[%s8 + $0x18] sm:$0xff]
  %v2554 = vld [vmem:[%s8 + $0x20] sm:$0xff]
  %v2555 = vld [vmem:[%s8 + $0x28] sm:$0xff]
  %v2556 = vld [vmem:[%s8 + $0x30] sm:$0xff]
  %v2557 = vld [vmem:[%s8 + $0x38] sm:$0xff]
  %v2558 = vld [vmem:[%s8 + $0x40] sm:$0xff]
  %v2559 = vld [vmem:[%s8 + $0x48] sm:$0xff]
  %v2560 = vld [vmem:[%s8 + $0x50] sm:$0xff]
  %v2561 = vld [vmem:[%s8 + $0x58] sm:$0xff]
  %v2562 = vld [vmem:[%s8 + $0x60] sm:$0xff]
  %v2563 = vld [vmem:[%s8 + $0x68] sm:$0xff]
  %v2564 = vld [vmem:[%s8 + $0x70] sm:$0xff]
  %v2565 = vld [vmem:[%s8 + $0x78] sm:$0xff]
  %2566 = vmatprep.subr.mxu0 0.0
  %2567 = vmatpush1.msra.mxu0 %v2565
  %2568 = vmatprep.subr.mxu0 0.0
  %2569 = vmatpush1.msra.mxu0 %v2564
  %2570 = vmatprep.subr.mxu0 0.0
  %2571 = vmatpush1.msra.mxu0 %v2563
  %2572 = vmatprep.subr.mxu0 0.0
  %2573 = vmatpush1.msra.mxu0 %v2562
  %2574 = vmatprep.subr.mxu0 0.0
  %2575 = vmatpush1.msra.mxu0 %v2561
  %2576 = vmatprep.subr.mxu0 0.0
  %2577 = vmatpush1.msra.mxu0 %v2560
  %2578 = vmatprep.subr.mxu0 0.0
  %2579 = vmatpush1.msra.mxu0 %v2559
  %2580 = vmatprep.subr.mxu0 0.0
  %2581 = vmatpush1.msra.mxu0 %v2558
  %2582 = vmatprep.subr.mxu0 0.0
  %2583 = vmatpush1.msra.mxu0 %v2557
  %2584 = vmatprep.subr.mxu0 0.0
  %2585 = vmatpush1.msra.mxu0 %v2556
  %2586 = vmatprep.subr.mxu0 0.0
  %2587 = vmatpush1.msra.mxu0 %v2555
  %2588 = vmatprep.subr.mxu0 0.0
  %2589 = vmatpush1.msra.mxu0 %v2554
  %2590 = vmatprep.subr.mxu0 0.0
  %2591 = vmatpush1.msra.mxu0 %v2553
  %2592 = vmatprep.subr.mxu0 0.0
  %2593 = vmatpush1.msra.mxu0 %v2552
  %2594 = vmatprep.subr.mxu0 0.0
  %2595 = vmatpush1.msra.mxu0 %v2551
  %2596 = vmatprep.subr.mxu0 0.0
  %2597 = vmatpush1.msra.mxu0 %v2550
  %2598 = vmatprep.subr.mxu0 0.0
  %2599 = vmatpush2.msra.mxu0 0.0
  %2600 = vmatprep.subr.mxu0 0.0
  %2601 = vmatpush2.msra.mxu0 0.0
  %2602 = vmatprep.subr.mxu0 0.0
  %2603 = vmatpush2.msra.mxu0 0.0
  %2604 = vmatprep.subr.mxu0 0.0
  %2605 = vmatpush2.msra.mxu0 0.0
  %2606 = vmatprep.subr.mxu0 0.0
  %2607 = vmatpush2.msra.mxu0 0.0
  %2608 = vmatprep.subr.mxu0 0.0
  %2609 = vmatpush2.msra.mxu0 0.0
  %2610 = vmatprep.subr.mxu0 0.0
  %2611 = vmatpush2.msra.mxu0 0.0
  %2612 = vmatprep.subr.mxu0 0.0
  %2613 = vmatpush2.msra.mxu0 0.0
  %2614 = vmatprep.subr.mxu0 0.0
  %2615 = vmatpush2.msra.mxu0 0.0
  %2616 = vmatprep.subr.mxu0 0.0
  %2617 = vmatpush2.msra.mxu0 0.0
  %2618 = vmatprep.subr.mxu0 0.0
  %2619 = vmatpush2.msra.mxu0 0.0
  %2620 = vmatprep.subr.mxu0 0.0
  %2621 = vmatpush2.msra.mxu0 0.0
  %2622 = vmatprep.subr.mxu0 0.0
  %2623 = vmatpush2.msra.mxu0 0.0
  %2624 = vmatprep.subr.mxu0 0.0
  %2625 = vmatpush2.msra.mxu0 0.0
  %2626 = vmatprep.subr.mxu0 0.0
  %2627 = vmatpush2.msra.mxu0 0.0
  %2628 = vmatprep.subr.mxu0 0.0
  %2629 = vmatpush2.msra.mxu0 0.0
  %2630 = vmatprep.mubr.f32.mxu0 0.0
  %2631 = vmatmul.mubr.f32.gmra.mxu0 %v2463
  %v2632 = vpop.f32.mrf.mxu0
  %v2633 = vadd.f32 0.0, %v2632
  %v2634 = vpop.f32.mrf.mxu0
  %2635 = vdwg.mxu0
  %v2636 = vmax.f32 %v2547, %v2633
  %v2637 = vld [vmem:[%s9] sm:$0xf]
  %v2639 = vsel %vm2150, %v2637, 0
  %2641 = vmatprep.subr.mxu0 0.0
  %2642 = vmatpush1.msra.mxu0 0.0
  %2643 = vmatprep.subr.mxu0 0.0
  %2644 = vmatpush1.msra.mxu0 0.0
  %2645 = vmatprep.subr.mxu0 0.0
  %2646 = vmatpush1.msra.mxu0 0.0
  %2647 = vmatprep.subr.mxu0 0.0
  %2648 = vmatpush1.msra.mxu0 0.0
  %2649 = vmatprep.subr.mxu0 0.0
  %2650 = vmatpush1.msra.mxu0 0.0
  %2651 = vmatprep.subr.mxu0 0.0
  %2652 = vmatpush1.msra.mxu0 0.0
  %2653 = vmatprep.subr.mxu0 0.0
  %2654 = vmatpush1.msra.mxu0 0.0
  %2655 = vmatprep.subr.mxu0 0.0
  %2656 = vmatpush1.msra.mxu0 0.0
  %2657 = vmatprep.subr.mxu0 0.0
  %2658 = vmatpush1.msra.mxu0 0.0
  %2659 = vmatprep.subr.mxu0 0.0
  %2660 = vmatpush1.msra.mxu0 0.0
  %2661 = vmatprep.subr.mxu0 0.0
  %2662 = vmatpush1.msra.mxu0 0.0
  %2663 = vmatprep.subr.mxu0 0.0
  %2664 = vmatpush1.msra.mxu0 0.0
  %2665 = vmatprep.subr.mxu0 0.0
  %2666 = vmatpush1.msra.mxu0 0.0
  %2667 = vmatprep.subr.mxu0 0.0
  %2668 = vmatpush1.msra.mxu0 0.0
  %2669 = vmatprep.subr.mxu0 0.0
  %2670 = vmatpush1.msra.mxu0 0.0
  %2671 = vmatprep.subr.mxu0 0.0
  %2672 = vmatpush1.msra.mxu0 %v2636
  %2673 = vmatprep.subr.mxu0 0.0
  %2674 = vmatpush2.msra.mxu0 0.0
  %2675 = vmatprep.subr.mxu0 0.0
  %2676 = vmatpush2.msra.mxu0 0.0
  %2677 = vmatprep.subr.mxu0 0.0
  %2678 = vmatpush2.msra.mxu0 0.0
  %2679 = vmatprep.subr.mxu0 0.0
  %2680 = vmatpush2.msra.mxu0 0.0
  %2681 = vmatprep.subr.mxu0 0.0
  %2682 = vmatpush2.msra.mxu0 0.0
  %2683 = vmatprep.subr.mxu0 0.0
  %2684 = vmatpush2.msra.mxu0 0.0
  %2685 = vmatprep.subr.mxu0 0.0
  %2686 = vmatpush2.msra.mxu0 0.0
  %2687 = vmatprep.subr.mxu0 0.0
  %2688 = vmatpush2.msra.mxu0 0.0
  %2689 = vmatprep.subr.mxu0 0.0
  %2690 = vmatpush2.msra.mxu0 0.0
  %2691 = vmatprep.subr.mxu0 0.0
  %2692 = vmatpush2.msra.mxu0 0.0
  %2693 = vmatprep.subr.mxu0 0.0
  %2694 = vmatpush2.msra.mxu0 0.0
  %2695 = vmatprep.subr.mxu0 0.0
  %2696 = vmatpush2.msra.mxu0 0.0
  %2697 = vmatprep.subr.mxu0 0.0
  %2698 = vmatpush2.msra.mxu0 0.0
  %2699 = vmatprep.subr.mxu0 0.0
  %2700 = vmatpush2.msra.mxu0 0.0
  %2701 = vmatprep.subr.mxu0 0.0
  %2702 = vmatpush2.msra.mxu0 0.0
  %2703 = vmatprep.subr.mxu0 0.0
  %2704 = vmatpush2.msra.mxu0 0.0
  %2705 = vmatprep.mubr.f32.mxu0 0.0
  %2706 = vmatmul.mubr.f32.gmra.mxu0 %v2639
  %v2707 = vpop.f32.mrf.mxu0
  %v2708 = vadd.f32 0.0, %v2707
  %v2709 = vpop.f32.mrf.mxu0
  %2710 = vdwg.mxu0
  %v2711 = vld [vmem:[%s10] sm:$0xf]
  %v2713 = vsel %vm2150, %v2711, 0
  %2715 = vmatprep.subr.mxu0 0.0
  %2716 = vmatpush1.msra.mxu0 0.0
  %2717 = vmatprep.subr.mxu0 0.0
  %2718 = vmatpush1.msra.mxu0 0.0
  %2719 = vmatprep.subr.mxu0 0.0
  %2720 = vmatpush1.msra.mxu0 0.0
  %2721 = vmatprep.subr.mxu0 0.0
  %2722 = vmatpush1.msra.mxu0 0.0
  %2723 = vmatprep.subr.mxu0 0.0
  %2724 = vmatpush1.msra.mxu0 0.0
  %2725 = vmatprep.subr.mxu0 0.0
  %2726 = vmatpush1.msra.mxu0 0.0
  %2727 = vmatprep.subr.mxu0 0.0
  %2728 = vmatpush1.msra.mxu0 0.0
  %2729 = vmatprep.subr.mxu0 0.0
  %2730 = vmatpush1.msra.mxu0 0.0
  %2731 = vmatprep.subr.mxu0 0.0
  %2732 = vmatpush1.msra.mxu0 0.0
  %2733 = vmatprep.subr.mxu0 0.0
  %2734 = vmatpush1.msra.mxu0 0.0
  %2735 = vmatprep.subr.mxu0 0.0
  %2736 = vmatpush1.msra.mxu0 0.0
  %2737 = vmatprep.subr.mxu0 0.0
  %2738 = vmatpush1.msra.mxu0 0.0
  %2739 = vmatprep.subr.mxu0 0.0
  %2740 = vmatpush1.msra.mxu0 0.0
  %2741 = vmatprep.subr.mxu0 0.0
  %2742 = vmatpush1.msra.mxu0 0.0
  %2743 = vmatprep.subr.mxu0 0.0
  %2744 = vmatpush1.msra.mxu0 0.0
  %2745 = vmatprep.subr.mxu0 0.0
  %2746 = vmatpush1.msra.mxu0 %v2636
  %2747 = vmatprep.subr.mxu0 0.0
  %2748 = vmatpush2.msra.mxu0 0.0
  %2749 = vmatprep.subr.mxu0 0.0
  %2750 = vmatpush2.msra.mxu0 0.0
  %2751 = vmatprep.subr.mxu0 0.0
  %2752 = vmatpush2.msra.mxu0 0.0
  %2753 = vmatprep.subr.mxu0 0.0
  %2754 = vmatpush2.msra.mxu0 0.0
  %2755 = vmatprep.subr.mxu0 0.0
  %2756 = vmatpush2.msra.mxu0 0.0
  %2757 = vmatprep.subr.mxu0 0.0
  %2758 = vmatpush2.msra.mxu0 0.0
  %2759 = vmatprep.subr.mxu0 0.0
  %2760 = vmatpush2.msra.mxu0 0.0
  %2761 = vmatprep.subr.mxu0 0.0
  %2762 = vmatpush2.msra.mxu0 0.0
  %2763 = vmatprep.subr.mxu0 0.0
  %2764 = vmatpush2.msra.mxu0 0.0
  %2765 = vmatprep.subr.mxu0 0.0
  %2766 = vmatpush2.msra.mxu0 0.0
  %2767 = vmatprep.subr.mxu0 0.0
  %2768 = vmatpush2.msra.mxu0 0.0
  %2769 = vmatprep.subr.mxu0 0.0
  %2770 = vmatpush2.msra.mxu0 0.0
  %2771 = vmatprep.subr.mxu0 0.0
  %2772 = vmatpush2.msra.mxu0 0.0
  %2773 = vmatprep.subr.mxu0 0.0
  %2774 = vmatpush2.msra.mxu0 0.0
  %2775 = vmatprep.subr.mxu0 0.0
  %2776 = vmatpush2.msra.mxu0 0.0
  %2777 = vmatprep.subr.mxu0 0.0
  %2778 = vmatpush2.msra.mxu0 0.0
  %2779 = vmatprep.mubr.f32.mxu0 0.0
  %2780 = vmatmul.mubr.f32.gmra.mxu0 %v2713
  %v2781 = vpop.f32.mrf.mxu0
  %v2782 = vadd.f32 0.0, %v2781
  %v2783 = vpop.f32.mrf.mxu0
  %2784 = vdwg.mxu0
  %v2785 = vmax.f32 %v2708, %v2782
  %v2786 = vld [vmem:[%s11] sm:$0x3f]
  %v2788 = vsel %vm2300, %v2786, 0
  %v2791 = vsel %vm2304, %v2785, 0
  %2793 = vmatprep.subr.mxu0 0.0
  %2794 = vmatpush1.msra.mxu0 0.0
  %2795 = vmatprep.subr.mxu0 0.0
  %2796 = vmatpush1.msra.mxu0 0.0
  %2797 = vmatprep.subr.mxu0 0.0
  %2798 = vmatpush1.msra.mxu0 0.0
  %2799 = vmatprep.subr.mxu0 0.0
  %2800 = vmatpush1.msra.mxu0 0.0
  %2801 = vmatprep.subr.mxu0 0.0
  %2802 = vmatpush1.msra.mxu0 0.0
  %2803 = vmatprep.subr.mxu0 0.0
  %2804 = vmatpush1.msra.mxu0 0.0
  %2805 = vmatprep.subr.mxu0 0.0
  %2806 = vmatpush1.msra.mxu0 0.0
  %2807 = vmatprep.subr.mxu0 0.0
  %2808 = vmatpush1.msra.mxu0 0.0
  %2809 = vmatprep.subr.mxu0 0.0
  %2810 = vmatpush1.msra.mxu0 0.0
  %2811 = vmatprep.subr.mxu0 0.0
  %2812 = vmatpush1.msra.mxu0 0.0
  %2813 = vmatprep.subr.mxu0 0.0
  %2814 = vmatpush1.msra.mxu0 0.0
  %2815 = vmatprep.subr.mxu0 0.0
  %2816 = vmatpush1.msra.mxu0 0.0
  %2817 = vmatprep.subr.mxu0 0.0
  %2818 = vmatpush1.msra.mxu0 0.0
  %2819 = vmatprep.subr.mxu0 0.0
  %2820 = vmatpush1.msra.mxu0 0.0
  %2821 = vmatprep.subr.mxu0 0.0
  %2822 = vmatpush1.msra.mxu0 0.0
  %2823 = vmatprep.subr.mxu0 0.0
  %2824 = vmatpush1.msra.mxu0 %v2791
  %2825 = vmatprep.subr.mxu0 0.0
  %2826 = vmatpush2.msra.mxu0 0.0
  %2827 = vmatprep.subr.mxu0 0.0
  %2828 = vmatpush2.msra.mxu0 0.0
  %2829 = vmatprep.subr.mxu0 0.0
  %2830 = vmatpush2.msra.mxu0 0.0
  %2831 = vmatprep.subr.mxu0 0.0
  %2832 = vmatpush2.msra.mxu0 0.0
  %2833 = vmatprep.subr.mxu0 0.0
  %2834 = vmatpush2.msra.mxu0 0.0
  %2835 = vmatprep.subr.mxu0 0.0
  %2836 = vmatpush2.msra.mxu0 0.0
  %2837 = vmatprep.subr.mxu0 0.0
  %2838 = vmatpush2.msra.mxu0 0.0
  %2839 = vmatprep.subr.mxu0 0.0
  %2840 = vmatpush2.msra.mxu0 0.0
  %2841 = vmatprep.subr.mxu0 0.0
  %2842 = vmatpush2.msra.mxu0 0.0
  %2843 = vmatprep.subr.mxu0 0.0
  %2844 = vmatpush2.msra.mxu0 0.0
  %2845 = vmatprep.subr.mxu0 0.0
  %2846 = vmatpush2.msra.mxu0 0.0
  %2847 = vmatprep.subr.mxu0 0.0
  %2848 = vmatpush2.msra.mxu0 0.0
  %2849 = vmatprep.subr.mxu0 0.0
  %2850 = vmatpush2.msra.mxu0 0.0
  %2851 = vmatprep.subr.mxu0 0.0
  %2852 = vmatpush2.msra.mxu0 0.0
  %2853 = vmatprep.subr.mxu0 0.0
  %2854 = vmatpush2.msra.mxu0 0.0
  %2855 = vmatprep.subr.mxu0 0.0
  %2856 = vmatpush2.msra.mxu0 0.0
  %2857 = vmatprep.mubr.f32.mxu0 0.0
  %2858 = vmatmul.mubr.f32.gmra.mxu0 %v2788
  %v2859 = vpop.f32.mrf.mxu0
  %v2860 = vadd.f32 0.0, %v2859
  %v2861 = vpop.f32.mrf.mxu0
  %2862 = vdwg.mxu0
  %v2863 = vld [vmem:[%s12] sm:$0xff]
  %v2864 = vld [vmem:[%s12 + $0x8] sm:$0xff]
  %v2865 = vld [vmem:[%s12 + $0x10] sm:$0xff]
  %v2866 = vld [vmem:[%s12 + $0x18] sm:$0xff]
  %v2867 = vld [vmem:[%s12 + $0x20] sm:$0xff]
  %v2868 = vld [vmem:[%s12 + $0x28] sm:$0xff]
  %v2869 = vld [vmem:[%s12 + $0x30] sm:$0xff]
  %v2870 = vld [vmem:[%s12 + $0x38] sm:$0xff]
  %v2872 = vsel %vm65, %v2860, 0
  %2874 = vmatprep.subr.mxu0 0.0
  %2875 = vmatpush1.msra.mxu0 0.0
  %2876 = vmatprep.subr.mxu0 0.0
  %2877 = vmatpush1.msra.mxu0 0.0
  %2878 = vmatprep.subr.mxu0 0.0
  %2879 = vmatpush1.msra.mxu0 0.0
  %2880 = vmatprep.subr.mxu0 0.0
  %2881 = vmatpush1.msra.mxu0 0.0
  %2882 = vmatprep.subr.mxu0 0.0
  %2883 = vmatpush1.msra.mxu0 0.0
  %2884 = vmatprep.subr.mxu0 0.0
  %2885 = vmatpush1.msra.mxu0 0.0
  %2886 = vmatprep.subr.mxu0 0.0
  %2887 = vmatpush1.msra.mxu0 0.0
  %2888 = vmatprep.subr.mxu0 0.0
  %2889 = vmatpush1.msra.mxu0 0.0
  %2890 = vmatprep.subr.mxu0 0.0
  %2891 = vmatpush1.msra.mxu0 %v2870
  %2892 = vmatprep.subr.mxu0 0.0
  %2893 = vmatpush1.msra.mxu0 %v2869
  %2894 = vmatprep.subr.mxu0 0.0
  %2895 = vmatpush1.msra.mxu0 %v2868
  %2896 = vmatprep.subr.mxu0 0.0
  %2897 = vmatpush1.msra.mxu0 %v2867
  %2898 = vmatprep.subr.mxu0 0.0
  %2899 = vmatpush1.msra.mxu0 %v2866
  %2900 = vmatprep.subr.mxu0 0.0
  %2901 = vmatpush1.msra.mxu0 %v2865
  %2902 = vmatprep.subr.mxu0 0.0
  %2903 = vmatpush1.msra.mxu0 %v2864
  %2904 = vmatprep.subr.mxu0 0.0
  %2905 = vmatpush1.msra.mxu0 %v2863
  %2906 = vmatprep.subr.mxu0 0.0
  %2907 = vmatpush2.msra.mxu0 0.0
  %2908 = vmatprep.subr.mxu0 0.0
  %2909 = vmatpush2.msra.mxu0 0.0
  %2910 = vmatprep.subr.mxu0 0.0
  %2911 = vmatpush2.msra.mxu0 0.0
  %2912 = vmatprep.subr.mxu0 0.0
  %2913 = vmatpush2.msra.mxu0 0.0
  %2914 = vmatprep.subr.mxu0 0.0
  %2915 = vmatpush2.msra.mxu0 0.0
  %2916 = vmatprep.subr.mxu0 0.0
  %2917 = vmatpush2.msra.mxu0 0.0
  %2918 = vmatprep.subr.mxu0 0.0
  %2919 = vmatpush2.msra.mxu0 0.0
  %2920 = vmatprep.subr.mxu0 0.0
  %2921 = vmatpush2.msra.mxu0 0.0
  %2922 = vmatprep.subr.mxu0 0.0
  %2923 = vmatpush2.msra.mxu0 0.0
  %2924 = vmatprep.subr.mxu0 0.0
  %2925 = vmatpush2.msra.mxu0 0.0
  %2926 = vmatprep.subr.mxu0 0.0
  %2927 = vmatpush2.msra.mxu0 0.0
  %2928 = vmatprep.subr.mxu0 0.0
  %2929 = vmatpush2.msra.mxu0 0.0
  %2930 = vmatprep.subr.mxu0 0.0
  %2931 = vmatpush2.msra.mxu0 0.0
  %2932 = vmatprep.subr.mxu0 0.0
  %2933 = vmatpush2.msra.mxu0 0.0
  %2934 = vmatprep.subr.mxu0 0.0
  %2935 = vmatpush2.msra.mxu0 0.0
  %2936 = vmatprep.subr.mxu0 0.0
  %2937 = vmatpush2.msra.mxu0 0.0
  %2938 = vmatprep.mubr.f32.mxu0 0.0
  %2939 = vmatmul.mubr.f32.gmra.mxu0 %v2872
  %v2940 = vpop.f32.mrf.mxu0
  %v2941 = vadd.f32 0.0, %v2940
  %v2942 = vpop.f32.mrf.mxu0
  %2943 = vdwg.mxu0
  %s2944 = scalar_lea.vmem %s13, 8
  %2945 = vst.msk [vmem:[%s2944] sm:$0x3f] %vm2459, %v2941
  // Predicated region
  $region54: #{cnn_forward.5} parent=0 // pred_check
    _
  $region55: #{cnn_forward.5} parent=0 // pred_check_branch
    %2947 = sbr.rel (0) target = $region57
  $region56: #{cnn_forward.5} parent=0 // pred_region
    _
  $region57: #{cnn_forward.5} parent=0 // pred_fallthru
    _
  // Predicated region
  $region58: #{cnn_forward.5} parent=0 // pred_check
    _
  $region59: #{cnn_forward.5} parent=0 // pred_check_branch
    %2949 = sbr.rel (0) target = $region61
  $region60: #{cnn_forward.5} parent=0 // pred_region
    _
  $region61: #{cnn_forward.5} parent=0 // pred_fallthru
    _

// kernel: cnn_forward.7
$region0: #{cnn_forward.7}
  #allocation0 [shape = 'u32[]', space=smem, size = 0x4, offset = 0x4, fixed_abs, tag = 'smem constant byte address 0x4 - core index']
  #allocation1 [shape = 'u32[144,128]{1,0:T(1,128)}', space=vmem, size = 0x12000, scoped, tag = 'internal scratch']
  %s0 = inlined_call_operand.vmem [shape: f32[8,128], index: 0, kind: input, shape index: {}]
  %s1 = inlined_call_operand.vmem [shape: f32[128,32], index: 1, kind: input, shape index: {}]
  %s2 = inlined_call_operand.vmem [shape: f32[1,32], index: 2, kind: input, shape index: {}]
  %s3 = inlined_call_operand.vmem [shape: f32[32,10], index: 3, kind: input, shape index: {}]
  %s4 = inlined_call_operand.vmem [shape: f32[1,10], index: 4, kind: input, shape index: {}]
  %s5 = inlined_call_operand.vmem [shape: f32[8,10], index: 5, kind: output, shape index: {}]
  %s6 = sld [smem:[#allocation0]]
  $region30: #{cnn_forward.7} parent=0
    _
  %s8 = ssub.s32 1, %s6
  %s9 = scalar_select 0, %s8, %s6
  // Predicated region
  $region2: #{cnn_forward.7} parent=0 // pred_check
    _
  $region3: #{cnn_forward.7} parent=0 // pred_check_branch
    %11 = sbr.rel (0) target = $region5
  $region4: #{cnn_forward.7} parent=0 // pred_region
    _
  $region5: #{cnn_forward.7} parent=0 // pred_fallthru
    _
  // Predicated region
  $region6: #{cnn_forward.7} parent=0 // pred_check
    _
  $region7: #{cnn_forward.7} parent=0 // pred_check_branch
    %13 = sbr.rel (0) target = $region9
  $region8: #{cnn_forward.7} parent=0 // pred_region
    _
  $region9: #{cnn_forward.7} parent=0 // pred_fallthru
    _
  // Predicated region
  $region10: #{cnn_forward.7} parent=0 // pred_check
    _
  $region11: #{cnn_forward.7} parent=0 // pred_check_branch
    %15 = sbr.rel (0) target = $region13
  $region12: #{cnn_forward.7} parent=0 // pred_region
    _
  $region13: #{cnn_forward.7} parent=0 // pred_fallthru
    _
  // Predicated region
  $region14: #{cnn_forward.7} parent=0 // pred_check
    _
  $region15: #{cnn_forward.7} parent=0 // pred_check_branch
    %17 = sbr.rel (0) target = $region17
  $region16: #{cnn_forward.7} parent=0 // pred_region
    _
  $region17: #{cnn_forward.7} parent=0 // pred_fallthru
    _
  // Predicated region
  $region18: #{cnn_forward.7} parent=0 // pred_check
    _
  $region19: #{cnn_forward.7} parent=0 // pred_check_branch
    %19 = sbr.rel (0) target = $region21
  $region20: #{cnn_forward.7} parent=0 // pred_region
    _
  $region21: #{cnn_forward.7} parent=0 // pred_fallthru
    _
  %v20 = vld [vmem:[%s0] sm:$0xff]
  %v21 = vld [vmem:[%s1] sm:$0xff]
  %v22 = vld [vmem:[%s1 + $0x8] sm:$0xff]
  %v23 = vld [vmem:[%s1 + $0x10] sm:$0xff]
  %v24 = vld [vmem:[%s1 + $0x18] sm:$0xff]
  %v25 = vld [vmem:[%s1 + $0x20] sm:$0xff]
  %v26 = vld [vmem:[%s1 + $0x28] sm:$0xff]
  %v27 = vld [vmem:[%s1 + $0x30] sm:$0xff]
  %v28 = vld [vmem:[%s1 + $0x38] sm:$0xff]
  %v29 = vld [vmem:[%s1 + $0x40] sm:$0xff]
  %v30 = vld [vmem:[%s1 + $0x48] sm:$0xff]
  %v31 = vld [vmem:[%s1 + $0x50] sm:$0xff]
  %v32 = vld [vmem:[%s1 + $0x58] sm:$0xff]
  %v33 = vld [vmem:[%s1 + $0x60] sm:$0xff]
  %v34 = vld [vmem:[%s1 + $0x68] sm:$0xff]
  %v35 = vld [vmem:[%s1 + $0x70] sm:$0xff]
  %v36 = vld [vmem:[%s1 + $0x78] sm:$0xff]
  %v37 = vld [vmem:[%s2] sm:$0x1]
  %v39 = vlaneseq
  %v40 = vshrl.u32 %v39, 7
  %v41 = vsub.s32 0, %v40
  %v42 = vrot.slane %v37, %v41
  %44 = vmatprep.subr.mxu0 0.0
  %45 = vmatpush1.msra.mxu0 %v36
  %46 = vmatprep.subr.mxu0 0.0
  %47 = vmatpush1.msra.mxu0 %v35
  %48 = vmatprep.subr.mxu0 0.0
  %49 = vmatpush1.msra.mxu0 %v34
  %50 = vmatprep.subr.mxu0 0.0
  %51 = vmatpush1.msra.mxu0 %v33
  %52 = vmatprep.subr.mxu0 0.0
  %53 = vmatpush1.msra.mxu0 %v32
  %54 = vmatprep.subr.mxu0 0.0
  %55 = vmatpush1.msra.mxu0 %v31
  %56 = vmatprep.subr.mxu0 0.0
  %57 = vmatpush1.msra.mxu0 %v30
  %58 = vmatprep.subr.mxu0 0.0
  %59 = vmatpush1.msra.mxu0 %v29
  %60 = vmatprep.subr.mxu0 0.0
  %61 = vmatpush1.msra.mxu0 %v28
  %62 = vmatprep.subr.mxu0 0.0
  %63 = vmatpush1.msra.mxu0 %v27
  %64 = vmatprep.subr.mxu0 0.0
  %65 = vmatpush1.msra.mxu0 %v26
  %66 = vmatprep.subr.mxu0 0.0
  %67 = vmatpush1.msra.mxu0 %v25
  %68 = vmatprep.subr.mxu0 0.0
  %69 = vmatpush1.msra.mxu0 %v24
  %70 = vmatprep.subr.mxu0 0.0
  %71 = vmatpush1.msra.mxu0 %v23
  %72 = vmatprep.subr.mxu0 0.0
  %73 = vmatpush1.msra.mxu0 %v22
  %74 = vmatprep.subr.mxu0 0.0
  %75 = vmatpush1.msra.mxu0 %v21
  %76 = vmatprep.subr.mxu0 0.0
  %77 = vmatpush2.msra.mxu0 0.0
  %78 = vmatprep.subr.mxu0 0.0
  %79 = vmatpush2.msra.mxu0 0.0
  %80 = vmatprep.subr.mxu0 0.0
  %81 = vmatpush2.msra.mxu0 0.0
  %82 = vmatprep.subr.mxu0 0.0
  %83 = vmatpush2.msra.mxu0 0.0
  %84 = vmatprep.subr.mxu0 0.0
  %85 = vmatpush2.msra.mxu0 0.0
  %86 = vmatprep.subr.mxu0 0.0
  %87 = vmatpush2.msra.mxu0 0.0
  %88 = vmatprep.subr.mxu0 0.0
  %89 = vmatpush2.msra.mxu0 0.0
  %90 = vmatprep.subr.mxu0 0.0
  %91 = vmatpush2.msra.mxu0 0.0
  %92 = vmatprep.subr.mxu0 0.0
  %93 = vmatpush2.msra.mxu0 0.0
  %94 = vmatprep.subr.mxu0 0.0
  %95 = vmatpush2.msra.mxu0 0.0
  %96 = vmatprep.subr.mxu0 0.0
  %97 = vmatpush2.msra.mxu0 0.0
  %98 = vmatprep.subr.mxu0 0.0
  %99 = vmatpush2.msra.mxu0 0.0
  %100 = vmatprep.subr.mxu0 0.0
  %101 = vmatpush2.msra.mxu0 0.0
  %102 = vmatprep.subr.mxu0 0.0
  %103 = vmatpush2.msra.mxu0 0.0
  %104 = vmatprep.subr.mxu0 0.0
  %105 = vmatpush2.msra.mxu0 0.0
  %106 = vmatprep.subr.mxu0 0.0
  %107 = vmatpush2.msra.mxu0 0.0
  %108 = vmatprep.mubr.f32.mxu0 0.0
  %109 = vmatmul.mubr.f32.gmra.mxu0 %v20
  %v110 = vpop.f32.mrf.mxu0
  %v111 = vadd.f32 %v42, %v110
  %v112 = vpop.f32.mrf.mxu0
  %113 = vdwg.mxu0
  %v114 = vmax.f32 %v111, 0.0
  %v115 = vld [vmem:[%s3] sm:$0xff]
  %v116 = vld [vmem:[%s3 + $0x8] sm:$0xff]
  %v117 = vld [vmem:[%s3 + $0x10] sm:$0xff]
  %v118 = vld [vmem:[%s3 + $0x18] sm:$0xff]
  %v119 = vld [vmem:[%s4] sm:$0x1]
  %v121 = vlaneseq
  %v122 = vshrl.u32 %v121, 7
  %v123 = vsub.s32 0, %v122
  %v124 = vrot.slane %v119, %v123
  %vm126 = vcmask 261120
  %v128 = vsel %vm126, %v114, 0
  %130 = vmatprep.subr.mxu0 0.0
  %131 = vmatpush1.msra.mxu0 0.0
  %132 = vmatprep.subr.mxu0 0.0
  %133 = vmatpush1.msra.mxu0 0.0
  %134 = vmatprep.subr.mxu0 0.0
  %135 = vmatpush1.msra.mxu0 0.0
  %136 = vmatprep.subr.mxu0 0.0
  %137 = vmatpush1.msra.mxu0 0.0
  %138 = vmatprep.subr.mxu0 0.0
  %139 = vmatpush1.msra.mxu0 0.0
  %140 = vmatprep.subr.mxu0 0.0
  %141 = vmatpush1.msra.mxu0 0.0
  %142 = vmatprep.subr.mxu0 0.0
  %143 = vmatpush1.msra.mxu0 0.0
  %144 = vmatprep.subr.mxu0 0.0
  %145 = vmatpush1.msra.mxu0 0.0
  %146 = vmatprep.subr.mxu0 0.0
  %147 = vmatpush1.msra.mxu0 0.0
  %148 = vmatprep.subr.mxu0 0.0
  %149 = vmatpush1.msra.mxu0 0.0
  %150 = vmatprep.subr.mxu0 0.0
  %151 = vmatpush1.msra.mxu0 0.0
  %152 = vmatprep.subr.mxu0 0.0
  %153 = vmatpush1.msra.mxu0 0.0
  %154 = vmatprep.subr.mxu0 0.0
  %155 = vmatpush1.msra.mxu0 %v118
  %156 = vmatprep.subr.mxu0 0.0
  %157 = vmatpush1.msra.mxu0 %v117
  %158 = vmatprep.subr.mxu0 0.0
  %159 = vmatpush1.msra.mxu0 %v116
  %160 = vmatprep.subr.mxu0 0.0
  %161 = vmatpush1.msra.mxu0 %v115
  %162 = vmatprep.subr.mxu0 0.0
  %163 = vmatpush2.msra.mxu0 0.0
  %164 = vmatprep.subr.mxu0 0.0
  %165 = vmatpush2.msra.mxu0 0.0
  %166 = vmatprep.subr.mxu0 0.0
  %167 = vmatpush2.msra.mxu0 0.0
  %168 = vmatprep.subr.mxu0 0.0
  %169 = vmatpush2.msra.mxu0 0.0
  %170 = vmatprep.subr.mxu0 0.0
  %171 = vmatpush2.msra.mxu0 0.0
  %172 = vmatprep.subr.mxu0 0.0
  %173 = vmatpush2.msra.mxu0 0.0
  %174 = vmatprep.subr.mxu0 0.0
  %175 = vmatpush2.msra.mxu0 0.0
  %176 = vmatprep.subr.mxu0 0.0
  %177 = vmatpush2.msra.mxu0 0.0
  %178 = vmatprep.subr.mxu0 0.0
  %179 = vmatpush2.msra.mxu0 0.0
  %180 = vmatprep.subr.mxu0 0.0
  %181 = vmatpush2.msra.mxu0 0.0
  %182 = vmatprep.subr.mxu0 0.0
  %183 = vmatpush2.msra.mxu0 0.0
  %184 = vmatprep.subr.mxu0 0.0
  %185 = vmatpush2.msra.mxu0 0.0
  %186 = vmatprep.subr.mxu0 0.0
  %187 = vmatpush2.msra.mxu0 0.0
  %188 = vmatprep.subr.mxu0 0.0
  %189 = vmatpush2.msra.mxu0 0.0
  %190 = vmatprep.subr.mxu0 0.0
  %191 = vmatpush2.msra.mxu0 0.0
  %192 = vmatprep.subr.mxu0 0.0
  %193 = vmatpush2.msra.mxu0 0.0
  %194 = vmatprep.mubr.f32.mxu0 0.0
  %195 = vmatmul.mubr.f32.gmra.mxu0 %v128
  %v196 = vpop.f32.mrf.mxu0
  %v197 = vadd.f32 %v124, %v196
  %v198 = vpop.f32.mrf.mxu0
  %199 = vdwg.mxu0
  %vm200 = vcmask 80896
  %201 = vst.msk [vmem:[%s5] sm:$0xff] %vm200, %v197
  // Predicated region
  $region22: #{cnn_forward.7} parent=0 // pred_check
    _
  $region23: #{cnn_forward.7} parent=0 // pred_check_branch
    %203 = sbr.rel (0) target = $region25
  $region24: #{cnn_forward.7} parent=0 // pred_region
    _
  $region25: #{cnn_forward.7} parent=0 // pred_fallthru
    _
  // Predicated region
  $region26: #{cnn_forward.7} parent=0 // pred_check
    _
  $region27: #{cnn_forward.7} parent=0 // pred_check_branch
    %205 = sbr.rel (0) target = $region29
  $region28: #{cnn_forward.7} parent=0 // pred_region
    _
  $region29: #{cnn_forward.7} parent=0 // pred_fallthru
    _

// kernel: cnn_forward.6
$region0: #{cnn_forward.6}
  #allocation0 [shape = 'u32[]', space=smem, size = 0x4, offset = 0x4, fixed_abs, tag = 'smem constant byte address 0x4 - core index']
  #allocation1 [shape = 'u32[144,128]{1,0:T(1,128)}', space=vmem, size = 0x12000, scoped, tag = 'internal scratch']
  %s0 = inlined_call_operand.vmem [shape: f32[2,6,96], index: 0, kind: input, shape index: {}]
  %s1 = inlined_call_operand.vmem [shape: f32[9,64,128], index: 1, kind: input, shape index: {}]
  %s2 = inlined_call_operand.vmem [shape: f32[1,128], index: 2, kind: input, shape index: {}]
  %s3 = inlined_call_operand.vmem [shape: f32[1,32], index: 3, kind: input, shape index: {}]
  %s4 = inlined_call_operand.vmem [shape: f32[1,32], index: 4, kind: input, shape index: {}]
  %s5 = inlined_call_operand.vmem [shape: f32[128,32], index: 5, kind: input, shape index: {}]
  %s6 = inlined_call_operand.vmem [shape: f32[32,128], index: 6, kind: input, shape index: {}]
  %s7 = inlined_call_operand.vmem [shape: f32[128,64], index: 7, kind: input, shape index: {}]
  %s8 = inlined_call_operand.vmem [shape: f32[128,64], index: 8, kind: input, shape index: {}]
  %s9 = inlined_call_operand.vmem [shape: f32[2,4], index: 9, kind: input, shape index: {}]
  %s10 = inlined_call_operand.vmem [shape: f32[2,4], index: 10, kind: input, shape index: {}]
  %s11 = inlined_call_operand.vmem [shape: f32[2,2], index: 11, kind: input, shape index: {}]
  %s12 = inlined_call_operand.vmem [shape: f32[64,64], index: 12, kind: input, shape index: {}]
  %s13 = inlined_call_operand.vmem [shape: f32[2,2,64], index: 13, kind: output, shape index: {}]
  %s14 = sld [smem:[#allocation0]]
  $region62: #{cnn_forward.6} parent=0
    _
  %s16 = ssub.s32 1, %s14
  %s17 = scalar_select 0, %s16, %s14
  // Predicated region
  $region2: #{cnn_forward.6} parent=0 // pred_check
    _
  $region3: #{cnn_forward.6} parent=0 // pred_check_branch
    %19 = sbr.rel (0) target = $region5
  $region4: #{cnn_forward.6} parent=0 // pred_region
    _
  $region5: #{cnn_forward.6} parent=0 // pred_fallthru
    _
  // Predicated region
  $region6: #{cnn_forward.6} parent=0 // pred_check
    _
  $region7: #{cnn_forward.6} parent=0 // pred_check_branch
    %21 = sbr.rel (0) target = $region9
  $region8: #{cnn_forward.6} parent=0 // pred_region
    _
  $region9: #{cnn_forward.6} parent=0 // pred_fallthru
    _
  // Predicated region
  $region10: #{cnn_forward.6} parent=0 // pred_check
    _
  $region11: #{cnn_forward.6} parent=0 // pred_check_branch
    %23 = sbr.rel (0) target = $region13
  $region12: #{cnn_forward.6} parent=0 // pred_region
    _
  $region13: #{cnn_forward.6} parent=0 // pred_fallthru
    _
  // Predicated region
  $region14: #{cnn_forward.6} parent=0 // pred_check
    _
  $region15: #{cnn_forward.6} parent=0 // pred_check_branch
    %25 = sbr.rel (0) target = $region17
  $region16: #{cnn_forward.6} parent=0 // pred_region
    _
  $region17: #{cnn_forward.6} parent=0 // pred_fallthru
    _
  // Predicated region
  $region18: #{cnn_forward.6} parent=0 // pred_check
    _
  $region19: #{cnn_forward.6} parent=0 // pred_check_branch
    %27 = sbr.rel (0) target = $region21
  $region20: #{cnn_forward.6} parent=0 // pred_region
    _
  $region21: #{cnn_forward.6} parent=0 // pred_fallthru
    _
  // Predicated region
  $region22: #{cnn_forward.6} parent=0 // pred_check
    _
  $region23: #{cnn_forward.6} parent=0 // pred_check_branch
    %29 = sbr.rel (0) target = $region25
  $region24: #{cnn_forward.6} parent=0 // pred_region
    _
  $region25: #{cnn_forward.6} parent=0 // pred_fallthru
    _
  // Predicated region
  $region26: #{cnn_forward.6} parent=0 // pred_check
    _
  $region27: #{cnn_forward.6} parent=0 // pred_check_branch
    %31 = sbr.rel (0) target = $region29
  $region28: #{cnn_forward.6} parent=0 // pred_region
    _
  $region29: #{cnn_forward.6} parent=0 // pred_fallthru
    _
  // Predicated region
  $region30: #{cnn_forward.6} parent=0 // pred_check
    _
  $region31: #{cnn_forward.6} parent=0 // pred_check_branch
    %33 = sbr.rel (0) target = $region33
  $region32: #{cnn_forward.6} parent=0 // pred_region
    _
  $region33: #{cnn_forward.6} parent=0 // pred_fallthru
    _
  // Predicated region
  $region34: #{cnn_forward.6} parent=0 // pred_check
    _
  $region35: #{cnn_forward.6} parent=0 // pred_check_branch
    %35 = sbr.rel (0) target = $region37
  $region36: #{cnn_forward.6} parent=0 // pred_region
    _
  $region37: #{cnn_forward.6} parent=0 // pred_fallthru
    _
  // Predicated region
  $region38: #{cnn_forward.6} parent=0 // pred_check
    _
  $region39: #{cnn_forward.6} parent=0 // pred_check_branch
    %37 = sbr.rel (0) target = $region41
  $region40: #{cnn_forward.6} parent=0 // pred_region
    _
  $region41: #{cnn_forward.6} parent=0 // pred_fallthru
    _
  // Predicated region
  $region42: #{cnn_forward.6} parent=0 // pred_check
    _
  $region43: #{cnn_forward.6} parent=0 // pred_check_branch
    %39 = sbr.rel (0) target = $region45
  $region44: #{cnn_forward.6} parent=0 // pred_region
    _
  $region45: #{cnn_forward.6} parent=0 // pred_fallthru
    _
  // Predicated region
  $region46: #{cnn_forward.6} parent=0 // pred_check
    _
  $region47: #{cnn_forward.6} parent=0 // pred_check_branch
    %41 = sbr.rel (0) target = $region49
  $region48: #{cnn_forward.6} parent=0 // pred_region
    _
  $region49: #{cnn_forward.6} parent=0 // pred_fallthru
    _
  // Predicated region
  $region50: #{cnn_forward.6} parent=0 // pred_check
    _
  $region51: #{cnn_forward.6} parent=0 // pred_check_branch
    %43 = sbr.rel (0) target = $region53
  $region52: #{cnn_forward.6} parent=0 // pred_region
    _
  $region53: #{cnn_forward.6} parent=0 // pred_fallthru
    _
  %v44 = vld [vmem:[%s0] sm:$0xf]
  %v45 = vld [vmem:[%s1] sm:$0xff]
  %v46 = vld [vmem:[%s1 + $0x8] sm:$0xff]
  %v47 = vld [vmem:[%s1 + $0x10] sm:$0xff]
  %v48 = vld [vmem:[%s1 + $0x18] sm:$0xff]
  %v49 = vld [vmem:[%s1 + $0x20] sm:$0xff]
  %v50 = vld [vmem:[%s1 + $0x28] sm:$0xff]
  %v51 = vld [vmem:[%s1 + $0x30] sm:$0xff]
  %v52 = vld [vmem:[%s1 + $0x38] sm:$0xff]
  %s53 = scalar_lea.vmem %s1, 64
  %v54 = vld [vmem:[%s53] sm:$0xff]
  %v55 = vld [vmem:[%s53 + $0x8] sm:$0xff]
  %v56 = vld [vmem:[%s53 + $0x10] sm:$0xff]
  %v57 = vld [vmem:[%s53 + $0x18] sm:$0xff]
  %v58 = vld [vmem:[%s53 + $0x20] sm:$0xff]
  %v59 = vld [vmem:[%s53 + $0x28] sm:$0xff]
  %v60 = vld [vmem:[%s53 + $0x30] sm:$0xff]
  %v61 = vld [vmem:[%s53 + $0x38] sm:$0xff]
  %63 = vrot.lane.b32.xlu0 %v44, 112
  %v64 = vpop.permute.xlu0 %63
  %vm65 = vcmask 523264
  %v66 = vsel %vm65, %v64, 0
  %68 = vmatprep.subr.mxu0 0.0
  %69 = vmatpush1.msra.mxu0 0.0
  %70 = vmatprep.subr.mxu0 0.0
  %71 = vmatpush1.msra.mxu0 0.0
  %72 = vmatprep.subr.mxu0 0.0
  %73 = vmatpush1.msra.mxu0 0.0
  %74 = vmatprep.subr.mxu0 0.0
  %75 = vmatpush1.msra.mxu0 0.0
  %76 = vmatprep.subr.mxu0 0.0
  %77 = vmatpush1.msra.mxu0 0.0
  %78 = vmatprep.subr.mxu0 0.0
  %79 = vmatpush1.msra.mxu0 0.0
  %80 = vmatprep.subr.mxu0 0.0
  %81 = vmatpush1.msra.mxu0 0.0
  %82 = vmatprep.subr.mxu0 0.0
  %83 = vmatpush1.msra.mxu0 0.0
  %84 = vmatprep.subr.mxu0 0.0
  %85 = vmatpush1.msra.mxu0 %v61
  %86 = vmatprep.subr.mxu0 0.0
  %87 = vmatpush1.msra.mxu0 %v60
  %88 = vmatprep.subr.mxu0 0.0
  %89 = vmatpush1.msra.mxu0 %v59
  %90 = vmatprep.subr.mxu0 0.0
  %91 = vmatpush1.msra.mxu0 %v58
  %92 = vmatprep.subr.mxu0 0.0
  %93 = vmatpush1.msra.mxu0 %v57
  %94 = vmatprep.subr.mxu0 0.0
  %95 = vmatpush1.msra.mxu0 %v56
  %96 = vmatprep.subr.mxu0 0.0
  %97 = vmatpush1.msra.mxu0 %v55
  %98 = vmatprep.subr.mxu0 0.0
  %99 = vmatpush1.msra.mxu0 %v54
  %100 = vmatprep.subr.mxu0 0.0
  %101 = vmatpush2.msra.mxu0 0.0
  %102 = vmatprep.subr.mxu0 0.0
  %103 = vmatpush2.msra.mxu0 0.0
  %104 = vmatprep.subr.mxu0 0.0
  %105 = vmatpush2.msra.mxu0 0.0
  %106 = vmatprep.subr.mxu0 0.0
  %107 = vmatpush2.msra.mxu0 0.0
  %108 = vmatprep.subr.mxu0 0.0
  %109 = vmatpush2.msra.mxu0 0.0
  %110 = vmatprep.subr.mxu0 0.0
  %111 = vmatpush2.msra.mxu0 0.0
  %112 = vmatprep.subr.mxu0 0.0
  %113 = vmatpush2.msra.mxu0 0.0
  %114 = vmatprep.subr.mxu0 0.0
  %115 = vmatpush2.msra.mxu0 0.0
  %116 = vmatprep.subr.mxu0 0.0
  %117 = vmatpush2.msra.mxu0 0.0
  %118 = vmatprep.subr.mxu0 0.0
  %119 = vmatpush2.msra.mxu0 0.0
  %120 = vmatprep.subr.mxu0 0.0
  %121 = vmatpush2.msra.mxu0 0.0
  %122 = vmatprep.subr.mxu0 0.0
  %123 = vmatpush2.msra.mxu0 0.0
  %124 = vmatprep.subr.mxu0 0.0
  %125 = vmatpush2.msra.mxu0 0.0
  %126 = vmatprep.subr.mxu0 0.0
  %127 = vmatpush2.msra.mxu0 0.0
  %128 = vmatprep.subr.mxu0 0.0
  %129 = vmatpush2.msra.mxu0 0.0
  %130 = vmatprep.subr.mxu0 0.0
  %131 = vmatpush2.msra.mxu0 0.0
  %132 = vmatprep.mubr.f32.mxu0 0.0
  %133 = vmatmul.mubr.f32.gmra.mxu0 %v66
  %v134 = vpop.f32.mrf.mxu0
  %v135 = vadd.f32 0.0, %v134
  %v136 = vpop.f32.mrf.mxu0
  %137 = vdwg.mxu0
  %v138 = vsel %vm65, %v44, 0
  %140 = vmatprep.subr.mxu0 0.0
  %141 = vmatpush1.msra.mxu0 0.0
  %142 = vmatprep.subr.mxu0 0.0
  %143 = vmatpush1.msra.mxu0 0.0
  %144 = vmatprep.subr.mxu0 0.0
  %145 = vmatpush1.msra.mxu0 0.0
  %146 = vmatprep.subr.mxu0 0.0
  %147 = vmatpush1.msra.mxu0 0.0
  %148 = vmatprep.subr.mxu0 0.0
  %149 = vmatpush1.msra.mxu0 0.0
  %150 = vmatprep.subr.mxu0 0.0
  %151 = vmatpush1.msra.mxu0 0.0
  %152 = vmatprep.subr.mxu0 0.0
  %153 = vmatpush1.msra.mxu0 0.0
  %154 = vmatprep.subr.mxu0 0.0
  %155 = vmatpush1.msra.mxu0 0.0
  %156 = vmatprep.subr.mxu0 0.0
  %157 = vmatpush1.msra.mxu0 %v52
  %158 = vmatprep.subr.mxu0 0.0
  %159 = vmatpush1.msra.mxu0 %v51
  %160 = vmatprep.subr.mxu0 0.0
  %161 = vmatpush1.msra.mxu0 %v50
  %162 = vmatprep.subr.mxu0 0.0
  %163 = vmatpush1.msra.mxu0 %v49
  %164 = vmatprep.subr.mxu0 0.0
  %165 = vmatpush1.msra.mxu0 %v48
  %166 = vmatprep.subr.mxu0 0.0
  %167 = vmatpush1.msra.mxu0 %v47
  %168 = vmatprep.subr.mxu0 0.0
  %169 = vmatpush1.msra.mxu0 %v46
  %170 = vmatprep.subr.mxu0 0.0
  %171 = vmatpush1.msra.mxu0 %v45
  %172 = vmatprep.subr.mxu0 0.0
  %173 = vmatpush2.msra.mxu0 0.0
  %174 = vmatprep.subr.mxu0 0.0
  %175 = vmatpush2.msra.mxu0 0.0
  %176 = vmatprep.subr.mxu0 0.0
  %177 = vmatpush2.msra.mxu0 0.0
  %178 = vmatprep.subr.mxu0 0.0
  %179 = vmatpush2.msra.mxu0 0.0
  %180 = vmatprep.subr.mxu0 0.0
  %181 = vmatpush2.msra.mxu0 0.0
  %182 = vmatprep.subr.mxu0 0.0
  %183 = vmatpush2.msra.mxu0 0.0
  %184 = vmatprep.subr.mxu0 0.0
  %185 = vmatpush2.msra.mxu0 0.0
  %186 = vmatprep.subr.mxu0 0.0
  %187 = vmatpush2.msra.mxu0 0.0
  %188 = vmatprep.subr.mxu0 0.0
  %189 = vmatpush2.msra.mxu0 0.0
  %190 = vmatprep.subr.mxu0 0.0
  %191 = vmatpush2.msra.mxu0 0.0
  %192 = vmatprep.subr.mxu0 0.0
  %193 = vmatpush2.msra.mxu0 0.0
  %194 = vmatprep.subr.mxu0 0.0
  %195 = vmatpush2.msra.mxu0 0.0
  %196 = vmatprep.subr.mxu0 0.0
  %197 = vmatpush2.msra.mxu0 0.0
  %198 = vmatprep.subr.mxu0 0.0
  %199 = vmatpush2.msra.mxu0 0.0
  %200 = vmatprep.subr.mxu0 0.0
  %201 = vmatpush2.msra.mxu0 0.0
  %202 = vmatprep.subr.mxu0 0.0
  %203 = vmatpush2.msra.mxu0 0.0
  %204 = vmatprep.mubr.f32.mxu0 0.0
  %205 = vmatmul.mubr.f32.gmra.mxu0 %v138
  %v206 = vpop.f32.mrf.mxu0
  %v207 = vadd.f32 %v135, %v206
  %v208 = vpop.f32.mrf.mxu0
  %209 = vdwg.mxu0
  %s210 = scalar_lea.vmem %s1, 128
  %v211 = vld [vmem:[%s210] sm:$0xff]
  %v212 = vld [vmem:[%s210 + $0x8] sm:$0xff]
  %v213 = vld [vmem:[%s210 + $0x10] sm:$0xff]
  %v214 = vld [vmem:[%s210 + $0x18] sm:$0xff]
  %v215 = vld [vmem:[%s210 + $0x20] sm:$0xff]
  %v216 = vld [vmem:[%s210 + $0x28] sm:$0xff]
  %v217 = vld [vmem:[%s210 + $0x30] sm:$0xff]
  %v218 = vld [vmem:[%s210 + $0x38] sm:$0xff]
  %219 = vrot.lane.b32.xlu0 %v44, 96
  %v220 = vpop.permute.xlu0 %219
  %v221 = vsel %vm65, %v220, 0
  %223 = vmatprep.subr.mxu0 0.0
  %224 = vmatpush1.msra.mxu0 0.0
  %225 = vmatprep.subr.mxu0 0.0
  %226 = vmatpush1.msra.mxu0 0.0
  %227 = vmatprep.subr.mxu0 0.0
  %228 = vmatpush1.msra.mxu0 0.0
  %229 = vmatprep.subr.mxu0 0.0
  %230 = vmatpush1.msra.mxu0 0.0
  %231 = vmatprep.subr.mxu0 0.0
  %232 = vmatpush1.msra.mxu0 0.0
  %233 = vmatprep.subr.mxu0 0.0
  %234 = vmatpush1.msra.mxu0 0.0
  %235 = vmatprep.subr.mxu0 0.0
  %236 = vmatpush1.msra.mxu0 0.0
  %237 = vmatprep.subr.mxu0 0.0
  %238 = vmatpush1.msra.mxu0 0.0
  %239 = vmatprep.subr.mxu0 0.0
  %240 = vmatpush1.msra.mxu0 %v218
  %241 = vmatprep.subr.mxu0 0.0
  %242 = vmatpush1.msra.mxu0 %v217
  %243 = vmatprep.subr.mxu0 0.0
  %244 = vmatpush1.msra.mxu0 %v216
  %245 = vmatprep.subr.mxu0 0.0
  %246 = vmatpush1.msra.mxu0 %v215
  %247 = vmatprep.subr.mxu0 0.0
  %248 = vmatpush1.msra.mxu0 %v214
  %249 = vmatprep.subr.mxu0 0.0
  %250 = vmatpush1.msra.mxu0 %v213
  %251 = vmatprep.subr.mxu0 0.0
  %252 = vmatpush1.msra.mxu0 %v212
  %253 = vmatprep.subr.mxu0 0.0
  %254 = vmatpush1.msra.mxu0 %v211
  %255 = vmatprep.subr.mxu0 0.0
  %256 = vmatpush2.msra.mxu0 0.0
  %257 = vmatprep.subr.mxu0 0.0
  %258 = vmatpush2.msra.mxu0 0.0
  %259 = vmatprep.subr.mxu0 0.0
  %260 = vmatpush2.msra.mxu0 0.0
  %261 = vmatprep.subr.mxu0 0.0
  %262 = vmatpush2.msra.mxu0 0.0
  %263 = vmatprep.subr.mxu0 0.0
  %264 = vmatpush2.msra.mxu0 0.0
  %265 = vmatprep.subr.mxu0 0.0
  %266 = vmatpush2.msra.mxu0 0.0
  %267 = vmatprep.subr.mxu0 0.0
  %268 = vmatpush2.msra.mxu0 0.0
  %269 = vmatprep.subr.mxu0 0.0
  %270 = vmatpush2.msra.mxu0 0.0
  %271 = vmatprep.subr.mxu0 0.0
  %272 = vmatpush2.msra.mxu0 0.0
  %273 = vmatprep.subr.mxu0 0.0
  %274 = vmatpush2.msra.mxu0 0.0
  %275 = vmatprep.subr.mxu0 0.0
  %276 = vmatpush2.msra.mxu0 0.0
  %277 = vmatprep.subr.mxu0 0.0
  %278 = vmatpush2.msra.mxu0 0.0
  %279 = vmatprep.subr.mxu0 0.0
  %280 = vmatpush2.msra.mxu0 0.0
  %281 = vmatprep.subr.mxu0 0.0
  %282 = vmatpush2.msra.mxu0 0.0
  %283 = vmatprep.subr.mxu0 0.0
  %284 = vmatpush2.msra.mxu0 0.0
  %285 = vmatprep.subr.mxu0 0.0
  %286 = vmatpush2.msra.mxu0 0.0
  %287 = vmatprep.mubr.f32.mxu0 0.0
  %288 = vmatmul.mubr.f32.gmra.mxu0 %v221
  %v289 = vpop.f32.mrf.mxu0
  %v290 = vadd.f32 0.0, %v289
  %v291 = vpop.f32.mrf.mxu0
  %292 = vdwg.mxu0
  %v293 = vadd.f32 %v207, %v290
  %v294 = vld [vmem:[%s0 + $0x1] sm:$0xf]
  %s295 = scalar_lea.vmem %s1, 192
  %v296 = vld [vmem:[%s295] sm:$0xff]
  %v297 = vld [vmem:[%s295 + $0x8] sm:$0xff]
  %v298 = vld [vmem:[%s295 + $0x10] sm:$0xff]
  %v299 = vld [vmem:[%s295 + $0x18] sm:$0xff]
  %v300 = vld [vmem:[%s295 + $0x20] sm:$0xff]
  %v301 = vld [vmem:[%s295 + $0x28] sm:$0xff]
  %v302 = vld [vmem:[%s295 + $0x30] sm:$0xff]
  %v303 = vld [vmem:[%s295 + $0x38] sm:$0xff]
  %v305 = vsel %vm65, %v294, 0
  %307 = vmatprep.subr.mxu0 0.0
  %308 = vmatpush1.msra.mxu0 0.0
  %309 = vmatprep.subr.mxu0 0.0
  %310 = vmatpush1.msra.mxu0 0.0
  %311 = vmatprep.subr.mxu0 0.0
  %312 = vmatpush1.msra.mxu0 0.0
  %313 = vmatprep.subr.mxu0 0.0
  %314 = vmatpush1.msra.mxu0 0.0
  %315 = vmatprep.subr.mxu0 0.0
  %316 = vmatpush1.msra.mxu0 0.0
  %317 = vmatprep.subr.mxu0 0.0
  %318 = vmatpush1.msra.mxu0 0.0
  %319 = vmatprep.subr.mxu0 0.0
  %320 = vmatpush1.msra.mxu0 0.0
  %321 = vmatprep.subr.mxu0 0.0
  %322 = vmatpush1.msra.mxu0 0.0
  %323 = vmatprep.subr.mxu0 0.0
  %324 = vmatpush1.msra.mxu0 %v303
  %325 = vmatprep.subr.mxu0 0.0
  %326 = vmatpush1.msra.mxu0 %v302
  %327 = vmatprep.subr.mxu0 0.0
  %328 = vmatpush1.msra.mxu0 %v301
  %329 = vmatprep.subr.mxu0 0.0
  %330 = vmatpush1.msra.mxu0 %v300
  %331 = vmatprep.subr.mxu0 0.0
  %332 = vmatpush1.msra.mxu0 %v299
  %333 = vmatprep.subr.mxu0 0.0
  %334 = vmatpush1.msra.mxu0 %v298
  %335 = vmatprep.subr.mxu0 0.0
  %336 = vmatpush1.msra.mxu0 %v297
  %337 = vmatprep.subr.mxu0 0.0
  %338 = vmatpush1.msra.mxu0 %v296
  %339 = vmatprep.subr.mxu0 0.0
  %340 = vmatpush2.msra.mxu0 0.0
  %341 = vmatprep.subr.mxu0 0.0
  %342 = vmatpush2.msra.mxu0 0.0
  %343 = vmatprep.subr.mxu0 0.0
  %344 = vmatpush2.msra.mxu0 0.0
  %345 = vmatprep.subr.mxu0 0.0
  %346 = vmatpush2.msra.mxu0 0.0
  %347 = vmatprep.subr.mxu0 0.0
  %348 = vmatpush2.msra.mxu0 0.0
  %349 = vmatprep.subr.mxu0 0.0
  %350 = vmatpush2.msra.mxu0 0.0
  %351 = vmatprep.subr.mxu0 0.0
  %352 = vmatpush2.msra.mxu0 0.0
  %353 = vmatprep.subr.mxu0 0.0
  %354 = vmatpush2.msra.mxu0 0.0
  %355 = vmatprep.subr.mxu0 0.0
  %356 = vmatpush2.msra.mxu0 0.0
  %357 = vmatprep.subr.mxu0 0.0
  %358 = vmatpush2.msra.mxu0 0.0
  %359 = vmatprep.subr.mxu0 0.0
  %360 = vmatpush2.msra.mxu0 0.0
  %361 = vmatprep.subr.mxu0 0.0
  %362 = vmatpush2.msra.mxu0 0.0
  %363 = vmatprep.subr.mxu0 0.0
  %364 = vmatpush2.msra.mxu0 0.0
  %365 = vmatprep.subr.mxu0 0.0
  %366 = vmatpush2.msra.mxu0 0.0
  %367 = vmatprep.subr.mxu0 0.0
  %368 = vmatpush2.msra.mxu0 0.0
  %369 = vmatprep.subr.mxu0 0.0
  %370 = vmatpush2.msra.mxu0 0.0
  %371 = vmatprep.mubr.f32.mxu0 0.0
  %372 = vmatmul.mubr.f32.gmra.mxu0 %v305
  %v373 = vpop.f32.mrf.mxu0
  %v374 = vadd.f32 0.0, %v373
  %v375 = vpop.f32.mrf.mxu0
  %376 = vdwg.mxu0
  %v377 = vadd.f32 %v293, %v374
  %s378 = scalar_lea.vmem %s1, 256
  %v379 = vld [vmem:[%s378] sm:$0xff]
  %v380 = vld [vmem:[%s378 + $0x8] sm:$0xff]
  %v381 = vld [vmem:[%s378 + $0x10] sm:$0xff]
  %v382 = vld [vmem:[%s378 + $0x18] sm:$0xff]
  %v383 = vld [vmem:[%s378 + $0x20] sm:$0xff]
  %v384 = vld [vmem:[%s378 + $0x28] sm:$0xff]
  %v385 = vld [vmem:[%s378 + $0x30] sm:$0xff]
  %v386 = vld [vmem:[%s378 + $0x38] sm:$0xff]
  %387 = vrot.lane.b32.xlu0 %v294, 112
  %v388 = vpop.permute.xlu0 %387
  %v389 = vsel %vm65, %v388, 0
  %391 = vmatprep.subr.mxu0 0.0
  %392 = vmatpush1.msra.mxu0 0.0
  %393 = vmatprep.subr.mxu0 0.0
  %394 = vmatpush1.msra.mxu0 0.0
  %395 = vmatprep.subr.mxu0 0.0
  %396 = vmatpush1.msra.mxu0 0.0
  %397 = vmatprep.subr.mxu0 0.0
  %398 = vmatpush1.msra.mxu0 0.0
  %399 = vmatprep.subr.mxu0 0.0
  %400 = vmatpush1.msra.mxu0 0.0
  %401 = vmatprep.subr.mxu0 0.0
  %402 = vmatpush1.msra.mxu0 0.0
  %403 = vmatprep.subr.mxu0 0.0
  %404 = vmatpush1.msra.mxu0 0.0
  %405 = vmatprep.subr.mxu0 0.0
  %406 = vmatpush1.msra.mxu0 0.0
  %407 = vmatprep.subr.mxu0 0.0
  %408 = vmatpush1.msra.mxu0 %v386
  %409 = vmatprep.subr.mxu0 0.0
  %410 = vmatpush1.msra.mxu0 %v385
  %411 = vmatprep.subr.mxu0 0.0
  %412 = vmatpush1.msra.mxu0 %v384
  %413 = vmatprep.subr.mxu0 0.0
  %414 = vmatpush1.msra.mxu0 %v383
  %415 = vmatprep.subr.mxu0 0.0
  %416 = vmatpush1.msra.mxu0 %v382
  %417 = vmatprep.subr.mxu0 0.0
  %418 = vmatpush1.msra.mxu0 %v381
  %419 = vmatprep.subr.mxu0 0.0
  %420 = vmatpush1.msra.mxu0 %v380
  %421 = vmatprep.subr.mxu0 0.0
  %422 = vmatpush1.msra.mxu0 %v379
  %423 = vmatprep.subr.mxu0 0.0
  %424 = vmatpush2.msra.mxu0 0.0
  %425 = vmatprep.subr.mxu0 0.0
  %426 = vmatpush2.msra.mxu0 0.0
  %427 = vmatprep.subr.mxu0 0.0
  %428 = vmatpush2.msra.mxu0 0.0
  %429 = vmatprep.subr.mxu0 0.0
  %430 = vmatpush2.msra.mxu0 0.0
  %431 = vmatprep.subr.mxu0 0.0
  %432 = vmatpush2.msra.mxu0 0.0
  %433 = vmatprep.subr.mxu0 0.0
  %434 = vmatpush2.msra.mxu0 0.0
  %435 = vmatprep.subr.mxu0 0.0
  %436 = vmatpush2.msra.mxu0 0.0
  %437 = vmatprep.subr.mxu0 0.0
  %438 = vmatpush2.msra.mxu0 0.0
  %439 = vmatprep.subr.mxu0 0.0
  %440 = vmatpush2.msra.mxu0 0.0
  %441 = vmatprep.subr.mxu0 0.0
  %442 = vmatpush2.msra.mxu0 0.0
  %443 = vmatprep.subr.mxu0 0.0
  %444 = vmatpush2.msra.mxu0 0.0
  %445 = vmatprep.subr.mxu0 0.0
  %446 = vmatpush2.msra.mxu0 0.0
  %447 = vmatprep.subr.mxu0 0.0
  %448 = vmatpush2.msra.mxu0 0.0
  %449 = vmatprep.subr.mxu0 0.0
  %450 = vmatpush2.msra.mxu0 0.0
  %451 = vmatprep.subr.mxu0 0.0
  %452 = vmatpush2.msra.mxu0 0.0
  %453 = vmatprep.subr.mxu0 0.0
  %454 = vmatpush2.msra.mxu0 0.0
  %455 = vmatprep.mubr.f32.mxu0 0.0
  %456 = vmatmul.mubr.f32.gmra.mxu0 %v389
  %v457 = vpop.f32.mrf.mxu0
  %v458 = vadd.f32 0.0, %v457
  %v459 = vpop.f32.mrf.mxu0
  %460 = vdwg.mxu0
  %v461 = vadd.f32 %v377, %v458
  %s462 = scalar_lea.vmem %s1, 320
  %v463 = vld [vmem:[%s462] sm:$0xff]
  %v464 = vld [vmem:[%s462 + $0x8] sm:$0xff]
  %v465 = vld [vmem:[%s462 + $0x10] sm:$0xff]
  %v466 = vld [vmem:[%s462 + $0x18] sm:$0xff]
  %v467 = vld [vmem:[%s462 + $0x20] sm:$0xff]
  %v468 = vld [vmem:[%s462 + $0x28] sm:$0xff]
  %v469 = vld [vmem:[%s462 + $0x30] sm:$0xff]
  %v470 = vld [vmem:[%s462 + $0x38] sm:$0xff]
  %471 = vrot.lane.b32.xlu0 %v294, 96
  %v472 = vpop.permute.xlu0 %471
  %v473 = vsel %vm65, %v472, 0
  %475 = vmatprep.subr.mxu0 0.0
  %476 = vmatpush1.msra.mxu0 0.0
  %477 = vmatprep.subr.mxu0 0.0
  %478 = vmatpush1.msra.mxu0 0.0
  %479 = vmatprep.subr.mxu0 0.0
  %480 = vmatpush1.msra.mxu0 0.0
  %481 = vmatprep.subr.mxu0 0.0
  %482 = vmatpush1.msra.mxu0 0.0
  %483 = vmatprep.subr.mxu0 0.0
  %484 = vmatpush1.msra.mxu0 0.0
  %485 = vmatprep.subr.mxu0 0.0
  %486 = vmatpush1.msra.mxu0 0.0
  %487 = vmatprep.subr.mxu0 0.0
  %488 = vmatpush1.msra.mxu0 0.0
  %489 = vmatprep.subr.mxu0 0.0
  %490 = vmatpush1.msra.mxu0 0.0
  %491 = vmatprep.subr.mxu0 0.0
  %492 = vmatpush1.msra.mxu0 %v470
  %493 = vmatprep.subr.mxu0 0.0
  %494 = vmatpush1.msra.mxu0 %v469
  %495 = vmatprep.subr.mxu0 0.0
  %496 = vmatpush1.msra.mxu0 %v468
  %497 = vmatprep.subr.mxu0 0.0
  %498 = vmatpush1.msra.mxu0 %v467
  %499 = vmatprep.subr.mxu0 0.0
  %500 = vmatpush1.msra.mxu0 %v466
  %501 = vmatprep.subr.mxu0 0.0
  %502 = vmatpush1.msra.mxu0 %v465
  %503 = vmatprep.subr.mxu0 0.0
  %504 = vmatpush1.msra.mxu0 %v464
  %505 = vmatprep.subr.mxu0 0.0
  %506 = vmatpush1.msra.mxu0 %v463
  %507 = vmatprep.subr.mxu0 0.0
  %508 = vmatpush2.msra.mxu0 0.0
  %509 = vmatprep.subr.mxu0 0.0
  %510 = vmatpush2.msra.mxu0 0.0
  %511 = vmatprep.subr.mxu0 0.0
  %512 = vmatpush2.msra.mxu0 0.0
  %513 = vmatprep.subr.mxu0 0.0
  %514 = vmatpush2.msra.mxu0 0.0
  %515 = vmatprep.subr.mxu0 0.0
  %516 = vmatpush2.msra.mxu0 0.0
  %517 = vmatprep.subr.mxu0 0.0
  %518 = vmatpush2.msra.mxu0 0.0
  %519 = vmatprep.subr.mxu0 0.0
  %520 = vmatpush2.msra.mxu0 0.0
  %521 = vmatprep.subr.mxu0 0.0
  %522 = vmatpush2.msra.mxu0 0.0
  %523 = vmatprep.subr.mxu0 0.0
  %524 = vmatpush2.msra.mxu0 0.0
  %525 = vmatprep.subr.mxu0 0.0
  %526 = vmatpush2.msra.mxu0 0.0
  %527 = vmatprep.subr.mxu0 0.0
  %528 = vmatpush2.msra.mxu0 0.0
  %529 = vmatprep.subr.mxu0 0.0
  %530 = vmatpush2.msra.mxu0 0.0
  %531 = vmatprep.subr.mxu0 0.0
  %532 = vmatpush2.msra.mxu0 0.0
  %533 = vmatprep.subr.mxu0 0.0
  %534 = vmatpush2.msra.mxu0 0.0
  %535 = vmatprep.subr.mxu0 0.0
  %536 = vmatpush2.msra.mxu0 0.0
  %537 = vmatprep.subr.mxu0 0.0
  %538 = vmatpush2.msra.mxu0 0.0
  %539 = vmatprep.mubr.f32.mxu0 0.0
  %540 = vmatmul.mubr.f32.gmra.mxu0 %v473
  %v541 = vpop.f32.mrf.mxu0
  %v542 = vadd.f32 0.0, %v541
  %v543 = vpop.f32.mrf.mxu0
  %544 = vdwg.mxu0
  %v545 = vadd.f32 %v461, %v542
  %v546 = vld [vmem:[%s0 + $0x2] sm:$0xf]
  %s547 = scalar_lea.vmem %s1, 384
  %v548 = vld [vmem:[%s547] sm:$0xff]
  %v549 = vld [vmem:[%s547 + $0x8] sm:$0xff]
  %v550 = vld [vmem:[%s547 + $0x10] sm:$0xff]
  %v551 = vld [vmem:[%s547 + $0x18] sm:$0xff]
  %v552 = vld [vmem:[%s547 + $0x20] sm:$0xff]
  %v553 = vld [vmem:[%s547 + $0x28] sm:$0xff]
  %v554 = vld [vmem:[%s547 + $0x30] sm:$0xff]
  %v555 = vld [vmem:[%s547 + $0x38] sm:$0xff]
  %v557 = vsel %vm65, %v546, 0
  %559 = vmatprep.subr.mxu0 0.0
  %560 = vmatpush1.msra.mxu0 0.0
  %561 = vmatprep.subr.mxu0 0.0
  %562 = vmatpush1.msra.mxu0 0.0
  %563 = vmatprep.subr.mxu0 0.0
  %564 = vmatpush1.msra.mxu0 0.0
  %565 = vmatprep.subr.mxu0 0.0
  %566 = vmatpush1.msra.mxu0 0.0
  %567 = vmatprep.subr.mxu0 0.0
  %568 = vmatpush1.msra.mxu0 0.0
  %569 = vmatprep.subr.mxu0 0.0
  %570 = vmatpush1.msra.mxu0 0.0
  %571 = vmatprep.subr.mxu0 0.0
  %572 = vmatpush1.msra.mxu0 0.0
  %573 = vmatprep.subr.mxu0 0.0
  %574 = vmatpush1.msra.mxu0 0.0
  %575 = vmatprep.subr.mxu0 0.0
  %576 = vmatpush1.msra.mxu0 %v555
  %577 = vmatprep.subr.mxu0 0.0
  %578 = vmatpush1.msra.mxu0 %v554
  %579 = vmatprep.subr.mxu0 0.0
  %580 = vmatpush1.msra.mxu0 %v553
  %581 = vmatprep.subr.mxu0 0.0
  %582 = vmatpush1.msra.mxu0 %v552
  %583 = vmatprep.subr.mxu0 0.0
  %584 = vmatpush1.msra.mxu0 %v551
  %585 = vmatprep.subr.mxu0 0.0
  %586 = vmatpush1.msra.mxu0 %v550
  %587 = vmatprep.subr.mxu0 0.0
  %588 = vmatpush1.msra.mxu0 %v549
  %589 = vmatprep.subr.mxu0 0.0
  %590 = vmatpush1.msra.mxu0 %v548
  %591 = vmatprep.subr.mxu0 0.0
  %592 = vmatpush2.msra.mxu0 0.0
  %593 = vmatprep.subr.mxu0 0.0
  %594 = vmatpush2.msra.mxu0 0.0
  %595 = vmatprep.subr.mxu0 0.0
  %596 = vmatpush2.msra.mxu0 0.0
  %597 = vmatprep.subr.mxu0 0.0
  %598 = vmatpush2.msra.mxu0 0.0
  %599 = vmatprep.subr.mxu0 0.0
  %600 = vmatpush2.msra.mxu0 0.0
  %601 = vmatprep.subr.mxu0 0.0
  %602 = vmatpush2.msra.mxu0 0.0
  %603 = vmatprep.subr.mxu0 0.0
  %604 = vmatpush2.msra.mxu0 0.0
  %605 = vmatprep.subr.mxu0 0.0
  %606 = vmatpush2.msra.mxu0 0.0
  %607 = vmatprep.subr.mxu0 0.0
  %608 = vmatpush2.msra.mxu0 0.0
  %609 = vmatprep.subr.mxu0 0.0
  %610 = vmatpush2.msra.mxu0 0.0
  %611 = vmatprep.subr.mxu0 0.0
  %612 = vmatpush2.msra.mxu0 0.0
  %613 = vmatprep.subr.mxu0 0.0
  %614 = vmatpush2.msra.mxu0 0.0
  %615 = vmatprep.subr.mxu0 0.0
  %616 = vmatpush2.msra.mxu0 0.0
  %617 = vmatprep.subr.mxu0 0.0
  %618 = vmatpush2.msra.mxu0 0.0
  %619 = vmatprep.subr.mxu0 0.0
  %620 = vmatpush2.msra.mxu0 0.0
  %621 = vmatprep.subr.mxu0 0.0
  %622 = vmatpush2.msra.mxu0 0.0
  %623 = vmatprep.mubr.f32.mxu0 0.0
  %624 = vmatmul.mubr.f32.gmra.mxu0 %v557
  %v625 = vpop.f32.mrf.mxu0
  %v626 = vadd.f32 0.0, %v625
  %v627 = vpop.f32.mrf.mxu0
  %628 = vdwg.mxu0
  %v629 = vadd.f32 %v545, %v626
  %s630 = scalar_lea.vmem %s1, 448
  %v631 = vld [vmem:[%s630] sm:$0xff]
  %v632 = vld [vmem:[%s630 + $0x8] sm:$0xff]
  %v633 = vld [vmem:[%s630 + $0x10] sm:$0xff]
  %v634 = vld [vmem:[%s630 + $0x18] sm:$0xff]
  %v635 = vld [vmem:[%s630 + $0x20] sm:$0xff]
  %v636 = vld [vmem:[%s630 + $0x28] sm:$0xff]
  %v637 = vld [vmem:[%s630 + $0x30] sm:$0xff]
  %v638 = vld [vmem:[%s630 + $0x38] sm:$0xff]
  %639 = vrot.lane.b32.xlu0 %v546, 112
  %v640 = vpop.permute.xlu0 %639
  %v641 = vsel %vm65, %v640, 0
  %643 = vmatprep.subr.mxu0 0.0
  %644 = vmatpush1.msra.mxu0 0.0
  %645 = vmatprep.subr.mxu0 0.0
  %646 = vmatpush1.msra.mxu0 0.0
  %647 = vmatprep.subr.mxu0 0.0
  %648 = vmatpush1.msra.mxu0 0.0
  %649 = vmatprep.subr.mxu0 0.0
  %650 = vmatpush1.msra.mxu0 0.0
  %651 = vmatprep.subr.mxu0 0.0
  %652 = vmatpush1.msra.mxu0 0.0
  %653 = vmatprep.subr.mxu0 0.0
  %654 = vmatpush1.msra.mxu0 0.0
  %655 = vmatprep.subr.mxu0 0.0
  %656 = vmatpush1.msra.mxu0 0.0
  %657 = vmatprep.subr.mxu0 0.0
  %658 = vmatpush1.msra.mxu0 0.0
  %659 = vmatprep.subr.mxu0 0.0
  %660 = vmatpush1.msra.mxu0 %v638
  %661 = vmatprep.subr.mxu0 0.0
  %662 = vmatpush1.msra.mxu0 %v637
  %663 = vmatprep.subr.mxu0 0.0
  %664 = vmatpush1.msra.mxu0 %v636
  %665 = vmatprep.subr.mxu0 0.0
  %666 = vmatpush1.msra.mxu0 %v635
  %667 = vmatprep.subr.mxu0 0.0
  %668 = vmatpush1.msra.mxu0 %v634
  %669 = vmatprep.subr.mxu0 0.0
  %670 = vmatpush1.msra.mxu0 %v633
  %671 = vmatprep.subr.mxu0 0.0
  %672 = vmatpush1.msra.mxu0 %v632
  %673 = vmatprep.subr.mxu0 0.0
  %674 = vmatpush1.msra.mxu0 %v631
  %675 = vmatprep.subr.mxu0 0.0
  %676 = vmatpush2.msra.mxu0 0.0
  %677 = vmatprep.subr.mxu0 0.0
  %678 = vmatpush2.msra.mxu0 0.0
  %679 = vmatprep.subr.mxu0 0.0
  %680 = vmatpush2.msra.mxu0 0.0
  %681 = vmatprep.subr.mxu0 0.0
  %682 = vmatpush2.msra.mxu0 0.0
  %683 = vmatprep.subr.mxu0 0.0
  %684 = vmatpush2.msra.mxu0 0.0
  %685 = vmatprep.subr.mxu0 0.0
  %686 = vmatpush2.msra.mxu0 0.0
  %687 = vmatprep.subr.mxu0 0.0
  %688 = vmatpush2.msra.mxu0 0.0
  %689 = vmatprep.subr.mxu0 0.0
  %690 = vmatpush2.msra.mxu0 0.0
  %691 = vmatprep.subr.mxu0 0.0
  %692 = vmatpush2.msra.mxu0 0.0
  %693 = vmatprep.subr.mxu0 0.0
  %694 = vmatpush2.msra.mxu0 0.0
  %695 = vmatprep.subr.mxu0 0.0
  %696 = vmatpush2.msra.mxu0 0.0
  %697 = vmatprep.subr.mxu0 0.0
  %698 = vmatpush2.msra.mxu0 0.0
  %699 = vmatprep.subr.mxu0 0.0
  %700 = vmatpush2.msra.mxu0 0.0
  %701 = vmatprep.subr.mxu0 0.0
  %702 = vmatpush2.msra.mxu0 0.0
  %703 = vmatprep.subr.mxu0 0.0
  %704 = vmatpush2.msra.mxu0 0.0
  %705 = vmatprep.subr.mxu0 0.0
  %706 = vmatpush2.msra.mxu0 0.0
  %707 = vmatprep.mubr.f32.mxu0 0.0
  %708 = vmatmul.mubr.f32.gmra.mxu0 %v641
  %v709 = vpop.f32.mrf.mxu0
  %v710 = vadd.f32 0.0, %v709
  %v711 = vpop.f32.mrf.mxu0
  %712 = vdwg.mxu0
  %v713 = vadd.f32 %v629, %v710
  %s714 = scalar_lea.vmem %s1, 512
  %v715 = vld [vmem:[%s714] sm:$0xff]
  %v716 = vld [vmem:[%s714 + $0x8] sm:$0xff]
  %v717 = vld [vmem:[%s714 + $0x10] sm:$0xff]
  %v718 = vld [vmem:[%s714 + $0x18] sm:$0xff]
  %v719 = vld [vmem:[%s714 + $0x20] sm:$0xff]
  %v720 = vld [vmem:[%s714 + $0x28] sm:$0xff]
  %v721 = vld [vmem:[%s714 + $0x30] sm:$0xff]
  %v722 = vld [vmem:[%s714 + $0x38] sm:$0xff]
  %723 = vrot.lane.b32.xlu0 %v546, 96
  %v724 = vpop.permute.xlu0 %723
  %v725 = vsel %vm65, %v724, 0
  %727 = vmatprep.subr.mxu0 0.0
  %728 = vmatpush1.msra.mxu0 0.0
  %729 = vmatprep.subr.mxu0 0.0
  %730 = vmatpush1.msra.mxu0 0.0
  %731 = vmatprep.subr.mxu0 0.0
  %732 = vmatpush1.msra.mxu0 0.0
  %733 = vmatprep.subr.mxu0 0.0
  %734 = vmatpush1.msra.mxu0 0.0
  %735 = vmatprep.subr.mxu0 0.0
  %736 = vmatpush1.msra.mxu0 0.0
  %737 = vmatprep.subr.mxu0 0.0
  %738 = vmatpush1.msra.mxu0 0.0
  %739 = vmatprep.subr.mxu0 0.0
  %740 = vmatpush1.msra.mxu0 0.0
  %741 = vmatprep.subr.mxu0 0.0
  %742 = vmatpush1.msra.mxu0 0.0
  %743 = vmatprep.subr.mxu0 0.0
  %744 = vmatpush1.msra.mxu0 %v722
  %745 = vmatprep.subr.mxu0 0.0
  %746 = vmatpush1.msra.mxu0 %v721
  %747 = vmatprep.subr.mxu0 0.0
  %748 = vmatpush1.msra.mxu0 %v720
  %749 = vmatprep.subr.mxu0 0.0
  %750 = vmatpush1.msra.mxu0 %v719
  %751 = vmatprep.subr.mxu0 0.0
  %752 = vmatpush1.msra.mxu0 %v718
  %753 = vmatprep.subr.mxu0 0.0
  %754 = vmatpush1.msra.mxu0 %v717
  %755 = vmatprep.subr.mxu0 0.0
  %756 = vmatpush1.msra.mxu0 %v716
  %757 = vmatprep.subr.mxu0 0.0
  %758 = vmatpush1.msra.mxu0 %v715
  %759 = vmatprep.subr.mxu0 0.0
  %760 = vmatpush2.msra.mxu0 0.0
  %761 = vmatprep.subr.mxu0 0.0
  %762 = vmatpush2.msra.mxu0 0.0
  %763 = vmatprep.subr.mxu0 0.0
  %764 = vmatpush2.msra.mxu0 0.0
  %765 = vmatprep.subr.mxu0 0.0
  %766 = vmatpush2.msra.mxu0 0.0
  %767 = vmatprep.subr.mxu0 0.0
  %768 = vmatpush2.msra.mxu0 0.0
  %769 = vmatprep.subr.mxu0 0.0
  %770 = vmatpush2.msra.mxu0 0.0
  %771 = vmatprep.subr.mxu0 0.0
  %772 = vmatpush2.msra.mxu0 0.0
  %773 = vmatprep.subr.mxu0 0.0
  %774 = vmatpush2.msra.mxu0 0.0
  %775 = vmatprep.subr.mxu0 0.0
  %776 = vmatpush2.msra.mxu0 0.0
  %777 = vmatprep.subr.mxu0 0.0
  %778 = vmatpush2.msra.mxu0 0.0
  %779 = vmatprep.subr.mxu0 0.0
  %780 = vmatpush2.msra.mxu0 0.0
  %781 = vmatprep.subr.mxu0 0.0
  %782 = vmatpush2.msra.mxu0 0.0
  %783 = vmatprep.subr.mxu0 0.0
  %784 = vmatpush2.msra.mxu0 0.0
  %785 = vmatprep.subr.mxu0 0.0
  %786 = vmatpush2.msra.mxu0 0.0
  %787 = vmatprep.subr.mxu0 0.0
  %788 = vmatpush2.msra.mxu0 0.0
  %789 = vmatprep.subr.mxu0 0.0
  %790 = vmatpush2.msra.mxu0 0.0
  %791 = vmatprep.mubr.f32.mxu0 0.0
  %792 = vmatmul.mubr.f32.gmra.mxu0 %v725
  %v793 = vpop.f32.mrf.mxu0
  %v794 = vadd.f32 0.0, %v793
  %v795 = vpop.f32.mrf.mxu0
  %796 = vdwg.mxu0
  %v797 = vadd.f32 %v713, %v794
  %v798 = vld [vmem:[%s2] sm:$0x1]
  %v800 = vlaneseq
  %v801 = vshrl.u32 %v800, 7
  %v802 = vsub.s32 0, %v801
  %v803 = vrot.slane %v798, %v802
  %v805 = vadd.f32 %v797, %v803
  %vm806 = vcmask 1043456
  %v807 = vsel %vm806, %v805, 0.0
  %v808 = vrot.slane %v807, 4
  %v809 = vadd.f32 %v807, %v808
  %v810 = vrot.slane %v809, 2
  %v811 = vadd.f32 %v809, %v810
  %v812 = vrot.slane %v811, 1
  %v813 = vadd.f32 %v811, %v812
  %v814 = vld [vmem:[%s5] sm:$0xff]
  %v815 = vld [vmem:[%s5 + $0x8] sm:$0xff]
  %v816 = vld [vmem:[%s5 + $0x10] sm:$0xff]
  %v817 = vld [vmem:[%s5 + $0x18] sm:$0xff]
  %v818 = vld [vmem:[%s5 + $0x20] sm:$0xff]
  %v819 = vld [vmem:[%s5 + $0x28] sm:$0xff]
  %v820 = vld [vmem:[%s5 + $0x30] sm:$0xff]
  %v821 = vld [vmem:[%s5 + $0x38] sm:$0xff]
  %v822 = vld [vmem:[%s5 + $0x40] sm:$0xff]
  %v823 = vld [vmem:[%s5 + $0x48] sm:$0xff]
  %v824 = vld [vmem:[%s5 + $0x50] sm:$0xff]
  %v825 = vld [vmem:[%s5 + $0x58] sm:$0xff]
  %v826 = vld [vmem:[%s5 + $0x60] sm:$0xff]
  %v827 = vld [vmem:[%s5 + $0x68] sm:$0xff]
  %v828 = vld [vmem:[%s5 + $0x70] sm:$0xff]
  %v829 = vld [vmem:[%s5 + $0x78] sm:$0xff]
  %v830 = vmul.f32 %v805, %v805
  %v831 = vsel %vm806, %v830, 0.0
  %v832 = vrot.slane %v831, 4
  %v833 = vadd.f32 %v831, %v832
  %v834 = vrot.slane %v833, 2
  %v835 = vadd.f32 %v833, %v834
  %v836 = vrot.slane %v835, 1
  %v837 = vadd.f32 %v835, %v836
  %s838 = scalar_lea.vmem %s0, 8
  %v839 = vld [vmem:[%s838] sm:$0xf]
  %841 = vrot.lane.b32.xlu0 %v839, 112
  %v842 = vpop.permute.xlu0 %841
  %v843 = vsel %vm65, %v842, 0
  %845 = vmatprep.subr.mxu0 0.0
  %846 = vmatpush1.msra.mxu0 0.0
  %847 = vmatprep.subr.mxu0 0.0
  %848 = vmatpush1.msra.mxu0 0.0
  %849 = vmatprep.subr.mxu0 0.0
  %850 = vmatpush1.msra.mxu0 0.0
  %851 = vmatprep.subr.mxu0 0.0
  %852 = vmatpush1.msra.mxu0 0.0
  %853 = vmatprep.subr.mxu0 0.0
  %854 = vmatpush1.msra.mxu0 0.0
  %855 = vmatprep.subr.mxu0 0.0
  %856 = vmatpush1.msra.mxu0 0.0
  %857 = vmatprep.subr.mxu0 0.0
  %858 = vmatpush1.msra.mxu0 0.0
  %859 = vmatprep.subr.mxu0 0.0
  %860 = vmatpush1.msra.mxu0 0.0
  %861 = vmatprep.subr.mxu0 0.0
  %862 = vmatpush1.msra.mxu0 %v61
  %863 = vmatprep.subr.mxu0 0.0
  %864 = vmatpush1.msra.mxu0 %v60
  %865 = vmatprep.subr.mxu0 0.0
  %866 = vmatpush1.msra.mxu0 %v59
  %867 = vmatprep.subr.mxu0 0.0
  %868 = vmatpush1.msra.mxu0 %v58
  %869 = vmatprep.subr.mxu0 0.0
  %870 = vmatpush1.msra.mxu0 %v57
  %871 = vmatprep.subr.mxu0 0.0
  %872 = vmatpush1.msra.mxu0 %v56
  %873 = vmatprep.subr.mxu0 0.0
  %874 = vmatpush1.msra.mxu0 %v55
  %875 = vmatprep.subr.mxu0 0.0
  %876 = vmatpush1.msra.mxu0 %v54
  %877 = vmatprep.subr.mxu0 0.0
  %878 = vmatpush2.msra.mxu0 0.0
  %879 = vmatprep.subr.mxu0 0.0
  %880 = vmatpush2.msra.mxu0 0.0
  %881 = vmatprep.subr.mxu0 0.0
  %882 = vmatpush2.msra.mxu0 0.0
  %883 = vmatprep.subr.mxu0 0.0
  %884 = vmatpush2.msra.mxu0 0.0
  %885 = vmatprep.subr.mxu0 0.0
  %886 = vmatpush2.msra.mxu0 0.0
  %887 = vmatprep.subr.mxu0 0.0
  %888 = vmatpush2.msra.mxu0 0.0
  %889 = vmatprep.subr.mxu0 0.0
  %890 = vmatpush2.msra.mxu0 0.0
  %891 = vmatprep.subr.mxu0 0.0
  %892 = vmatpush2.msra.mxu0 0.0
  %893 = vmatprep.subr.mxu0 0.0
  %894 = vmatpush2.msra.mxu0 0.0
  %895 = vmatprep.subr.mxu0 0.0
  %896 = vmatpush2.msra.mxu0 0.0
  %897 = vmatprep.subr.mxu0 0.0
  %898 = vmatpush2.msra.mxu0 0.0
  %899 = vmatprep.subr.mxu0 0.0
  %900 = vmatpush2.msra.mxu0 0.0
  %901 = vmatprep.subr.mxu0 0.0
  %902 = vmatpush2.msra.mxu0 0.0
  %903 = vmatprep.subr.mxu0 0.0
  %904 = vmatpush2.msra.mxu0 0.0
  %905 = vmatprep.subr.mxu0 0.0
  %906 = vmatpush2.msra.mxu0 0.0
  %907 = vmatprep.subr.mxu0 0.0
  %908 = vmatpush2.msra.mxu0 0.0
  %909 = vmatprep.mubr.f32.mxu0 0.0
  %910 = vmatmul.mubr.f32.gmra.mxu0 %v843
  %v911 = vpop.f32.mrf.mxu0
  %v912 = vadd.f32 0.0, %v911
  %v913 = vpop.f32.mrf.mxu0
  %914 = vdwg.mxu0
  %v915 = vsel %vm65, %v839, 0
  %917 = vmatprep.subr.mxu0 0.0
  %918 = vmatpush1.msra.mxu0 0.0
  %919 = vmatprep.subr.mxu0 0.0
  %920 = vmatpush1.msra.mxu0 0.0
  %921 = vmatprep.subr.mxu0 0.0
  %922 = vmatpush1.msra.mxu0 0.0
  %923 = vmatprep.subr.mxu0 0.0
  %924 = vmatpush1.msra.mxu0 0.0
  %925 = vmatprep.subr.mxu0 0.0
  %926 = vmatpush1.msra.mxu0 0.0
  %927 = vmatprep.subr.mxu0 0.0
  %928 = vmatpush1.msra.mxu0 0.0
  %929 = vmatprep.subr.mxu0 0.0
  %930 = vmatpush1.msra.mxu0 0.0
  %931 = vmatprep.subr.mxu0 0.0
  %932 = vmatpush1.msra.mxu0 0.0
  %933 = vmatprep.subr.mxu0 0.0
  %934 = vmatpush1.msra.mxu0 %v52
  %935 = vmatprep.subr.mxu0 0.0
  %936 = vmatpush1.msra.mxu0 %v51
  %937 = vmatprep.subr.mxu0 0.0
  %938 = vmatpush1.msra.mxu0 %v50
  %939 = vmatprep.subr.mxu0 0.0
  %940 = vmatpush1.msra.mxu0 %v49
  %941 = vmatprep.subr.mxu0 0.0
  %942 = vmatpush1.msra.mxu0 %v48
  %943 = vmatprep.subr.mxu0 0.0
  %944 = vmatpush1.msra.mxu0 %v47
  %945 = vmatprep.subr.mxu0 0.0
  %946 = vmatpush1.msra.mxu0 %v46
  %947 = vmatprep.subr.mxu0 0.0
  %948 = vmatpush1.msra.mxu0 %v45
  %949 = vmatprep.subr.mxu0 0.0
  %950 = vmatpush2.msra.mxu0 0.0
  %951 = vmatprep.subr.mxu0 0.0
  %952 = vmatpush2.msra.mxu0 0.0
  %953 = vmatprep.subr.mxu0 0.0
  %954 = vmatpush2.msra.mxu0 0.0
  %955 = vmatprep.subr.mxu0 0.0
  %956 = vmatpush2.msra.mxu0 0.0
  %957 = vmatprep.subr.mxu0 0.0
  %958 = vmatpush2.msra.mxu0 0.0
  %959 = vmatprep.subr.mxu0 0.0
  %960 = vmatpush2.msra.mxu0 0.0
  %961 = vmatprep.subr.mxu0 0.0
  %962 = vmatpush2.msra.mxu0 0.0
  %963 = vmatprep.subr.mxu0 0.0
  %964 = vmatpush2.msra.mxu0 0.0
  %965 = vmatprep.subr.mxu0 0.0
  %966 = vmatpush2.msra.mxu0 0.0
  %967 = vmatprep.subr.mxu0 0.0
  %968 = vmatpush2.msra.mxu0 0.0
  %969 = vmatprep.subr.mxu0 0.0
  %970 = vmatpush2.msra.mxu0 0.0
  %971 = vmatprep.subr.mxu0 0.0
  %972 = vmatpush2.msra.mxu0 0.0
  %973 = vmatprep.subr.mxu0 0.0
  %974 = vmatpush2.msra.mxu0 0.0
  %975 = vmatprep.subr.mxu0 0.0
  %976 = vmatpush2.msra.mxu0 0.0
  %977 = vmatprep.subr.mxu0 0.0
  %978 = vmatpush2.msra.mxu0 0.0
  %979 = vmatprep.subr.mxu0 0.0
  %980 = vmatpush2.msra.mxu0 0.0
  %981 = vmatprep.mubr.f32.mxu0 0.0
  %982 = vmatmul.mubr.f32.gmra.mxu0 %v915
  %v983 = vpop.f32.mrf.mxu0
  %v984 = vadd.f32 %v912, %v983
  %v985 = vpop.f32.mrf.mxu0
  %986 = vdwg.mxu0
  %987 = vrot.lane.b32.xlu0 %v839, 96
  %v988 = vpop.permute.xlu0 %987
  %v989 = vsel %vm65, %v988, 0
  %991 = vmatprep.subr.mxu0 0.0
  %992 = vmatpush1.msra.mxu0 0.0
  %993 = vmatprep.subr.mxu0 0.0
  %994 = vmatpush1.msra.mxu0 0.0
  %995 = vmatprep.subr.mxu0 0.0
  %996 = vmatpush1.msra.mxu0 0.0
  %997 = vmatprep.subr.mxu0 0.0
  %998 = vmatpush1.msra.mxu0 0.0
  %999 = vmatprep.subr.mxu0 0.0
  %1000 = vmatpush1.msra.mxu0 0.0
  %1001 = vmatprep.subr.mxu0 0.0
  %1002 = vmatpush1.msra.mxu0 0.0
  %1003 = vmatprep.subr.mxu0 0.0
  %1004 = vmatpush1.msra.mxu0 0.0
  %1005 = vmatprep.subr.mxu0 0.0
  %1006 = vmatpush1.msra.mxu0 0.0
  %1007 = vmatprep.subr.mxu0 0.0
  %1008 = vmatpush1.msra.mxu0 %v218
  %1009 = vmatprep.subr.mxu0 0.0
  %1010 = vmatpush1.msra.mxu0 %v217
  %1011 = vmatprep.subr.mxu0 0.0
  %1012 = vmatpush1.msra.mxu0 %v216
  %1013 = vmatprep.subr.mxu0 0.0
  %1014 = vmatpush1.msra.mxu0 %v215
  %1015 = vmatprep.subr.mxu0 0.0
  %1016 = vmatpush1.msra.mxu0 %v214
  %1017 = vmatprep.subr.mxu0 0.0
  %1018 = vmatpush1.msra.mxu0 %v213
  %1019 = vmatprep.subr.mxu0 0.0
  %1020 = vmatpush1.msra.mxu0 %v212
  %1021 = vmatprep.subr.mxu0 0.0
  %1022 = vmatpush1.msra.mxu0 %v211
  %1023 = vmatprep.subr.mxu0 0.0
  %1024 = vmatpush2.msra.mxu0 0.0
  %1025 = vmatprep.subr.mxu0 0.0
  %1026 = vmatpush2.msra.mxu0 0.0
  %1027 = vmatprep.subr.mxu0 0.0
  %1028 = vmatpush2.msra.mxu0 0.0
  %1029 = vmatprep.subr.mxu0 0.0
  %1030 = vmatpush2.msra.mxu0 0.0
  %1031 = vmatprep.subr.mxu0 0.0
  %1032 = vmatpush2.msra.mxu0 0.0
  %1033 = vmatprep.subr.mxu0 0.0
  %1034 = vmatpush2.msra.mxu0 0.0
  %1035 = vmatprep.subr.mxu0 0.0
  %1036 = vmatpush2.msra.mxu0 0.0
  %1037 = vmatprep.subr.mxu0 0.0
  %1038 = vmatpush2.msra.mxu0 0.0
  %1039 = vmatprep.subr.mxu0 0.0
  %1040 = vmatpush2.msra.mxu0 0.0
  %1041 = vmatprep.subr.mxu0 0.0
  %1042 = vmatpush2.msra.mxu0 0.0
  %1043 = vmatprep.subr.mxu0 0.0
  %1044 = vmatpush2.msra.mxu0 0.0
  %1045 = vmatprep.subr.mxu0 0.0
  %1046 = vmatpush2.msra.mxu0 0.0
  %1047 = vmatprep.subr.mxu0 0.0
  %1048 = vmatpush2.msra.mxu0 0.0
  %1049 = vmatprep.subr.mxu0 0.0
  %1050 = vmatpush2.msra.mxu0 0.0
  %1051 = vmatprep.subr.mxu0 0.0
  %1052 = vmatpush2.msra.mxu0 0.0
  %1053 = vmatprep.subr.mxu0 0.0
  %1054 = vmatpush2.msra.mxu0 0.0
  %1055 = vmatprep.mubr.f32.mxu0 0.0
  %1056 = vmatmul.mubr.f32.gmra.mxu0 %v989
  %v1057 = vpop.f32.mrf.mxu0
  %v1058 = vadd.f32 0.0, %v1057
  %v1059 = vpop.f32.mrf.mxu0
  %1060 = vdwg.mxu0
  %v1061 = vadd.f32 %v984, %v1058
  %v1062 = vld [vmem:[%s838 + $0x1] sm:$0xf]
  %v1064 = vsel %vm65, %v1062, 0
  %1066 = vmatprep.subr.mxu0 0.0
  %1067 = vmatpush1.msra.mxu0 0.0
  %1068 = vmatprep.subr.mxu0 0.0
  %1069 = vmatpush1.msra.mxu0 0.0
  %1070 = vmatprep.subr.mxu0 0.0
  %1071 = vmatpush1.msra.mxu0 0.0
  %1072 = vmatprep.subr.mxu0 0.0
  %1073 = vmatpush1.msra.mxu0 0.0
  %1074 = vmatprep.subr.mxu0 0.0
  %1075 = vmatpush1.msra.mxu0 0.0
  %1076 = vmatprep.subr.mxu0 0.0
  %1077 = vmatpush1.msra.mxu0 0.0
  %1078 = vmatprep.subr.mxu0 0.0
  %1079 = vmatpush1.msra.mxu0 0.0
  %1080 = vmatprep.subr.mxu0 0.0
  %1081 = vmatpush1.msra.mxu0 0.0
  %1082 = vmatprep.subr.mxu0 0.0
  %1083 = vmatpush1.msra.mxu0 %v303
  %1084 = vmatprep.subr.mxu0 0.0
  %1085 = vmatpush1.msra.mxu0 %v302
  %1086 = vmatprep.subr.mxu0 0.0
  %1087 = vmatpush1.msra.mxu0 %v301
  %1088 = vmatprep.subr.mxu0 0.0
  %1089 = vmatpush1.msra.mxu0 %v300
  %1090 = vmatprep.subr.mxu0 0.0
  %1091 = vmatpush1.msra.mxu0 %v299
  %1092 = vmatprep.subr.mxu0 0.0
  %1093 = vmatpush1.msra.mxu0 %v298
  %1094 = vmatprep.subr.mxu0 0.0
  %1095 = vmatpush1.msra.mxu0 %v297
  %1096 = vmatprep.subr.mxu0 0.0
  %1097 = vmatpush1.msra.mxu0 %v296
  %1098 = vmatprep.subr.mxu0 0.0
  %1099 = vmatpush2.msra.mxu0 0.0
  %1100 = vmatprep.subr.mxu0 0.0
  %1101 = vmatpush2.msra.mxu0 0.0
  %1102 = vmatprep.subr.mxu0 0.0
  %1103 = vmatpush2.msra.mxu0 0.0
  %1104 = vmatprep.subr.mxu0 0.0
  %1105 = vmatpush2.msra.mxu0 0.0
  %1106 = vmatprep.subr.mxu0 0.0
  %1107 = vmatpush2.msra.mxu0 0.0
  %1108 = vmatprep.subr.mxu0 0.0
  %1109 = vmatpush2.msra.mxu0 0.0
  %1110 = vmatprep.subr.mxu0 0.0
  %1111 = vmatpush2.msra.mxu0 0.0
  %1112 = vmatprep.subr.mxu0 0.0
  %1113 = vmatpush2.msra.mxu0 0.0
  %1114 = vmatprep.subr.mxu0 0.0
  %1115 = vmatpush2.msra.mxu0 0.0
  %1116 = vmatprep.subr.mxu0 0.0
  %1117 = vmatpush2.msra.mxu0 0.0
  %1118 = vmatprep.subr.mxu0 0.0
  %1119 = vmatpush2.msra.mxu0 0.0
  %1120 = vmatprep.subr.mxu0 0.0
  %1121 = vmatpush2.msra.mxu0 0.0
  %1122 = vmatprep.subr.mxu0 0.0
  %1123 = vmatpush2.msra.mxu0 0.0
  %1124 = vmatprep.subr.mxu0 0.0
  %1125 = vmatpush2.msra.mxu0 0.0
  %1126 = vmatprep.subr.mxu0 0.0
  %1127 = vmatpush2.msra.mxu0 0.0
  %1128 = vmatprep.subr.mxu0 0.0
  %1129 = vmatpush2.msra.mxu0 0.0
  %1130 = vmatprep.mubr.f32.mxu0 0.0
  %1131 = vmatmul.mubr.f32.gmra.mxu0 %v1064
  %v1132 = vpop.f32.mrf.mxu0
  %v1133 = vadd.f32 0.0, %v1132
  %v1134 = vpop.f32.mrf.mxu0
  %1135 = vdwg.mxu0
  %v1136 = vadd.f32 %v1061, %v1133
  %1137 = vrot.lane.b32.xlu0 %v1062, 112
  %v1138 = vpop.permute.xlu0 %1137
  %v1139 = vsel %vm65, %v1138, 0
  %1141 = vmatprep.subr.mxu0 0.0
  %1142 = vmatpush1.msra.mxu0 0.0
  %1143 = vmatprep.subr.mxu0 0.0
  %1144 = vmatpush1.msra.mxu0 0.0
  %1145 = vmatprep.subr.mxu0 0.0
  %1146 = vmatpush1.msra.mxu0 0.0
  %1147 = vmatprep.subr.mxu0 0.0
  %1148 = vmatpush1.msra.mxu0 0.0
  %1149 = vmatprep.subr.mxu0 0.0
  %1150 = vmatpush1.msra.mxu0 0.0
  %1151 = vmatprep.subr.mxu0 0.0
  %1152 = vmatpush1.msra.mxu0 0.0
  %1153 = vmatprep.subr.mxu0 0.0
  %1154 = vmatpush1.msra.mxu0 0.0
  %1155 = vmatprep.subr.mxu0 0.0
  %1156 = vmatpush1.msra.mxu0 0.0
  %1157 = vmatprep.subr.mxu0 0.0
  %1158 = vmatpush1.msra.mxu0 %v386
  %1159 = vmatprep.subr.mxu0 0.0
  %1160 = vmatpush1.msra.mxu0 %v385
  %1161 = vmatprep.subr.mxu0 0.0
  %1162 = vmatpush1.msra.mxu0 %v384
  %1163 = vmatprep.subr.mxu0 0.0
  %1164 = vmatpush1.msra.mxu0 %v383
  %1165 = vmatprep.subr.mxu0 0.0
  %1166 = vmatpush1.msra.mxu0 %v382
  %1167 = vmatprep.subr.mxu0 0.0
  %1168 = vmatpush1.msra.mxu0 %v381
  %1169 = vmatprep.subr.mxu0 0.0
  %1170 = vmatpush1.msra.mxu0 %v380
  %1171 = vmatprep.subr.mxu0 0.0
  %1172 = vmatpush1.msra.mxu0 %v379
  %1173 = vmatprep.subr.mxu0 0.0
  %1174 = vmatpush2.msra.mxu0 0.0
  %1175 = vmatprep.subr.mxu0 0.0
  %1176 = vmatpush2.msra.mxu0 0.0
  %1177 = vmatprep.subr.mxu0 0.0
  %1178 = vmatpush2.msra.mxu0 0.0
  %1179 = vmatprep.subr.mxu0 0.0
  %1180 = vmatpush2.msra.mxu0 0.0
  %1181 = vmatprep.subr.mxu0 0.0
  %1182 = vmatpush2.msra.mxu0 0.0
  %1183 = vmatprep.subr.mxu0 0.0
  %1184 = vmatpush2.msra.mxu0 0.0
  %1185 = vmatprep.subr.mxu0 0.0
  %1186 = vmatpush2.msra.mxu0 0.0
  %1187 = vmatprep.subr.mxu0 0.0
  %1188 = vmatpush2.msra.mxu0 0.0
  %1189 = vmatprep.subr.mxu0 0.0
  %1190 = vmatpush2.msra.mxu0 0.0
  %1191 = vmatprep.subr.mxu0 0.0
  %1192 = vmatpush2.msra.mxu0 0.0
  %1193 = vmatprep.subr.mxu0 0.0
  %1194 = vmatpush2.msra.mxu0 0.0
  %1195 = vmatprep.subr.mxu0 0.0
  %1196 = vmatpush2.msra.mxu0 0.0
  %1197 = vmatprep.subr.mxu0 0.0
  %1198 = vmatpush2.msra.mxu0 0.0
  %1199 = vmatprep.subr.mxu0 0.0
  %1200 = vmatpush2.msra.mxu0 0.0
  %1201 = vmatprep.subr.mxu0 0.0
  %1202 = vmatpush2.msra.mxu0 0.0
  %1203 = vmatprep.subr.mxu0 0.0
  %1204 = vmatpush2.msra.mxu0 0.0
  %1205 = vmatprep.mubr.f32.mxu0 0.0
  %1206 = vmatmul.mubr.f32.gmra.mxu0 %v1139
  %v1207 = vpop.f32.mrf.mxu0
  %v1208 = vadd.f32 0.0, %v1207
  %v1209 = vpop.f32.mrf.mxu0
  %1210 = vdwg.mxu0
  %v1211 = vadd.f32 %v1136, %v1208
  %1212 = vrot.lane.b32.xlu0 %v1062, 96
  %v1213 = vpop.permute.xlu0 %1212
  %v1214 = vsel %vm65, %v1213, 0
  %1216 = vmatprep.subr.mxu0 0.0
  %1217 = vmatpush1.msra.mxu0 0.0
  %1218 = vmatprep.subr.mxu0 0.0
  %1219 = vmatpush1.msra.mxu0 0.0
  %1220 = vmatprep.subr.mxu0 0.0
  %1221 = vmatpush1.msra.mxu0 0.0
  %1222 = vmatprep.subr.mxu0 0.0
  %1223 = vmatpush1.msra.mxu0 0.0
  %1224 = vmatprep.subr.mxu0 0.0
  %1225 = vmatpush1.msra.mxu0 0.0
  %1226 = vmatprep.subr.mxu0 0.0
  %1227 = vmatpush1.msra.mxu0 0.0
  %1228 = vmatprep.subr.mxu0 0.0
  %1229 = vmatpush1.msra.mxu0 0.0
  %1230 = vmatprep.subr.mxu0 0.0
  %1231 = vmatpush1.msra.mxu0 0.0
  %1232 = vmatprep.subr.mxu0 0.0
  %1233 = vmatpush1.msra.mxu0 %v470
  %1234 = vmatprep.subr.mxu0 0.0
  %1235 = vmatpush1.msra.mxu0 %v469
  %1236 = vmatprep.subr.mxu0 0.0
  %1237 = vmatpush1.msra.mxu0 %v468
  %1238 = vmatprep.subr.mxu0 0.0
  %1239 = vmatpush1.msra.mxu0 %v467
  %1240 = vmatprep.subr.mxu0 0.0
  %1241 = vmatpush1.msra.mxu0 %v466
  %1242 = vmatprep.subr.mxu0 0.0
  %1243 = vmatpush1.msra.mxu0 %v465
  %1244 = vmatprep.subr.mxu0 0.0
  %1245 = vmatpush1.msra.mxu0 %v464
  %1246 = vmatprep.subr.mxu0 0.0
  %1247 = vmatpush1.msra.mxu0 %v463
  %1248 = vmatprep.subr.mxu0 0.0
  %1249 = vmatpush2.msra.mxu0 0.0
  %1250 = vmatprep.subr.mxu0 0.0
  %1251 = vmatpush2.msra.mxu0 0.0
  %1252 = vmatprep.subr.mxu0 0.0
  %1253 = vmatpush2.msra.mxu0 0.0
  %1254 = vmatprep.subr.mxu0 0.0
  %1255 = vmatpush2.msra.mxu0 0.0
  %1256 = vmatprep.subr.mxu0 0.0
  %1257 = vmatpush2.msra.mxu0 0.0
  %1258 = vmatprep.subr.mxu0 0.0
  %1259 = vmatpush2.msra.mxu0 0.0
  %1260 = vmatprep.subr.mxu0 0.0
  %1261 = vmatpush2.msra.mxu0 0.0
  %1262 = vmatprep.subr.mxu0 0.0
  %1263 = vmatpush2.msra.mxu0 0.0
  %1264 = vmatprep.subr.mxu0 0.0
  %1265 = vmatpush2.msra.mxu0 0.0
  %1266 = vmatprep.subr.mxu0 0.0
  %1267 = vmatpush2.msra.mxu0 0.0
  %1268 = vmatprep.subr.mxu0 0.0
  %1269 = vmatpush2.msra.mxu0 0.0
  %1270 = vmatprep.subr.mxu0 0.0
  %1271 = vmatpush2.msra.mxu0 0.0
  %1272 = vmatprep.subr.mxu0 0.0
  %1273 = vmatpush2.msra.mxu0 0.0
  %1274 = vmatprep.subr.mxu0 0.0
  %1275 = vmatpush2.msra.mxu0 0.0
  %1276 = vmatprep.subr.mxu0 0.0
  %1277 = vmatpush2.msra.mxu0 0.0
  %1278 = vmatprep.subr.mxu0 0.0
  %1279 = vmatpush2.msra.mxu0 0.0
  %1280 = vmatprep.mubr.f32.mxu0 0.0
  %1281 = vmatmul.mubr.f32.gmra.mxu0 %v1214
  %v1282 = vpop.f32.mrf.mxu0
  %v1283 = vadd.f32 0.0, %v1282
  %v1284 = vpop.f32.mrf.mxu0
  %1285 = vdwg.mxu0
  %v1286 = vadd.f32 %v1211, %v1283
  %v1287 = vld [vmem:[%s838 + $0x2] sm:$0xf]
  %v1289 = vsel %vm65, %v1287, 0
  %1291 = vmatprep.subr.mxu0 0.0
  %1292 = vmatpush1.msra.mxu0 0.0
  %1293 = vmatprep.subr.mxu0 0.0
  %1294 = vmatpush1.msra.mxu0 0.0
  %1295 = vmatprep.subr.mxu0 0.0
  %1296 = vmatpush1.msra.mxu0 0.0
  %1297 = vmatprep.subr.mxu0 0.0
  %1298 = vmatpush1.msra.mxu0 0.0
  %1299 = vmatprep.subr.mxu0 0.0
  %1300 = vmatpush1.msra.mxu0 0.0
  %1301 = vmatprep.subr.mxu0 0.0
  %1302 = vmatpush1.msra.mxu0 0.0
  %1303 = vmatprep.subr.mxu0 0.0
  %1304 = vmatpush1.msra.mxu0 0.0
  %1305 = vmatprep.subr.mxu0 0.0
  %1306 = vmatpush1.msra.mxu0 0.0
  %1307 = vmatprep.subr.mxu0 0.0
  %1308 = vmatpush1.msra.mxu0 %v555
  %1309 = vmatprep.subr.mxu0 0.0
  %1310 = vmatpush1.msra.mxu0 %v554
  %1311 = vmatprep.subr.mxu0 0.0
  %1312 = vmatpush1.msra.mxu0 %v553
  %1313 = vmatprep.subr.mxu0 0.0
  %1314 = vmatpush1.msra.mxu0 %v552
  %1315 = vmatprep.subr.mxu0 0.0
  %1316 = vmatpush1.msra.mxu0 %v551
  %1317 = vmatprep.subr.mxu0 0.0
  %1318 = vmatpush1.msra.mxu0 %v550
  %1319 = vmatprep.subr.mxu0 0.0
  %1320 = vmatpush1.msra.mxu0 %v549
  %1321 = vmatprep.subr.mxu0 0.0
  %1322 = vmatpush1.msra.mxu0 %v548
  %1323 = vmatprep.subr.mxu0 0.0
  %1324 = vmatpush2.msra.mxu0 0.0
  %1325 = vmatprep.subr.mxu0 0.0
  %1326 = vmatpush2.msra.mxu0 0.0
  %1327 = vmatprep.subr.mxu0 0.0
  %1328 = vmatpush2.msra.mxu0 0.0
  %1329 = vmatprep.subr.mxu0 0.0
  %1330 = vmatpush2.msra.mxu0 0.0
  %1331 = vmatprep.subr.mxu0 0.0
  %1332 = vmatpush2.msra.mxu0 0.0
  %1333 = vmatprep.subr.mxu0 0.0
  %1334 = vmatpush2.msra.mxu0 0.0
  %1335 = vmatprep.subr.mxu0 0.0
  %1336 = vmatpush2.msra.mxu0 0.0
  %1337 = vmatprep.subr.mxu0 0.0
  %1338 = vmatpush2.msra.mxu0 0.0
  %1339 = vmatprep.subr.mxu0 0.0
  %1340 = vmatpush2.msra.mxu0 0.0
  %1341 = vmatprep.subr.mxu0 0.0
  %1342 = vmatpush2.msra.mxu0 0.0
  %1343 = vmatprep.subr.mxu0 0.0
  %1344 = vmatpush2.msra.mxu0 0.0
  %1345 = vmatprep.subr.mxu0 0.0
  %1346 = vmatpush2.msra.mxu0 0.0
  %1347 = vmatprep.subr.mxu0 0.0
  %1348 = vmatpush2.msra.mxu0 0.0
  %1349 = vmatprep.subr.mxu0 0.0
  %1350 = vmatpush2.msra.mxu0 0.0
  %1351 = vmatprep.subr.mxu0 0.0
  %1352 = vmatpush2.msra.mxu0 0.0
  %1353 = vmatprep.subr.mxu0 0.0
  %1354 = vmatpush2.msra.mxu0 0.0
  %1355 = vmatprep.mubr.f32.mxu0 0.0
  %1356 = vmatmul.mubr.f32.gmra.mxu0 %v1289
  %v1357 = vpop.f32.mrf.mxu0
  %v1358 = vadd.f32 0.0, %v1357
  %v1359 = vpop.f32.mrf.mxu0
  %1360 = vdwg.mxu0
  %v1361 = vadd.f32 %v1286, %v1358
  %1362 = vrot.lane.b32.xlu0 %v1287, 112
  %v1363 = vpop.permute.xlu0 %1362
  %v1364 = vsel %vm65, %v1363, 0
  %1366 = vmatprep.subr.mxu0 0.0
  %1367 = vmatpush1.msra.mxu0 0.0
  %1368 = vmatprep.subr.mxu0 0.0
  %1369 = vmatpush1.msra.mxu0 0.0
  %1370 = vmatprep.subr.mxu0 0.0
  %1371 = vmatpush1.msra.mxu0 0.0
  %1372 = vmatprep.subr.mxu0 0.0
  %1373 = vmatpush1.msra.mxu0 0.0
  %1374 = vmatprep.subr.mxu0 0.0
  %1375 = vmatpush1.msra.mxu0 0.0
  %1376 = vmatprep.subr.mxu0 0.0
  %1377 = vmatpush1.msra.mxu0 0.0
  %1378 = vmatprep.subr.mxu0 0.0
  %1379 = vmatpush1.msra.mxu0 0.0
  %1380 = vmatprep.subr.mxu0 0.0
  %1381 = vmatpush1.msra.mxu0 0.0
  %1382 = vmatprep.subr.mxu0 0.0
  %1383 = vmatpush1.msra.mxu0 %v638
  %1384 = vmatprep.subr.mxu0 0.0
  %1385 = vmatpush1.msra.mxu0 %v637
  %1386 = vmatprep.subr.mxu0 0.0
  %1387 = vmatpush1.msra.mxu0 %v636
  %1388 = vmatprep.subr.mxu0 0.0
  %1389 = vmatpush1.msra.mxu0 %v635
  %1390 = vmatprep.subr.mxu0 0.0
  %1391 = vmatpush1.msra.mxu0 %v634
  %1392 = vmatprep.subr.mxu0 0.0
  %1393 = vmatpush1.msra.mxu0 %v633
  %1394 = vmatprep.subr.mxu0 0.0
  %1395 = vmatpush1.msra.mxu0 %v632
  %1396 = vmatprep.subr.mxu0 0.0
  %1397 = vmatpush1.msra.mxu0 %v631
  %1398 = vmatprep.subr.mxu0 0.0
  %1399 = vmatpush2.msra.mxu0 0.0
  %1400 = vmatprep.subr.mxu0 0.0
  %1401 = vmatpush2.msra.mxu0 0.0
  %1402 = vmatprep.subr.mxu0 0.0
  %1403 = vmatpush2.msra.mxu0 0.0
  %1404 = vmatprep.subr.mxu0 0.0
  %1405 = vmatpush2.msra.mxu0 0.0
  %1406 = vmatprep.subr.mxu0 0.0
  %1407 = vmatpush2.msra.mxu0 0.0
  %1408 = vmatprep.subr.mxu0 0.0
  %1409 = vmatpush2.msra.mxu0 0.0
  %1410 = vmatprep.subr.mxu0 0.0
  %1411 = vmatpush2.msra.mxu0 0.0
  %1412 = vmatprep.subr.mxu0 0.0
  %1413 = vmatpush2.msra.mxu0 0.0
  %1414 = vmatprep.subr.mxu0 0.0
  %1415 = vmatpush2.msra.mxu0 0.0
  %1416 = vmatprep.subr.mxu0 0.0
  %1417 = vmatpush2.msra.mxu0 0.0
  %1418 = vmatprep.subr.mxu0 0.0
  %1419 = vmatpush2.msra.mxu0 0.0
  %1420 = vmatprep.subr.mxu0 0.0
  %1421 = vmatpush2.msra.mxu0 0.0
  %1422 = vmatprep.subr.mxu0 0.0
  %1423 = vmatpush2.msra.mxu0 0.0
  %1424 = vmatprep.subr.mxu0 0.0
  %1425 = vmatpush2.msra.mxu0 0.0
  %1426 = vmatprep.subr.mxu0 0.0
  %1427 = vmatpush2.msra.mxu0 0.0
  %1428 = vmatprep.subr.mxu0 0.0
  %1429 = vmatpush2.msra.mxu0 0.0
  %1430 = vmatprep.mubr.f32.mxu0 0.0
  %1431 = vmatmul.mubr.f32.gmra.mxu0 %v1364
  %v1432 = vpop.f32.mrf.mxu0
  %v1433 = vadd.f32 0.0, %v1432
  %v1434 = vpop.f32.mrf.mxu0
  %1435 = vdwg.mxu0
  %v1436 = vadd.f32 %v1361, %v1433
  %1437 = vrot.lane.b32.xlu0 %v1287, 96
  %v1438 = vpop.permute.xlu0 %1437
  %v1439 = vsel %vm65, %v1438, 0
  %1441 = vmatprep.subr.mxu0 0.0
  %1442 = vmatpush1.msra.mxu0 0.0
  %1443 = vmatprep.subr.mxu0 0.0
  %1444 = vmatpush1.msra.mxu0 0.0
  %1445 = vmatprep.subr.mxu0 0.0
  %1446 = vmatpush1.msra.mxu0 0.0
  %1447 = vmatprep.subr.mxu0 0.0
  %1448 = vmatpush1.msra.mxu0 0.0
  %1449 = vmatprep.subr.mxu0 0.0
  %1450 = vmatpush1.msra.mxu0 0.0
  %1451 = vmatprep.subr.mxu0 0.0
  %1452 = vmatpush1.msra.mxu0 0.0
  %1453 = vmatprep.subr.mxu0 0.0
  %1454 = vmatpush1.msra.mxu0 0.0
  %1455 = vmatprep.subr.mxu0 0.0
  %1456 = vmatpush1.msra.mxu0 0.0
  %1457 = vmatprep.subr.mxu0 0.0
  %1458 = vmatpush1.msra.mxu0 %v722
  %1459 = vmatprep.subr.mxu0 0.0
  %1460 = vmatpush1.msra.mxu0 %v721
  %1461 = vmatprep.subr.mxu0 0.0
  %1462 = vmatpush1.msra.mxu0 %v720
  %1463 = vmatprep.subr.mxu0 0.0
  %1464 = vmatpush1.msra.mxu0 %v719
  %1465 = vmatprep.subr.mxu0 0.0
  %1466 = vmatpush1.msra.mxu0 %v718
  %1467 = vmatprep.subr.mxu0 0.0
  %1468 = vmatpush1.msra.mxu0 %v717
  %1469 = vmatprep.subr.mxu0 0.0
  %1470 = vmatpush1.msra.mxu0 %v716
  %1471 = vmatprep.subr.mxu0 0.0
  %1472 = vmatpush1.msra.mxu0 %v715
  %1473 = vmatprep.subr.mxu0 0.0
  %1474 = vmatpush2.msra.mxu0 0.0
  %1475 = vmatprep.subr.mxu0 0.0
  %1476 = vmatpush2.msra.mxu0 0.0
  %1477 = vmatprep.subr.mxu0 0.0
  %1478 = vmatpush2.msra.mxu0 0.0
  %1479 = vmatprep.subr.mxu0 0.0
  %1480 = vmatpush2.msra.mxu0 0.0
  %1481 = vmatprep.subr.mxu0 0.0
  %1482 = vmatpush2.msra.mxu0 0.0
  %1483 = vmatprep.subr.mxu0 0.0
  %1484 = vmatpush2.msra.mxu0 0.0
  %1485 = vmatprep.subr.mxu0 0.0
  %1486 = vmatpush2.msra.mxu0 0.0
  %1487 = vmatprep.subr.mxu0 0.0
  %1488 = vmatpush2.msra.mxu0 0.0
  %1489 = vmatprep.subr.mxu0 0.0
  %1490 = vmatpush2.msra.mxu0 0.0
  %1491 = vmatprep.subr.mxu0 0.0
  %1492 = vmatpush2.msra.mxu0 0.0
  %1493 = vmatprep.subr.mxu0 0.0
  %1494 = vmatpush2.msra.mxu0 0.0
  %1495 = vmatprep.subr.mxu0 0.0
  %1496 = vmatpush2.msra.mxu0 0.0
  %1497 = vmatprep.subr.mxu0 0.0
  %1498 = vmatpush2.msra.mxu0 0.0
  %1499 = vmatprep.subr.mxu0 0.0
  %1500 = vmatpush2.msra.mxu0 0.0
  %1501 = vmatprep.subr.mxu0 0.0
  %1502 = vmatpush2.msra.mxu0 0.0
  %1503 = vmatprep.subr.mxu0 0.0
  %1504 = vmatpush2.msra.mxu0 0.0
  %1505 = vmatprep.mubr.f32.mxu0 0.0
  %1506 = vmatmul.mubr.f32.gmra.mxu0 %v1439
  %v1507 = vpop.f32.mrf.mxu0
  %v1508 = vadd.f32 0.0, %v1507
  %v1509 = vpop.f32.mrf.mxu0
  %1510 = vdwg.mxu0
  %v1511 = vadd.f32 %v1436, %v1508
  %v1512 = vadd.f32 %v1511, %v803
  %v1513 = vsel %vm806, %v1512, 0.0
  %v1514 = vrot.slane %v1513, 4
  %v1515 = vadd.f32 %v1513, %v1514
  %v1516 = vrot.slane %v1515, 2
  %v1517 = vadd.f32 %v1515, %v1516
  %v1518 = vrot.slane %v1517, 1
  %v1519 = vadd.f32 %v1517, %v1518
  %1520 = vmatprep.subr.mxu0 0.0
  %1521 = vmatpush1.msra.mxu0 %v829
  %1522 = vmatprep.subr.mxu0 0.0
  %1523 = vmatpush1.msra.mxu0 %v828
  %1524 = vmatprep.subr.mxu0 0.0
  %1525 = vmatpush1.msra.mxu0 %v827
  %1526 = vmatprep.subr.mxu0 0.0
  %1527 = vmatpush1.msra.mxu0 %v826
  %1528 = vmatprep.subr.mxu0 0.0
  %1529 = vmatpush1.msra.mxu0 %v825
  %1530 = vmatprep.subr.mxu0 0.0
  %1531 = vmatpush1.msra.mxu0 %v824
  %1532 = vmatprep.subr.mxu0 0.0
  %1533 = vmatpush1.msra.mxu0 %v823
  %1534 = vmatprep.subr.mxu0 0.0
  %1535 = vmatpush1.msra.mxu0 %v822
  %1536 = vmatprep.subr.mxu0 0.0
  %1537 = vmatpush1.msra.mxu0 %v821
  %1538 = vmatprep.subr.mxu0 0.0
  %1539 = vmatpush1.msra.mxu0 %v820
  %1540 = vmatprep.subr.mxu0 0.0
  %1541 = vmatpush1.msra.mxu0 %v819
  %1542 = vmatprep.subr.mxu0 0.0
  %1543 = vmatpush1.msra.mxu0 %v818
  %1544 = vmatprep.subr.mxu0 0.0
  %1545 = vmatpush1.msra.mxu0 %v817
  %1546 = vmatprep.subr.mxu0 0.0
  %1547 = vmatpush1.msra.mxu0 %v816
  %1548 = vmatprep.subr.mxu0 0.0
  %1549 = vmatpush1.msra.mxu0 %v815
  %1550 = vmatprep.subr.mxu0 0.0
  %1551 = vmatpush1.msra.mxu0 %v814
  %1552 = vmatprep.subr.mxu0 0.0
  %1553 = vmatpush2.msra.mxu0 0.0
  %1554 = vmatprep.subr.mxu0 0.0
  %1555 = vmatpush2.msra.mxu0 0.0
  %1556 = vmatprep.subr.mxu0 0.0
  %1557 = vmatpush2.msra.mxu0 0.0
  %1558 = vmatprep.subr.mxu0 0.0
  %1559 = vmatpush2.msra.mxu0 0.0
  %1560 = vmatprep.subr.mxu0 0.0
  %1561 = vmatpush2.msra.mxu0 0.0
  %1562 = vmatprep.subr.mxu0 0.0
  %1563 = vmatpush2.msra.mxu0 0.0
  %1564 = vmatprep.subr.mxu0 0.0
  %1565 = vmatpush2.msra.mxu0 0.0
  %1566 = vmatprep.subr.mxu0 0.0
  %1567 = vmatpush2.msra.mxu0 0.0
  %1568 = vmatprep.subr.mxu0 0.0
  %1569 = vmatpush2.msra.mxu0 0.0
  %1570 = vmatprep.subr.mxu0 0.0
  %1571 = vmatpush2.msra.mxu0 0.0
  %1572 = vmatprep.subr.mxu0 0.0
  %1573 = vmatpush2.msra.mxu0 0.0
  %1574 = vmatprep.subr.mxu0 0.0
  %1575 = vmatpush2.msra.mxu0 0.0
  %1576 = vmatprep.subr.mxu0 0.0
  %1577 = vmatpush2.msra.mxu0 0.0
  %1578 = vmatprep.subr.mxu0 0.0
  %1579 = vmatpush2.msra.mxu0 0.0
  %1580 = vmatprep.subr.mxu0 0.0
  %1581 = vmatpush2.msra.mxu0 0.0
  %1582 = vmatprep.subr.mxu0 0.0
  %1583 = vmatpush2.msra.mxu0 0.0
  %1584 = vmatprep.mubr.f32.mxu0 0.0
  %1585 = vmatmul.mubr.f32.gmra.mxu0 %v1519
  %v1586 = vpop.f32.mrf.mxu0
  %v1587 = vadd.f32 0.0, %v1586
  %v1588 = vpop.f32.mrf.mxu0
  %1589 = vdwg.mxu0
  %1590 = vmatprep.subr.mxu0 0.0
  %1591 = vmatpush1.msra.mxu0 %v829
  %1592 = vmatprep.subr.mxu0 0.0
  %1593 = vmatpush1.msra.mxu0 %v828
  %1594 = vmatprep.subr.mxu0 0.0
  %1595 = vmatpush1.msra.mxu0 %v827
  %1596 = vmatprep.subr.mxu0 0.0
  %1597 = vmatpush1.msra.mxu0 %v826
  %1598 = vmatprep.subr.mxu0 0.0
  %1599 = vmatpush1.msra.mxu0 %v825
  %1600 = vmatprep.subr.mxu0 0.0
  %1601 = vmatpush1.msra.mxu0 %v824
  %1602 = vmatprep.subr.mxu0 0.0
  %1603 = vmatpush1.msra.mxu0 %v823
  %1604 = vmatprep.subr.mxu0 0.0
  %1605 = vmatpush1.msra.mxu0 %v822
  %1606 = vmatprep.subr.mxu0 0.0
  %1607 = vmatpush1.msra.mxu0 %v821
  %1608 = vmatprep.subr.mxu0 0.0
  %1609 = vmatpush1.msra.mxu0 %v820
  %1610 = vmatprep.subr.mxu0 0.0
  %1611 = vmatpush1.msra.mxu0 %v819
  %1612 = vmatprep.subr.mxu0 0.0
  %1613 = vmatpush1.msra.mxu0 %v818
  %1614 = vmatprep.subr.mxu0 0.0
  %1615 = vmatpush1.msra.mxu0 %v817
  %1616 = vmatprep.subr.mxu0 0.0
  %1617 = vmatpush1.msra.mxu0 %v816
  %1618 = vmatprep.subr.mxu0 0.0
  %1619 = vmatpush1.msra.mxu0 %v815
  %1620 = vmatprep.subr.mxu0 0.0
  %1621 = vmatpush1.msra.mxu0 %v814
  %1622 = vmatprep.subr.mxu0 0.0
  %1623 = vmatpush2.msra.mxu0 0.0
  %1624 = vmatprep.subr.mxu0 0.0
  %1625 = vmatpush2.msra.mxu0 0.0
  %1626 = vmatprep.subr.mxu0 0.0
  %1627 = vmatpush2.msra.mxu0 0.0
  %1628 = vmatprep.subr.mxu0 0.0
  %1629 = vmatpush2.msra.mxu0 0.0
  %1630 = vmatprep.subr.mxu0 0.0
  %1631 = vmatpush2.msra.mxu0 0.0
  %1632 = vmatprep.subr.mxu0 0.0
  %1633 = vmatpush2.msra.mxu0 0.0
  %1634 = vmatprep.subr.mxu0 0.0
  %1635 = vmatpush2.msra.mxu0 0.0
  %1636 = vmatprep.subr.mxu0 0.0
  %1637 = vmatpush2.msra.mxu0 0.0
  %1638 = vmatprep.subr.mxu0 0.0
  %1639 = vmatpush2.msra.mxu0 0.0
  %1640 = vmatprep.subr.mxu0 0.0
  %1641 = vmatpush2.msra.mxu0 0.0
  %1642 = vmatprep.subr.mxu0 0.0
  %1643 = vmatpush2.msra.mxu0 0.0
  %1644 = vmatprep.subr.mxu0 0.0
  %1645 = vmatpush2.msra.mxu0 0.0
  %1646 = vmatprep.subr.mxu0 0.0
  %1647 = vmatpush2.msra.mxu0 0.0
  %1648 = vmatprep.subr.mxu0 0.0
  %1649 = vmatpush2.msra.mxu0 0.0
  %1650 = vmatprep.subr.mxu0 0.0
  %1651 = vmatpush2.msra.mxu0 0.0
  %1652 = vmatprep.subr.mxu0 0.0
  %1653 = vmatpush2.msra.mxu0 0.0
  %1654 = vmatprep.mubr.f32.mxu0 0.0
  %1655 = vmatmul.mubr.f32.gmra.mxu0 %v813
  %v1656 = vpop.f32.mrf.mxu0
  %v1657 = vadd.f32 %v1587, %v1656
  %v1658 = vpop.f32.mrf.mxu0
  %1659 = vdwg.mxu0
  %v1660 = vmul.f32 %v1512, %v1512
  %v1661 = vsel %vm806, %v1660, 0.0
  %v1662 = vrot.slane %v1661, 4
  %v1663 = vadd.f32 %v1661, %v1662
  %v1664 = vrot.slane %v1663, 2
  %v1665 = vadd.f32 %v1663, %v1664
  %v1666 = vrot.slane %v1665, 1
  %v1667 = vadd.f32 %v1665, %v1666
  %1668 = vmatprep.subr.mxu0 0.0
  %1669 = vmatpush1.msra.mxu0 %v829
  %1670 = vmatprep.subr.mxu0 0.0
  %1671 = vmatpush1.msra.mxu0 %v828
  %1672 = vmatprep.subr.mxu0 0.0
  %1673 = vmatpush1.msra.mxu0 %v827
  %1674 = vmatprep.subr.mxu0 0.0
  %1675 = vmatpush1.msra.mxu0 %v826
  %1676 = vmatprep.subr.mxu0 0.0
  %1677 = vmatpush1.msra.mxu0 %v825
  %1678 = vmatprep.subr.mxu0 0.0
  %1679 = vmatpush1.msra.mxu0 %v824
  %1680 = vmatprep.subr.mxu0 0.0
  %1681 = vmatpush1.msra.mxu0 %v823
  %1682 = vmatprep.subr.mxu0 0.0
  %1683 = vmatpush1.msra.mxu0 %v822
  %1684 = vmatprep.subr.mxu0 0.0
  %1685 = vmatpush1.msra.mxu0 %v821
  %1686 = vmatprep.subr.mxu0 0.0
  %1687 = vmatpush1.msra.mxu0 %v820
  %1688 = vmatprep.subr.mxu0 0.0
  %1689 = vmatpush1.msra.mxu0 %v819
  %1690 = vmatprep.subr.mxu0 0.0
  %1691 = vmatpush1.msra.mxu0 %v818
  %1692 = vmatprep.subr.mxu0 0.0
  %1693 = vmatpush1.msra.mxu0 %v817
  %1694 = vmatprep.subr.mxu0 0.0
  %1695 = vmatpush1.msra.mxu0 %v816
  %1696 = vmatprep.subr.mxu0 0.0
  %1697 = vmatpush1.msra.mxu0 %v815
  %1698 = vmatprep.subr.mxu0 0.0
  %1699 = vmatpush1.msra.mxu0 %v814
  %1700 = vmatprep.subr.mxu0 0.0
  %1701 = vmatpush2.msra.mxu0 0.0
  %1702 = vmatprep.subr.mxu0 0.0
  %1703 = vmatpush2.msra.mxu0 0.0
  %1704 = vmatprep.subr.mxu0 0.0
  %1705 = vmatpush2.msra.mxu0 0.0
  %1706 = vmatprep.subr.mxu0 0.0
  %1707 = vmatpush2.msra.mxu0 0.0
  %1708 = vmatprep.subr.mxu0 0.0
  %1709 = vmatpush2.msra.mxu0 0.0
  %1710 = vmatprep.subr.mxu0 0.0
  %1711 = vmatpush2.msra.mxu0 0.0
  %1712 = vmatprep.subr.mxu0 0.0
  %1713 = vmatpush2.msra.mxu0 0.0
  %1714 = vmatprep.subr.mxu0 0.0
  %1715 = vmatpush2.msra.mxu0 0.0
  %1716 = vmatprep.subr.mxu0 0.0
  %1717 = vmatpush2.msra.mxu0 0.0
  %1718 = vmatprep.subr.mxu0 0.0
  %1719 = vmatpush2.msra.mxu0 0.0
  %1720 = vmatprep.subr.mxu0 0.0
  %1721 = vmatpush2.msra.mxu0 0.0
  %1722 = vmatprep.subr.mxu0 0.0
  %1723 = vmatpush2.msra.mxu0 0.0
  %1724 = vmatprep.subr.mxu0 0.0
  %1725 = vmatpush2.msra.mxu0 0.0
  %1726 = vmatprep.subr.mxu0 0.0
  %1727 = vmatpush2.msra.mxu0 0.0
  %1728 = vmatprep.subr.mxu0 0.0
  %1729 = vmatpush2.msra.mxu0 0.0
  %1730 = vmatprep.subr.mxu0 0.0
  %1731 = vmatpush2.msra.mxu0 0.0
  %1732 = vmatprep.mubr.f32.mxu0 0.0
  %1733 = vmatmul.mubr.f32.gmra.mxu0 %v1667
  %v1734 = vpop.f32.mrf.mxu0
  %v1735 = vadd.f32 0.0, %v1734
  %v1736 = vpop.f32.mrf.mxu0
  %1737 = vdwg.mxu0
  %1738 = vmatprep.subr.mxu0 0.0
  %1739 = vmatpush1.msra.mxu0 %v829
  %1740 = vmatprep.subr.mxu0 0.0
  %1741 = vmatpush1.msra.mxu0 %v828
  %1742 = vmatprep.subr.mxu0 0.0
  %1743 = vmatpush1.msra.mxu0 %v827
  %1744 = vmatprep.subr.mxu0 0.0
  %1745 = vmatpush1.msra.mxu0 %v826
  %1746 = vmatprep.subr.mxu0 0.0
  %1747 = vmatpush1.msra.mxu0 %v825
  %1748 = vmatprep.subr.mxu0 0.0
  %1749 = vmatpush1.msra.mxu0 %v824
  %1750 = vmatprep.subr.mxu0 0.0
  %1751 = vmatpush1.msra.mxu0 %v823
  %1752 = vmatprep.subr.mxu0 0.0
  %1753 = vmatpush1.msra.mxu0 %v822
  %1754 = vmatprep.subr.mxu0 0.0
  %1755 = vmatpush1.msra.mxu0 %v821
  %1756 = vmatprep.subr.mxu0 0.0
  %1757 = vmatpush1.msra.mxu0 %v820
  %1758 = vmatprep.subr.mxu0 0.0
  %1759 = vmatpush1.msra.mxu0 %v819
  %1760 = vmatprep.subr.mxu0 0.0
  %1761 = vmatpush1.msra.mxu0 %v818
  %1762 = vmatprep.subr.mxu0 0.0
  %1763 = vmatpush1.msra.mxu0 %v817
  %1764 = vmatprep.subr.mxu0 0.0
  %1765 = vmatpush1.msra.mxu0 %v816
  %1766 = vmatprep.subr.mxu0 0.0
  %1767 = vmatpush1.msra.mxu0 %v815
  %1768 = vmatprep.subr.mxu0 0.0
  %1769 = vmatpush1.msra.mxu0 %v814
  %1770 = vmatprep.subr.mxu0 0.0
  %1771 = vmatpush2.msra.mxu0 0.0
  %1772 = vmatprep.subr.mxu0 0.0
  %1773 = vmatpush2.msra.mxu0 0.0
  %1774 = vmatprep.subr.mxu0 0.0
  %1775 = vmatpush2.msra.mxu0 0.0
  %1776 = vmatprep.subr.mxu0 0.0
  %1777 = vmatpush2.msra.mxu0 0.0
  %1778 = vmatprep.subr.mxu0 0.0
  %1779 = vmatpush2.msra.mxu0 0.0
  %1780 = vmatprep.subr.mxu0 0.0
  %1781 = vmatpush2.msra.mxu0 0.0
  %1782 = vmatprep.subr.mxu0 0.0
  %1783 = vmatpush2.msra.mxu0 0.0
  %1784 = vmatprep.subr.mxu0 0.0
  %1785 = vmatpush2.msra.mxu0 0.0
  %1786 = vmatprep.subr.mxu0 0.0
  %1787 = vmatpush2.msra.mxu0 0.0
  %1788 = vmatprep.subr.mxu0 0.0
  %1789 = vmatpush2.msra.mxu0 0.0
  %1790 = vmatprep.subr.mxu0 0.0
  %1791 = vmatpush2.msra.mxu0 0.0
  %1792 = vmatprep.subr.mxu0 0.0
  %1793 = vmatpush2.msra.mxu0 0.0
  %1794 = vmatprep.subr.mxu0 0.0
  %1795 = vmatpush2.msra.mxu0 0.0
  %1796 = vmatprep.subr.mxu0 0.0
  %1797 = vmatpush2.msra.mxu0 0.0
  %1798 = vmatprep.subr.mxu0 0.0
  %1799 = vmatpush2.msra.mxu0 0.0
  %1800 = vmatprep.subr.mxu0 0.0
  %1801 = vmatpush2.msra.mxu0 0.0
  %1802 = vmatprep.mubr.f32.mxu0 0.0
  %1803 = vmatmul.mubr.f32.gmra.mxu0 %v837
  %v1804 = vpop.f32.mrf.mxu0
  %v1805 = vadd.f32 %v1735, %v1804
  %v1806 = vpop.f32.mrf.mxu0
  %1807 = vdwg.mxu0
  %v1808 = vrcp.pop 32.0
  %v1809 = vmul.f32 %v1657, %v1808
  %v1810 = vmul.f32 %v1805, %v1808
  %v1811 = vmul.f32 %v1809, %v1809
  %v1812 = vsub.f32 %v1810, %v1811
  %v1813 = vmax.f32 %v1812, 0.0
  %v1814 = vld [vmem:[%s3] sm:$0x1]
  %v1815 = vadd.f32 %v1813, 1e-05
  %v1816 = vrsqrt.pop %v1815
  %v1817 = vmul.f32 %v1814, %v1816
  %v1818 = vld [vmem:[%s4] sm:$0x1]
  %v1819 = vmul.f32 %v1809, %v1817
  %v1820 = vsub.f32 %v1818, %v1819
  %v1821 = vld [vmem:[%s6] sm:$0xff]
  %v1822 = vld [vmem:[%s6 + $0x8] sm:$0xff]
  %v1823 = vld [vmem:[%s6 + $0x10] sm:$0xff]
  %v1824 = vld [vmem:[%s6 + $0x18] sm:$0xff]
  %vm1825 = vcmask 261120
  %v1827 = vsel %vm1825, %v1817, 0
  %1829 = vmatprep.subr.mxu0 0.0
  %1830 = vmatpush1.msra.mxu0 0.0
  %1831 = vmatprep.subr.mxu0 0.0
  %1832 = vmatpush1.msra.mxu0 0.0
  %1833 = vmatprep.subr.mxu0 0.0
  %1834 = vmatpush1.msra.mxu0 0.0
  %1835 = vmatprep.subr.mxu0 0.0
  %1836 = vmatpush1.msra.mxu0 0.0
  %1837 = vmatprep.subr.mxu0 0.0
  %1838 = vmatpush1.msra.mxu0 0.0
  %1839 = vmatprep.subr.mxu0 0.0
  %1840 = vmatpush1.msra.mxu0 0.0
  %1841 = vmatprep.subr.mxu0 0.0
  %1842 = vmatpush1.msra.mxu0 0.0
  %1843 = vmatprep.subr.mxu0 0.0
  %1844 = vmatpush1.msra.mxu0 0.0
  %1845 = vmatprep.subr.mxu0 0.0
  %1846 = vmatpush1.msra.mxu0 0.0
  %1847 = vmatprep.subr.mxu0 0.0
  %1848 = vmatpush1.msra.mxu0 0.0
  %1849 = vmatprep.subr.mxu0 0.0
  %1850 = vmatpush1.msra.mxu0 0.0
  %1851 = vmatprep.subr.mxu0 0.0
  %1852 = vmatpush1.msra.mxu0 0.0
  %1853 = vmatprep.subr.mxu0 0.0
  %1854 = vmatpush1.msra.mxu0 %v1824
  %1855 = vmatprep.subr.mxu0 0.0
  %1856 = vmatpush1.msra.mxu0 %v1823
  %1857 = vmatprep.subr.mxu0 0.0
  %1858 = vmatpush1.msra.mxu0 %v1822
  %1859 = vmatprep.subr.mxu0 0.0
  %1860 = vmatpush1.msra.mxu0 %v1821
  %1861 = vmatprep.subr.mxu0 0.0
  %1862 = vmatpush2.msra.mxu0 0.0
  %1863 = vmatprep.subr.mxu0 0.0
  %1864 = vmatpush2.msra.mxu0 0.0
  %1865 = vmatprep.subr.mxu0 0.0
  %1866 = vmatpush2.msra.mxu0 0.0
  %1867 = vmatprep.subr.mxu0 0.0
  %1868 = vmatpush2.msra.mxu0 0.0
  %1869 = vmatprep.subr.mxu0 0.0
  %1870 = vmatpush2.msra.mxu0 0.0
  %1871 = vmatprep.subr.mxu0 0.0
  %1872 = vmatpush2.msra.mxu0 0.0
  %1873 = vmatprep.subr.mxu0 0.0
  %1874 = vmatpush2.msra.mxu0 0.0
  %1875 = vmatprep.subr.mxu0 0.0
  %1876 = vmatpush2.msra.mxu0 0.0
  %1877 = vmatprep.subr.mxu0 0.0
  %1878 = vmatpush2.msra.mxu0 0.0
  %1879 = vmatprep.subr.mxu0 0.0
  %1880 = vmatpush2.msra.mxu0 0.0
  %1881 = vmatprep.subr.mxu0 0.0
  %1882 = vmatpush2.msra.mxu0 0.0
  %1883 = vmatprep.subr.mxu0 0.0
  %1884 = vmatpush2.msra.mxu0 0.0
  %1885 = vmatprep.subr.mxu0 0.0
  %1886 = vmatpush2.msra.mxu0 0.0
  %1887 = vmatprep.subr.mxu0 0.0
  %1888 = vmatpush2.msra.mxu0 0.0
  %1889 = vmatprep.subr.mxu0 0.0
  %1890 = vmatpush2.msra.mxu0 0.0
  %1891 = vmatprep.subr.mxu0 0.0
  %1892 = vmatpush2.msra.mxu0 0.0
  %1893 = vmatprep.mubr.f32.mxu0 0.0
  %1894 = vmatmul.mubr.f32.gmra.mxu0 %v1827
  %v1895 = vpop.f32.mrf.mxu0
  %v1896 = vadd.f32 0.0, %v1895
  %v1897 = vpop.f32.mrf.mxu0
  %1898 = vdwg.mxu0
  %v1900 = vsel %vm1825, %v1820, 0
  %1902 = vmatprep.subr.mxu0 0.0
  %1903 = vmatpush1.msra.mxu0 0.0
  %1904 = vmatprep.subr.mxu0 0.0
  %1905 = vmatpush1.msra.mxu0 0.0
  %1906 = vmatprep.subr.mxu0 0.0
  %1907 = vmatpush1.msra.mxu0 0.0
  %1908 = vmatprep.subr.mxu0 0.0
  %1909 = vmatpush1.msra.mxu0 0.0
  %1910 = vmatprep.subr.mxu0 0.0
  %1911 = vmatpush1.msra.mxu0 0.0
  %1912 = vmatprep.subr.mxu0 0.0
  %1913 = vmatpush1.msra.mxu0 0.0
  %1914 = vmatprep.subr.mxu0 0.0
  %1915 = vmatpush1.msra.mxu0 0.0
  %1916 = vmatprep.subr.mxu0 0.0
  %1917 = vmatpush1.msra.mxu0 0.0
  %1918 = vmatprep.subr.mxu0 0.0
  %1919 = vmatpush1.msra.mxu0 0.0
  %1920 = vmatprep.subr.mxu0 0.0
  %1921 = vmatpush1.msra.mxu0 0.0
  %1922 = vmatprep.subr.mxu0 0.0
  %1923 = vmatpush1.msra.mxu0 0.0
  %1924 = vmatprep.subr.mxu0 0.0
  %1925 = vmatpush1.msra.mxu0 0.0
  %1926 = vmatprep.subr.mxu0 0.0
  %1927 = vmatpush1.msra.mxu0 %v1824
  %1928 = vmatprep.subr.mxu0 0.0
  %1929 = vmatpush1.msra.mxu0 %v1823
  %1930 = vmatprep.subr.mxu0 0.0
  %1931 = vmatpush1.msra.mxu0 %v1822
  %1932 = vmatprep.subr.mxu0 0.0
  %1933 = vmatpush1.msra.mxu0 %v1821
  %1934 = vmatprep.subr.mxu0 0.0
  %1935 = vmatpush2.msra.mxu0 0.0
  %1936 = vmatprep.subr.mxu0 0.0
  %1937 = vmatpush2.msra.mxu0 0.0
  %1938 = vmatprep.subr.mxu0 0.0
  %1939 = vmatpush2.msra.mxu0 0.0
  %1940 = vmatprep.subr.mxu0 0.0
  %1941 = vmatpush2.msra.mxu0 0.0
  %1942 = vmatprep.subr.mxu0 0.0
  %1943 = vmatpush2.msra.mxu0 0.0
  %1944 = vmatprep.subr.mxu0 0.0
  %1945 = vmatpush2.msra.mxu0 0.0
  %1946 = vmatprep.subr.mxu0 0.0
  %1947 = vmatpush2.msra.mxu0 0.0
  %1948 = vmatprep.subr.mxu0 0.0
  %1949 = vmatpush2.msra.mxu0 0.0
  %1950 = vmatprep.subr.mxu0 0.0
  %1951 = vmatpush2.msra.mxu0 0.0
  %1952 = vmatprep.subr.mxu0 0.0
  %1953 = vmatpush2.msra.mxu0 0.0
  %1954 = vmatprep.subr.mxu0 0.0
  %1955 = vmatpush2.msra.mxu0 0.0
  %1956 = vmatprep.subr.mxu0 0.0
  %1957 = vmatpush2.msra.mxu0 0.0
  %1958 = vmatprep.subr.mxu0 0.0
  %1959 = vmatpush2.msra.mxu0 0.0
  %1960 = vmatprep.subr.mxu0 0.0
  %1961 = vmatpush2.msra.mxu0 0.0
  %1962 = vmatprep.subr.mxu0 0.0
  %1963 = vmatpush2.msra.mxu0 0.0
  %1964 = vmatprep.subr.mxu0 0.0
  %1965 = vmatpush2.msra.mxu0 0.0
  %1966 = vmatprep.mubr.f32.mxu0 0.0
  %1967 = vmatmul.mubr.f32.gmra.mxu0 %v1900
  %v1968 = vpop.f32.mrf.mxu0
  %v1969 = vadd.f32 0.0, %v1968
  %v1970 = vpop.f32.mrf.mxu0
  %1971 = vdwg.mxu0
  %v1972 = vlaneseq
  %v1973 = vshrl.u32 %v1972, 7
  %v1974 = vsub.s32 0, %v1973
  %v1975 = vrot.slane %v1896, %v1974
  %v1976 = vmul.f32 %v805, %v1975
  %v1977 = vlaneseq
  %v1978 = vshrl.u32 %v1977, 7
  %v1979 = vsub.s32 0, %v1978
  %v1980 = vrot.slane %v1969, %v1979
  %v1981 = vadd.f32 %v1976, %v1980
  %v1982 = vmax.f32 %v1981, 0.0
  %v1983 = vld [vmem:[%s7] sm:$0xff]
  %v1984 = vld [vmem:[%s7 + $0x8] sm:$0xff]
  %v1985 = vld [vmem:[%s7 + $0x10] sm:$0xff]
  %v1986 = vld [vmem:[%s7 + $0x18] sm:$0xff]
  %v1987 = vld [vmem:[%s7 + $0x20] sm:$0xff]
  %v1988 = vld [vmem:[%s7 + $0x28] sm:$0xff]
  %v1989 = vld [vmem:[%s7 + $0x30] sm:$0xff]
  %v1990 = vld [vmem:[%s7 + $0x38] sm:$0xff]
  %v1991 = vld [vmem:[%s7 + $0x40] sm:$0xff]
  %v1992 = vld [vmem:[%s7 + $0x48] sm:$0xff]
  %v1993 = vld [vmem:[%s7 + $0x50] sm:$0xff]
  %v1994 = vld [vmem:[%s7 + $0x58] sm:$0xff]
  %v1995 = vld [vmem:[%s7 + $0x60] sm:$0xff]
  %v1996 = vld [vmem:[%s7 + $0x68] sm:$0xff]
  %v1997 = vld [vmem:[%s7 + $0x70] sm:$0xff]
  %v1998 = vld [vmem:[%s7 + $0x78] sm:$0xff]
  %1999 = vmatprep.subr.mxu0 0.0
  %2000 = vmatpush1.msra.mxu0 %v1998
  %2001 = vmatprep.subr.mxu0 0.0
  %2002 = vmatpush1.msra.mxu0 %v1997
  %2003 = vmatprep.subr.mxu0 0.0
  %2004 = vmatpush1.msra.mxu0 %v1996
  %2005 = vmatprep.subr.mxu0 0.0
  %2006 = vmatpush1.msra.mxu0 %v1995
  %2007 = vmatprep.subr.mxu0 0.0
  %2008 = vmatpush1.msra.mxu0 %v1994
  %2009 = vmatprep.subr.mxu0 0.0
  %2010 = vmatpush1.msra.mxu0 %v1993
  %2011 = vmatprep.subr.mxu0 0.0
  %2012 = vmatpush1.msra.mxu0 %v1992
  %2013 = vmatprep.subr.mxu0 0.0
  %2014 = vmatpush1.msra.mxu0 %v1991
  %2015 = vmatprep.subr.mxu0 0.0
  %2016 = vmatpush1.msra.mxu0 %v1990
  %2017 = vmatprep.subr.mxu0 0.0
  %2018 = vmatpush1.msra.mxu0 %v1989
  %2019 = vmatprep.subr.mxu0 0.0
  %2020 = vmatpush1.msra.mxu0 %v1988
  %2021 = vmatprep.subr.mxu0 0.0
  %2022 = vmatpush1.msra.mxu0 %v1987
  %2023 = vmatprep.subr.mxu0 0.0
  %2024 = vmatpush1.msra.mxu0 %v1986
  %2025 = vmatprep.subr.mxu0 0.0
  %2026 = vmatpush1.msra.mxu0 %v1985
  %2027 = vmatprep.subr.mxu0 0.0
  %2028 = vmatpush1.msra.mxu0 %v1984
  %2029 = vmatprep.subr.mxu0 0.0
  %2030 = vmatpush1.msra.mxu0 %v1983
  %2031 = vmatprep.subr.mxu0 0.0
  %2032 = vmatpush2.msra.mxu0 0.0
  %2033 = vmatprep.subr.mxu0 0.0
  %2034 = vmatpush2.msra.mxu0 0.0
  %2035 = vmatprep.subr.mxu0 0.0
  %2036 = vmatpush2.msra.mxu0 0.0
  %2037 = vmatprep.subr.mxu0 0.0
  %2038 = vmatpush2.msra.mxu0 0.0
  %2039 = vmatprep.subr.mxu0 0.0
  %2040 = vmatpush2.msra.mxu0 0.0
  %2041 = vmatprep.subr.mxu0 0.0
  %2042 = vmatpush2.msra.mxu0 0.0
  %2043 = vmatprep.subr.mxu0 0.0
  %2044 = vmatpush2.msra.mxu0 0.0
  %2045 = vmatprep.subr.mxu0 0.0
  %2046 = vmatpush2.msra.mxu0 0.0
  %2047 = vmatprep.subr.mxu0 0.0
  %2048 = vmatpush2.msra.mxu0 0.0
  %2049 = vmatprep.subr.mxu0 0.0
  %2050 = vmatpush2.msra.mxu0 0.0
  %2051 = vmatprep.subr.mxu0 0.0
  %2052 = vmatpush2.msra.mxu0 0.0
  %2053 = vmatprep.subr.mxu0 0.0
  %2054 = vmatpush2.msra.mxu0 0.0
  %2055 = vmatprep.subr.mxu0 0.0
  %2056 = vmatpush2.msra.mxu0 0.0
  %2057 = vmatprep.subr.mxu0 0.0
  %2058 = vmatpush2.msra.mxu0 0.0
  %2059 = vmatprep.subr.mxu0 0.0
  %2060 = vmatpush2.msra.mxu0 0.0
  %2061 = vmatprep.subr.mxu0 0.0
  %2062 = vmatpush2.msra.mxu0 0.0
  %2063 = vmatprep.mubr.f32.mxu0 0.0
  %2064 = vmatmul.mubr.f32.gmra.mxu0 %v1982
  %v2065 = vpop.f32.mrf.mxu0
  %v2066 = vadd.f32 0.0, %v2065
  %v2067 = vpop.f32.mrf.mxu0
  %2068 = vdwg.mxu0
  %v2069 = vld [vmem:[%s8] sm:$0xff]
  %v2070 = vld [vmem:[%s8 + $0x8] sm:$0xff]
  %v2071 = vld [vmem:[%s8 + $0x10] sm:$0xff]
  %v2072 = vld [vmem:[%s8 + $0x18] sm:$0xff]
  %v2073 = vld [vmem:[%s8 + $0x20] sm:$0xff]
  %v2074 = vld [vmem:[%s8 + $0x28] sm:$0xff]
  %v2075 = vld [vmem:[%s8 + $0x30] sm:$0xff]
  %v2076 = vld [vmem:[%s8 + $0x38] sm:$0xff]
  %v2077 = vld [vmem:[%s8 + $0x40] sm:$0xff]
  %v2078 = vld [vmem:[%s8 + $0x48] sm:$0xff]
  %v2079 = vld [vmem:[%s8 + $0x50] sm:$0xff]
  %v2080 = vld [vmem:[%s8 + $0x58] sm:$0xff]
  %v2081 = vld [vmem:[%s8 + $0x60] sm:$0xff]
  %v2082 = vld [vmem:[%s8 + $0x68] sm:$0xff]
  %v2083 = vld [vmem:[%s8 + $0x70] sm:$0xff]
  %v2084 = vld [vmem:[%s8 + $0x78] sm:$0xff]
  %2085 = vmatprep.subr.mxu0 0.0
  %2086 = vmatpush1.msra.mxu0 %v2084
  %2087 = vmatprep.subr.mxu0 0.0
  %2088 = vmatpush1.msra.mxu0 %v2083
  %2089 = vmatprep.subr.mxu0 0.0
  %2090 = vmatpush1.msra.mxu0 %v2082
  %2091 = vmatprep.subr.mxu0 0.0
  %2092 = vmatpush1.msra.mxu0 %v2081
  %2093 = vmatprep.subr.mxu0 0.0
  %2094 = vmatpush1.msra.mxu0 %v2080
  %2095 = vmatprep.subr.mxu0 0.0
  %2096 = vmatpush1.msra.mxu0 %v2079
  %2097 = vmatprep.subr.mxu0 0.0
  %2098 = vmatpush1.msra.mxu0 %v2078
  %2099 = vmatprep.subr.mxu0 0.0
  %2100 = vmatpush1.msra.mxu0 %v2077
  %2101 = vmatprep.subr.mxu0 0.0
  %2102 = vmatpush1.msra.mxu0 %v2076
  %2103 = vmatprep.subr.mxu0 0.0
  %2104 = vmatpush1.msra.mxu0 %v2075
  %2105 = vmatprep.subr.mxu0 0.0
  %2106 = vmatpush1.msra.mxu0 %v2074
  %2107 = vmatprep.subr.mxu0 0.0
  %2108 = vmatpush1.msra.mxu0 %v2073
  %2109 = vmatprep.subr.mxu0 0.0
  %2110 = vmatpush1.msra.mxu0 %v2072
  %2111 = vmatprep.subr.mxu0 0.0
  %2112 = vmatpush1.msra.mxu0 %v2071
  %2113 = vmatprep.subr.mxu0 0.0
  %2114 = vmatpush1.msra.mxu0 %v2070
  %2115 = vmatprep.subr.mxu0 0.0
  %2116 = vmatpush1.msra.mxu0 %v2069
  %2117 = vmatprep.subr.mxu0 0.0
  %2118 = vmatpush2.msra.mxu0 0.0
  %2119 = vmatprep.subr.mxu0 0.0
  %2120 = vmatpush2.msra.mxu0 0.0
  %2121 = vmatprep.subr.mxu0 0.0
  %2122 = vmatpush2.msra.mxu0 0.0
  %2123 = vmatprep.subr.mxu0 0.0
  %2124 = vmatpush2.msra.mxu0 0.0
  %2125 = vmatprep.subr.mxu0 0.0
  %2126 = vmatpush2.msra.mxu0 0.0
  %2127 = vmatprep.subr.mxu0 0.0
  %2128 = vmatpush2.msra.mxu0 0.0
  %2129 = vmatprep.subr.mxu0 0.0
  %2130 = vmatpush2.msra.mxu0 0.0
  %2131 = vmatprep.subr.mxu0 0.0
  %2132 = vmatpush2.msra.mxu0 0.0
  %2133 = vmatprep.subr.mxu0 0.0
  %2134 = vmatpush2.msra.mxu0 0.0
  %2135 = vmatprep.subr.mxu0 0.0
  %2136 = vmatpush2.msra.mxu0 0.0
  %2137 = vmatprep.subr.mxu0 0.0
  %2138 = vmatpush2.msra.mxu0 0.0
  %2139 = vmatprep.subr.mxu0 0.0
  %2140 = vmatpush2.msra.mxu0 0.0
  %2141 = vmatprep.subr.mxu0 0.0
  %2142 = vmatpush2.msra.mxu0 0.0
  %2143 = vmatprep.subr.mxu0 0.0
  %2144 = vmatpush2.msra.mxu0 0.0
  %2145 = vmatprep.subr.mxu0 0.0
  %2146 = vmatpush2.msra.mxu0 0.0
  %2147 = vmatprep.subr.mxu0 0.0
  %2148 = vmatpush2.msra.mxu0 0.0
  %2149 = vmatprep.mubr.f32.mxu0 0.0
  %2150 = vmatmul.mubr.f32.gmra.mxu0 %v1982
  %v2151 = vpop.f32.mrf.mxu0
  %v2152 = vadd.f32 0.0, %v2151
  %v2153 = vpop.f32.mrf.mxu0
  %2154 = vdwg.mxu0
  %v2155 = vmax.f32 %v2066, %v2152
  %v2156 = vld [vmem:[%s9] sm:$0x3]
  %vm2157 = vcmask 31744
  %v2159 = vsel %vm2157, %v2156, 0
  %v2162 = vsel %vm806, %v2155, 0
  %2164 = vmatprep.subr.mxu0 0.0
  %2165 = vmatpush1.msra.mxu0 0.0
  %2166 = vmatprep.subr.mxu0 0.0
  %2167 = vmatpush1.msra.mxu0 0.0
  %2168 = vmatprep.subr.mxu0 0.0
  %2169 = vmatpush1.msra.mxu0 0.0
  %2170 = vmatprep.subr.mxu0 0.0
  %2171 = vmatpush1.msra.mxu0 0.0
  %2172 = vmatprep.subr.mxu0 0.0
  %2173 = vmatpush1.msra.mxu0 0.0
  %2174 = vmatprep.subr.mxu0 0.0
  %2175 = vmatpush1.msra.mxu0 0.0
  %2176 = vmatprep.subr.mxu0 0.0
  %2177 = vmatpush1.msra.mxu0 0.0
  %2178 = vmatprep.subr.mxu0 0.0
  %2179 = vmatpush1.msra.mxu0 0.0
  %2180 = vmatprep.subr.mxu0 0.0
  %2181 = vmatpush1.msra.mxu0 0.0
  %2182 = vmatprep.subr.mxu0 0.0
  %2183 = vmatpush1.msra.mxu0 0.0
  %2184 = vmatprep.subr.mxu0 0.0
  %2185 = vmatpush1.msra.mxu0 0.0
  %2186 = vmatprep.subr.mxu0 0.0
  %2187 = vmatpush1.msra.mxu0 0.0
  %2188 = vmatprep.subr.mxu0 0.0
  %2189 = vmatpush1.msra.mxu0 0.0
  %2190 = vmatprep.subr.mxu0 0.0
  %2191 = vmatpush1.msra.mxu0 0.0
  %2192 = vmatprep.subr.mxu0 0.0
  %2193 = vmatpush1.msra.mxu0 0.0
  %2194 = vmatprep.subr.mxu0 0.0
  %2195 = vmatpush1.msra.mxu0 %v2162
  %2196 = vmatprep.subr.mxu0 0.0
  %2197 = vmatpush2.msra.mxu0 0.0
  %2198 = vmatprep.subr.mxu0 0.0
  %2199 = vmatpush2.msra.mxu0 0.0
  %2200 = vmatprep.subr.mxu0 0.0
  %2201 = vmatpush2.msra.mxu0 0.0
  %2202 = vmatprep.subr.mxu0 0.0
  %2203 = vmatpush2.msra.mxu0 0.0
  %2204 = vmatprep.subr.mxu0 0.0
  %2205 = vmatpush2.msra.mxu0 0.0
  %2206 = vmatprep.subr.mxu0 0.0
  %2207 = vmatpush2.msra.mxu0 0.0
  %2208 = vmatprep.subr.mxu0 0.0
  %2209 = vmatpush2.msra.mxu0 0.0
  %2210 = vmatprep.subr.mxu0 0.0
  %2211 = vmatpush2.msra.mxu0 0.0
  %2212 = vmatprep.subr.mxu0 0.0
  %2213 = vmatpush2.msra.mxu0 0.0
  %2214 = vmatprep.subr.mxu0 0.0
  %2215 = vmatpush2.msra.mxu0 0.0
  %2216 = vmatprep.subr.mxu0 0.0
  %2217 = vmatpush2.msra.mxu0 0.0
  %2218 = vmatprep.subr.mxu0 0.0
  %2219 = vmatpush2.msra.mxu0 0.0
  %2220 = vmatprep.subr.mxu0 0.0
  %2221 = vmatpush2.msra.mxu0 0.0
  %2222 = vmatprep.subr.mxu0 0.0
  %2223 = vmatpush2.msra.mxu0 0.0
  %2224 = vmatprep.subr.mxu0 0.0
  %2225 = vmatpush2.msra.mxu0 0.0
  %2226 = vmatprep.subr.mxu0 0.0
  %2227 = vmatpush2.msra.mxu0 0.0
  %2228 = vmatprep.mubr.f32.mxu0 0.0
  %2229 = vmatmul.mubr.f32.gmra.mxu0 %v2159
  %v2230 = vpop.f32.mrf.mxu0
  %v2231 = vadd.f32 0.0, %v2230
  %v2232 = vpop.f32.mrf.mxu0
  %2233 = vdwg.mxu0
  %v2234 = vld [vmem:[%s10] sm:$0x3]
  %v2236 = vsel %vm2157, %v2234, 0
  %2238 = vmatprep.subr.mxu0 0.0
  %2239 = vmatpush1.msra.mxu0 0.0
  %2240 = vmatprep.subr.mxu0 0.0
  %2241 = vmatpush1.msra.mxu0 0.0
  %2242 = vmatprep.subr.mxu0 0.0
  %2243 = vmatpush1.msra.mxu0 0.0
  %2244 = vmatprep.subr.mxu0 0.0
  %2245 = vmatpush1.msra.mxu0 0.0
  %2246 = vmatprep.subr.mxu0 0.0
  %2247 = vmatpush1.msra.mxu0 0.0
  %2248 = vmatprep.subr.mxu0 0.0
  %2249 = vmatpush1.msra.mxu0 0.0
  %2250 = vmatprep.subr.mxu0 0.0
  %2251 = vmatpush1.msra.mxu0 0.0
  %2252 = vmatprep.subr.mxu0 0.0
  %2253 = vmatpush1.msra.mxu0 0.0
  %2254 = vmatprep.subr.mxu0 0.0
  %2255 = vmatpush1.msra.mxu0 0.0
  %2256 = vmatprep.subr.mxu0 0.0
  %2257 = vmatpush1.msra.mxu0 0.0
  %2258 = vmatprep.subr.mxu0 0.0
  %2259 = vmatpush1.msra.mxu0 0.0
  %2260 = vmatprep.subr.mxu0 0.0
  %2261 = vmatpush1.msra.mxu0 0.0
  %2262 = vmatprep.subr.mxu0 0.0
  %2263 = vmatpush1.msra.mxu0 0.0
  %2264 = vmatprep.subr.mxu0 0.0
  %2265 = vmatpush1.msra.mxu0 0.0
  %2266 = vmatprep.subr.mxu0 0.0
  %2267 = vmatpush1.msra.mxu0 0.0
  %2268 = vmatprep.subr.mxu0 0.0
  %2269 = vmatpush1.msra.mxu0 %v2162
  %2270 = vmatprep.subr.mxu0 0.0
  %2271 = vmatpush2.msra.mxu0 0.0
  %2272 = vmatprep.subr.mxu0 0.0
  %2273 = vmatpush2.msra.mxu0 0.0
  %2274 = vmatprep.subr.mxu0 0.0
  %2275 = vmatpush2.msra.mxu0 0.0
  %2276 = vmatprep.subr.mxu0 0.0
  %2277 = vmatpush2.msra.mxu0 0.0
  %2278 = vmatprep.subr.mxu0 0.0
  %2279 = vmatpush2.msra.mxu0 0.0
  %2280 = vmatprep.subr.mxu0 0.0
  %2281 = vmatpush2.msra.mxu0 0.0
  %2282 = vmatprep.subr.mxu0 0.0
  %2283 = vmatpush2.msra.mxu0 0.0
  %2284 = vmatprep.subr.mxu0 0.0
  %2285 = vmatpush2.msra.mxu0 0.0
  %2286 = vmatprep.subr.mxu0 0.0
  %2287 = vmatpush2.msra.mxu0 0.0
  %2288 = vmatprep.subr.mxu0 0.0
  %2289 = vmatpush2.msra.mxu0 0.0
  %2290 = vmatprep.subr.mxu0 0.0
  %2291 = vmatpush2.msra.mxu0 0.0
  %2292 = vmatprep.subr.mxu0 0.0
  %2293 = vmatpush2.msra.mxu0 0.0
  %2294 = vmatprep.subr.mxu0 0.0
  %2295 = vmatpush2.msra.mxu0 0.0
  %2296 = vmatprep.subr.mxu0 0.0
  %2297 = vmatpush2.msra.mxu0 0.0
  %2298 = vmatprep.subr.mxu0 0.0
  %2299 = vmatpush2.msra.mxu0 0.0
  %2300 = vmatprep.subr.mxu0 0.0
  %2301 = vmatpush2.msra.mxu0 0.0
  %2302 = vmatprep.mubr.f32.mxu0 0.0
  %2303 = vmatmul.mubr.f32.gmra.mxu0 %v2236
  %v2304 = vpop.f32.mrf.mxu0
  %v2305 = vadd.f32 0.0, %v2304
  %v2306 = vpop.f32.mrf.mxu0
  %2307 = vdwg.mxu0
  %v2308 = vmax.f32 %v2231, %v2305
  %vm2309 = vcmask 517120
  %2310 = vst.msk [vmem:[%s13] sm:$0x3] %vm2309, %v2308
  %v2311 = vmul.f32 %v1512, %v1975
  %v2312 = vadd.f32 %v2311, %v1980
  %v2313 = vmax.f32 %v2312, 0.0
  %v2314 = vld [vmem:[%s7] sm:$0xff]
  %v2315 = vld [vmem:[%s7 + $0x8] sm:$0xff]
  %v2316 = vld [vmem:[%s7 + $0x10] sm:$0xff]
  %v2317 = vld [vmem:[%s7 + $0x18] sm:$0xff]
  %v2318 = vld [vmem:[%s7 + $0x20] sm:$0xff]
  %v2319 = vld [vmem:[%s7 + $0x28] sm:$0xff]
  %v2320 = vld [vmem:[%s7 + $0x30] sm:$0xff]
  %v2321 = vld [vmem:[%s7 + $0x38] sm:$0xff]
  %v2322 = vld [vmem:[%s7 + $0x40] sm:$0xff]
  %v2323 = vld [vmem:[%s7 + $0x48] sm:$0xff]
  %v2324 = vld [vmem:[%s7 + $0x50] sm:$0xff]
  %v2325 = vld [vmem:[%s7 + $0x58] sm:$0xff]
  %v2326 = vld [vmem:[%s7 + $0x60] sm:$0xff]
  %v2327 = vld [vmem:[%s7 + $0x68] sm:$0xff]
  %v2328 = vld [vmem:[%s7 + $0x70] sm:$0xff]
  %v2329 = vld [vmem:[%s7 + $0x78] sm:$0xff]
  %2330 = vmatprep.subr.mxu0 0.0
  %2331 = vmatpush1.msra.mxu0 %v2329
  %2332 = vmatprep.subr.mxu0 0.0
  %2333 = vmatpush1.msra.mxu0 %v2328
  %2334 = vmatprep.subr.mxu0 0.0
  %2335 = vmatpush1.msra.mxu0 %v2327
  %2336 = vmatprep.subr.mxu0 0.0
  %2337 = vmatpush1.msra.mxu0 %v2326
  %2338 = vmatprep.subr.mxu0 0.0
  %2339 = vmatpush1.msra.mxu0 %v2325
  %2340 = vmatprep.subr.mxu0 0.0
  %2341 = vmatpush1.msra.mxu0 %v2324
  %2342 = vmatprep.subr.mxu0 0.0
  %2343 = vmatpush1.msra.mxu0 %v2323
  %2344 = vmatprep.subr.mxu0 0.0
  %2345 = vmatpush1.msra.mxu0 %v2322
  %2346 = vmatprep.subr.mxu0 0.0
  %2347 = vmatpush1.msra.mxu0 %v2321
  %2348 = vmatprep.subr.mxu0 0.0
  %2349 = vmatpush1.msra.mxu0 %v2320
  %2350 = vmatprep.subr.mxu0 0.0
  %2351 = vmatpush1.msra.mxu0 %v2319
  %2352 = vmatprep.subr.mxu0 0.0
  %2353 = vmatpush1.msra.mxu0 %v2318
  %2354 = vmatprep.subr.mxu0 0.0
  %2355 = vmatpush1.msra.mxu0 %v2317
  %2356 = vmatprep.subr.mxu0 0.0
  %2357 = vmatpush1.msra.mxu0 %v2316
  %2358 = vmatprep.subr.mxu0 0.0
  %2359 = vmatpush1.msra.mxu0 %v2315
  %2360 = vmatprep.subr.mxu0 0.0
  %2361 = vmatpush1.msra.mxu0 %v2314
  %2362 = vmatprep.subr.mxu0 0.0
  %2363 = vmatpush2.msra.mxu0 0.0
  %2364 = vmatprep.subr.mxu0 0.0
  %2365 = vmatpush2.msra.mxu0 0.0
  %2366 = vmatprep.subr.mxu0 0.0
  %2367 = vmatpush2.msra.mxu0 0.0
  %2368 = vmatprep.subr.mxu0 0.0
  %2369 = vmatpush2.msra.mxu0 0.0
  %2370 = vmatprep.subr.mxu0 0.0
  %2371 = vmatpush2.msra.mxu0 0.0
  %2372 = vmatprep.subr.mxu0 0.0
  %2373 = vmatpush2.msra.mxu0 0.0
  %2374 = vmatprep.subr.mxu0 0.0
  %2375 = vmatpush2.msra.mxu0 0.0
  %2376 = vmatprep.subr.mxu0 0.0
  %2377 = vmatpush2.msra.mxu0 0.0
  %2378 = vmatprep.subr.mxu0 0.0
  %2379 = vmatpush2.msra.mxu0 0.0
  %2380 = vmatprep.subr.mxu0 0.0
  %2381 = vmatpush2.msra.mxu0 0.0
  %2382 = vmatprep.subr.mxu0 0.0
  %2383 = vmatpush2.msra.mxu0 0.0
  %2384 = vmatprep.subr.mxu0 0.0
  %2385 = vmatpush2.msra.mxu0 0.0
  %2386 = vmatprep.subr.mxu0 0.0
  %2387 = vmatpush2.msra.mxu0 0.0
  %2388 = vmatprep.subr.mxu0 0.0
  %2389 = vmatpush2.msra.mxu0 0.0
  %2390 = vmatprep.subr.mxu0 0.0
  %2391 = vmatpush2.msra.mxu0 0.0
  %2392 = vmatprep.subr.mxu0 0.0
  %2393 = vmatpush2.msra.mxu0 0.0
  %2394 = vmatprep.mubr.f32.mxu0 0.0
  %2395 = vmatmul.mubr.f32.gmra.mxu0 %v2313
  %v2396 = vpop.f32.mrf.mxu0
  %v2397 = vadd.f32 0.0, %v2396
  %v2398 = vpop.f32.mrf.mxu0
  %2399 = vdwg.mxu0
  %v2400 = vld [vmem:[%s8] sm:$0xff]
  %v2401 = vld [vmem:[%s8 + $0x8] sm:$0xff]
  %v2402 = vld [vmem:[%s8 + $0x10] sm:$0xff]
  %v2403 = vld [vmem:[%s8 + $0x18] sm:$0xff]
  %v2404 = vld [vmem:[%s8 + $0x20] sm:$0xff]
  %v2405 = vld [vmem:[%s8 + $0x28] sm:$0xff]
  %v2406 = vld [vmem:[%s8 + $0x30] sm:$0xff]
  %v2407 = vld [vmem:[%s8 + $0x38] sm:$0xff]
  %v2408 = vld [vmem:[%s8 + $0x40] sm:$0xff]
  %v2409 = vld [vmem:[%s8 + $0x48] sm:$0xff]
  %v2410 = vld [vmem:[%s8 + $0x50] sm:$0xff]
  %v2411 = vld [vmem:[%s8 + $0x58] sm:$0xff]
  %v2412 = vld [vmem:[%s8 + $0x60] sm:$0xff]
  %v2413 = vld [vmem:[%s8 + $0x68] sm:$0xff]
  %v2414 = vld [vmem:[%s8 + $0x70] sm:$0xff]
  %v2415 = vld [vmem:[%s8 + $0x78] sm:$0xff]
  %2416 = vmatprep.subr.mxu0 0.0
  %2417 = vmatpush1.msra.mxu0 %v2415
  %2418 = vmatprep.subr.mxu0 0.0
  %2419 = vmatpush1.msra.mxu0 %v2414
  %2420 = vmatprep.subr.mxu0 0.0
  %2421 = vmatpush1.msra.mxu0 %v2413
  %2422 = vmatprep.subr.mxu0 0.0
  %2423 = vmatpush1.msra.mxu0 %v2412
  %2424 = vmatprep.subr.mxu0 0.0
  %2425 = vmatpush1.msra.mxu0 %v2411
  %2426 = vmatprep.subr.mxu0 0.0
  %2427 = vmatpush1.msra.mxu0 %v2410
  %2428 = vmatprep.subr.mxu0 0.0
  %2429 = vmatpush1.msra.mxu0 %v2409
  %2430 = vmatprep.subr.mxu0 0.0
  %2431 = vmatpush1.msra.mxu0 %v2408
  %2432 = vmatprep.subr.mxu0 0.0
  %2433 = vmatpush1.msra.mxu0 %v2407
  %2434 = vmatprep.subr.mxu0 0.0
  %2435 = vmatpush1.msra.mxu0 %v2406
  %2436 = vmatprep.subr.mxu0 0.0
  %2437 = vmatpush1.msra.mxu0 %v2405
  %2438 = vmatprep.subr.mxu0 0.0
  %2439 = vmatpush1.msra.mxu0 %v2404
  %2440 = vmatprep.subr.mxu0 0.0
  %2441 = vmatpush1.msra.mxu0 %v2403
  %2442 = vmatprep.subr.mxu0 0.0
  %2443 = vmatpush1.msra.mxu0 %v2402
  %2444 = vmatprep.subr.mxu0 0.0
  %2445 = vmatpush1.msra.mxu0 %v2401
  %2446 = vmatprep.subr.mxu0 0.0
  %2447 = vmatpush1.msra.mxu0 %v2400
  %2448 = vmatprep.subr.mxu0 0.0
  %2449 = vmatpush2.msra.mxu0 0.0
  %2450 = vmatprep.subr.mxu0 0.0
  %2451 = vmatpush2.msra.mxu0 0.0
  %2452 = vmatprep.subr.mxu0 0.0
  %2453 = vmatpush2.msra.mxu0 0.0
  %2454 = vmatprep.subr.mxu0 0.0
  %2455 = vmatpush2.msra.mxu0 0.0
  %2456 = vmatprep.subr.mxu0 0.0
  %2457 = vmatpush2.msra.mxu0 0.0
  %2458 = vmatprep.subr.mxu0 0.0
  %2459 = vmatpush2.msra.mxu0 0.0
  %2460 = vmatprep.subr.mxu0 0.0
  %2461 = vmatpush2.msra.mxu0 0.0
  %2462 = vmatprep.subr.mxu0 0.0
  %2463 = vmatpush2.msra.mxu0 0.0
  %2464 = vmatprep.subr.mxu0 0.0
  %2465 = vmatpush2.msra.mxu0 0.0
  %2466 = vmatprep.subr.mxu0 0.0
  %2467 = vmatpush2.msra.mxu0 0.0
  %2468 = vmatprep.subr.mxu0 0.0
  %2469 = vmatpush2.msra.mxu0 0.0
  %2470 = vmatprep.subr.mxu0 0.0
  %2471 = vmatpush2.msra.mxu0 0.0
  %2472 = vmatprep.subr.mxu0 0.0
  %2473 = vmatpush2.msra.mxu0 0.0
  %2474 = vmatprep.subr.mxu0 0.0
  %2475 = vmatpush2.msra.mxu0 0.0
  %2476 = vmatprep.subr.mxu0 0.0
  %2477 = vmatpush2.msra.mxu0 0.0
  %2478 = vmatprep.subr.mxu0 0.0
  %2479 = vmatpush2.msra.mxu0 0.0
  %2480 = vmatprep.mubr.f32.mxu0 0.0
  %2481 = vmatmul.mubr.f32.gmra.mxu0 %v2313
  %v2482 = vpop.f32.mrf.mxu0
  %v2483 = vadd.f32 0.0, %v2482
  %v2484 = vpop.f32.mrf.mxu0
  %2485 = vdwg.mxu0
  %v2486 = vmax.f32 %v2397, %v2483
  %v2487 = vld [vmem:[%s9] sm:$0x3]
  %v2489 = vsel %vm2157, %v2487, 0
  %v2492 = vsel %vm806, %v2486, 0
  %2494 = vmatprep.subr.mxu0 0.0
  %2495 = vmatpush1.msra.mxu0 0.0
  %2496 = vmatprep.subr.mxu0 0.0
  %2497 = vmatpush1.msra.mxu0 0.0
  %2498 = vmatprep.subr.mxu0 0.0
  %2499 = vmatpush1.msra.mxu0 0.0
  %2500 = vmatprep.subr.mxu0 0.0
  %2501 = vmatpush1.msra.mxu0 0.0
  %2502 = vmatprep.subr.mxu0 0.0
  %2503 = vmatpush1.msra.mxu0 0.0
  %2504 = vmatprep.subr.mxu0 0.0
  %2505 = vmatpush1.msra.mxu0 0.0
  %2506 = vmatprep.subr.mxu0 0.0
  %2507 = vmatpush1.msra.mxu0 0.0
  %2508 = vmatprep.subr.mxu0 0.0
  %2509 = vmatpush1.msra.mxu0 0.0
  %2510 = vmatprep.subr.mxu0 0.0
  %2511 = vmatpush1.msra.mxu0 0.0
  %2512 = vmatprep.subr.mxu0 0.0
  %2513 = vmatpush1.msra.mxu0 0.0
  %2514 = vmatprep.subr.mxu0 0.0
  %2515 = vmatpush1.msra.mxu0 0.0
  %2516 = vmatprep.subr.mxu0 0.0
  %2517 = vmatpush1.msra.mxu0 0.0
  %2518 = vmatprep.subr.mxu0 0.0
  %2519 = vmatpush1.msra.mxu0 0.0
  %2520 = vmatprep.subr.mxu0 0.0
  %2521 = vmatpush1.msra.mxu0 0.0
  %2522 = vmatprep.subr.mxu0 0.0
  %2523 = vmatpush1.msra.mxu0 0.0
  %2524 = vmatprep.subr.mxu0 0.0
  %2525 = vmatpush1.msra.mxu0 %v2492
  %2526 = vmatprep.subr.mxu0 0.0
  %2527 = vmatpush2.msra.mxu0 0.0
  %2528 = vmatprep.subr.mxu0 0.0
  %2529 = vmatpush2.msra.mxu0 0.0
  %2530 = vmatprep.subr.mxu0 0.0
  %2531 = vmatpush2.msra.mxu0 0.0
  %2532 = vmatprep.subr.mxu0 0.0
  %2533 = vmatpush2.msra.mxu0 0.0
  %2534 = vmatprep.subr.mxu0 0.0
  %2535 = vmatpush2.msra.mxu0 0.0
  %2536 = vmatprep.subr.mxu0 0.0
  %2537 = vmatpush2.msra.mxu0 0.0
  %2538 = vmatprep.subr.mxu0 0.0
  %2539 = vmatpush2.msra.mxu0 0.0
  %2540 = vmatprep.subr.mxu0 0.0
  %2541 = vmatpush2.msra.mxu0 0.0
  %2542 = vmatprep.subr.mxu0 0.0
  %2543 = vmatpush2.msra.mxu0 0.0
  %2544 = vmatprep.subr.mxu0 0.0
  %2545 = vmatpush2.msra.mxu0 0.0
  %2546 = vmatprep.subr.mxu0 0.0
  %2547 = vmatpush2.msra.mxu0 0.0
  %2548 = vmatprep.subr.mxu0 0.0
  %2549 = vmatpush2.msra.mxu0 0.0
  %2550 = vmatprep.subr.mxu0 0.0
  %2551 = vmatpush2.msra.mxu0 0.0
  %2552 = vmatprep.subr.mxu0 0.0
  %2553 = vmatpush2.msra.mxu0 0.0
  %2554 = vmatprep.subr.mxu0 0.0
  %2555 = vmatpush2.msra.mxu0 0.0
  %2556 = vmatprep.subr.mxu0 0.0
  %2557 = vmatpush2.msra.mxu0 0.0
  %2558 = vmatprep.mubr.f32.mxu0 0.0
  %2559 = vmatmul.mubr.f32.gmra.mxu0 %v2489
  %v2560 = vpop.f32.mrf.mxu0
  %v2561 = vadd.f32 0.0, %v2560
  %v2562 = vpop.f32.mrf.mxu0
  %2563 = vdwg.mxu0
  %v2564 = vld [vmem:[%s10] sm:$0x3]
  %v2566 = vsel %vm2157, %v2564, 0
  %2568 = vmatprep.subr.mxu0 0.0
  %2569 = vmatpush1.msra.mxu0 0.0
  %2570 = vmatprep.subr.mxu0 0.0
  %2571 = vmatpush1.msra.mxu0 0.0
  %2572 = vmatprep.subr.mxu0 0.0
  %2573 = vmatpush1.msra.mxu0 0.0
  %2574 = vmatprep.subr.mxu0 0.0
  %2575 = vmatpush1.msra.mxu0 0.0
  %2576 = vmatprep.subr.mxu0 0.0
  %2577 = vmatpush1.msra.mxu0 0.0
  %2578 = vmatprep.subr.mxu0 0.0
  %2579 = vmatpush1.msra.mxu0 0.0
  %2580 = vmatprep.subr.mxu0 0.0
  %2581 = vmatpush1.msra.mxu0 0.0
  %2582 = vmatprep.subr.mxu0 0.0
  %2583 = vmatpush1.msra.mxu0 0.0
  %2584 = vmatprep.subr.mxu0 0.0
  %2585 = vmatpush1.msra.mxu0 0.0
  %2586 = vmatprep.subr.mxu0 0.0
  %2587 = vmatpush1.msra.mxu0 0.0
  %2588 = vmatprep.subr.mxu0 0.0
  %2589 = vmatpush1.msra.mxu0 0.0
  %2590 = vmatprep.subr.mxu0 0.0
  %2591 = vmatpush1.msra.mxu0 0.0
  %2592 = vmatprep.subr.mxu0 0.0
  %2593 = vmatpush1.msra.mxu0 0.0
  %2594 = vmatprep.subr.mxu0 0.0
  %2595 = vmatpush1.msra.mxu0 0.0
  %2596 = vmatprep.subr.mxu0 0.0
  %2597 = vmatpush1.msra.mxu0 0.0
  %2598 = vmatprep.subr.mxu0 0.0
  %2599 = vmatpush1.msra.mxu0 %v2492
  %2600 = vmatprep.subr.mxu0 0.0
  %2601 = vmatpush2.msra.mxu0 0.0
  %2602 = vmatprep.subr.mxu0 0.0
  %2603 = vmatpush2.msra.mxu0 0.0
  %2604 = vmatprep.subr.mxu0 0.0
  %2605 = vmatpush2.msra.mxu0 0.0
  %2606 = vmatprep.subr.mxu0 0.0
  %2607 = vmatpush2.msra.mxu0 0.0
  %2608 = vmatprep.subr.mxu0 0.0
  %2609 = vmatpush2.msra.mxu0 0.0
  %2610 = vmatprep.subr.mxu0 0.0
  %2611 = vmatpush2.msra.mxu0 0.0
  %2612 = vmatprep.subr.mxu0 0.0
  %2613 = vmatpush2.msra.mxu0 0.0
  %2614 = vmatprep.subr.mxu0 0.0
  %2615 = vmatpush2.msra.mxu0 0.0
  %2616 = vmatprep.subr.mxu0 0.0
  %2617 = vmatpush2.msra.mxu0 0.0
  %2618 = vmatprep.subr.mxu0 0.0
  %2619 = vmatpush2.msra.mxu0 0.0
  %2620 = vmatprep.subr.mxu0 0.0
  %2621 = vmatpush2.msra.mxu0 0.0
  %2622 = vmatprep.subr.mxu0 0.0
  %2623 = vmatpush2.msra.mxu0 0.0
  %2624 = vmatprep.subr.mxu0 0.0
  %2625 = vmatpush2.msra.mxu0 0.0
  %2626 = vmatprep.subr.mxu0 0.0
  %2627 = vmatpush2.msra.mxu0 0.0
  %2628 = vmatprep.subr.mxu0 0.0
  %2629 = vmatpush2.msra.mxu0 0.0
  %2630 = vmatprep.subr.mxu0 0.0
  %2631 = vmatpush2.msra.mxu0 0.0
  %2632 = vmatprep.mubr.f32.mxu0 0.0
  %2633 = vmatmul.mubr.f32.gmra.mxu0 %v2566
  %v2634 = vpop.f32.mrf.mxu0
  %v2635 = vadd.f32 0.0, %v2634
  %v2636 = vpop.f32.mrf.mxu0
  %2637 = vdwg.mxu0
  %v2638 = vmax.f32 %v2561, %v2635
  %s2639 = scalar_lea.vmem %s13, 2
  %2640 = vst.msk [vmem:[%s2639] sm:$0x3] %vm2309, %v2638
  // Predicated region
  $region54: #{cnn_forward.6} parent=0 // pred_check
    _
  $region55: #{cnn_forward.6} parent=0 // pred_check_branch
    %2642 = sbr.rel (0) target = $region57
  $region56: #{cnn_forward.6} parent=0 // pred_region
    _
  $region57: #{cnn_forward.6} parent=0 // pred_fallthru
    _
  // Predicated region
  $region58: #{cnn_forward.6} parent=0 // pred_check
    _
  $region59: #{cnn_forward.6} parent=0 // pred_check_branch
    %2644 = sbr.rel (0) target = $region61
  $region60: #{cnn_forward.6} parent=0 // pred_region
    _
  $region61: #{cnn_forward.6} parent=0 // pred_fallthru
    _

</llo_original>
